<compile_context>
chip_gen: v7x
topology: tpu7x:2x2x1
jax: 0.10.0
libtpu: 0.0.40
codegen_flags: <defaults>
</compile_context>

<pallas_src>
import functools

import jax
import jax.numpy as jnp
from jax import lax
from jax.experimental import pallas as pl
from jax.experimental.pallas import tpu as pltpu


# ----------------------------------------------------------------------------
# Helpers
# ----------------------------------------------------------------------------
def get_sinusoid_pos_embeddings(seqlen, ndims, posenc_min_rate=1 / 10000):
    """JAX port of the PyTorch helper."""
    angle_rate_exps = jnp.linspace(0.0, 1.0, ndims // 2)
    angle_rates = posenc_min_rate ** angle_rate_exps
    positions = jnp.arange(seqlen, dtype=jnp.float32)
    angles_rad = positions[:, None] * angle_rates[None, :]
    return jnp.concatenate([jnp.sin(angles_rad), jnp.cos(angles_rad)], axis=-1)


def _layer_norm(x, w, b, eps=1e-5):
    mean = jnp.mean(x, axis=-1, keepdims=True)
    xc = x - mean
    var = jnp.mean(xc * xc, axis=-1, keepdims=True)
    return xc * lax.rsqrt(var + eps) * w + b


# ----------------------------------------------------------------------------
# Pallas kernel: full TransformerEncoder stack, one layer per grid step
# ----------------------------------------------------------------------------
def encoder_stack_kernel(x_ref, mask_ref, wqkv_ref, bqkv_ref, wo_ref, bo_ref,
                         w1_ref, b1_ref, w2_ref, b2_ref,
                         ln1w_ref, ln1b_ref, ln2w_ref, ln2b_ref,
                         out_ref, x_scr, *, n_heads):
    layer = pl.program_id(0)

    @pl.when(layer == 0)
    def _():
        x_scr[...] = x_ref[...].astype(jnp.float32)

    N, D = x_scr.shape
    H = n_heads
    Dh = D // H
    scale = 1.0 / (Dh ** 0.5)

    x = x_scr[...]                                                  # (N, D) f32

    # ---- multi-head self-attention -----------------------------------------
    # q/k/v projection for ALL tokens in one MXU matmul (bias fused).
    qkv = (jnp.dot(x, wqkv_ref[...], preferred_element_type=jnp.float32)
           + bqkv_ref[...])                                         # (N, 3D)
    mask = mask_ref[...]                                            # (N, N) block-diag

    # Per-head SDPA over all batches at once; cross-batch entries are masked
    # out with a large negative additive bias -> softmax is per-batch.
    sa = jnp.zeros((N, D), jnp.float32)
    for h in range(H):
        c0 = h * Dh
        q_h = qkv[:, c0:c0 + Dh]                                    # (N, Dh)
        k_h = qkv[:, D + c0:D + c0 + Dh]                            # (N, Dh)
        v_h = qkv[:, 2 * D + c0:2 * D + c0 + Dh]                    # (N, Dh)
        s = lax.dot_general(q_h, k_h, (((1,), (1,)), ((), ())),
                            preferred_element_type=jnp.float32) * scale + mask
        s = s - jnp.max(s, axis=-1, keepdims=True)
        p = jnp.exp(s)
        p = p / jnp.sum(p, axis=-1, keepdims=True)                  # (N, N)
        o_h = jnp.dot(p, v_h, preferred_element_type=jnp.float32)   # (N, Dh)
        # concat(heads) @ Wo == sum_h o_h @ Wo[h*Dh:(h+1)*Dh, :]
        sa = sa + jnp.dot(o_h, wo_ref[c0:c0 + Dh, :],
                          preferred_element_type=jnp.float32)
    sa = sa + bo_ref[...]

    x = _layer_norm(x + sa, ln1w_ref[...], ln1b_ref[...])

    # ---- feed-forward (linear1 -> relu -> linear2) --------------------------
    hdn = jnp.maximum(
        jnp.dot(x, w1_ref[...], preferred_element_type=jnp.float32) + b1_ref[...],
        0.0)
    ff = jnp.dot(hdn, w2_ref[...], preferred_element_type=jnp.float32) + b2_ref[...]
    x = _layer_norm(x + ff, ln2w_ref[...], ln2b_ref[...])

    x_scr[...] = x

    @pl.when(layer == pl.num_programs(0) - 1)
    def _():
        out_ref[...] = x.astype(out_ref.dtype)


def transformer_encoder_pallas(x, mask, params, *, n_heads):
    """x: (B*T, D) batch-major token slab. mask: (B*T, B*T) additive batch mask."""
    (w_qkv, b_qkv, w_o, b_o, w_1, b_1, w_2, b_2,
     ln1_w, ln1_b, ln2_w, ln2_b) = params
    n_layers = w_qkv.shape[0]
    N, D = x.shape
    F = w_1.shape[-1]

    kernel = functools.partial(encoder_stack_kernel, n_heads=n_heads)

    def resident(shape):            # same block for every layer step
        return pl.BlockSpec(shape, lambda l, _n=len(shape): (0,) * _n)

    def per_layer(rows, cols):      # pick layer l's slice of a stacked param
        return pl.BlockSpec((None, rows, cols), lambda l: (l, 0, 0))

    return pl.pallas_call(
        kernel,
        out_shape=jax.ShapeDtypeStruct((N, D), x.dtype),
        grid=(n_layers,),
        in_specs=[
            resident((N, D)),
            resident((N, N)),
            per_layer(D, 3 * D), per_layer(1, 3 * D),
            per_layer(D, D), per_layer(1, D),
            per_layer(D, F), per_layer(1, F),
            per_layer(F, D), per_layer(1, D),
            per_layer(1, D), per_layer(1, D),
            per_layer(1, D), per_layer(1, D),
        ],
        out_specs=resident((N, D)),
        scratch_shapes=[
            pltpu.VMEM((N, D), jnp.float32),   # activations carried across layers
        ],
        compiler_params=pltpu.CompilerParams(
            dimension_semantics=("arbitrary",)),
    )(x, mask, w_qkv, b_qkv, w_o, b_o, w_1, b_1, w_2, b_2,
      ln1_w, ln1_b, ln2_w, ln2_b)


# ----------------------------------------------------------------------------
# Pure-JAX (XLA) reference of the same encoder stack, for correctness checking
# ----------------------------------------------------------------------------
def transformer_encoder_reference(x, params, *, n_batch, n_tokens, n_heads):
    (w_qkv, b_qkv, w_o, b_o, w_1, b_1, w_2, b_2,
     ln1_w, ln1_b, ln2_w, ln2_b) = params
    n_layers = w_qkv.shape[0]
    D = x.shape[-1]
    Dh = D // n_heads

    def ln(v, w, b):
        m = jnp.mean(v, axis=-1, keepdims=True)
        c = v - m
        var = jnp.mean(c * c, axis=-1, keepdims=True)
        return c * lax.rsqrt(var + 1e-5) * w + b

    def heads(a):
        return a.reshape(n_batch, n_tokens, n_heads, Dh).transpose(0, 2, 1, 3)

    for l in range(n_layers):
        qkv = x @ w_qkv[l] + b_qkv[l]
        q, k, v = jnp.split(qkv, 3, axis=-1)
        qh, kh, vh = heads(q), heads(k), heads(v)
        s = jnp.einsum("bhqd,bhkd->bhqk", qh, kh) / (Dh ** 0.5)
        p = jax.nn.softmax(s, axis=-1)
        o = jnp.einsum("bhqk,bhkd->bhqd", p, vh)
        o = o.transpose(0, 2, 1, 3).reshape(n_batch * n_tokens, D)
        x = ln(x + (o @ w_o[l] + b_o[l]), ln1_w[l], ln1_b[l])
        h = jnp.maximum(x @ w_1[l] + b_1[l], 0.0)
        x = ln(x + (h @ w_2[l] + b_2[l]), ln2_w[l], ln2_b[l])
    return x


# ----------------------------------------------------------------------------
# Model wrapper + parameter setup
# ----------------------------------------------------------------------------
def transformer_seq_model_forward(state_embed, action_embeddings, params,
                                  n_heads, use_pallas=True):
    """Equivalent of TransformerSeqModel.forward (eval mode)."""
    S, B, D = action_embeddings.shape
    sinseq = get_sinusoid_pos_embeddings(S, state_embed.shape[-1])
    sinseq = sinseq.astype(action_embeddings.dtype)
    seq = jnp.concatenate(
        [state_embed, action_embeddings + sinseq[:, None, :]], axis=0)  # (T, B, D)
    T = seq.shape[0]
    N = B * T

    # Batch-major 2-D token slab for the kernel: row index = b * T + t.
    x = jnp.transpose(seq, (1, 0, 2)).reshape(N, D)

    if use_pallas:
        # Block-diagonal additive mask: tokens only attend within their batch.
        batch_id = jnp.arange(N, dtype=jnp.int32) // T
        mask = jnp.where(batch_id[:, None] == batch_id[None, :],
                         0.0, -1e9).astype(jnp.float32)
        y = transformer_encoder_pallas(x, mask, params, n_heads=n_heads)
    else:
        y = transformer_encoder_reference(x, params, n_batch=B, n_tokens=T,
                                          n_heads=n_heads)

    y = y.reshape(B, T, D).transpose(1, 0, 2)                           # (T, B, D)
    return y[1:]                                                        # drop the state token


def init_transformer_params(key, n_layers, d_model, dim_feedforward):
    """Encoder-layer params, pre-transposed to x @ W layout and stacked over
    layers ONCE at setup time (the forward pass does no transposes)."""
    D, F = d_model, dim_feedforward
    layers = []
    for _ in range(n_layers):
        key, *ks = jax.random.split(key, 9)
        s = 1.0 / (D ** 0.5)
        sf = 1.0 / (F ** 0.5)
        layers.append(dict(
            w_qkv=jax.random.uniform(ks[0], (D, 3 * D), jnp.float32, -s, s),
            b_qkv=jax.random.uniform(ks[1], (1, 3 * D), jnp.float32, -s, s),
            w_o=jax.random.uniform(ks[2], (D, D), jnp.float32, -s, s),
            b_o=jax.random.uniform(ks[3], (1, D), jnp.float32, -s, s),
            w_1=jax.random.uniform(ks[4], (D, F), jnp.float32, -s, s),
            b_1=jax.random.uniform(ks[5], (1, F), jnp.float32, -s, s),
            w_2=jax.random.uniform(ks[6], (F, D), jnp.float32, -sf, sf),
            b_2=jax.random.uniform(ks[7], (1, D), jnp.float32, -sf, sf),
            ln1_w=jnp.ones((1, D), jnp.float32),
            ln1_b=jnp.zeros((1, D), jnp.float32),
            ln2_w=jnp.ones((1, D), jnp.float32),
            ln2_b=jnp.zeros((1, D), jnp.float32),
        ))
    names = ("w_qkv", "b_qkv", "w_o", "b_o", "w_1", "b_1", "w_2", "b_2",
             "ln1_w", "ln1_b", "ln2_w", "ln2_b")
    return tuple(jnp.stack([lyr[n] for lyr in layers], axis=0) for n in names)


if __name__ == "__main__":
    jax.config.update("jax_default_matmul_precision", "highest")

    n_layers = 2
    input_dim = 16
    n_heads = 4
    dim_feedforward = 4 * input_dim
    seq_len = 8
    batch = 4

    key = jax.random.PRNGKey(0)
    key, k_state, k_act, k_params = jax.random.split(key, 4)

    state_embed = jax.random.normal(k_state, (1, batch, input_dim), jnp.float32)
    action_embeddings = jax.random.normal(
        k_act, (seq_len, batch, input_dim), jnp.float32)
    params = init_transformer_params(
        k_params, n_layers, input_dim, dim_feedforward)

    fwd = jax.jit(transformer_seq_model_forward,
                  static_argnames=("n_heads", "use_pallas"))

    seq_embed = fwd(state_embed, action_embeddings, params, n_heads=n_heads)
    seq_embed = jax.block_until_ready(seq_embed)
    assert seq_embed.shape == (seq_len, batch, input_dim)

    # Cross-check the Pallas kernel against a pure-XLA reference of the same math.
    ref = fwd(state_embed, action_embeddings, params, n_heads=n_heads,
              use_pallas=False)
    ref = jax.block_until_ready(ref)
    assert jnp.allclose(seq_embed, ref, atol=1e-2, rtol=1e-2), (
        float(jnp.max(jnp.abs(seq_embed - ref))))

    print("KERNEL_OK")
</pallas_src>

<mosaic_0001>
module attributes {stable_mosaic.version = 11 : i64} {
  func.func @encoder_stack_kernel(%arg0: i32, %arg1: memref<36x16xf32, #tpu.memory_space<vmem>>, %arg2: memref<36x36xf32, #tpu.memory_space<vmem>>, %arg3: memref<1x16x48xf32, #tpu.memory_space<vmem>>, %arg4: memref<1x1x48xf32, #tpu.memory_space<vmem>>, %arg5: memref<1x16x16xf32, #tpu.memory_space<vmem>>, %arg6: memref<1x1x16xf32, #tpu.memory_space<vmem>>, %arg7: memref<1x16x64xf32, #tpu.memory_space<vmem>>, %arg8: memref<1x1x64xf32, #tpu.memory_space<vmem>>, %arg9: memref<1x64x16xf32, #tpu.memory_space<vmem>>, %arg10: memref<1x1x16xf32, #tpu.memory_space<vmem>>, %arg11: memref<1x1x16xf32, #tpu.memory_space<vmem>>, %arg12: memref<1x1x16xf32, #tpu.memory_space<vmem>>, %arg13: memref<1x1x16xf32, #tpu.memory_space<vmem>>, %arg14: memref<1x1x16xf32, #tpu.memory_space<vmem>>, %arg15: memref<36x16xf32, #tpu.memory_space<vmem>>, %arg16: memref<36x16xf32, #tpu.memory_space<vmem>>) attributes {dimension_semantics = [#tpu.dimension_semantics<arbitrary>], iteration_bounds = array<i64: 2>, scalar_prefetch = 0 : i64, scratch_operands = 1 : i64, tpu.core_type = #tpu.core_type<tc>, window_params = [{pipeline_mode = #tpu.pipeline_mode<synchronous>, transform_indices = @transform_0, window_bounds = array<i64: 36, 16>}, {pipeline_mode = #tpu.pipeline_mode<synchronous>, transform_indices = @transform_1, window_bounds = array<i64: 36, 36>}, {transform_indices = @transform_2, window_bounds = array<i64: 1, 16, 48>}, {transform_indices = @transform_3, window_bounds = array<i64: 1, 1, 48>}, {transform_indices = @transform_4, window_bounds = array<i64: 1, 16, 16>}, {transform_indices = @transform_5, window_bounds = array<i64: 1, 1, 16>}, {transform_indices = @transform_6, window_bounds = array<i64: 1, 16, 64>}, {transform_indices = @transform_7, window_bounds = array<i64: 1, 1, 64>}, {transform_indices = @transform_8, window_bounds = array<i64: 1, 64, 16>}, {transform_indices = @transform_9, window_bounds = array<i64: 1, 1, 16>}, {transform_indices = @transform_10, window_bounds = array<i64: 1, 1, 16>}, {transform_indices = @transform_11, window_bounds = array<i64: 1, 1, 16>}, {transform_indices = @transform_12, window_bounds = array<i64: 1, 1, 16>}, {transform_indices = @transform_13, window_bounds = array<i64: 1, 1, 16>}, {pipeline_mode = #tpu.pipeline_mode<synchronous>, transform_indices = @transform_14, window_bounds = array<i64: 36, 16>}]} {
    %c0_i32 = arith.constant 0 : i32
    %0 = arith.cmpi eq, %arg0, %c0_i32 : i32
    %1 = arith.extui %0 : i1 to i32
    %c0_i32_0 = arith.constant 0 : i32
    %2 = arith.cmpi ne, %1, %c0_i32_0 : i32
    scf.if %2 {
      %c0_87 = arith.constant 0 : index
      %c0_88 = arith.constant 0 : index
      %171 = vector.load %arg1[%c0_87, %c0_88] : memref<36x16xf32, #tpu.memory_space<vmem>>, vector<36x16xf32>
      %c0_89 = arith.constant 0 : index
      %c0_90 = arith.constant 0 : index
      %172 = vector.load %arg16[%c0_89, %c0_90] : memref<36x16xf32, #tpu.memory_space<vmem>>, vector<36x16xf32>
      tpu.vector_store %arg16[%c0_89, %c0_90], %171 {strides = array<i32>} : memref<36x16xf32, #tpu.memory_space<vmem>>, vector<36x16xf32>,
    } else {
    }
    %c0 = arith.constant 0 : index
    %c0_1 = arith.constant 0 : index
    %3 = vector.load %arg16[%c0, %c0_1] : memref<36x16xf32, #tpu.memory_space<vmem>>, vector<36x16xf32>
    %c0_2 = arith.constant 0 : index
    %c0_3 = arith.constant 0 : index
    %c0_4 = arith.constant 0 : index
    %4 = vector.load %arg3[%c0_2, %c0_3, %c0_4] : memref<1x16x48xf32, #tpu.memory_space<vmem>>, vector<1x16x48xf32>
    %5 = vector.shape_cast %4 : vector<1x16x48xf32> to vector<16x48xf32>
    %cst = arith.constant dense<0.000000e+00> : vector<36x48xf32>
    %6 = tpu.matmul %3, %5, %cst {dimension_numbers = #tpu.dot_dimension_numbers<[1], [0], [0], [1], [0, 0, 1, 1], [], []>, precision = #tpu.contract_precision<fp32>} : vector<36x16xf32>, vector<16x48xf32>, vector<36x48xf32> -> vector<36x48xf32>
    %c0_5 = arith.constant 0 : index
    %c0_6 = arith.constant 0 : index
    %c0_7 = arith.constant 0 : index
    %7 = vector.load %arg4[%c0_5, %c0_6, %c0_7] : memref<1x1x48xf32, #tpu.memory_space<vmem>>, vector<1x1x48xf32>
    %8 = vector.shape_cast %7 : vector<1x1x48xf32> to vector<1x48xf32>
    %9 = vector.broadcast %8 : vector<1x48xf32> to vector<36x48xf32>
    %10 = arith.addf %6, %9 : vector<36x48xf32>
    %c0_8 = arith.constant 0 : index
    %c0_9 = arith.constant 0 : index
    %11 = vector.load %arg2[%c0_8, %c0_9] : memref<36x36xf32, #tpu.memory_space<vmem>>, vector<36x36xf32>
    %cst_10 = arith.constant 0.000000e+00 : f32
    %12 = vector.broadcast %cst_10 : f32 to vector<36x16xf32>
    %13 = vector.extract_strided_slice %10 {offsets = [0, 0], sizes = [36, 4], strides = [1, 1]} : vector<36x48xf32> to vector<36x4xf32>
    %14 = vector.extract_strided_slice %10 {offsets = [0, 16], sizes = [36, 4], strides = [1, 1]} : vector<36x48xf32> to vector<36x4xf32>
    %15 = vector.extract_strided_slice %10 {offsets = [0, 32], sizes = [36, 4], strides = [1, 1]} : vector<36x48xf32> to vector<36x4xf32>
    %cst_11 = arith.constant dense<0.000000e+00> : vector<36x36xf32>
    %16 = tpu.matmul %13, %14, %cst_11 {dimension_numbers = #tpu.dot_dimension_numbers<[1], [1], [0], [0], [0, 0, 1, 0], [], []>, precision = #tpu.contract_precision<fp32>} : vector<36x4xf32>, vector<36x4xf32>, vector<36x36xf32> -> vector<36x36xf32>
    %cst_12 = arith.constant 5.000000e-01 : f32
    %17 = vector.broadcast %cst_12 : f32 to vector<36x36xf32>
    %18 = arith.mulf %16, %17 : vector<36x36xf32>
    %19 = arith.addf %18, %11 : vector<36x36xf32>
    %cst_13 = arith.constant dense<0xFF800000> : vector<36xf32>
    %20 = vector.multi_reduction <maximumf>, %19, %cst_13 [1] : vector<36x36xf32> to vector<36xf32>
    %21 = vector.shape_cast %20 : vector<36xf32> to vector<36x1xf32>
    %22 = vector.broadcast %21 : vector<36x1xf32> to vector<36x36xf32>
    %23 = arith.subf %19, %22 : vector<36x36xf32>
    %24 = math.exp %23 : vector<36x36xf32>
    %cst_14 = arith.constant dense<0.000000e+00> : vector<36xf32>
    %25 = vector.multi_reduction <add>, %24, %cst_14 [1] : vector<36x36xf32> to vector<36xf32>
    %26 = vector.shape_cast %25 : vector<36xf32> to vector<36x1xf32>
    %27 = vector.broadcast %26 : vector<36x1xf32> to vector<36x36xf32>
    %28 = arith.divf %24, %27 : vector<36x36xf32>
    %cst_15 = arith.constant dense<0.000000e+00> : vector<36x4xf32>
    %29 = tpu.matmul %28, %15, %cst_15 {dimension_numbers = #tpu.dot_dimension_numbers<[1], [0], [0], [1], [0, 0, 1, 1], [], []>, precision = #tpu.contract_precision<fp32>} : vector<36x36xf32>, vector<36x4xf32>, vector<36x4xf32> -> vector<36x4xf32>
    %c0_16 = arith.constant 0 : index
    %c0_17 = arith.constant 0 : index
    %c0_18 = arith.constant 0 : index
    %30 = vector.load %arg5[%c0_16, %c0_17, %c0_18] : memref<1x16x16xf32, #tpu.memory_space<vmem>>, vector<1x4x16xf32>
    %31 = vector.shape_cast %30 : vector<1x4x16xf32> to vector<4x16xf32>
    %cst_19 = arith.constant dense<0.000000e+00> : vector<36x16xf32>
    %32 = tpu.matmul %29, %31, %cst_19 {dimension_numbers = #tpu.dot_dimension_numbers<[1], [0], [0], [1], [0, 0, 1, 1], [], []>, precision = #tpu.contract_precision<fp32>} : vector<36x4xf32>, vector<4x16xf32>, vector<36x16xf32> -> vector<36x16xf32>
    %33 = arith.addf %12, %32 : vector<36x16xf32>
    %34 = vector.extract_strided_slice %10 {offsets = [0, 4], sizes = [36, 4], strides = [1, 1]} : vector<36x48xf32> to vector<36x4xf32>
    %35 = vector.extract_strided_slice %10 {offsets = [0, 20], sizes = [36, 4], strides = [1, 1]} : vector<36x48xf32> to vector<36x4xf32>
    %36 = vector.extract_strided_slice %10 {offsets = [0, 36], sizes = [36, 4], strides = [1, 1]} : vector<36x48xf32> to vector<36x4xf32>
    %cst_20 = arith.constant dense<0.000000e+00> : vector<36x36xf32>
    %37 = tpu.matmul %34, %35, %cst_20 {dimension_numbers = #tpu.dot_dimension_numbers<[1], [1], [0], [0], [0, 0, 1, 0], [], []>, precision = #tpu.contract_precision<fp32>} : vector<36x4xf32>, vector<36x4xf32>, vector<36x36xf32> -> vector<36x36xf32>
    %cst_21 = arith.constant 5.000000e-01 : f32
    %38 = vector.broadcast %cst_21 : f32 to vector<36x36xf32>
    %39 = arith.mulf %37, %38 : vector<36x36xf32>
    %40 = arith.addf %39, %11 : vector<36x36xf32>
    %cst_22 = arith.constant dense<0xFF800000> : vector<36xf32>
    %41 = vector.multi_reduction <maximumf>, %40, %cst_22 [1] : vector<36x36xf32> to vector<36xf32>
    %42 = vector.shape_cast %41 : vector<36xf32> to vector<36x1xf32>
    %43 = vector.broadcast %42 : vector<36x1xf32> to vector<36x36xf32>
    %44 = arith.subf %40, %43 : vector<36x36xf32>
    %45 = math.exp %44 : vector<36x36xf32>
    %cst_23 = arith.constant dense<0.000000e+00> : vector<36xf32>
    %46 = vector.multi_reduction <add>, %45, %cst_23 [1] : vector<36x36xf32> to vector<36xf32>
    %47 = vector.shape_cast %46 : vector<36xf32> to vector<36x1xf32>
    %48 = vector.broadcast %47 : vector<36x1xf32> to vector<36x36xf32>
    %49 = arith.divf %45, %48 : vector<36x36xf32>
    %cst_24 = arith.constant dense<0.000000e+00> : vector<36x4xf32>
    %50 = tpu.matmul %49, %36, %cst_24 {dimension_numbers = #tpu.dot_dimension_numbers<[1], [0], [0], [1], [0, 0, 1, 1], [], []>, precision = #tpu.contract_precision<fp32>} : vector<36x36xf32>, vector<36x4xf32>, vector<36x4xf32> -> vector<36x4xf32>
    %c0_25 = arith.constant 0 : index
    %c4 = arith.constant 4 : index
    %c0_26 = arith.constant 0 : index
    %51 = vector.load %arg5[%c0_25, %c4, %c0_26] : memref<1x16x16xf32, #tpu.memory_space<vmem>>, vector<1x4x16xf32>
    %52 = vector.shape_cast %51 : vector<1x4x16xf32> to vector<4x16xf32>
    %cst_27 = arith.constant dense<0.000000e+00> : vector<36x16xf32>
    %53 = tpu.matmul %50, %52, %cst_27 {dimension_numbers = #tpu.dot_dimension_numbers<[1], [0], [0], [1], [0, 0, 1, 1], [], []>, precision = #tpu.contract_precision<fp32>} : vector<36x4xf32>, vector<4x16xf32>, vector<36x16xf32> -> vector<36x16xf32>
    %54 = arith.addf %33, %53 : vector<36x16xf32>
    %55 = vector.extract_strided_slice %10 {offsets = [0, 8], sizes = [36, 4], strides = [1, 1]} : vector<36x48xf32> to vector<36x4xf32>
    %56 = vector.extract_strided_slice %10 {offsets = [0, 24], sizes = [36, 4], strides = [1, 1]} : vector<36x48xf32> to vector<36x4xf32>
    %57 = vector.extract_strided_slice %10 {offsets = [0, 40], sizes = [36, 4], strides = [1, 1]} : vector<36x48xf32> to vector<36x4xf32>
    %cst_28 = arith.constant dense<0.000000e+00> : vector<36x36xf32>
    %58 = tpu.matmul %55, %56, %cst_28 {dimension_numbers = #tpu.dot_dimension_numbers<[1], [1], [0], [0], [0, 0, 1, 0], [], []>, precision = #tpu.contract_precision<fp32>} : vector<36x4xf32>, vector<36x4xf32>, vector<36x36xf32> -> vector<36x36xf32>
    %cst_29 = arith.constant 5.000000e-01 : f32
    %59 = vector.broadcast %cst_29 : f32 to vector<36x36xf32>
    %60 = arith.mulf %58, %59 : vector<36x36xf32>
    %61 = arith.addf %60, %11 : vector<36x36xf32>
    %cst_30 = arith.constant dense<0xFF800000> : vector<36xf32>
    %62 = vector.multi_reduction <maximumf>, %61, %cst_30 [1] : vector<36x36xf32> to vector<36xf32>
    %63 = vector.shape_cast %62 : vector<36xf32> to vector<36x1xf32>
    %64 = vector.broadcast %63 : vector<36x1xf32> to vector<36x36xf32>
    %65 = arith.subf %61, %64 : vector<36x36xf32>
    %66 = math.exp %65 : vector<36x36xf32>
    %cst_31 = arith.constant dense<0.000000e+00> : vector<36xf32>
    %67 = vector.multi_reduction <add>, %66, %cst_31 [1] : vector<36x36xf32> to vector<36xf32>
    %68 = vector.shape_cast %67 : vector<36xf32> to vector<36x1xf32>
    %69 = vector.broadcast %68 : vector<36x1xf32> to vector<36x36xf32>
    %70 = arith.divf %66, %69 : vector<36x36xf32>
    %cst_32 = arith.constant dense<0.000000e+00> : vector<36x4xf32>
    %71 = tpu.matmul %70, %57, %cst_32 {dimension_numbers = #tpu.dot_dimension_numbers<[1], [0], [0], [1], [0, 0, 1, 1], [], []>, precision = #tpu.contract_precision<fp32>} : vector<36x36xf32>, vector<36x4xf32>, vector<36x4xf32> -> vector<36x4xf32>
    %c0_33 = arith.constant 0 : index
    %c8 = arith.constant 8 : index
    %c0_34 = arith.constant 0 : index
    %72 = vector.load %arg5[%c0_33, %c8, %c0_34] : memref<1x16x16xf32, #tpu.memory_space<vmem>>, vector<1x4x16xf32>
    %73 = vector.shape_cast %72 : vector<1x4x16xf32> to vector<4x16xf32>
    %cst_35 = arith.constant dense<0.000000e+00> : vector<36x16xf32>
    %74 = tpu.matmul %71, %73, %cst_35 {dimension_numbers = #tpu.dot_dimension_numbers<[1], [0], [0], [1], [0, 0, 1, 1], [], []>, precision = #tpu.contract_precision<fp32>} : vector<36x4xf32>, vector<4x16xf32>, vector<36x16xf32> -> vector<36x16xf32>
    %75 = arith.addf %54, %74 : vector<36x16xf32>
    %76 = vector.extract_strided_slice %10 {offsets = [0, 12], sizes = [36, 4], strides = [1, 1]} : vector<36x48xf32> to vector<36x4xf32>
    %77 = vector.extract_strided_slice %10 {offsets = [0, 28], sizes = [36, 4], strides = [1, 1]} : vector<36x48xf32> to vector<36x4xf32>
    %78 = vector.extract_strided_slice %10 {offsets = [0, 44], sizes = [36, 4], strides = [1, 1]} : vector<36x48xf32> to vector<36x4xf32>
    %cst_36 = arith.constant dense<0.000000e+00> : vector<36x36xf32>
    %79 = tpu.matmul %76, %77, %cst_36 {dimension_numbers = #tpu.dot_dimension_numbers<[1], [1], [0], [0], [0, 0, 1, 0], [], []>, precision = #tpu.contract_precision<fp32>} : vector<36x4xf32>, vector<36x4xf32>, vector<36x36xf32> -> vector<36x36xf32>
    %cst_37 = arith.constant 5.000000e-01 : f32
    %80 = vector.broadcast %cst_37 : f32 to vector<36x36xf32>
    %81 = arith.mulf %79, %80 : vector<36x36xf32>
    %82 = arith.addf %81, %11 : vector<36x36xf32>
    %cst_38 = arith.constant dense<0xFF800000> : vector<36xf32>
    %83 = vector.multi_reduction <maximumf>, %82, %cst_38 [1] : vector<36x36xf32> to vector<36xf32>
    %84 = vector.shape_cast %83 : vector<36xf32> to vector<36x1xf32>
    %85 = vector.broadcast %84 : vector<36x1xf32> to vector<36x36xf32>
    %86 = arith.subf %82, %85 : vector<36x36xf32>
    %87 = math.exp %86 : vector<36x36xf32>
    %cst_39 = arith.constant dense<0.000000e+00> : vector<36xf32>
    %88 = vector.multi_reduction <add>, %87, %cst_39 [1] : vector<36x36xf32> to vector<36xf32>
    %89 = vector.shape_cast %88 : vector<36xf32> to vector<36x1xf32>
    %90 = vector.broadcast %89 : vector<36x1xf32> to vector<36x36xf32>
    %91 = arith.divf %87, %90 : vector<36x36xf32>
    %cst_40 = arith.constant dense<0.000000e+00> : vector<36x4xf32>
    %92 = tpu.matmul %91, %78, %cst_40 {dimension_numbers = #tpu.dot_dimension_numbers<[1], [0], [0], [1], [0, 0, 1, 1], [], []>, precision = #tpu.contract_precision<fp32>} : vector<36x36xf32>, vector<36x4xf32>, vector<36x4xf32> -> vector<36x4xf32>
    %c0_41 = arith.constant 0 : index
    %c12 = arith.constant 12 : index
    %c0_42 = arith.constant 0 : index
    %93 = vector.load %arg5[%c0_41, %c12, %c0_42] : memref<1x16x16xf32, #tpu.memory_space<vmem>>, vector<1x4x16xf32>
    %94 = vector.shape_cast %93 : vector<1x4x16xf32> to vector<4x16xf32>
    %cst_43 = arith.constant dense<0.000000e+00> : vector<36x16xf32>
    %95 = tpu.matmul %92, %94, %cst_43 {dimension_numbers = #tpu.dot_dimension_numbers<[1], [0], [0], [1], [0, 0, 1, 1], [], []>, precision = #tpu.contract_precision<fp32>} : vector<36x4xf32>, vector<4x16xf32>, vector<36x16xf32> -> vector<36x16xf32>
    %96 = arith.addf %75, %95 : vector<36x16xf32>
    %c0_44 = arith.constant 0 : index
    %c0_45 = arith.constant 0 : index
    %c0_46 = arith.constant 0 : index
    %97 = vector.load %arg6[%c0_44, %c0_45, %c0_46] : memref<1x1x16xf32, #tpu.memory_space<vmem>>, vector<1x1x16xf32>
    %98 = vector.shape_cast %97 : vector<1x1x16xf32> to vector<1x16xf32>
    %99 = vector.broadcast %98 : vector<1x16xf32> to vector<36x16xf32>
    %100 = arith.addf %96, %99 : vector<36x16xf32>
    %101 = arith.addf %3, %100 : vector<36x16xf32>
    %c0_47 = arith.constant 0 : index
    %c0_48 = arith.constant 0 : index
    %c0_49 = arith.constant 0 : index
    %102 = vector.load %arg11[%c0_47, %c0_48, %c0_49] : memref<1x1x16xf32, #tpu.memory_space<vmem>>, vector<1x1x16xf32>
    %103 = vector.shape_cast %102 : vector<1x1x16xf32> to vector<1x16xf32>
    %c0_50 = arith.constant 0 : index
    %c0_51 = arith.constant 0 : index
    %c0_52 = arith.constant 0 : index
    %104 = vector.load %arg12[%c0_50, %c0_51, %c0_52] : memref<1x1x16xf32, #tpu.memory_space<vmem>>, vector<1x1x16xf32>
    %105 = vector.shape_cast %104 : vector<1x1x16xf32> to vector<1x16xf32>
    %cst_53 = arith.constant dense<0.000000e+00> : vector<36xf32>
    %106 = vector.multi_reduction <add>, %101, %cst_53 [1] : vector<36x16xf32> to vector<36xf32>
    %107 = vector.shape_cast %106 : vector<36xf32> to vector<36x1xf32>
    %cst_54 = arith.constant 1.600000e+01 : f32
    %108 = vector.broadcast %cst_54 : f32 to vector<36x1xf32>
    %109 = arith.divf %107, %108 : vector<36x1xf32>
    %110 = vector.broadcast %109 : vector<36x1xf32> to vector<36x16xf32>
    %111 = arith.subf %101, %110 : vector<36x16xf32>
    %112 = arith.mulf %111, %111 : vector<36x16xf32>
    %cst_55 = arith.constant dense<0.000000e+00> : vector<36xf32>
    %113 = vector.multi_reduction <add>, %112, %cst_55 [1] : vector<36x16xf32> to vector<36xf32>
    %114 = vector.shape_cast %113 : vector<36xf32> to vector<36x1xf32>
    %cst_56 = arith.constant 1.600000e+01 : f32
    %115 = vector.broadcast %cst_56 : f32 to vector<36x1xf32>
    %116 = arith.divf %114, %115 : vector<36x1xf32>
    %cst_57 = arith.constant 9.99999974E-6 : f32
    %117 = vector.broadcast %cst_57 : f32 to vector<36x1xf32>
    %118 = arith.addf %116, %117 : vector<36x1xf32>
    %119 = math.rsqrt %118 : vector<36x1xf32>
    %120 = vector.broadcast %119 : vector<36x1xf32> to vector<36x16xf32>
    %121 = arith.mulf %111, %120 : vector<36x16xf32>
    %122 = vector.broadcast %103 : vector<1x16xf32> to vector<36x16xf32>
    %123 = arith.mulf %121, %122 : vector<36x16xf32>
    %124 = vector.broadcast %105 : vector<1x16xf32> to vector<36x16xf32>
    %125 = arith.addf %123, %124 : vector<36x16xf32>
    %c0_58 = arith.constant 0 : index
    %c0_59 = arith.constant 0 : index
    %c0_60 = arith.constant 0 : index
    %126 = vector.load %arg7[%c0_58, %c0_59, %c0_60] : memref<1x16x64xf32, #tpu.memory_space<vmem>>, vector<1x16x64xf32>
    %127 = vector.shape_cast %126 : vector<1x16x64xf32> to vector<16x64xf32>
    %cst_61 = arith.constant dense<0.000000e+00> : vector<36x64xf32>
    %128 = tpu.matmul %125, %127, %cst_61 {dimension_numbers = #tpu.dot_dimension_numbers<[1], [0], [0], [1], [0, 0, 1, 1], [], []>, precision = #tpu.contract_precision<fp32>} : vector<36x16xf32>, vector<16x64xf32>, vector<36x64xf32> -> vector<36x64xf32>
    %c0_62 = arith.constant 0 : index
    %c0_63 = arith.constant 0 : index
    %c0_64 = arith.constant 0 : index
    %129 = vector.load %arg8[%c0_62, %c0_63, %c0_64] : memref<1x1x64xf32, #tpu.memory_space<vmem>>, vector<1x1x64xf32>
    %130 = vector.shape_cast %129 : vector<1x1x64xf32> to vector<1x64xf32>
    %131 = vector.broadcast %130 : vector<1x64xf32> to vector<36x64xf32>
    %132 = arith.addf %128, %131 : vector<36x64xf32>
    %cst_65 = arith.constant 0.000000e+00 : f32
    %133 = vector.broadcast %cst_65 : f32 to vector<36x64xf32>
    %134 = arith.maximumf %132, %133 : vector<36x64xf32>
    %c0_66 = arith.constant 0 : index
    %c0_67 = arith.constant 0 : index
    %c0_68 = arith.constant 0 : index
    %135 = vector.load %arg9[%c0_66, %c0_67, %c0_68] : memref<1x64x16xf32, #tpu.memory_space<vmem>>, vector<1x64x16xf32>
    %136 = vector.shape_cast %135 : vector<1x64x16xf32> to vector<64x16xf32>
    %cst_69 = arith.constant dense<0.000000e+00> : vector<36x16xf32>
    %137 = tpu.matmul %134, %136, %cst_69 {dimension_numbers = #tpu.dot_dimension_numbers<[1], [0], [0], [1], [0, 0, 1, 1], [], []>, precision = #tpu.contract_precision<fp32>} : vector<36x64xf32>, vector<64x16xf32>, vector<36x16xf32> -> vector<36x16xf32>
    %c0_70 = arith.constant 0 : index
    %c0_71 = arith.constant 0 : index
    %c0_72 = arith.constant 0 : index
    %138 = vector.load %arg10[%c0_70, %c0_71, %c0_72] : memref<1x1x16xf32, #tpu.memory_space<vmem>>, vector<1x1x16xf32>
    %139 = vector.shape_cast %138 : vector<1x1x16xf32> to vector<1x16xf32>
    %140 = vector.broadcast %139 : vector<1x16xf32> to vector<36x16xf32>
    %141 = arith.addf %137, %140 : vector<36x16xf32>
    %142 = arith.addf %125, %141 : vector<36x16xf32>
    %c0_73 = arith.constant 0 : index
    %c0_74 = arith.constant 0 : index
    %c0_75 = arith.constant 0 : index
    %143 = vector.load %arg13[%c0_73, %c0_74, %c0_75] : memref<1x1x16xf32, #tpu.memory_space<vmem>>, vector<1x1x16xf32>
    %144 = vector.shape_cast %143 : vector<1x1x16xf32> to vector<1x16xf32>
    %c0_76 = arith.constant 0 : index
    %c0_77 = arith.constant 0 : index
    %c0_78 = arith.constant 0 : index
    %145 = vector.load %arg14[%c0_76, %c0_77, %c0_78] : memref<1x1x16xf32, #tpu.memory_space<vmem>>, vector<1x1x16xf32>
    %146 = vector.shape_cast %145 : vector<1x1x16xf32> to vector<1x16xf32>
    %cst_79 = arith.constant dense<0.000000e+00> : vector<36xf32>
    %147 = vector.multi_reduction <add>, %142, %cst_79 [1] : vector<36x16xf32> to vector<36xf32>
    %148 = vector.shape_cast %147 : vector<36xf32> to vector<36x1xf32>
    %cst_80 = arith.constant 1.600000e+01 : f32
    %149 = vector.broadcast %cst_80 : f32 to vector<36x1xf32>
    %150 = arith.divf %148, %149 : vector<36x1xf32>
    %151 = vector.broadcast %150 : vector<36x1xf32> to vector<36x16xf32>
    %152 = arith.subf %142, %151 : vector<36x16xf32>
    %153 = arith.mulf %152, %152 : vector<36x16xf32>
    %cst_81 = arith.constant dense<0.000000e+00> : vector<36xf32>
    %154 = vector.multi_reduction <add>, %153, %cst_81 [1] : vector<36x16xf32> to vector<36xf32>
    %155 = vector.shape_cast %154 : vector<36xf32> to vector<36x1xf32>
    %cst_82 = arith.constant 1.600000e+01 : f32
    %156 = vector.broadcast %cst_82 : f32 to vector<36x1xf32>
    %157 = arith.divf %155, %156 : vector<36x1xf32>
    %cst_83 = arith.constant 9.99999974E-6 : f32
    %158 = vector.broadcast %cst_83 : f32 to vector<36x1xf32>
    %159 = arith.addf %157, %158 : vector<36x1xf32>
    %160 = math.rsqrt %159 : vector<36x1xf32>
    %161 = vector.broadcast %160 : vector<36x1xf32> to vector<36x16xf32>
    %162 = arith.mulf %152, %161 : vector<36x16xf32>
    %163 = vector.broadcast %144 : vector<1x16xf32> to vector<36x16xf32>
    %164 = arith.mulf %162, %163 : vector<36x16xf32>
    %165 = vector.broadcast %146 : vector<1x16xf32> to vector<36x16xf32>
    %166 = arith.addf %164, %165 : vector<36x16xf32>
    %c0_84 = arith.constant 0 : index
    %c0_85 = arith.constant 0 : index
    %167 = vector.load %arg16[%c0_84, %c0_85] : memref<36x16xf32, #tpu.memory_space<vmem>>, vector<36x16xf32>
    tpu.vector_store %arg16[%c0_84, %c0_85], %166 {strides = array<i32>} : memref<36x16xf32, #tpu.memory_space<vmem>>, vector<36x16xf32>,
    %c1_i32 = arith.constant 1 : i32
    %168 = arith.cmpi eq, %arg0, %c1_i32 : i32
    %169 = arith.extui %168 : i1 to i32
    %c0_i32_86 = arith.constant 0 : i32
    %170 = arith.cmpi ne, %169, %c0_i32_86 : i32
    scf.if %170 {
      %c0_87 = arith.constant 0 : index
      %c0_88 = arith.constant 0 : index
      %171 = vector.load %arg15[%c0_87, %c0_88] : memref<36x16xf32, #tpu.memory_space<vmem>>, vector<36x16xf32>
      tpu.vector_store %arg15[%c0_87, %c0_88], %166 {strides = array<i32>} : memref<36x16xf32, #tpu.memory_space<vmem>>, vector<36x16xf32>,
    } else {
    }
    return
  }
  func.func @transform_0(%arg0: i32) -> (i32, i32) {
    %c0_i32 = arith.constant 0 : i32
    %c0_i32_0 = arith.constant 0 : i32
    %c0_i32_1 = arith.constant 0 : i32
    return %c0_i32, %c0_i32_0 : i32, i32
  }
  func.func @transform_1(%arg0: i32) -> (i32, i32) {
    %c0_i32 = arith.constant 0 : i32
    %c0_i32_0 = arith.constant 0 : i32
    %c0_i32_1 = arith.constant 0 : i32
    return %c0_i32, %c0_i32_0 : i32, i32
  }
  func.func @transform_2(%arg0: i32) -> (i32, i32, i32) {
    %c0_i32 = arith.constant 0 : i32
    %c0_i32_0 = arith.constant 0 : i32
    %c0_i32_1 = arith.constant 0 : i32
    return %arg0, %c0_i32, %c0_i32_0 : i32, i32, i32
  }
  func.func @transform_3(%arg0: i32) -> (i32, i32, i32) {
    %c0_i32 = arith.constant 0 : i32
    %c0_i32_0 = arith.constant 0 : i32
    %c0_i32_1 = arith.constant 0 : i32
    return %arg0, %c0_i32, %c0_i32_0 : i32, i32, i32
  }
  func.func @transform_4(%arg0: i32) -> (i32, i32, i32) {
    %c0_i32 = arith.constant 0 : i32
    %c0_i32_0 = arith.constant 0 : i32
    %c0_i32_1 = arith.constant 0 : i32
    return %arg0, %c0_i32, %c0_i32_0 : i32, i32, i32
  }
  func.func @transform_5(%arg0: i32) -> (i32, i32, i32) {
    %c0_i32 = arith.constant 0 : i32
    %c0_i32_0 = arith.constant 0 : i32
    %c0_i32_1 = arith.constant 0 : i32
    return %arg0, %c0_i32, %c0_i32_0 : i32, i32, i32
  }
  func.func @transform_6(%arg0: i32) -> (i32, i32, i32) {
    %c0_i32 = arith.constant 0 : i32
    %c0_i32_0 = arith.constant 0 : i32
    %c0_i32_1 = arith.constant 0 : i32
    return %arg0, %c0_i32, %c0_i32_0 : i32, i32, i32
  }
  func.func @transform_7(%arg0: i32) -> (i32, i32, i32) {
    %c0_i32 = arith.constant 0 : i32
    %c0_i32_0 = arith.constant 0 : i32
    %c0_i32_1 = arith.constant 0 : i32
    return %arg0, %c0_i32, %c0_i32_0 : i32, i32, i32
  }
  func.func @transform_8(%arg0: i32) -> (i32, i32, i32) {
    %c0_i32 = arith.constant 0 : i32
    %c0_i32_0 = arith.constant 0 : i32
    %c0_i32_1 = arith.constant 0 : i32
    return %arg0, %c0_i32, %c0_i32_0 : i32, i32, i32
  }
  func.func @transform_9(%arg0: i32) -> (i32, i32, i32) {
    %c0_i32 = arith.constant 0 : i32
    %c0_i32_0 = arith.constant 0 : i32
    %c0_i32_1 = arith.constant 0 : i32
    return %arg0, %c0_i32, %c0_i32_0 : i32, i32, i32
  }
  func.func @transform_10(%arg0: i32) -> (i32, i32, i32) {
    %c0_i32 = arith.constant 0 : i32
    %c0_i32_0 = arith.constant 0 : i32
    %c0_i32_1 = arith.constant 0 : i32
    return %arg0, %c0_i32, %c0_i32_0 : i32, i32, i32
  }
  func.func @transform_11(%arg0: i32) -> (i32, i32, i32) {
    %c0_i32 = arith.constant 0 : i32
    %c0_i32_0 = arith.constant 0 : i32
    %c0_i32_1 = arith.constant 0 : i32
    return %arg0, %c0_i32, %c0_i32_0 : i32, i32, i32
  }
  func.func @transform_12(%arg0: i32) -> (i32, i32, i32) {
    %c0_i32 = arith.constant 0 : i32
    %c0_i32_0 = arith.constant 0 : i32
    %c0_i32_1 = arith.constant 0 : i32
    return %arg0, %c0_i32, %c0_i32_0 : i32, i32, i32
  }
  func.func @transform_13(%arg0: i32) -> (i32, i32, i32) {
    %c0_i32 = arith.constant 0 : i32
    %c0_i32_0 = arith.constant 0 : i32
    %c0_i32_1 = arith.constant 0 : i32
    return %arg0, %c0_i32, %c0_i32_0 : i32, i32, i32
  }
  func.func @transform_14(%arg0: i32) -> (i32, i32) {
    %c0_i32 = arith.constant 0 : i32
    %c0_i32_0 = arith.constant 0 : i32
    %c0_i32_1 = arith.constant 0 : i32
    return %c0_i32, %c0_i32_0 : i32, i32
  }
}

</mosaic_0001>

<llo_original>
// kernel: transformer_seq_model_forward.1
$region0: #{transformer_seq_model_forward.1}
  #allocation0 [shape = 'u32[]', space=smem, size = 0x4, offset = 0x4, fixed_abs, tag = 'smem constant byte address 0x4 - core index']
  #allocation1 [shape = 'u32[144,128]{1,0:T(1,128)}', space=vmem, size = 0x12000, scoped, tag = 'internal scratch']
  #allocation2 [shape = 'f32[36,16]{1,0:T(8,128)}', space=vmem, size = 0x5000, scoped, tag = 'scratch operand']
  %s0 = inlined_call_operand.vmem [shape: f32[36,16], index: 0, kind: input, shape index: {}]
  %s1 = inlined_call_operand.vmem [shape: f32[36,36], index: 1, kind: input, shape index: {}]
  %s2 = inlined_call_operand.vmem [shape: f32[2,16,48], index: 2, kind: input, shape index: {}]
  %s3 = inlined_call_operand.vmem [shape: f32[2,1,48], index: 3, kind: input, shape index: {}]
  %s4 = inlined_call_operand.vmem [shape: f32[2,16,16], index: 4, kind: input, shape index: {}]
  %s5 = inlined_call_operand.vmem [shape: f32[2,1,16], index: 5, kind: input, shape index: {}]
  %s6 = inlined_call_operand.vmem [shape: f32[2,16,64], index: 6, kind: input, shape index: {}]
  %s7 = inlined_call_operand.vmem [shape: f32[2,1,64], index: 7, kind: input, shape index: {}]
  %s8 = inlined_call_operand.vmem [shape: f32[2,64,16], index: 8, kind: input, shape index: {}]
  %s9 = inlined_call_operand.vmem [shape: f32[2,1,16], index: 9, kind: input, shape index: {}]
  %s10 = inlined_call_operand.vmem [shape: f32[2,1,16], index: 10, kind: input, shape index: {}]
  %s11 = inlined_call_operand.vmem [shape: f32[2,1,16], index: 11, kind: input, shape index: {}]
  %s12 = inlined_call_operand.vmem [shape: f32[2,1,16], index: 12, kind: input, shape index: {}]
  %s13 = inlined_call_operand.vmem [shape: f32[2,1,16], index: 13, kind: input, shape index: {}]
  %s14 = inlined_call_operand.vmem [shape: f32[36,16], index: 14, kind: output, shape index: {}]
  %s15 = sld [smem:[#allocation0]]
  $region97: #{transformer_seq_model_forward.1} parent=0
    _
  %s17 = ssub.s32 1, %s15
  %s18 = scalar_select 0, %s17, %s15
  loop: start=0, step=1, limit=4
  $region2: #{transformer_seq_model_forward.1} parent=0 // loop_pre_header
    _
  $region3: #{transformer_seq_model_forward.1} parent=0 // loop_header
    %s20 = sphi 0, %s24
    %p21 = scmp.ge.s32.totalorder %s20, 4
    %s28 = sphi 0, %s28
    %s30 = sphi 0, %s28
    %s31 = sphi 0, %s30
    %s45 = sphi 0, %s31
    %s49 = sphi 0, %s49
    %s51 = sphi 0, %s49
    %s52 = sphi 0, %s51
    %s66 = sphi 0, %s52
    %s72 = sphi 0, %s74
    %s75 = sphi 0, %s72
    %s76 = sphi 0, %s75
    %s92 = sphi 0, %s76
    %s98 = sphi 0, %s100
    %s101 = sphi 0, %s98
    %s102 = sphi 0, %s101
    %s118 = sphi 0, %s102
    %s124 = sphi 0, %s126
    %s127 = sphi 0, %s124
    %s128 = sphi 0, %s127
    %s144 = sphi 0, %s128
    %s150 = sphi 0, %s152
    %s153 = sphi 0, %s150
    %s154 = sphi 0, %s153
    %s170 = sphi 0, %s154
    %s176 = sphi 0, %s178
    %s179 = sphi 0, %s176
    %s180 = sphi 0, %s179
    %s196 = sphi 0, %s180
    %s202 = sphi 0, %s204
    %s205 = sphi 0, %s202
    %s206 = sphi 0, %s205
    %s222 = sphi 0, %s206
    %s228 = sphi 0, %s230
    %s231 = sphi 0, %s228
    %s232 = sphi 0, %s231
    %s248 = sphi 0, %s232
    %s254 = sphi 0, %s256
    %s257 = sphi 0, %s254
    %s258 = sphi 0, %s257
    %s274 = sphi 0, %s258
    %s280 = sphi 0, %s282
    %s283 = sphi 0, %s280
    %s284 = sphi 0, %s283
    %s300 = sphi 0, %s284
    %s306 = sphi 0, %s308
    %s309 = sphi 0, %s306
    %s310 = sphi 0, %s309
    %s326 = sphi 0, %s310
    %s332 = sphi 0, %s334
    %s335 = sphi 0, %s332
    %s336 = sphi 0, %s335
    %s352 = sphi 0, %s336
    %s358 = sphi 0, %s360
    %s361 = sphi 0, %s358
    %s362 = sphi 0, %s361
    %s378 = sphi 0, %s362
    %s382 = sphi 0, %s382
    %s384 = sphi 0, %s382
    %s385 = sphi 0, %s384
    %s399 = sphi 0, %s385
  $region4: #{transformer_seq_model_forward.1} parent=0 // loop_header_branch
    %23 = sbr.rel (%p21) target = $region8
  $region5: #{transformer_seq_model_forward.1} parent=0 // loop_body
    %s25 = ssub.s32 %s20, 1
    %s26 = ssub.s32 %s20, 2
    %s27 = sadd.s32 %s20, 1
    %s29 = sadd.s32 %s28, 1
    %p32 = scmp.eq.s32.totalorder %s20, 1
    %p33 = scmp.ne.s32.totalorder %s28, %s30
    %p34 = scmp.eq.s32.totalorder %s20, 0
    %p35 = por %p33, %p34
    %p36 = scmp.ne.s32.totalorder %s28, %s30
    %p37 = scmp.eq.s32.totalorder %s25, 1
    %p38 = por %p36, %p37
    %p39 = scmp.ne.s32.totalorder %s30, %s31
    %p40 = scmp.eq.s32.totalorder %s25, 0
    %p41 = por %p39, %p40
    %p42 = scmp.ne.s32.totalorder %s30, %s31
    %p43 = scmp.eq.s32.totalorder %s26, 1
    %p44 = por %p42, %p43
    %p46 = scmp.ne.s32.totalorder %s31, %s45
    %p47 = scmp.eq.s32.totalorder %s26, 0
    %p48 = por %p46, %p47
    %s50 = sadd.s32 %s49, 1
    %p53 = scmp.eq.s32.totalorder %s20, 1
    %p54 = scmp.ne.s32.totalorder %s49, %s51
    %p55 = scmp.eq.s32.totalorder %s20, 0
    %p56 = por %p54, %p55
    %p57 = scmp.ne.s32.totalorder %s49, %s51
    %p58 = scmp.eq.s32.totalorder %s25, 1
    %p59 = por %p57, %p58
    %p60 = scmp.ne.s32.totalorder %s51, %s52
    %p61 = scmp.eq.s32.totalorder %s25, 0
    %p62 = por %p60, %p61
    %p63 = scmp.ne.s32.totalorder %s51, %s52
    %p64 = scmp.eq.s32.totalorder %s26, 1
    %p65 = por %p63, %p64
    %p67 = scmp.ne.s32.totalorder %s52, %s66
    %p68 = scmp.eq.s32.totalorder %s26, 0
    %p69 = por %p67, %p68
    %s70 = ssub.s32 %s20, %s27
    %p71 = scmp.eq.s32.totalorder %s70, 0
    %s73 = sadd.s32 %s72, 1
    %s74 = scalar_select %p71, %s72, %s73
    %p77 = pneg %p71
    %p78 = scmp.eq.s32.totalorder %s20, 1
    %p79 = por %p77, %p78
    %p80 = scmp.ne.s32.totalorder %s72, %s75
    %p81 = scmp.eq.s32.totalorder %s20, 0
    %p82 = por %p80, %p81
    %p83 = scmp.ne.s32.totalorder %s72, %s75
    %p84 = scmp.eq.s32.totalorder %s25, 1
    %p85 = por %p83, %p84
    %p86 = scmp.ne.s32.totalorder %s75, %s76
    %p87 = scmp.eq.s32.totalorder %s25, 0
    %p88 = por %p86, %p87
    %p89 = scmp.ne.s32.totalorder %s75, %s76
    %p90 = scmp.eq.s32.totalorder %s26, 1
    %p91 = por %p89, %p90
    %p93 = scmp.ne.s32.totalorder %s76, %s92
    %p94 = scmp.eq.s32.totalorder %s26, 0
    %p95 = por %p93, %p94
    %s96 = ssub.s32 %s20, %s27
    %p97 = scmp.eq.s32.totalorder %s96, 0
    %s99 = sadd.s32 %s98, 1
    %s100 = scalar_select %p97, %s98, %s99
    %p103 = pneg %p97
    %p104 = scmp.eq.s32.totalorder %s20, 1
    %p105 = por %p103, %p104
    %p106 = scmp.ne.s32.totalorder %s98, %s101
    %p107 = scmp.eq.s32.totalorder %s20, 0
    %p108 = por %p106, %p107
    %p109 = scmp.ne.s32.totalorder %s98, %s101
    %p110 = scmp.eq.s32.totalorder %s25, 1
    %p111 = por %p109, %p110
    %p112 = scmp.ne.s32.totalorder %s101, %s102
    %p113 = scmp.eq.s32.totalorder %s25, 0
    %p114 = por %p112, %p113
    %p115 = scmp.ne.s32.totalorder %s101, %s102
    %p116 = scmp.eq.s32.totalorder %s26, 1
    %p117 = por %p115, %p116
    %p119 = scmp.ne.s32.totalorder %s102, %s118
    %p120 = scmp.eq.s32.totalorder %s26, 0
    %p121 = por %p119, %p120
    %s122 = ssub.s32 %s20, %s27
    %p123 = scmp.eq.s32.totalorder %s122, 0
    %s125 = sadd.s32 %s124, 1
    %s126 = scalar_select %p123, %s124, %s125
    %p129 = pneg %p123
    %p130 = scmp.eq.s32.totalorder %s20, 1
    %p131 = por %p129, %p130
    %p132 = scmp.ne.s32.totalorder %s124, %s127
    %p133 = scmp.eq.s32.totalorder %s20, 0
    %p134 = por %p132, %p133
    %p135 = scmp.ne.s32.totalorder %s124, %s127
    %p136 = scmp.eq.s32.totalorder %s25, 1
    %p137 = por %p135, %p136
    %p138 = scmp.ne.s32.totalorder %s127, %s128
    %p139 = scmp.eq.s32.totalorder %s25, 0
    %p140 = por %p138, %p139
    %p141 = scmp.ne.s32.totalorder %s127, %s128
    %p142 = scmp.eq.s32.totalorder %s26, 1
    %p143 = por %p141, %p142
    %p145 = scmp.ne.s32.totalorder %s128, %s144
    %p146 = scmp.eq.s32.totalorder %s26, 0
    %p147 = por %p145, %p146
    %s148 = ssub.s32 %s20, %s27
    %p149 = scmp.eq.s32.totalorder %s148, 0
    %s151 = sadd.s32 %s150, 1
    %s152 = scalar_select %p149, %s150, %s151
    %p155 = pneg %p149
    %p156 = scmp.eq.s32.totalorder %s20, 1
    %p157 = por %p155, %p156
    %p158 = scmp.ne.s32.totalorder %s150, %s153
    %p159 = scmp.eq.s32.totalorder %s20, 0
    %p160 = por %p158, %p159
    %p161 = scmp.ne.s32.totalorder %s150, %s153
    %p162 = scmp.eq.s32.totalorder %s25, 1
    %p163 = por %p161, %p162
    %p164 = scmp.ne.s32.totalorder %s153, %s154
    %p165 = scmp.eq.s32.totalorder %s25, 0
    %p166 = por %p164, %p165
    %p167 = scmp.ne.s32.totalorder %s153, %s154
    %p168 = scmp.eq.s32.totalorder %s26, 1
    %p169 = por %p167, %p168
    %p171 = scmp.ne.s32.totalorder %s154, %s170
    %p172 = scmp.eq.s32.totalorder %s26, 0
    %p173 = por %p171, %p172
    %s174 = ssub.s32 %s20, %s27
    %p175 = scmp.eq.s32.totalorder %s174, 0
    %s177 = sadd.s32 %s176, 1
    %s178 = scalar_select %p175, %s176, %s177
    %p181 = pneg %p175
    %p182 = scmp.eq.s32.totalorder %s20, 1
    %p183 = por %p181, %p182
    %p184 = scmp.ne.s32.totalorder %s176, %s179
    %p185 = scmp.eq.s32.totalorder %s20, 0
    %p186 = por %p184, %p185
    %p187 = scmp.ne.s32.totalorder %s176, %s179
    %p188 = scmp.eq.s32.totalorder %s25, 1
    %p189 = por %p187, %p188
    %p190 = scmp.ne.s32.totalorder %s179, %s180
    %p191 = scmp.eq.s32.totalorder %s25, 0
    %p192 = por %p190, %p191
    %p193 = scmp.ne.s32.totalorder %s179, %s180
    %p194 = scmp.eq.s32.totalorder %s26, 1
    %p195 = por %p193, %p194
    %p197 = scmp.ne.s32.totalorder %s180, %s196
    %p198 = scmp.eq.s32.totalorder %s26, 0
    %p199 = por %p197, %p198
    %s200 = ssub.s32 %s20, %s27
    %p201 = scmp.eq.s32.totalorder %s200, 0
    %s203 = sadd.s32 %s202, 1
    %s204 = scalar_select %p201, %s202, %s203
    %p207 = pneg %p201
    %p208 = scmp.eq.s32.totalorder %s20, 1
    %p209 = por %p207, %p208
    %p210 = scmp.ne.s32.totalorder %s202, %s205
    %p211 = scmp.eq.s32.totalorder %s20, 0
    %p212 = por %p210, %p211
    %p213 = scmp.ne.s32.totalorder %s202, %s205
    %p214 = scmp.eq.s32.totalorder %s25, 1
    %p215 = por %p213, %p214
    %p216 = scmp.ne.s32.totalorder %s205, %s206
    %p217 = scmp.eq.s32.totalorder %s25, 0
    %p218 = por %p216, %p217
    %p219 = scmp.ne.s32.totalorder %s205, %s206
    %p220 = scmp.eq.s32.totalorder %s26, 1
    %p221 = por %p219, %p220
    %p223 = scmp.ne.s32.totalorder %s206, %s222
    %p224 = scmp.eq.s32.totalorder %s26, 0
    %p225 = por %p223, %p224
    %s226 = ssub.s32 %s20, %s27
    %p227 = scmp.eq.s32.totalorder %s226, 0
    %s229 = sadd.s32 %s228, 1
    %s230 = scalar_select %p227, %s228, %s229
    %p233 = pneg %p227
    %p234 = scmp.eq.s32.totalorder %s20, 1
    %p235 = por %p233, %p234
    %p236 = scmp.ne.s32.totalorder %s228, %s231
    %p237 = scmp.eq.s32.totalorder %s20, 0
    %p238 = por %p236, %p237
    %p239 = scmp.ne.s32.totalorder %s228, %s231
    %p240 = scmp.eq.s32.totalorder %s25, 1
    %p241 = por %p239, %p240
    %p242 = scmp.ne.s32.totalorder %s231, %s232
    %p243 = scmp.eq.s32.totalorder %s25, 0
    %p244 = por %p242, %p243
    %p245 = scmp.ne.s32.totalorder %s231, %s232
    %p246 = scmp.eq.s32.totalorder %s26, 1
    %p247 = por %p245, %p246
    %p249 = scmp.ne.s32.totalorder %s232, %s248
    %p250 = scmp.eq.s32.totalorder %s26, 0
    %p251 = por %p249, %p250
    %s252 = ssub.s32 %s20, %s27
    %p253 = scmp.eq.s32.totalorder %s252, 0
    %s255 = sadd.s32 %s254, 1
    %s256 = scalar_select %p253, %s254, %s255
    %p259 = pneg %p253
    %p260 = scmp.eq.s32.totalorder %s20, 1
    %p261 = por %p259, %p260
    %p262 = scmp.ne.s32.totalorder %s254, %s257
    %p263 = scmp.eq.s32.totalorder %s20, 0
    %p264 = por %p262, %p263
    %p265 = scmp.ne.s32.totalorder %s254, %s257
    %p266 = scmp.eq.s32.totalorder %s25, 1
    %p267 = por %p265, %p266
    %p268 = scmp.ne.s32.totalorder %s257, %s258
    %p269 = scmp.eq.s32.totalorder %s25, 0
    %p270 = por %p268, %p269
    %p271 = scmp.ne.s32.totalorder %s257, %s258
    %p272 = scmp.eq.s32.totalorder %s26, 1
    %p273 = por %p271, %p272
    %p275 = scmp.ne.s32.totalorder %s258, %s274
    %p276 = scmp.eq.s32.totalorder %s26, 0
    %p277 = por %p275, %p276
    %s278 = ssub.s32 %s20, %s27
    %p279 = scmp.eq.s32.totalorder %s278, 0
    %s281 = sadd.s32 %s280, 1
    %s282 = scalar_select %p279, %s280, %s281
    %p285 = pneg %p279
    %p286 = scmp.eq.s32.totalorder %s20, 1
    %p287 = por %p285, %p286
    %p288 = scmp.ne.s32.totalorder %s280, %s283
    %p289 = scmp.eq.s32.totalorder %s20, 0
    %p290 = por %p288, %p289
    %p291 = scmp.ne.s32.totalorder %s280, %s283
    %p292 = scmp.eq.s32.totalorder %s25, 1
    %p293 = por %p291, %p292
    %p294 = scmp.ne.s32.totalorder %s283, %s284
    %p295 = scmp.eq.s32.totalorder %s25, 0
    %p296 = por %p294, %p295
    %p297 = scmp.ne.s32.totalorder %s283, %s284
    %p298 = scmp.eq.s32.totalorder %s26, 1
    %p299 = por %p297, %p298
    %p301 = scmp.ne.s32.totalorder %s284, %s300
    %p302 = scmp.eq.s32.totalorder %s26, 0
    %p303 = por %p301, %p302
    %s304 = ssub.s32 %s20, %s27
    %p305 = scmp.eq.s32.totalorder %s304, 0
    %s307 = sadd.s32 %s306, 1
    %s308 = scalar_select %p305, %s306, %s307
    %p311 = pneg %p305
    %p312 = scmp.eq.s32.totalorder %s20, 1
    %p313 = por %p311, %p312
    %p314 = scmp.ne.s32.totalorder %s306, %s309
    %p315 = scmp.eq.s32.totalorder %s20, 0
    %p316 = por %p314, %p315
    %p317 = scmp.ne.s32.totalorder %s306, %s309
    %p318 = scmp.eq.s32.totalorder %s25, 1
    %p319 = por %p317, %p318
    %p320 = scmp.ne.s32.totalorder %s309, %s310
    %p321 = scmp.eq.s32.totalorder %s25, 0
    %p322 = por %p320, %p321
    %p323 = scmp.ne.s32.totalorder %s309, %s310
    %p324 = scmp.eq.s32.totalorder %s26, 1
    %p325 = por %p323, %p324
    %p327 = scmp.ne.s32.totalorder %s310, %s326
    %p328 = scmp.eq.s32.totalorder %s26, 0
    %p329 = por %p327, %p328
    %s330 = ssub.s32 %s20, %s27
    %p331 = scmp.eq.s32.totalorder %s330, 0
    %s333 = sadd.s32 %s332, 1
    %s334 = scalar_select %p331, %s332, %s333
    %p337 = pneg %p331
    %p338 = scmp.eq.s32.totalorder %s20, 1
    %p339 = por %p337, %p338
    %p340 = scmp.ne.s32.totalorder %s332, %s335
    %p341 = scmp.eq.s32.totalorder %s20, 0
    %p342 = por %p340, %p341
    %p343 = scmp.ne.s32.totalorder %s332, %s335
    %p344 = scmp.eq.s32.totalorder %s25, 1
    %p345 = por %p343, %p344
    %p346 = scmp.ne.s32.totalorder %s335, %s336
    %p347 = scmp.eq.s32.totalorder %s25, 0
    %p348 = por %p346, %p347
    %p349 = scmp.ne.s32.totalorder %s335, %s336
    %p350 = scmp.eq.s32.totalorder %s26, 1
    %p351 = por %p349, %p350
    %p353 = scmp.ne.s32.totalorder %s336, %s352
    %p354 = scmp.eq.s32.totalorder %s26, 0
    %p355 = por %p353, %p354
    %s356 = ssub.s32 %s20, %s27
    %p357 = scmp.eq.s32.totalorder %s356, 0
    %s359 = sadd.s32 %s358, 1
    %s360 = scalar_select %p357, %s358, %s359
    %p363 = pneg %p357
    %p364 = scmp.eq.s32.totalorder %s20, 1
    %p365 = por %p363, %p364
    %p366 = scmp.ne.s32.totalorder %s358, %s361
    %p367 = scmp.eq.s32.totalorder %s20, 0
    %p368 = por %p366, %p367
    %p369 = scmp.ne.s32.totalorder %s358, %s361
    %p370 = scmp.eq.s32.totalorder %s25, 1
    %p371 = por %p369, %p370
    %p372 = scmp.ne.s32.totalorder %s361, %s362
    %p373 = scmp.eq.s32.totalorder %s25, 0
    %p374 = por %p372, %p373
    %p375 = scmp.ne.s32.totalorder %s361, %s362
    %p376 = scmp.eq.s32.totalorder %s26, 1
    %p377 = por %p375, %p376
    %p379 = scmp.ne.s32.totalorder %s362, %s378
    %p380 = scmp.eq.s32.totalorder %s26, 0
    %p381 = por %p379, %p380
    %s383 = sadd.s32 %s382, 1
    %p386 = scmp.eq.s32.totalorder %s20, 1
    %p387 = scmp.ne.s32.totalorder %s382, %s384
    %p388 = scmp.eq.s32.totalorder %s20, 0
    %p389 = por %p387, %p388
    %p390 = scmp.ne.s32.totalorder %s382, %s384
    %p391 = scmp.eq.s32.totalorder %s25, 1
    %p392 = por %p390, %p391
    %p393 = scmp.ne.s32.totalorder %s384, %s385
    %p394 = scmp.eq.s32.totalorder %s25, 0
    %p395 = por %p393, %p394
    %p396 = scmp.ne.s32.totalorder %s384, %s385
    %p397 = scmp.eq.s32.totalorder %s26, 1
    %p398 = por %p396, %p397
    %p400 = scmp.ne.s32.totalorder %s385, %s399
    %p401 = scmp.eq.s32.totalorder %s26, 0
    %p402 = por %p400, %p401
    %p403 = scmp.le.s32.totalorder 1, %s20
    %p404 = scmp.lt.s32.totalorder %s20, 3
    %p405 = pnand %p403, %p404
    %p406 = pneg %p405
    // Predicated region
    $region9: #{transformer_seq_model_forward.1} parent=5 // pred_check
      _
    $region10: #{transformer_seq_model_forward.1} parent=5 // pred_check_branch
      %408 = sbr.rel (%p405) target = $region12
    $region11: #{transformer_seq_model_forward.1} parent=5 // pred_region
      %s409 = ssub.s32 %s20, 1
      // Predicated region
      $region13: #{transformer_seq_model_forward.1} parent=11 // pred_check
        %p410 = pneg %p41
      $region14: #{transformer_seq_model_forward.1} parent=11 // pred_check_branch
        %412 = sbr.rel (%p410) target = $region16
      $region15: #{transformer_seq_model_forward.1} parent=11 // pred_region
        _
      $region16: #{transformer_seq_model_forward.1} parent=11 // pred_fallthru
        _
      // Predicated region
      $region17: #{transformer_seq_model_forward.1} parent=11 // pred_check
        %p413 = pneg %p62
      $region18: #{transformer_seq_model_forward.1} parent=11 // pred_check_branch
        %415 = sbr.rel (%p413) target = $region20
      $region19: #{transformer_seq_model_forward.1} parent=11 // pred_region
        _
      $region20: #{transformer_seq_model_forward.1} parent=11 // pred_fallthru
        _
    $region12: #{transformer_seq_model_forward.1} parent=5 // pred_fallthru
      _
    %p416 = scmp.lt.s32.totalorder %s20, 2
    // Predicated region
    $region21: #{transformer_seq_model_forward.1} parent=5 // pred_check
      %p417 = pneg %p416
    $region22: #{transformer_seq_model_forward.1} parent=5 // pred_check_branch
      %419 = sbr.rel (%p417) target = $region24
    $region23: #{transformer_seq_model_forward.1} parent=5 // pred_region
      // Predicated region
      $region25: #{transformer_seq_model_forward.1} parent=23 // pred_check
        %p420 = pneg %p82
      $region26: #{transformer_seq_model_forward.1} parent=23 // pred_check_branch
        %422 = sbr.rel (%p420) target = $region28
      $region27: #{transformer_seq_model_forward.1} parent=23 // pred_region
        %p423 = scmp.lt.s32.totalorder %s20, 1
        %s424 = scalar_select %p423, %s20, 1
        %s425 = smul.addr %s424, 2
        %s426 = smul.addr %s425, 8
        %s427 = scalar_lea.vmem %s2, %s426
      $region28: #{transformer_seq_model_forward.1} parent=23 // pred_fallthru
        _
      // Predicated region
      $region29: #{transformer_seq_model_forward.1} parent=23 // pred_check
        %p428 = pneg %p108
      $region30: #{transformer_seq_model_forward.1} parent=23 // pred_check_branch
        %430 = sbr.rel (%p428) target = $region32
      $region31: #{transformer_seq_model_forward.1} parent=23 // pred_region
        %p431 = scmp.lt.s32.totalorder %s20, 1
        %s432 = scalar_select %p431, %s20, 1
        %s433 = scalar_lea.vmem %s3, %s432
      $region32: #{transformer_seq_model_forward.1} parent=23 // pred_fallthru
        _
      // Predicated region
      $region33: #{transformer_seq_model_forward.1} parent=23 // pred_check
        %p434 = pneg %p134
      $region34: #{transformer_seq_model_forward.1} parent=23 // pred_check_branch
        %436 = sbr.rel (%p434) target = $region36
      $region35: #{transformer_seq_model_forward.1} parent=23 // pred_region
        %p437 = scmp.lt.s32.totalorder %s20, 1
        %s438 = scalar_select %p437, %s20, 1
        %s439 = smul.addr %s438, 2
        %s440 = smul.addr %s439, 8
        %s441 = scalar_lea.vmem %s4, %s440
      $region36: #{transformer_seq_model_forward.1} parent=23 // pred_fallthru
        _
      // Predicated region
      $region37: #{transformer_seq_model_forward.1} parent=23 // pred_check
        %p442 = pneg %p160
      $region38: #{transformer_seq_model_forward.1} parent=23 // pred_check_branch
        %444 = sbr.rel (%p442) target = $region40
      $region39: #{transformer_seq_model_forward.1} parent=23 // pred_region
        %p445 = scmp.lt.s32.totalorder %s20, 1
        %s446 = scalar_select %p445, %s20, 1
        %s447 = scalar_lea.vmem %s5, %s446
      $region40: #{transformer_seq_model_forward.1} parent=23 // pred_fallthru
        _
      // Predicated region
      $region41: #{transformer_seq_model_forward.1} parent=23 // pred_check
        %p448 = pneg %p186
      $region42: #{transformer_seq_model_forward.1} parent=23 // pred_check_branch
        %450 = sbr.rel (%p448) target = $region44
      $region43: #{transformer_seq_model_forward.1} parent=23 // pred_region
        %p451 = scmp.lt.s32.totalorder %s20, 1
        %s452 = scalar_select %p451, %s20, 1
        %s453 = smul.addr %s452, 2
        %s454 = smul.addr %s453, 8
        %s455 = scalar_lea.vmem %s6, %s454
      $region44: #{transformer_seq_model_forward.1} parent=23 // pred_fallthru
        _
      // Predicated region
      $region45: #{transformer_seq_model_forward.1} parent=23 // pred_check
        %p456 = pneg %p212
      $region46: #{transformer_seq_model_forward.1} parent=23 // pred_check_branch
        %458 = sbr.rel (%p456) target = $region48
      $region47: #{transformer_seq_model_forward.1} parent=23 // pred_region
        %p459 = scmp.lt.s32.totalorder %s20, 1
        %s460 = scalar_select %p459, %s20, 1
        %s461 = scalar_lea.vmem %s7, %s460
      $region48: #{transformer_seq_model_forward.1} parent=23 // pred_fallthru
        _
      // Predicated region
      $region49: #{transformer_seq_model_forward.1} parent=23 // pred_check
        %p462 = pneg %p238
      $region50: #{transformer_seq_model_forward.1} parent=23 // pred_check_branch
        %464 = sbr.rel (%p462) target = $region52
      $region51: #{transformer_seq_model_forward.1} parent=23 // pred_region
        %p465 = scmp.lt.s32.totalorder %s20, 1
        %s466 = scalar_select %p465, %s20, 1
        %s467 = smul.addr %s466, 8
        %s468 = smul.addr %s467, 8
        %s469 = scalar_lea.vmem %s8, %s468
      $region52: #{transformer_seq_model_forward.1} parent=23 // pred_fallthru
        _
      // Predicated region
      $region53: #{transformer_seq_model_forward.1} parent=23 // pred_check
        %p470 = pneg %p264
      $region54: #{transformer_seq_model_forward.1} parent=23 // pred_check_branch
        %472 = sbr.rel (%p470) target = $region56
      $region55: #{transformer_seq_model_forward.1} parent=23 // pred_region
        %p473 = scmp.lt.s32.totalorder %s20, 1
        %s474 = scalar_select %p473, %s20, 1
        %s475 = scalar_lea.vmem %s9, %s474
      $region56: #{transformer_seq_model_forward.1} parent=23 // pred_fallthru
        _
      // Predicated region
      $region57: #{transformer_seq_model_forward.1} parent=23 // pred_check
        %p476 = pneg %p290
      $region58: #{transformer_seq_model_forward.1} parent=23 // pred_check_branch
        %478 = sbr.rel (%p476) target = $region60
      $region59: #{transformer_seq_model_forward.1} parent=23 // pred_region
        %p479 = scmp.lt.s32.totalorder %s20, 1
        %s480 = scalar_select %p479, %s20, 1
        %s481 = scalar_lea.vmem %s10, %s480
      $region60: #{transformer_seq_model_forward.1} parent=23 // pred_fallthru
        _
      // Predicated region
      $region61: #{transformer_seq_model_forward.1} parent=23 // pred_check
        %p482 = pneg %p316
      $region62: #{transformer_seq_model_forward.1} parent=23 // pred_check_branch
        %484 = sbr.rel (%p482) target = $region64
      $region63: #{transformer_seq_model_forward.1} parent=23 // pred_region
        %p485 = scmp.lt.s32.totalorder %s20, 1
        %s486 = scalar_select %p485, %s20, 1
        %s487 = scalar_lea.vmem %s11, %s486
      $region64: #{transformer_seq_model_forward.1} parent=23 // pred_fallthru
        _
      // Predicated region
      $region65: #{transformer_seq_model_forward.1} parent=23 // pred_check
        %p488 = pneg %p342
      $region66: #{transformer_seq_model_forward.1} parent=23 // pred_check_branch
        %490 = sbr.rel (%p488) target = $region68
      $region67: #{transformer_seq_model_forward.1} parent=23 // pred_region
        %p491 = scmp.lt.s32.totalorder %s20, 1
        %s492 = scalar_select %p491, %s20, 1
        %s493 = scalar_lea.vmem %s12, %s492
      $region68: #{transformer_seq_model_forward.1} parent=23 // pred_fallthru
        _
      // Predicated region
      $region69: #{transformer_seq_model_forward.1} parent=23 // pred_check
        %p494 = pneg %p368
      $region70: #{transformer_seq_model_forward.1} parent=23 // pred_check_branch
        %496 = sbr.rel (%p494) target = $region72
      $region71: #{transformer_seq_model_forward.1} parent=23 // pred_region
        %p497 = scmp.lt.s32.totalorder %s20, 1
        %s498 = scalar_select %p497, %s20, 1
        %s499 = scalar_lea.vmem %s13, %s498
      $region72: #{transformer_seq_model_forward.1} parent=23 // pred_fallthru
        _
    $region24: #{transformer_seq_model_forward.1} parent=5 // pred_fallthru
      _
    %p500 = scmp.le.s32.totalorder 1, %s20
    %p501 = scmp.lt.s32.totalorder %s20, 3
    %p502 = pnand %p500, %p501
    %p503 = pneg %p502
    // Predicated region
    $region73: #{transformer_seq_model_forward.1} parent=5 // pred_check
      _
    $region74: #{transformer_seq_model_forward.1} parent=5 // pred_check_branch
      %505 = sbr.rel (%p502) target = $region76
    $region75: #{transformer_seq_model_forward.1} parent=5 // pred_region
      %s506 = ssub.s32 %s20, 1
      %p507 = pneg %p41
      %p508 = pneg %p38
      %p509 = pneg %p62
      %p510 = pneg %p59
      %p511 = scmp.lt.s32.totalorder %s25, 1
      %s512 = scalar_select %p511, %s25, 1
      %s513 = smul.addr %s512, 2
      %s514 = smul.addr %s513, 8
      %s515 = scalar_lea.vmem %s2, %s514
      %p516 = pneg %p88
      %p517 = pneg %p85
      %p518 = scmp.lt.s32.totalorder %s25, 1
      %s519 = scalar_select %p518, %s25, 1
      %s520 = scalar_lea.vmem %s3, %s519
      %p521 = pneg %p114
      %p522 = pneg %p111
      %p523 = scmp.lt.s32.totalorder %s25, 1
      %s524 = scalar_select %p523, %s25, 1
      %s525 = smul.addr %s524, 2
      %s526 = smul.addr %s525, 8
      %s527 = scalar_lea.vmem %s4, %s526
      %p528 = pneg %p140
      %p529 = pneg %p137
      %p530 = scmp.lt.s32.totalorder %s25, 1
      %s531 = scalar_select %p530, %s25, 1
      %s532 = scalar_lea.vmem %s5, %s531
      %p533 = pneg %p166
      %p534 = pneg %p163
      %p535 = scmp.lt.s32.totalorder %s25, 1
      %s536 = scalar_select %p535, %s25, 1
      %s537 = smul.addr %s536, 2
      %s538 = smul.addr %s537, 8
      %s539 = scalar_lea.vmem %s6, %s538
      %p540 = pneg %p192
      %p541 = pneg %p189
      %p542 = scmp.lt.s32.totalorder %s25, 1
      %s543 = scalar_select %p542, %s25, 1
      %s544 = scalar_lea.vmem %s7, %s543
      %p545 = pneg %p218
      %p546 = pneg %p215
      %p547 = scmp.lt.s32.totalorder %s25, 1
      %s548 = scalar_select %p547, %s25, 1
      %s549 = smul.addr %s548, 8
      %s550 = smul.addr %s549, 8
      %s551 = scalar_lea.vmem %s8, %s550
      %p552 = pneg %p244
      %p553 = pneg %p241
      %p554 = scmp.lt.s32.totalorder %s25, 1
      %s555 = scalar_select %p554, %s25, 1
      %s556 = scalar_lea.vmem %s9, %s555
      %p557 = pneg %p270
      %p558 = pneg %p267
      %p559 = scmp.lt.s32.totalorder %s25, 1
      %s560 = scalar_select %p559, %s25, 1
      %s561 = scalar_lea.vmem %s10, %s560
      %p562 = pneg %p296
      %p563 = pneg %p293
      %p564 = scmp.lt.s32.totalorder %s25, 1
      %s565 = scalar_select %p564, %s25, 1
      %s566 = scalar_lea.vmem %s11, %s565
      %p567 = pneg %p322
      %p568 = pneg %p319
      %p569 = scmp.lt.s32.totalorder %s25, 1
      %s570 = scalar_select %p569, %s25, 1
      %s571 = scalar_lea.vmem %s12, %s570
      %p572 = pneg %p348
      %p573 = pneg %p345
      %p574 = scmp.lt.s32.totalorder %s25, 1
      %s575 = scalar_select %p574, %s25, 1
      %s576 = scalar_lea.vmem %s13, %s575
      %p577 = pneg %p374
      %p578 = pneg %p371
      %p579 = pneg %p395
      %p580 = pneg %p392
      %p581 = scmp.lt.s32.totalorder %s25, 1
      %s582 = scalar_select %p581, %s25, 1
      %s583 = smul.addr %s582, 2
      %s584 = smul.addr %s583, 8
      %s585 = scalar_lea.vmem %s2, %s584
      %p586 = scmp.lt.s32.totalorder %s25, 1
      %s587 = scalar_select %p586, %s25, 1
      %s588 = scalar_lea.vmem %s3, %s587
      %p589 = scmp.lt.s32.totalorder %s25, 1
      %s590 = scalar_select %p589, %s25, 1
      %s591 = smul.addr %s590, 2
      %s592 = smul.addr %s591, 8
      %s593 = scalar_lea.vmem %s4, %s592
      %p594 = scmp.lt.s32.totalorder %s25, 1
      %s595 = scalar_select %p594, %s25, 1
      %s596 = scalar_lea.vmem %s5, %s595
      %p597 = scmp.lt.s32.totalorder %s25, 1
      %s598 = scalar_select %p597, %s25, 1
      %s599 = smul.addr %s598, 2
      %s600 = smul.addr %s599, 8
      %s601 = scalar_lea.vmem %s6, %s600
      %p602 = scmp.lt.s32.totalorder %s25, 1
      %s603 = scalar_select %p602, %s25, 1
      %s604 = scalar_lea.vmem %s7, %s603
      %p605 = scmp.lt.s32.totalorder %s25, 1
      %s606 = scalar_select %p605, %s25, 1
      %s607 = smul.addr %s606, 8
      %s608 = smul.addr %s607, 8
      %s609 = scalar_lea.vmem %s8, %s608
      %p610 = scmp.lt.s32.totalorder %s25, 1
      %s611 = scalar_select %p610, %s25, 1
      %s612 = scalar_lea.vmem %s9, %s611
      %p613 = scmp.lt.s32.totalorder %s25, 1
      %s614 = scalar_select %p613, %s25, 1
      %s615 = scalar_lea.vmem %s10, %s614
      %p616 = scmp.lt.s32.totalorder %s25, 1
      %s617 = scalar_select %p616, %s25, 1
      %s618 = scalar_lea.vmem %s11, %s617
      %p619 = scmp.lt.s32.totalorder %s25, 1
      %s620 = scalar_select %p619, %s25, 1
      %s621 = scalar_lea.vmem %s12, %s620
      %p622 = scmp.lt.s32.totalorder %s25, 1
      %s623 = scalar_select %p622, %s25, 1
      %s624 = scalar_lea.vmem %s13, %s623
      %p625 = scmp.eq.s32.totalorder %s25, 0
      // Predicated region
      $region77: #{transformer_seq_model_forward.1} parent=75 // pred_check
        %p626 = pneg %p625
      $region78: #{transformer_seq_model_forward.1} parent=75 // pred_check_branch
        %628 = sbr.rel (%p626) target = $region80
      $region79: #{transformer_seq_model_forward.1} parent=75 // pred_region
        %v629 = vld [vmem:[%s0] sm:$0xff]
        %v630 = vld [vmem:[%s0 + $0x8] sm:$0xff]
        %v631 = vld [vmem:[%s0 + $0x10] sm:$0xff]
        %v632 = vld [vmem:[%s0 + $0x18] sm:$0xff]
        %v633 = vld [vmem:[%s0 + $0x20] sm:$0xf]
        %vm634 = vcmask 130048
        %635 = vst.msk [vmem:[#allocation2] sm:$0xff] %vm634, %v629
        %636 = vst.msk [vmem:[#allocation2 + $0x8] sm:$0xff] %vm634, %v630
        %637 = vst.msk [vmem:[#allocation2 + $0x10] sm:$0xff] %vm634, %v631
        %638 = vst.msk [vmem:[#allocation2 + $0x18] sm:$0xff] %vm634, %v632
        %vm639 = vcmask 125952
        %640 = vst.msk [vmem:[#allocation2 + $0x20] sm:$0xf] %vm639, %v633
      $region80: #{transformer_seq_model_forward.1} parent=75 // pred_fallthru
        _
      %v641 = vld [vmem:[#allocation2] sm:$0xff]
      %v642 = vld [vmem:[#allocation2 + $0x8] sm:$0xff]
      %v643 = vld [vmem:[#allocation2 + $0x10] sm:$0xff]
      %v644 = vld [vmem:[#allocation2 + $0x18] sm:$0xff]
      %v645 = vld [vmem:[#allocation2 + $0x20] sm:$0xf]
      %v646 = vld [vmem:[%s585] sm:$0xff]
      %v647 = vld [vmem:[%s585 + $0x8] sm:$0xff]
      %v648 = vld [vmem:[%s588] sm:$0x1]
      %v650 = vlaneseq
      %v651 = vshrl.u32 %v650, 7
      %v652 = vsub.s32 0, %v651
      %v653 = vrot.slane %v648, %v652
      %vm655 = vcmask 130048
      %v657 = vsel %vm655, %v641, 0
      %v660 = vsel %vm655, %v642, 0
      %v663 = vsel %vm655, %v643, 0
      %v666 = vsel %vm655, %v644, 0
      %v669 = vsel %vm655, %v645, 0
      %671 = vmatprep.subr.mxu0 0.0
      %v672 = vand.u32 %v646, 4294901760
      %673 = vmatpush1.msra.mxu0 %v672
      %674 = vmatprep.subr.mxu0 0.0
      %v675 = vand.u32 %v647, 4294901760
      %676 = vmatpush1.msra.mxu0 %v675
      %677 = vmatprep.subr.mxu0 0.0
      %678 = vmatpush1.msra.mxu0 0.0
      %679 = vmatprep.subr.mxu0 0.0
      %680 = vmatpush1.msra.mxu0 0.0
      %681 = vmatprep.subr.mxu0 0.0
      %682 = vmatpush1.msra.mxu0 0.0
      %683 = vmatprep.subr.mxu0 0.0
      %684 = vmatpush1.msra.mxu0 0.0
      %685 = vmatprep.subr.mxu0 0.0
      %686 = vmatpush1.msra.mxu0 0.0
      %687 = vmatprep.subr.mxu0 0.0
      %688 = vmatpush1.msra.mxu0 0.0
      %689 = vmatprep.subr.mxu0 0.0
      %690 = vmatpush1.msra.mxu0 0.0
      %691 = vmatprep.subr.mxu0 0.0
      %692 = vmatpush1.msra.mxu0 0.0
      %693 = vmatprep.subr.mxu0 0.0
      %694 = vmatpush1.msra.mxu0 0.0
      %695 = vmatprep.subr.mxu0 0.0
      %696 = vmatpush1.msra.mxu0 0.0
      %697 = vmatprep.subr.mxu0 0.0
      %698 = vmatpush1.msra.mxu0 0.0
      %699 = vmatprep.subr.mxu0 0.0
      %700 = vmatpush1.msra.mxu0 0.0
      %701 = vmatprep.subr.mxu0 0.0
      %702 = vmatpush1.msra.mxu0 0.0
      %703 = vmatprep.subr.mxu0 0.0
      %704 = vmatpush1.msra.mxu0 0.0
      %705 = vmatprep.subr.mxu0 0.0
      %706 = vmatpush1.msra.mxu0 0.0
      %707 = vmatprep.subr.mxu0 0.0
      %708 = vmatpush1.msra.mxu0 0.0
      %709 = vmatprep.subr.mxu0 0.0
      %710 = vmatpush1.msra.mxu0 0.0
      %711 = vmatprep.subr.mxu0 0.0
      %712 = vmatpush1.msra.mxu0 0.0
      %713 = vmatprep.subr.mxu0 0.0
      %714 = vmatpush1.msra.mxu0 0.0
      %715 = vmatprep.subr.mxu0 0.0
      %716 = vmatpush1.msra.mxu0 0.0
      %717 = vmatprep.subr.mxu0 0.0
      %718 = vmatpush1.msra.mxu0 0.0
      %719 = vmatprep.subr.mxu0 0.0
      %720 = vmatpush1.msra.mxu0 0.0
      %721 = vmatprep.subr.mxu0 0.0
      %722 = vmatpush1.msra.mxu0 0.0
      %723 = vmatprep.subr.mxu0 0.0
      %724 = vmatpush1.msra.mxu0 0.0
      %725 = vmatprep.subr.mxu0 0.0
      %726 = vmatpush1.msra.mxu0 0.0
      %727 = vmatprep.subr.mxu0 0.0
      %728 = vmatpush1.msra.mxu0 0.0
      %729 = vmatprep.subr.mxu0 0.0
      %730 = vmatpush1.msra.mxu0 0.0
      %731 = vmatprep.subr.mxu0 0.0
      %732 = vmatpush1.msra.mxu0 0.0
      %733 = vmatprep.subr.mxu0 0.0
      %734 = vmatpush1.msra.mxu0 0.0
      %735 = vmatprep.subr.mxu0 0.0
      %736 = vmatpush1.msra.mxu0 0.0
      %737 = vmatprep.mubr.f32.mxu0 0.0
      %v738 = vand.u32 %v657, 4294901760
      %v739 = vsub.f32 %v657, %v738
      %v740 = vand.u32 %v739, 4294901760
      %v741 = vsub.f32 %v739, %v740
      %v742 = vand.u32 %v741, 4294901760
      %743 = vmatmul.mubr.f32.gmra.mrb[0].mxu0 %v742
      %v744 = vpop.f32.mrb[0].mxu0
      %v745 = vadd.f32 %v653, %v744
      %v746 = vpop.f32.mrb[0].mxu0
      %747 = vmatprep.mubr.f32.mxu0 0.0
      %v748 = vand.u32 %v660, 4294901760
      %v749 = vsub.f32 %v660, %v748
      %v750 = vand.u32 %v749, 4294901760
      %v751 = vsub.f32 %v749, %v750
      %v752 = vand.u32 %v751, 4294901760
      %753 = vmatmul.mubr.f32.gmra.mrb[0].mxu0 %v752
      %v754 = vpop.f32.mrb[0].mxu0
      %v755 = vadd.f32 %v653, %v754
      %v756 = vpop.f32.mrb[0].mxu0
      %757 = vmatprep.mubr.f32.mxu0 0.0
      %v758 = vand.u32 %v663, 4294901760
      %v759 = vsub.f32 %v663, %v758
      %v760 = vand.u32 %v759, 4294901760
      %v761 = vsub.f32 %v759, %v760
      %v762 = vand.u32 %v761, 4294901760
      %763 = vmatmul.mubr.f32.gmra.mrb[0].mxu0 %v762
      %v764 = vpop.f32.mrb[0].mxu0
      %v765 = vadd.f32 %v653, %v764
      %v766 = vpop.f32.mrb[0].mxu0
      %767 = vmatprep.mubr.f32.mxu0 0.0
      %v768 = vand.u32 %v666, 4294901760
      %v769 = vsub.f32 %v666, %v768
      %v770 = vand.u32 %v769, 4294901760
      %v771 = vsub.f32 %v769, %v770
      %v772 = vand.u32 %v771, 4294901760
      %773 = vmatmul.mubr.f32.gmra.mrb[0].mxu0 %v772
      %v774 = vpop.f32.mrb[0].mxu0
      %v775 = vadd.f32 %v653, %v774
      %v776 = vpop.f32.mrb[0].mxu0
      %777 = vmatprep.mubr.f32.mxu0 0.0
      %v778 = vand.u32 %v669, 4294901760
      %v779 = vsub.f32 %v669, %v778
      %v780 = vand.u32 %v779, 4294901760
      %v781 = vsub.f32 %v779, %v780
      %v782 = vand.u32 %v781, 4294901760
      %783 = vmatmul.mubr.f32.gmra.mrb[0].mxu0 %v782
      %v784 = vpop.f32.mrb[0].mxu0
      %v785 = vadd.f32 %v653, %v784
      %v786 = vpop.f32.mrb[0].mxu0
      %787 = vdwg.mxu0
      %788 = vmatprep.subr.mxu0 0.0
      %v789 = vand.u32 %v646, 4294901760
      %v790 = vsub.f32 %v646, %v789
      %v791 = vand.u32 %v790, 4294901760
      %v792 = vsub.f32 %v790, %v791
      %v793 = vand.u32 %v792, 4294901760
      %794 = vmatpush1.msra.mxu0 %v793
      %795 = vmatprep.subr.mxu0 0.0
      %v796 = vand.u32 %v647, 4294901760
      %v797 = vsub.f32 %v647, %v796
      %v798 = vand.u32 %v797, 4294901760
      %v799 = vsub.f32 %v797, %v798
      %v800 = vand.u32 %v799, 4294901760
      %801 = vmatpush1.msra.mxu0 %v800
      %802 = vmatprep.subr.mxu0 0.0
      %803 = vmatpush1.msra.mxu0 0.0
      %804 = vmatprep.subr.mxu0 0.0
      %805 = vmatpush1.msra.mxu0 0.0
      %806 = vmatprep.subr.mxu0 0.0
      %807 = vmatpush1.msra.mxu0 0.0
      %808 = vmatprep.subr.mxu0 0.0
      %809 = vmatpush1.msra.mxu0 0.0
      %810 = vmatprep.subr.mxu0 0.0
      %811 = vmatpush1.msra.mxu0 0.0
      %812 = vmatprep.subr.mxu0 0.0
      %813 = vmatpush1.msra.mxu0 0.0
      %814 = vmatprep.subr.mxu0 0.0
      %815 = vmatpush1.msra.mxu0 0.0
      %816 = vmatprep.subr.mxu0 0.0
      %817 = vmatpush1.msra.mxu0 0.0
      %818 = vmatprep.subr.mxu0 0.0
      %819 = vmatpush1.msra.mxu0 0.0
      %820 = vmatprep.subr.mxu0 0.0
      %821 = vmatpush1.msra.mxu0 0.0
      %822 = vmatprep.subr.mxu0 0.0
      %823 = vmatpush1.msra.mxu0 0.0
      %824 = vmatprep.subr.mxu0 0.0
      %825 = vmatpush1.msra.mxu0 0.0
      %826 = vmatprep.subr.mxu0 0.0
      %827 = vmatpush1.msra.mxu0 0.0
      %828 = vmatprep.subr.mxu0 0.0
      %829 = vmatpush1.msra.mxu0 0.0
      %830 = vmatprep.subr.mxu0 0.0
      %831 = vmatpush1.msra.mxu0 0.0
      %832 = vmatprep.subr.mxu0 0.0
      %833 = vmatpush1.msra.mxu0 0.0
      %834 = vmatprep.subr.mxu0 0.0
      %835 = vmatpush1.msra.mxu0 0.0
      %836 = vmatprep.subr.mxu0 0.0
      %837 = vmatpush1.msra.mxu0 0.0
      %838 = vmatprep.subr.mxu0 0.0
      %839 = vmatpush1.msra.mxu0 0.0
      %840 = vmatprep.subr.mxu0 0.0
      %841 = vmatpush1.msra.mxu0 0.0
      %842 = vmatprep.subr.mxu0 0.0
      %843 = vmatpush1.msra.mxu0 0.0
      %844 = vmatprep.subr.mxu0 0.0
      %845 = vmatpush1.msra.mxu0 0.0
      %846 = vmatprep.subr.mxu0 0.0
      %847 = vmatpush1.msra.mxu0 0.0
      %848 = vmatprep.subr.mxu0 0.0
      %849 = vmatpush1.msra.mxu0 0.0
      %850 = vmatprep.subr.mxu0 0.0
      %851 = vmatpush1.msra.mxu0 0.0
      %852 = vmatprep.subr.mxu0 0.0
      %853 = vmatpush1.msra.mxu0 0.0
      %854 = vmatprep.subr.mxu0 0.0
      %855 = vmatpush1.msra.mxu0 0.0
      %856 = vmatprep.subr.mxu0 0.0
      %857 = vmatpush1.msra.mxu0 0.0
      %858 = vmatprep.subr.mxu0 0.0
      %859 = vmatpush1.msra.mxu0 0.0
      %860 = vmatprep.subr.mxu0 0.0
      %861 = vmatpush1.msra.mxu0 0.0
      %862 = vmatprep.mubr.f32.mxu0 0.0
      %v863 = vand.u32 %v657, 4294901760
      %864 = vmatmul.mubr.f32.gmra.mrb[0].mxu0 %v863
      %v865 = vpop.f32.mrb[0].mxu0
      %v866 = vadd.f32 %v745, %v865
      %v867 = vpop.f32.mrb[0].mxu0
      %868 = vmatprep.mubr.f32.mxu0 0.0
      %v869 = vand.u32 %v660, 4294901760
      %870 = vmatmul.mubr.f32.gmra.mrb[0].mxu0 %v869
      %v871 = vpop.f32.mrb[0].mxu0
      %v872 = vadd.f32 %v755, %v871
      %v873 = vpop.f32.mrb[0].mxu0
      %874 = vmatprep.mubr.f32.mxu0 0.0
      %v875 = vand.u32 %v663, 4294901760
      %876 = vmatmul.mubr.f32.gmra.mrb[0].mxu0 %v875
      %v877 = vpop.f32.mrb[0].mxu0
      %v878 = vadd.f32 %v765, %v877
      %v879 = vpop.f32.mrb[0].mxu0
      %880 = vmatprep.mubr.f32.mxu0 0.0
      %v881 = vand.u32 %v666, 4294901760
      %882 = vmatmul.mubr.f32.gmra.mrb[0].mxu0 %v881
      %v883 = vpop.f32.mrb[0].mxu0
      %v884 = vadd.f32 %v775, %v883
      %v885 = vpop.f32.mrb[0].mxu0
      %886 = vmatprep.mubr.f32.mxu0 0.0
      %v887 = vand.u32 %v669, 4294901760
      %888 = vmatmul.mubr.f32.gmra.mrb[0].mxu0 %v887
      %v889 = vpop.f32.mrb[0].mxu0
      %v890 = vadd.f32 %v785, %v889
      %v891 = vpop.f32.mrb[0].mxu0
      %892 = vdwg.mxu0
      %893 = vmatprep.subr.mxu0 0.0
      %v894 = vand.u32 %v646, 4294901760
      %v895 = vsub.f32 %v646, %v894
      %896 = vmatpush1.msra.mxu0 %v895
      %897 = vmatprep.subr.mxu0 0.0
      %v898 = vand.u32 %v647, 4294901760
      %v899 = vsub.f32 %v647, %v898
      %900 = vmatpush1.msra.mxu0 %v899
      %901 = vmatprep.subr.mxu0 0.0
      %902 = vmatpush1.msra.mxu0 0.0
      %903 = vmatprep.subr.mxu0 0.0
      %904 = vmatpush1.msra.mxu0 0.0
      %905 = vmatprep.subr.mxu0 0.0
      %906 = vmatpush1.msra.mxu0 0.0
      %907 = vmatprep.subr.mxu0 0.0
      %908 = vmatpush1.msra.mxu0 0.0
      %909 = vmatprep.subr.mxu0 0.0
      %910 = vmatpush1.msra.mxu0 0.0
      %911 = vmatprep.subr.mxu0 0.0
      %912 = vmatpush1.msra.mxu0 0.0
      %913 = vmatprep.subr.mxu0 0.0
      %914 = vmatpush1.msra.mxu0 0.0
      %915 = vmatprep.subr.mxu0 0.0
      %916 = vmatpush1.msra.mxu0 0.0
      %917 = vmatprep.subr.mxu0 0.0
      %918 = vmatpush1.msra.mxu0 0.0
      %919 = vmatprep.subr.mxu0 0.0
      %920 = vmatpush1.msra.mxu0 0.0
      %921 = vmatprep.subr.mxu0 0.0
      %922 = vmatpush1.msra.mxu0 0.0
      %923 = vmatprep.subr.mxu0 0.0
      %924 = vmatpush1.msra.mxu0 0.0
      %925 = vmatprep.subr.mxu0 0.0
      %926 = vmatpush1.msra.mxu0 0.0
      %927 = vmatprep.subr.mxu0 0.0
      %928 = vmatpush1.msra.mxu0 0.0
      %929 = vmatprep.subr.mxu0 0.0
      %930 = vmatpush1.msra.mxu0 0.0
      %931 = vmatprep.subr.mxu0 0.0
      %932 = vmatpush1.msra.mxu0 0.0
      %933 = vmatprep.subr.mxu0 0.0
      %934 = vmatpush1.msra.mxu0 0.0
      %935 = vmatprep.subr.mxu0 0.0
      %936 = vmatpush1.msra.mxu0 0.0
      %937 = vmatprep.subr.mxu0 0.0
      %938 = vmatpush1.msra.mxu0 0.0
      %939 = vmatprep.subr.mxu0 0.0
      %940 = vmatpush1.msra.mxu0 0.0
      %941 = vmatprep.subr.mxu0 0.0
      %942 = vmatpush1.msra.mxu0 0.0
      %943 = vmatprep.subr.mxu0 0.0
      %944 = vmatpush1.msra.mxu0 0.0
      %945 = vmatprep.subr.mxu0 0.0
      %946 = vmatpush1.msra.mxu0 0.0
      %947 = vmatprep.subr.mxu0 0.0
      %948 = vmatpush1.msra.mxu0 0.0
      %949 = vmatprep.subr.mxu0 0.0
      %950 = vmatpush1.msra.mxu0 0.0
      %951 = vmatprep.subr.mxu0 0.0
      %952 = vmatpush1.msra.mxu0 0.0
      %953 = vmatprep.subr.mxu0 0.0
      %954 = vmatpush1.msra.mxu0 0.0
      %955 = vmatprep.subr.mxu0 0.0
      %956 = vmatpush1.msra.mxu0 0.0
      %957 = vmatprep.subr.mxu0 0.0
      %958 = vmatpush1.msra.mxu0 0.0
      %959 = vmatprep.subr.mxu0 0.0
      %960 = vmatpush1.msra.mxu0 0.0
      %961 = vmatprep.mubr.f32.mxu0 0.0
      %v962 = vand.u32 %v657, 4294901760
      %v963 = vsub.f32 %v657, %v962
      %964 = vmatmul.mubr.f32.gmra.mrb[0].mxu0 %v963
      %v965 = vpop.f32.mrb[0].mxu0
      %v966 = vadd.f32 %v866, %v965
      %v967 = vpop.f32.mrb[0].mxu0
      %968 = vmatprep.mubr.f32.mxu0 0.0
      %v969 = vand.u32 %v660, 4294901760
      %v970 = vsub.f32 %v660, %v969
      %971 = vmatmul.mubr.f32.gmra.mrb[0].mxu0 %v970
      %v972 = vpop.f32.mrb[0].mxu0
      %v973 = vadd.f32 %v872, %v972
      %v974 = vpop.f32.mrb[0].mxu0
      %975 = vmatprep.mubr.f32.mxu0 0.0
      %v976 = vand.u32 %v663, 4294901760
      %v977 = vsub.f32 %v663, %v976
      %978 = vmatmul.mubr.f32.gmra.mrb[0].mxu0 %v977
      %v979 = vpop.f32.mrb[0].mxu0
      %v980 = vadd.f32 %v878, %v979
      %v981 = vpop.f32.mrb[0].mxu0
      %982 = vmatprep.mubr.f32.mxu0 0.0
      %v983 = vand.u32 %v666, 4294901760
      %v984 = vsub.f32 %v666, %v983
      %985 = vmatmul.mubr.f32.gmra.mrb[0].mxu0 %v984
      %v986 = vpop.f32.mrb[0].mxu0
      %v987 = vadd.f32 %v884, %v986
      %v988 = vpop.f32.mrb[0].mxu0
      %989 = vmatprep.mubr.f32.mxu0 0.0
      %v990 = vand.u32 %v669, 4294901760
      %v991 = vsub.f32 %v669, %v990
      %992 = vmatmul.mubr.f32.gmra.mrb[0].mxu0 %v991
      %v993 = vpop.f32.mrb[0].mxu0
      %v994 = vadd.f32 %v890, %v993
      %v995 = vpop.f32.mrb[0].mxu0
      %996 = vdwg.mxu0
      %997 = vmatprep.subr.mxu0 0.0
      %v998 = vand.u32 %v646, 4294901760
      %999 = vmatpush1.msra.mxu0 %v998
      %1000 = vmatprep.subr.mxu0 0.0
      %v1001 = vand.u32 %v647, 4294901760
      %1002 = vmatpush1.msra.mxu0 %v1001
      %1003 = vmatprep.subr.mxu0 0.0
      %1004 = vmatpush1.msra.mxu0 0.0
      %1005 = vmatprep.subr.mxu0 0.0
      %1006 = vmatpush1.msra.mxu0 0.0
      %1007 = vmatprep.subr.mxu0 0.0
      %1008 = vmatpush1.msra.mxu0 0.0
      %1009 = vmatprep.subr.mxu0 0.0
      %1010 = vmatpush1.msra.mxu0 0.0
      %1011 = vmatprep.subr.mxu0 0.0
      %1012 = vmatpush1.msra.mxu0 0.0
      %1013 = vmatprep.subr.mxu0 0.0
      %1014 = vmatpush1.msra.mxu0 0.0
      %1015 = vmatprep.subr.mxu0 0.0
      %1016 = vmatpush1.msra.mxu0 0.0
      %1017 = vmatprep.subr.mxu0 0.0
      %1018 = vmatpush1.msra.mxu0 0.0
      %1019 = vmatprep.subr.mxu0 0.0
      %1020 = vmatpush1.msra.mxu0 0.0
      %1021 = vmatprep.subr.mxu0 0.0
      %1022 = vmatpush1.msra.mxu0 0.0
      %1023 = vmatprep.subr.mxu0 0.0
      %1024 = vmatpush1.msra.mxu0 0.0
      %1025 = vmatprep.subr.mxu0 0.0
      %1026 = vmatpush1.msra.mxu0 0.0
      %1027 = vmatprep.subr.mxu0 0.0
      %1028 = vmatpush1.msra.mxu0 0.0
      %1029 = vmatprep.subr.mxu0 0.0
      %1030 = vmatpush1.msra.mxu0 0.0
      %1031 = vmatprep.subr.mxu0 0.0
      %1032 = vmatpush1.msra.mxu0 0.0
      %1033 = vmatprep.subr.mxu0 0.0
      %1034 = vmatpush1.msra.mxu0 0.0
      %1035 = vmatprep.subr.mxu0 0.0
      %1036 = vmatpush1.msra.mxu0 0.0
      %1037 = vmatprep.subr.mxu0 0.0
      %1038 = vmatpush1.msra.mxu0 0.0
      %1039 = vmatprep.subr.mxu0 0.0
      %1040 = vmatpush1.msra.mxu0 0.0
      %1041 = vmatprep.subr.mxu0 0.0
      %1042 = vmatpush1.msra.mxu0 0.0
      %1043 = vmatprep.subr.mxu0 0.0
      %1044 = vmatpush1.msra.mxu0 0.0
      %1045 = vmatprep.subr.mxu0 0.0
      %1046 = vmatpush1.msra.mxu0 0.0
      %1047 = vmatprep.subr.mxu0 0.0
      %1048 = vmatpush1.msra.mxu0 0.0
      %1049 = vmatprep.subr.mxu0 0.0
      %1050 = vmatpush1.msra.mxu0 0.0
      %1051 = vmatprep.subr.mxu0 0.0
      %1052 = vmatpush1.msra.mxu0 0.0
      %1053 = vmatprep.subr.mxu0 0.0
      %1054 = vmatpush1.msra.mxu0 0.0
      %1055 = vmatprep.subr.mxu0 0.0
      %1056 = vmatpush1.msra.mxu0 0.0
      %1057 = vmatprep.subr.mxu0 0.0
      %1058 = vmatpush1.msra.mxu0 0.0
      %1059 = vmatprep.subr.mxu0 0.0
      %1060 = vmatpush1.msra.mxu0 0.0
      %1061 = vmatprep.subr.mxu0 0.0
      %1062 = vmatpush1.msra.mxu0 0.0
      %1063 = vmatprep.mubr.f32.mxu0 0.0
      %v1064 = vand.u32 %v657, 4294901760
      %v1065 = vsub.f32 %v657, %v1064
      %v1066 = vand.u32 %v1065, 4294901760
      %1067 = vmatmul.mubr.f32.gmra.mrb[0].mxu0 %v1066
      %v1068 = vpop.f32.mrb[0].mxu0
      %v1069 = vadd.f32 %v966, %v1068
      %v1070 = vpop.f32.mrb[0].mxu0
      %1071 = vmatprep.mubr.f32.mxu0 0.0
      %v1072 = vand.u32 %v660, 4294901760
      %v1073 = vsub.f32 %v660, %v1072
      %v1074 = vand.u32 %v1073, 4294901760
      %1075 = vmatmul.mubr.f32.gmra.mrb[0].mxu0 %v1074
      %v1076 = vpop.f32.mrb[0].mxu0
      %v1077 = vadd.f32 %v973, %v1076
      %v1078 = vpop.f32.mrb[0].mxu0
      %1079 = vmatprep.mubr.f32.mxu0 0.0
      %v1080 = vand.u32 %v663, 4294901760
      %v1081 = vsub.f32 %v663, %v1080
      %v1082 = vand.u32 %v1081, 4294901760
      %1083 = vmatmul.mubr.f32.gmra.mrb[0].mxu0 %v1082
      %v1084 = vpop.f32.mrb[0].mxu0
      %v1085 = vadd.f32 %v980, %v1084
      %v1086 = vpop.f32.mrb[0].mxu0
      %1087 = vmatprep.mubr.f32.mxu0 0.0
      %v1088 = vand.u32 %v666, 4294901760
      %v1089 = vsub.f32 %v666, %v1088
      %v1090 = vand.u32 %v1089, 4294901760
      %1091 = vmatmul.mubr.f32.gmra.mrb[0].mxu0 %v1090
      %v1092 = vpop.f32.mrb[0].mxu0
      %v1093 = vadd.f32 %v987, %v1092
      %v1094 = vpop.f32.mrb[0].mxu0
      %1095 = vmatprep.mubr.f32.mxu0 0.0
      %v1096 = vand.u32 %v669, 4294901760
      %v1097 = vsub.f32 %v669, %v1096
      %v1098 = vand.u32 %v1097, 4294901760
      %1099 = vmatmul.mubr.f32.gmra.mrb[0].mxu0 %v1098
      %v1100 = vpop.f32.mrb[0].mxu0
      %v1101 = vadd.f32 %v994, %v1100
      %v1102 = vpop.f32.mrb[0].mxu0
      %1103 = vdwg.mxu0
      %1104 = vmatprep.subr.mxu0 0.0
      %v1105 = vand.u32 %v646, 4294901760
      %v1106 = vsub.f32 %v646, %v1105
      %v1107 = vand.u32 %v1106, 4294901760
      %1108 = vmatpush1.msra.mxu0 %v1107
      %1109 = vmatprep.subr.mxu0 0.0
      %v1110 = vand.u32 %v647, 4294901760
      %v1111 = vsub.f32 %v647, %v1110
      %v1112 = vand.u32 %v1111, 4294901760
      %1113 = vmatpush1.msra.mxu0 %v1112
      %1114 = vmatprep.subr.mxu0 0.0
      %1115 = vmatpush1.msra.mxu0 0.0
      %1116 = vmatprep.subr.mxu0 0.0
      %1117 = vmatpush1.msra.mxu0 0.0
      %1118 = vmatprep.subr.mxu0 0.0
      %1119 = vmatpush1.msra.mxu0 0.0
      %1120 = vmatprep.subr.mxu0 0.0
      %1121 = vmatpush1.msra.mxu0 0.0
      %1122 = vmatprep.subr.mxu0 0.0
      %1123 = vmatpush1.msra.mxu0 0.0
      %1124 = vmatprep.subr.mxu0 0.0
      %1125 = vmatpush1.msra.mxu0 0.0
      %1126 = vmatprep.subr.mxu0 0.0
      %1127 = vmatpush1.msra.mxu0 0.0
      %1128 = vmatprep.subr.mxu0 0.0
      %1129 = vmatpush1.msra.mxu0 0.0
      %1130 = vmatprep.subr.mxu0 0.0
      %1131 = vmatpush1.msra.mxu0 0.0
      %1132 = vmatprep.subr.mxu0 0.0
      %1133 = vmatpush1.msra.mxu0 0.0
      %1134 = vmatprep.subr.mxu0 0.0
      %1135 = vmatpush1.msra.mxu0 0.0
      %1136 = vmatprep.subr.mxu0 0.0
      %1137 = vmatpush1.msra.mxu0 0.0
      %1138 = vmatprep.subr.mxu0 0.0
      %1139 = vmatpush1.msra.mxu0 0.0
      %1140 = vmatprep.subr.mxu0 0.0
      %1141 = vmatpush1.msra.mxu0 0.0
      %1142 = vmatprep.subr.mxu0 0.0
      %1143 = vmatpush1.msra.mxu0 0.0
      %1144 = vmatprep.subr.mxu0 0.0
      %1145 = vmatpush1.msra.mxu0 0.0
      %1146 = vmatprep.subr.mxu0 0.0
      %1147 = vmatpush1.msra.mxu0 0.0
      %1148 = vmatprep.subr.mxu0 0.0
      %1149 = vmatpush1.msra.mxu0 0.0
      %1150 = vmatprep.subr.mxu0 0.0
      %1151 = vmatpush1.msra.mxu0 0.0
      %1152 = vmatprep.subr.mxu0 0.0
      %1153 = vmatpush1.msra.mxu0 0.0
      %1154 = vmatprep.subr.mxu0 0.0
      %1155 = vmatpush1.msra.mxu0 0.0
      %1156 = vmatprep.subr.mxu0 0.0
      %1157 = vmatpush1.msra.mxu0 0.0
      %1158 = vmatprep.subr.mxu0 0.0
      %1159 = vmatpush1.msra.mxu0 0.0
      %1160 = vmatprep.subr.mxu0 0.0
      %1161 = vmatpush1.msra.mxu0 0.0
      %1162 = vmatprep.subr.mxu0 0.0
      %1163 = vmatpush1.msra.mxu0 0.0
      %1164 = vmatprep.subr.mxu0 0.0
      %1165 = vmatpush1.msra.mxu0 0.0
      %1166 = vmatprep.subr.mxu0 0.0
      %1167 = vmatpush1.msra.mxu0 0.0
      %1168 = vmatprep.subr.mxu0 0.0
      %1169 = vmatpush1.msra.mxu0 0.0
      %1170 = vmatprep.subr.mxu0 0.0
      %1171 = vmatpush1.msra.mxu0 0.0
      %1172 = vmatprep.subr.mxu0 0.0
      %1173 = vmatpush1.msra.mxu0 0.0
      %1174 = vmatprep.mubr.f32.mxu0 0.0
      %v1175 = vand.u32 %v657, 4294901760
      %1176 = vmatmul.mubr.f32.gmra.mrb[0].mxu0 %v1175
      %v1177 = vpop.f32.mrb[0].mxu0
      %v1178 = vadd.f32 %v1069, %v1177
      %v1179 = vpop.f32.mrb[0].mxu0
      %1180 = vmatprep.mubr.f32.mxu0 0.0
      %v1181 = vand.u32 %v660, 4294901760
      %1182 = vmatmul.mubr.f32.gmra.mrb[0].mxu0 %v1181
      %v1183 = vpop.f32.mrb[0].mxu0
      %v1184 = vadd.f32 %v1077, %v1183
      %v1185 = vpop.f32.mrb[0].mxu0
      %1186 = vmatprep.mubr.f32.mxu0 0.0
      %v1187 = vand.u32 %v663, 4294901760
      %1188 = vmatmul.mubr.f32.gmra.mrb[0].mxu0 %v1187
      %v1189 = vpop.f32.mrb[0].mxu0
      %v1190 = vadd.f32 %v1085, %v1189
      %v1191 = vpop.f32.mrb[0].mxu0
      %1192 = vmatprep.mubr.f32.mxu0 0.0
      %v1193 = vand.u32 %v666, 4294901760
      %1194 = vmatmul.mubr.f32.gmra.mrb[0].mxu0 %v1193
      %v1195 = vpop.f32.mrb[0].mxu0
      %v1196 = vadd.f32 %v1093, %v1195
      %v1197 = vpop.f32.mrb[0].mxu0
      %1198 = vmatprep.mubr.f32.mxu0 0.0
      %v1199 = vand.u32 %v669, 4294901760
      %1200 = vmatmul.mubr.f32.gmra.mrb[0].mxu0 %v1199
      %v1201 = vpop.f32.mrb[0].mxu0
      %v1202 = vadd.f32 %v1101, %v1201
      %v1203 = vpop.f32.mrb[0].mxu0
      %1204 = vdwg.mxu0
      %1205 = vmatprep.subr.mxu0 0.0
      %v1206 = vand.u32 %v646, 4294901760
      %1207 = vmatpush1.msra.mxu0 %v1206
      %1208 = vmatprep.subr.mxu0 0.0
      %v1209 = vand.u32 %v647, 4294901760
      %1210 = vmatpush1.msra.mxu0 %v1209
      %1211 = vmatprep.subr.mxu0 0.0
      %1212 = vmatpush1.msra.mxu0 0.0
      %1213 = vmatprep.subr.mxu0 0.0
      %1214 = vmatpush1.msra.mxu0 0.0
      %1215 = vmatprep.subr.mxu0 0.0
      %1216 = vmatpush1.msra.mxu0 0.0
      %1217 = vmatprep.subr.mxu0 0.0
      %1218 = vmatpush1.msra.mxu0 0.0
      %1219 = vmatprep.subr.mxu0 0.0
      %1220 = vmatpush1.msra.mxu0 0.0
      %1221 = vmatprep.subr.mxu0 0.0
      %1222 = vmatpush1.msra.mxu0 0.0
      %1223 = vmatprep.subr.mxu0 0.0
      %1224 = vmatpush1.msra.mxu0 0.0
      %1225 = vmatprep.subr.mxu0 0.0
      %1226 = vmatpush1.msra.mxu0 0.0
      %1227 = vmatprep.subr.mxu0 0.0
      %1228 = vmatpush1.msra.mxu0 0.0
      %1229 = vmatprep.subr.mxu0 0.0
      %1230 = vmatpush1.msra.mxu0 0.0
      %1231 = vmatprep.subr.mxu0 0.0
      %1232 = vmatpush1.msra.mxu0 0.0
      %1233 = vmatprep.subr.mxu0 0.0
      %1234 = vmatpush1.msra.mxu0 0.0
      %1235 = vmatprep.subr.mxu0 0.0
      %1236 = vmatpush1.msra.mxu0 0.0
      %1237 = vmatprep.subr.mxu0 0.0
      %1238 = vmatpush1.msra.mxu0 0.0
      %1239 = vmatprep.subr.mxu0 0.0
      %1240 = vmatpush1.msra.mxu0 0.0
      %1241 = vmatprep.subr.mxu0 0.0
      %1242 = vmatpush1.msra.mxu0 0.0
      %1243 = vmatprep.subr.mxu0 0.0
      %1244 = vmatpush1.msra.mxu0 0.0
      %1245 = vmatprep.subr.mxu0 0.0
      %1246 = vmatpush1.msra.mxu0 0.0
      %1247 = vmatprep.subr.mxu0 0.0
      %1248 = vmatpush1.msra.mxu0 0.0
      %1249 = vmatprep.subr.mxu0 0.0
      %1250 = vmatpush1.msra.mxu0 0.0
      %1251 = vmatprep.subr.mxu0 0.0
      %1252 = vmatpush1.msra.mxu0 0.0
      %1253 = vmatprep.subr.mxu0 0.0
      %1254 = vmatpush1.msra.mxu0 0.0
      %1255 = vmatprep.subr.mxu0 0.0
      %1256 = vmatpush1.msra.mxu0 0.0
      %1257 = vmatprep.subr.mxu0 0.0
      %1258 = vmatpush1.msra.mxu0 0.0
      %1259 = vmatprep.subr.mxu0 0.0
      %1260 = vmatpush1.msra.mxu0 0.0
      %1261 = vmatprep.subr.mxu0 0.0
      %1262 = vmatpush1.msra.mxu0 0.0
      %1263 = vmatprep.subr.mxu0 0.0
      %1264 = vmatpush1.msra.mxu0 0.0
      %1265 = vmatprep.subr.mxu0 0.0
      %1266 = vmatpush1.msra.mxu0 0.0
      %1267 = vmatprep.subr.mxu0 0.0
      %1268 = vmatpush1.msra.mxu0 0.0
      %1269 = vmatprep.subr.mxu0 0.0
      %1270 = vmatpush1.msra.mxu0 0.0
      %1271 = vmatprep.mubr.f32.mxu0 0.0
      %v1272 = vand.u32 %v657, 4294901760
      %1273 = vmatmul.mubr.f32.gmra.mrb[0].mxu0 %v1272
      %v1274 = vpop.f32.mrb[0].mxu0
      %v1275 = vadd.f32 %v1178, %v1274
      %v1276 = vpop.f32.mrb[0].mxu0
      %1277 = vmatprep.mubr.f32.mxu0 0.0
      %v1278 = vand.u32 %v660, 4294901760
      %1279 = vmatmul.mubr.f32.gmra.mrb[0].mxu0 %v1278
      %v1280 = vpop.f32.mrb[0].mxu0
      %v1281 = vadd.f32 %v1184, %v1280
      %v1282 = vpop.f32.mrb[0].mxu0
      %1283 = vmatprep.mubr.f32.mxu0 0.0
      %v1284 = vand.u32 %v663, 4294901760
      %1285 = vmatmul.mubr.f32.gmra.mrb[0].mxu0 %v1284
      %v1286 = vpop.f32.mrb[0].mxu0
      %v1287 = vadd.f32 %v1190, %v1286
      %v1288 = vpop.f32.mrb[0].mxu0
      %1289 = vmatprep.mubr.f32.mxu0 0.0
      %v1290 = vand.u32 %v666, 4294901760
      %1291 = vmatmul.mubr.f32.gmra.mrb[0].mxu0 %v1290
      %v1292 = vpop.f32.mrb[0].mxu0
      %v1293 = vadd.f32 %v1196, %v1292
      %v1294 = vpop.f32.mrb[0].mxu0
      %1295 = vmatprep.mubr.f32.mxu0 0.0
      %v1296 = vand.u32 %v669, 4294901760
      %1297 = vmatmul.mubr.f32.gmra.mrb[0].mxu0 %v1296
      %v1298 = vpop.f32.mrb[0].mxu0
      %v1299 = vadd.f32 %v1202, %v1298
      %v1300 = vpop.f32.mrb[0].mxu0
      %1301 = vdwg.mxu0
      %v1302 = vld [vmem:[%s1] sm:$0xff]
      %v1303 = vld [vmem:[%s1 + $0x8] sm:$0xff]
      %v1304 = vld [vmem:[%s1 + $0x10] sm:$0xff]
      %v1305 = vld [vmem:[%s1 + $0x18] sm:$0xff]
      %v1306 = vld [vmem:[%s1 + $0x20] sm:$0xf]
      %1312 = vrot.lane.b32.xlu0 %v1275, 112
      %v1313 = vpop.permute.xlu0 %1312
      %1314 = vrot.lane.b32.xlu0 %v1281, 112
      %v1315 = vpop.permute.xlu0 %1314
      %1316 = vrot.lane.b32.xlu0 %v1287, 112
      %v1317 = vpop.permute.xlu0 %1316
      %1318 = vrot.lane.b32.xlu0 %v1293, 112
      %v1319 = vpop.permute.xlu0 %1318
      %1320 = vrot.lane.b32.xlu0 %v1299, 112
      %v1321 = vpop.permute.xlu0 %1320
      %vm1322 = vcmask 31744
      %v1323 = vsel %vm1322, %v1275, 0
      %v1325 = vsel %vm1322, %v1281, 0
      %v1327 = vsel %vm1322, %v1287, 0
      %v1329 = vsel %vm1322, %v1293, 0
      %v1331 = vsel %vm1322, %v1299, 0
      %v1333 = vsel %vm1322, %v1313, 0
      %v1335 = vsel %vm1322, %v1315, 0
      %v1337 = vsel %vm1322, %v1317, 0
      %v1339 = vsel %vm1322, %v1319, 0
      %v1341 = vsel %vm1322, %v1321, 0
      %1343 = vmatprep.subr.mxu0 0.0
      %v1344 = vand.u32 %v1333, 4294901760
      %1345 = vmatpush1.xpose.msra.mxu0 %v1344
      %1346 = vmatprep.subr.mxu0 0.0
      %v1347 = vand.u32 %v1335, 4294901760
      %1348 = vmatpush1.xpose.msra.mxu0 %v1347
      %1349 = vmatprep.subr.mxu0 0.0
      %v1350 = vand.u32 %v1337, 4294901760
      %1351 = vmatpush1.xpose.msra.mxu0 %v1350
      %1352 = vmatprep.subr.mxu0 0.0
      %v1353 = vand.u32 %v1339, 4294901760
      %1354 = vmatpush1.xpose.msra.mxu0 %v1353
      %1355 = vmatprep.subr.mxu0 0.0
      %v1356 = vand.u32 %v1341, 4294901760
      %1357 = vmatpush1.xpose.msra.mxu0 %v1356
      %1358 = vmatprep.subr.mxu0 0.0
      %1359 = vmatpush1.xpose.msra.mxu0 0.0
      %1360 = vmatprep.subr.mxu0 0.0
      %1361 = vmatpush1.xpose.msra.mxu0 0.0
      %1362 = vmatprep.subr.mxu0 0.0
      %1363 = vmatpush1.xpose.msra.mxu0 0.0
      %1364 = vmatprep.subr.mxu0 0.0
      %1365 = vmatpush1.xpose.msra.mxu0 0.0
      %1366 = vmatprep.subr.mxu0 0.0
      %1367 = vmatpush1.xpose.msra.mxu0 0.0
      %1368 = vmatprep.subr.mxu0 0.0
      %1369 = vmatpush1.xpose.msra.mxu0 0.0
      %1370 = vmatprep.subr.mxu0 0.0
      %1371 = vmatpush1.xpose.msra.mxu0 0.0
      %1372 = vmatprep.subr.mxu0 0.0
      %1373 = vmatpush1.xpose.msra.mxu0 0.0
      %1374 = vmatprep.subr.mxu0 0.0
      %1375 = vmatpush1.xpose.msra.mxu0 0.0
      %1376 = vmatprep.subr.mxu0 0.0
      %1377 = vmatpush1.xpose.msra.mxu0 0.0
      %1378 = vmatprep.subr.mxu0 0.0
      %1379 = vmatpush1.xpose.msra.mxu0 0.0
      %1380 = vmatprep.subr.mxu0 0.0
      %1381 = vmatpush1.xpose.msra.mxu0 0.0
      %1382 = vmatprep.subr.mxu0 0.0
      %1383 = vmatpush1.xpose.msra.mxu0 0.0
      %1384 = vmatprep.subr.mxu0 0.0
      %1385 = vmatpush1.xpose.msra.mxu0 0.0
      %1386 = vmatprep.subr.mxu0 0.0
      %1387 = vmatpush1.xpose.msra.mxu0 0.0
      %1388 = vmatprep.subr.mxu0 0.0
      %1389 = vmatpush1.xpose.msra.mxu0 0.0
      %1390 = vmatprep.subr.mxu0 0.0
      %1391 = vmatpush1.xpose.msra.mxu0 0.0
      %1392 = vmatprep.subr.mxu0 0.0
      %1393 = vmatpush1.xpose.msra.mxu0 0.0
      %1394 = vmatprep.subr.mxu0 0.0
      %1395 = vmatpush1.xpose.msra.mxu0 0.0
      %1396 = vmatprep.subr.mxu0 0.0
      %1397 = vmatpush1.xpose.msra.mxu0 0.0
      %1398 = vmatprep.subr.mxu0 0.0
      %1399 = vmatpush1.xpose.msra.mxu0 0.0
      %1400 = vmatprep.subr.mxu0 0.0
      %1401 = vmatpush1.xpose.msra.mxu0 0.0
      %1402 = vmatprep.subr.mxu0 0.0
      %1403 = vmatpush1.xpose.msra.mxu0 0.0
      %1404 = vmatprep.subr.mxu0 0.0
      %1405 = vmatpush1.xpose.msra.mxu0 0.0
      %1406 = vmatprep.subr.mxu0 0.0
      %1407 = vmatpush1.xpose.msra.mxu0 0.0
      %1408 = vmatprep.subr.mxu0 0.0
      %1409 = vmatpush1.xpose.msra.mxu0 0.0
      %1410 = vmatprep.subr.mxu0 0.0
      %1411 = vmatpush1.xpose.msra.mxu0 0.0
      %1412 = vmatprep.mubr.f32.mxu0 0.0
      %v1413 = vand.u32 %v1323, 4294901760
      %v1414 = vsub.f32 %v1323, %v1413
      %v1415 = vand.u32 %v1414, 4294901760
      %v1416 = vsub.f32 %v1414, %v1415
      %v1417 = vand.u32 %v1416, 4294901760
      %1418 = vmatmul.mubr.f32.gmra.mrb[0].mxu0 %v1417
      %v1419 = vpop.f32.mrb[0].mxu0
      %v1420 = vadd.f32 0.0, %v1419
      %v1421 = vpop.f32.mrb[0].mxu0
      %1422 = vmatprep.mubr.f32.mxu0 0.0
      %v1423 = vand.u32 %v1325, 4294901760
      %v1424 = vsub.f32 %v1325, %v1423
      %v1425 = vand.u32 %v1424, 4294901760
      %v1426 = vsub.f32 %v1424, %v1425
      %v1427 = vand.u32 %v1426, 4294901760
      %1428 = vmatmul.mubr.f32.gmra.mrb[0].mxu0 %v1427
      %v1429 = vpop.f32.mrb[0].mxu0
      %v1430 = vadd.f32 0.0, %v1429
      %v1431 = vpop.f32.mrb[0].mxu0
      %1432 = vmatprep.mubr.f32.mxu0 0.0
      %v1433 = vand.u32 %v1327, 4294901760
      %v1434 = vsub.f32 %v1327, %v1433
      %v1435 = vand.u32 %v1434, 4294901760
      %v1436 = vsub.f32 %v1434, %v1435
      %v1437 = vand.u32 %v1436, 4294901760
      %1438 = vmatmul.mubr.f32.gmra.mrb[0].mxu0 %v1437
      %v1439 = vpop.f32.mrb[0].mxu0
      %v1440 = vadd.f32 0.0, %v1439
      %v1441 = vpop.f32.mrb[0].mxu0
      %1442 = vmatprep.mubr.f32.mxu0 0.0
      %v1443 = vand.u32 %v1329, 4294901760
      %v1444 = vsub.f32 %v1329, %v1443
      %v1445 = vand.u32 %v1444, 4294901760
      %v1446 = vsub.f32 %v1444, %v1445
      %v1447 = vand.u32 %v1446, 4294901760
      %1448 = vmatmul.mubr.f32.gmra.mrb[0].mxu0 %v1447
      %v1449 = vpop.f32.mrb[0].mxu0
      %v1450 = vadd.f32 0.0, %v1449
      %v1451 = vpop.f32.mrb[0].mxu0
      %1452 = vmatprep.mubr.f32.mxu0 0.0
      %v1453 = vand.u32 %v1331, 4294901760
      %v1454 = vsub.f32 %v1331, %v1453
      %v1455 = vand.u32 %v1454, 4294901760
      %v1456 = vsub.f32 %v1454, %v1455
      %v1457 = vand.u32 %v1456, 4294901760
      %1458 = vmatmul.mubr.f32.gmra.mrb[0].mxu0 %v1457
      %v1459 = vpop.f32.mrb[0].mxu0
      %v1460 = vadd.f32 0.0, %v1459
      %v1461 = vpop.f32.mrb[0].mxu0
      %1462 = vdwg.mxu0
      %1463 = vmatprep.subr.mxu0 0.0
      %v1464 = vand.u32 %v1333, 4294901760
      %v1465 = vsub.f32 %v1333, %v1464
      %v1466 = vand.u32 %v1465, 4294901760
      %v1467 = vsub.f32 %v1465, %v1466
      %v1468 = vand.u32 %v1467, 4294901760
      %1469 = vmatpush1.xpose.msra.mxu0 %v1468
      %1470 = vmatprep.subr.mxu0 0.0
      %v1471 = vand.u32 %v1335, 4294901760
      %v1472 = vsub.f32 %v1335, %v1471
      %v1473 = vand.u32 %v1472, 4294901760
      %v1474 = vsub.f32 %v1472, %v1473
      %v1475 = vand.u32 %v1474, 4294901760
      %1476 = vmatpush1.xpose.msra.mxu0 %v1475
      %1477 = vmatprep.subr.mxu0 0.0
      %v1478 = vand.u32 %v1337, 4294901760
      %v1479 = vsub.f32 %v1337, %v1478
      %v1480 = vand.u32 %v1479, 4294901760
      %v1481 = vsub.f32 %v1479, %v1480
      %v1482 = vand.u32 %v1481, 4294901760
      %1483 = vmatpush1.xpose.msra.mxu0 %v1482
      %1484 = vmatprep.subr.mxu0 0.0
      %v1485 = vand.u32 %v1339, 4294901760
      %v1486 = vsub.f32 %v1339, %v1485
      %v1487 = vand.u32 %v1486, 4294901760
      %v1488 = vsub.f32 %v1486, %v1487
      %v1489 = vand.u32 %v1488, 4294901760
      %1490 = vmatpush1.xpose.msra.mxu0 %v1489
      %1491 = vmatprep.subr.mxu0 0.0
      %v1492 = vand.u32 %v1341, 4294901760
      %v1493 = vsub.f32 %v1341, %v1492
      %v1494 = vand.u32 %v1493, 4294901760
      %v1495 = vsub.f32 %v1493, %v1494
      %v1496 = vand.u32 %v1495, 4294901760
      %1497 = vmatpush1.xpose.msra.mxu0 %v1496
      %1498 = vmatprep.subr.mxu0 0.0
      %1499 = vmatpush1.xpose.msra.mxu0 0.0
      %1500 = vmatprep.subr.mxu0 0.0
      %1501 = vmatpush1.xpose.msra.mxu0 0.0
      %1502 = vmatprep.subr.mxu0 0.0
      %1503 = vmatpush1.xpose.msra.mxu0 0.0
      %1504 = vmatprep.subr.mxu0 0.0
      %1505 = vmatpush1.xpose.msra.mxu0 0.0
      %1506 = vmatprep.subr.mxu0 0.0
      %1507 = vmatpush1.xpose.msra.mxu0 0.0
      %1508 = vmatprep.subr.mxu0 0.0
      %1509 = vmatpush1.xpose.msra.mxu0 0.0
      %1510 = vmatprep.subr.mxu0 0.0
      %1511 = vmatpush1.xpose.msra.mxu0 0.0
      %1512 = vmatprep.subr.mxu0 0.0
      %1513 = vmatpush1.xpose.msra.mxu0 0.0
      %1514 = vmatprep.subr.mxu0 0.0
      %1515 = vmatpush1.xpose.msra.mxu0 0.0
      %1516 = vmatprep.subr.mxu0 0.0
      %1517 = vmatpush1.xpose.msra.mxu0 0.0
      %1518 = vmatprep.subr.mxu0 0.0
      %1519 = vmatpush1.xpose.msra.mxu0 0.0
      %1520 = vmatprep.subr.mxu0 0.0
      %1521 = vmatpush1.xpose.msra.mxu0 0.0
      %1522 = vmatprep.subr.mxu0 0.0
      %1523 = vmatpush1.xpose.msra.mxu0 0.0
      %1524 = vmatprep.subr.mxu0 0.0
      %1525 = vmatpush1.xpose.msra.mxu0 0.0
      %1526 = vmatprep.subr.mxu0 0.0
      %1527 = vmatpush1.xpose.msra.mxu0 0.0
      %1528 = vmatprep.subr.mxu0 0.0
      %1529 = vmatpush1.xpose.msra.mxu0 0.0
      %1530 = vmatprep.subr.mxu0 0.0
      %1531 = vmatpush1.xpose.msra.mxu0 0.0
      %1532 = vmatprep.subr.mxu0 0.0
      %1533 = vmatpush1.xpose.msra.mxu0 0.0
      %1534 = vmatprep.subr.mxu0 0.0
      %1535 = vmatpush1.xpose.msra.mxu0 0.0
      %1536 = vmatprep.subr.mxu0 0.0
      %1537 = vmatpush1.xpose.msra.mxu0 0.0
      %1538 = vmatprep.subr.mxu0 0.0
      %1539 = vmatpush1.xpose.msra.mxu0 0.0
      %1540 = vmatprep.subr.mxu0 0.0
      %1541 = vmatpush1.xpose.msra.mxu0 0.0
      %1542 = vmatprep.subr.mxu0 0.0
      %1543 = vmatpush1.xpose.msra.mxu0 0.0
      %1544 = vmatprep.subr.mxu0 0.0
      %1545 = vmatpush1.xpose.msra.mxu0 0.0
      %1546 = vmatprep.subr.mxu0 0.0
      %1547 = vmatpush1.xpose.msra.mxu0 0.0
      %1548 = vmatprep.subr.mxu0 0.0
      %1549 = vmatpush1.xpose.msra.mxu0 0.0
      %1550 = vmatprep.subr.mxu0 0.0
      %1551 = vmatpush1.xpose.msra.mxu0 0.0
      %1552 = vmatprep.mubr.f32.mxu0 0.0
      %v1553 = vand.u32 %v1323, 4294901760
      %1554 = vmatmul.mubr.f32.gmra.mrb[0].mxu0 %v1553
      %v1555 = vpop.f32.mrb[0].mxu0
      %v1556 = vadd.f32 %v1420, %v1555
      %v1557 = vpop.f32.mrb[0].mxu0
      %1558 = vmatprep.mubr.f32.mxu0 0.0
      %v1559 = vand.u32 %v1325, 4294901760
      %1560 = vmatmul.mubr.f32.gmra.mrb[0].mxu0 %v1559
      %v1561 = vpop.f32.mrb[0].mxu0
      %v1562 = vadd.f32 %v1430, %v1561
      %v1563 = vpop.f32.mrb[0].mxu0
      %1564 = vmatprep.mubr.f32.mxu0 0.0
      %v1565 = vand.u32 %v1327, 4294901760
      %1566 = vmatmul.mubr.f32.gmra.mrb[0].mxu0 %v1565
      %v1567 = vpop.f32.mrb[0].mxu0
      %v1568 = vadd.f32 %v1440, %v1567
      %v1569 = vpop.f32.mrb[0].mxu0
      %1570 = vmatprep.mubr.f32.mxu0 0.0
      %v1571 = vand.u32 %v1329, 4294901760
      %1572 = vmatmul.mubr.f32.gmra.mrb[0].mxu0 %v1571
      %v1573 = vpop.f32.mrb[0].mxu0
      %v1574 = vadd.f32 %v1450, %v1573
      %v1575 = vpop.f32.mrb[0].mxu0
      %1576 = vmatprep.mubr.f32.mxu0 0.0
      %v1577 = vand.u32 %v1331, 4294901760
      %1578 = vmatmul.mubr.f32.gmra.mrb[0].mxu0 %v1577
      %v1579 = vpop.f32.mrb[0].mxu0
      %v1580 = vadd.f32 %v1460, %v1579
      %v1581 = vpop.f32.mrb[0].mxu0
      %1582 = vdwg.mxu0
      %1583 = vmatprep.subr.mxu0 0.0
      %v1584 = vand.u32 %v1333, 4294901760
      %v1585 = vsub.f32 %v1333, %v1584
      %1586 = vmatpush1.xpose.msra.mxu0 %v1585
      %1587 = vmatprep.subr.mxu0 0.0
      %v1588 = vand.u32 %v1335, 4294901760
      %v1589 = vsub.f32 %v1335, %v1588
      %1590 = vmatpush1.xpose.msra.mxu0 %v1589
      %1591 = vmatprep.subr.mxu0 0.0
      %v1592 = vand.u32 %v1337, 4294901760
      %v1593 = vsub.f32 %v1337, %v1592
      %1594 = vmatpush1.xpose.msra.mxu0 %v1593
      %1595 = vmatprep.subr.mxu0 0.0
      %v1596 = vand.u32 %v1339, 4294901760
      %v1597 = vsub.f32 %v1339, %v1596
      %1598 = vmatpush1.xpose.msra.mxu0 %v1597
      %1599 = vmatprep.subr.mxu0 0.0
      %v1600 = vand.u32 %v1341, 4294901760
      %v1601 = vsub.f32 %v1341, %v1600
      %1602 = vmatpush1.xpose.msra.mxu0 %v1601
      %1603 = vmatprep.subr.mxu0 0.0
      %1604 = vmatpush1.xpose.msra.mxu0 0.0
      %1605 = vmatprep.subr.mxu0 0.0
      %1606 = vmatpush1.xpose.msra.mxu0 0.0
      %1607 = vmatprep.subr.mxu0 0.0
      %1608 = vmatpush1.xpose.msra.mxu0 0.0
      %1609 = vmatprep.subr.mxu0 0.0
      %1610 = vmatpush1.xpose.msra.mxu0 0.0
      %1611 = vmatprep.subr.mxu0 0.0
      %1612 = vmatpush1.xpose.msra.mxu0 0.0
      %1613 = vmatprep.subr.mxu0 0.0
      %1614 = vmatpush1.xpose.msra.mxu0 0.0
      %1615 = vmatprep.subr.mxu0 0.0
      %1616 = vmatpush1.xpose.msra.mxu0 0.0
      %1617 = vmatprep.subr.mxu0 0.0
      %1618 = vmatpush1.xpose.msra.mxu0 0.0
      %1619 = vmatprep.subr.mxu0 0.0
      %1620 = vmatpush1.xpose.msra.mxu0 0.0
      %1621 = vmatprep.subr.mxu0 0.0
      %1622 = vmatpush1.xpose.msra.mxu0 0.0
      %1623 = vmatprep.subr.mxu0 0.0
      %1624 = vmatpush1.xpose.msra.mxu0 0.0
      %1625 = vmatprep.subr.mxu0 0.0
      %1626 = vmatpush1.xpose.msra.mxu0 0.0
      %1627 = vmatprep.subr.mxu0 0.0
      %1628 = vmatpush1.xpose.msra.mxu0 0.0
      %1629 = vmatprep.subr.mxu0 0.0
      %1630 = vmatpush1.xpose.msra.mxu0 0.0
      %1631 = vmatprep.subr.mxu0 0.0
      %1632 = vmatpush1.xpose.msra.mxu0 0.0
      %1633 = vmatprep.subr.mxu0 0.0
      %1634 = vmatpush1.xpose.msra.mxu0 0.0
      %1635 = vmatprep.subr.mxu0 0.0
      %1636 = vmatpush1.xpose.msra.mxu0 0.0
      %1637 = vmatprep.subr.mxu0 0.0
      %1638 = vmatpush1.xpose.msra.mxu0 0.0
      %1639 = vmatprep.subr.mxu0 0.0
      %1640 = vmatpush1.xpose.msra.mxu0 0.0
      %1641 = vmatprep.subr.mxu0 0.0
      %1642 = vmatpush1.xpose.msra.mxu0 0.0
      %1643 = vmatprep.subr.mxu0 0.0
      %1644 = vmatpush1.xpose.msra.mxu0 0.0
      %1645 = vmatprep.subr.mxu0 0.0
      %1646 = vmatpush1.xpose.msra.mxu0 0.0
      %1647 = vmatprep.subr.mxu0 0.0
      %1648 = vmatpush1.xpose.msra.mxu0 0.0
      %1649 = vmatprep.subr.mxu0 0.0
      %1650 = vmatpush1.xpose.msra.mxu0 0.0
      %1651 = vmatprep.subr.mxu0 0.0
      %1652 = vmatpush1.xpose.msra.mxu0 0.0
      %1653 = vmatprep.subr.mxu0 0.0
      %1654 = vmatpush1.xpose.msra.mxu0 0.0
      %1655 = vmatprep.subr.mxu0 0.0
      %1656 = vmatpush1.xpose.msra.mxu0 0.0
      %1657 = vmatprep.mubr.f32.mxu0 0.0
      %v1658 = vand.u32 %v1323, 4294901760
      %v1659 = vsub.f32 %v1323, %v1658
      %1660 = vmatmul.mubr.f32.gmra.mrb[0].mxu0 %v1659
      %v1661 = vpop.f32.mrb[0].mxu0
      %v1662 = vadd.f32 %v1556, %v1661
      %v1663 = vpop.f32.mrb[0].mxu0
      %1664 = vmatprep.mubr.f32.mxu0 0.0
      %v1665 = vand.u32 %v1325, 4294901760
      %v1666 = vsub.f32 %v1325, %v1665
      %1667 = vmatmul.mubr.f32.gmra.mrb[0].mxu0 %v1666
      %v1668 = vpop.f32.mrb[0].mxu0
      %v1669 = vadd.f32 %v1562, %v1668
      %v1670 = vpop.f32.mrb[0].mxu0
      %1671 = vmatprep.mubr.f32.mxu0 0.0
      %v1672 = vand.u32 %v1327, 4294901760
      %v1673 = vsub.f32 %v1327, %v1672
      %1674 = vmatmul.mubr.f32.gmra.mrb[0].mxu0 %v1673
      %v1675 = vpop.f32.mrb[0].mxu0
      %v1676 = vadd.f32 %v1568, %v1675
      %v1677 = vpop.f32.mrb[0].mxu0
      %1678 = vmatprep.mubr.f32.mxu0 0.0
      %v1679 = vand.u32 %v1329, 4294901760
      %v1680 = vsub.f32 %v1329, %v1679
      %1681 = vmatmul.mubr.f32.gmra.mrb[0].mxu0 %v1680
      %v1682 = vpop.f32.mrb[0].mxu0
      %v1683 = vadd.f32 %v1574, %v1682
      %v1684 = vpop.f32.mrb[0].mxu0
      %1685 = vmatprep.mubr.f32.mxu0 0.0
      %v1686 = vand.u32 %v1331, 4294901760
      %v1687 = vsub.f32 %v1331, %v1686
      %1688 = vmatmul.mubr.f32.gmra.mrb[0].mxu0 %v1687
      %v1689 = vpop.f32.mrb[0].mxu0
      %v1690 = vadd.f32 %v1580, %v1689
      %v1691 = vpop.f32.mrb[0].mxu0
      %1692 = vdwg.mxu0
      %1693 = vmatprep.subr.mxu0 0.0
      %v1694 = vand.u32 %v1333, 4294901760
      %1695 = vmatpush1.xpose.msra.mxu0 %v1694
      %1696 = vmatprep.subr.mxu0 0.0
      %v1697 = vand.u32 %v1335, 4294901760
      %1698 = vmatpush1.xpose.msra.mxu0 %v1697
      %1699 = vmatprep.subr.mxu0 0.0
      %v1700 = vand.u32 %v1337, 4294901760
      %1701 = vmatpush1.xpose.msra.mxu0 %v1700
      %1702 = vmatprep.subr.mxu0 0.0
      %v1703 = vand.u32 %v1339, 4294901760
      %1704 = vmatpush1.xpose.msra.mxu0 %v1703
      %1705 = vmatprep.subr.mxu0 0.0
      %v1706 = vand.u32 %v1341, 4294901760
      %1707 = vmatpush1.xpose.msra.mxu0 %v1706
      %1708 = vmatprep.subr.mxu0 0.0
      %1709 = vmatpush1.xpose.msra.mxu0 0.0
      %1710 = vmatprep.subr.mxu0 0.0
      %1711 = vmatpush1.xpose.msra.mxu0 0.0
      %1712 = vmatprep.subr.mxu0 0.0
      %1713 = vmatpush1.xpose.msra.mxu0 0.0
      %1714 = vmatprep.subr.mxu0 0.0
      %1715 = vmatpush1.xpose.msra.mxu0 0.0
      %1716 = vmatprep.subr.mxu0 0.0
      %1717 = vmatpush1.xpose.msra.mxu0 0.0
      %1718 = vmatprep.subr.mxu0 0.0
      %1719 = vmatpush1.xpose.msra.mxu0 0.0
      %1720 = vmatprep.subr.mxu0 0.0
      %1721 = vmatpush1.xpose.msra.mxu0 0.0
      %1722 = vmatprep.subr.mxu0 0.0
      %1723 = vmatpush1.xpose.msra.mxu0 0.0
      %1724 = vmatprep.subr.mxu0 0.0
      %1725 = vmatpush1.xpose.msra.mxu0 0.0
      %1726 = vmatprep.subr.mxu0 0.0
      %1727 = vmatpush1.xpose.msra.mxu0 0.0
      %1728 = vmatprep.subr.mxu0 0.0
      %1729 = vmatpush1.xpose.msra.mxu0 0.0
      %1730 = vmatprep.subr.mxu0 0.0
      %1731 = vmatpush1.xpose.msra.mxu0 0.0
      %1732 = vmatprep.subr.mxu0 0.0
      %1733 = vmatpush1.xpose.msra.mxu0 0.0
      %1734 = vmatprep.subr.mxu0 0.0
      %1735 = vmatpush1.xpose.msra.mxu0 0.0
      %1736 = vmatprep.subr.mxu0 0.0
      %1737 = vmatpush1.xpose.msra.mxu0 0.0
      %1738 = vmatprep.subr.mxu0 0.0
      %1739 = vmatpush1.xpose.msra.mxu0 0.0
      %1740 = vmatprep.subr.mxu0 0.0
      %1741 = vmatpush1.xpose.msra.mxu0 0.0
      %1742 = vmatprep.subr.mxu0 0.0
      %1743 = vmatpush1.xpose.msra.mxu0 0.0
      %1744 = vmatprep.subr.mxu0 0.0
      %1745 = vmatpush1.xpose.msra.mxu0 0.0
      %1746 = vmatprep.subr.mxu0 0.0
      %1747 = vmatpush1.xpose.msra.mxu0 0.0
      %1748 = vmatprep.subr.mxu0 0.0
      %1749 = vmatpush1.xpose.msra.mxu0 0.0
      %1750 = vmatprep.subr.mxu0 0.0
      %1751 = vmatpush1.xpose.msra.mxu0 0.0
      %1752 = vmatprep.subr.mxu0 0.0
      %1753 = vmatpush1.xpose.msra.mxu0 0.0
      %1754 = vmatprep.subr.mxu0 0.0
      %1755 = vmatpush1.xpose.msra.mxu0 0.0
      %1756 = vmatprep.subr.mxu0 0.0
      %1757 = vmatpush1.xpose.msra.mxu0 0.0
      %1758 = vmatprep.subr.mxu0 0.0
      %1759 = vmatpush1.xpose.msra.mxu0 0.0
      %1760 = vmatprep.subr.mxu0 0.0
      %1761 = vmatpush1.xpose.msra.mxu0 0.0
      %1762 = vmatprep.mubr.f32.mxu0 0.0
      %v1763 = vand.u32 %v1323, 4294901760
      %v1764 = vsub.f32 %v1323, %v1763
      %v1765 = vand.u32 %v1764, 4294901760
      %1766 = vmatmul.mubr.f32.gmra.mrb[0].mxu0 %v1765
      %v1767 = vpop.f32.mrb[0].mxu0
      %v1768 = vadd.f32 %v1662, %v1767
      %v1769 = vpop.f32.mrb[0].mxu0
      %1770 = vmatprep.mubr.f32.mxu0 0.0
      %v1771 = vand.u32 %v1325, 4294901760
      %v1772 = vsub.f32 %v1325, %v1771
      %v1773 = vand.u32 %v1772, 4294901760
      %1774 = vmatmul.mubr.f32.gmra.mrb[0].mxu0 %v1773
      %v1775 = vpop.f32.mrb[0].mxu0
      %v1776 = vadd.f32 %v1669, %v1775
      %v1777 = vpop.f32.mrb[0].mxu0
      %1778 = vmatprep.mubr.f32.mxu0 0.0
      %v1779 = vand.u32 %v1327, 4294901760
      %v1780 = vsub.f32 %v1327, %v1779
      %v1781 = vand.u32 %v1780, 4294901760
      %1782 = vmatmul.mubr.f32.gmra.mrb[0].mxu0 %v1781
      %v1783 = vpop.f32.mrb[0].mxu0
      %v1784 = vadd.f32 %v1676, %v1783
      %v1785 = vpop.f32.mrb[0].mxu0
      %1786 = vmatprep.mubr.f32.mxu0 0.0
      %v1787 = vand.u32 %v1329, 4294901760
      %v1788 = vsub.f32 %v1329, %v1787
      %v1789 = vand.u32 %v1788, 4294901760
      %1790 = vmatmul.mubr.f32.gmra.mrb[0].mxu0 %v1789
      %v1791 = vpop.f32.mrb[0].mxu0
      %v1792 = vadd.f32 %v1683, %v1791
      %v1793 = vpop.f32.mrb[0].mxu0
      %1794 = vmatprep.mubr.f32.mxu0 0.0
      %v1795 = vand.u32 %v1331, 4294901760
      %v1796 = vsub.f32 %v1331, %v1795
      %v1797 = vand.u32 %v1796, 4294901760
      %1798 = vmatmul.mubr.f32.gmra.mrb[0].mxu0 %v1797
      %v1799 = vpop.f32.mrb[0].mxu0
      %v1800 = vadd.f32 %v1690, %v1799
      %v1801 = vpop.f32.mrb[0].mxu0
      %1802 = vdwg.mxu0
      %1803 = vmatprep.subr.mxu0 0.0
      %v1804 = vand.u32 %v1333, 4294901760
      %v1805 = vsub.f32 %v1333, %v1804
      %v1806 = vand.u32 %v1805, 4294901760
      %1807 = vmatpush1.xpose.msra.mxu0 %v1806
      %1808 = vmatprep.subr.mxu0 0.0
      %v1809 = vand.u32 %v1335, 4294901760
      %v1810 = vsub.f32 %v1335, %v1809
      %v1811 = vand.u32 %v1810, 4294901760
      %1812 = vmatpush1.xpose.msra.mxu0 %v1811
      %1813 = vmatprep.subr.mxu0 0.0
      %v1814 = vand.u32 %v1337, 4294901760
      %v1815 = vsub.f32 %v1337, %v1814
      %v1816 = vand.u32 %v1815, 4294901760
      %1817 = vmatpush1.xpose.msra.mxu0 %v1816
      %1818 = vmatprep.subr.mxu0 0.0
      %v1819 = vand.u32 %v1339, 4294901760
      %v1820 = vsub.f32 %v1339, %v1819
      %v1821 = vand.u32 %v1820, 4294901760
      %1822 = vmatpush1.xpose.msra.mxu0 %v1821
      %1823 = vmatprep.subr.mxu0 0.0
      %v1824 = vand.u32 %v1341, 4294901760
      %v1825 = vsub.f32 %v1341, %v1824
      %v1826 = vand.u32 %v1825, 4294901760
      %1827 = vmatpush1.xpose.msra.mxu0 %v1826
      %1828 = vmatprep.subr.mxu0 0.0
      %1829 = vmatpush1.xpose.msra.mxu0 0.0
      %1830 = vmatprep.subr.mxu0 0.0
      %1831 = vmatpush1.xpose.msra.mxu0 0.0
      %1832 = vmatprep.subr.mxu0 0.0
      %1833 = vmatpush1.xpose.msra.mxu0 0.0
      %1834 = vmatprep.subr.mxu0 0.0
      %1835 = vmatpush1.xpose.msra.mxu0 0.0
      %1836 = vmatprep.subr.mxu0 0.0
      %1837 = vmatpush1.xpose.msra.mxu0 0.0
      %1838 = vmatprep.subr.mxu0 0.0
      %1839 = vmatpush1.xpose.msra.mxu0 0.0
      %1840 = vmatprep.subr.mxu0 0.0
      %1841 = vmatpush1.xpose.msra.mxu0 0.0
      %1842 = vmatprep.subr.mxu0 0.0
      %1843 = vmatpush1.xpose.msra.mxu0 0.0
      %1844 = vmatprep.subr.mxu0 0.0
      %1845 = vmatpush1.xpose.msra.mxu0 0.0
      %1846 = vmatprep.subr.mxu0 0.0
      %1847 = vmatpush1.xpose.msra.mxu0 0.0
      %1848 = vmatprep.subr.mxu0 0.0
      %1849 = vmatpush1.xpose.msra.mxu0 0.0
      %1850 = vmatprep.subr.mxu0 0.0
      %1851 = vmatpush1.xpose.msra.mxu0 0.0
      %1852 = vmatprep.subr.mxu0 0.0
      %1853 = vmatpush1.xpose.msra.mxu0 0.0
      %1854 = vmatprep.subr.mxu0 0.0
      %1855 = vmatpush1.xpose.msra.mxu0 0.0
      %1856 = vmatprep.subr.mxu0 0.0
      %1857 = vmatpush1.xpose.msra.mxu0 0.0
      %1858 = vmatprep.subr.mxu0 0.0
      %1859 = vmatpush1.xpose.msra.mxu0 0.0
      %1860 = vmatprep.subr.mxu0 0.0
      %1861 = vmatpush1.xpose.msra.mxu0 0.0
      %1862 = vmatprep.subr.mxu0 0.0
      %1863 = vmatpush1.xpose.msra.mxu0 0.0
      %1864 = vmatprep.subr.mxu0 0.0
      %1865 = vmatpush1.xpose.msra.mxu0 0.0
      %1866 = vmatprep.subr.mxu0 0.0
      %1867 = vmatpush1.xpose.msra.mxu0 0.0
      %1868 = vmatprep.subr.mxu0 0.0
      %1869 = vmatpush1.xpose.msra.mxu0 0.0
      %1870 = vmatprep.subr.mxu0 0.0
      %1871 = vmatpush1.xpose.msra.mxu0 0.0
      %1872 = vmatprep.subr.mxu0 0.0
      %1873 = vmatpush1.xpose.msra.mxu0 0.0
      %1874 = vmatprep.subr.mxu0 0.0
      %1875 = vmatpush1.xpose.msra.mxu0 0.0
      %1876 = vmatprep.subr.mxu0 0.0
      %1877 = vmatpush1.xpose.msra.mxu0 0.0
      %1878 = vmatprep.subr.mxu0 0.0
      %1879 = vmatpush1.xpose.msra.mxu0 0.0
      %1880 = vmatprep.subr.mxu0 0.0
      %1881 = vmatpush1.xpose.msra.mxu0 0.0
      %1882 = vmatprep.mubr.f32.mxu0 0.0
      %v1883 = vand.u32 %v1323, 4294901760
      %1884 = vmatmul.mubr.f32.gmra.mrb[0].mxu0 %v1883
      %v1885 = vpop.f32.mrb[0].mxu0
      %v1886 = vadd.f32 %v1768, %v1885
      %v1887 = vpop.f32.mrb[0].mxu0
      %1888 = vmatprep.mubr.f32.mxu0 0.0
      %v1889 = vand.u32 %v1325, 4294901760
      %1890 = vmatmul.mubr.f32.gmra.mrb[0].mxu0 %v1889
      %v1891 = vpop.f32.mrb[0].mxu0
      %v1892 = vadd.f32 %v1776, %v1891
      %v1893 = vpop.f32.mrb[0].mxu0
      %1894 = vmatprep.mubr.f32.mxu0 0.0
      %v1895 = vand.u32 %v1327, 4294901760
      %1896 = vmatmul.mubr.f32.gmra.mrb[0].mxu0 %v1895
      %v1897 = vpop.f32.mrb[0].mxu0
      %v1898 = vadd.f32 %v1784, %v1897
      %v1899 = vpop.f32.mrb[0].mxu0
      %1900 = vmatprep.mubr.f32.mxu0 0.0
      %v1901 = vand.u32 %v1329, 4294901760
      %1902 = vmatmul.mubr.f32.gmra.mrb[0].mxu0 %v1901
      %v1903 = vpop.f32.mrb[0].mxu0
      %v1904 = vadd.f32 %v1792, %v1903
      %v1905 = vpop.f32.mrb[0].mxu0
      %1906 = vmatprep.mubr.f32.mxu0 0.0
      %v1907 = vand.u32 %v1331, 4294901760
      %1908 = vmatmul.mubr.f32.gmra.mrb[0].mxu0 %v1907
      %v1909 = vpop.f32.mrb[0].mxu0
      %v1910 = vadd.f32 %v1800, %v1909
      %v1911 = vpop.f32.mrb[0].mxu0
      %1912 = vdwg.mxu0
      %1913 = vmatprep.subr.mxu0 0.0
      %v1914 = vand.u32 %v1333, 4294901760
      %1915 = vmatpush1.xpose.msra.mxu0 %v1914
      %1916 = vmatprep.subr.mxu0 0.0
      %v1917 = vand.u32 %v1335, 4294901760
      %1918 = vmatpush1.xpose.msra.mxu0 %v1917
      %1919 = vmatprep.subr.mxu0 0.0
      %v1920 = vand.u32 %v1337, 4294901760
      %1921 = vmatpush1.xpose.msra.mxu0 %v1920
      %1922 = vmatprep.subr.mxu0 0.0
      %v1923 = vand.u32 %v1339, 4294901760
      %1924 = vmatpush1.xpose.msra.mxu0 %v1923
      %1925 = vmatprep.subr.mxu0 0.0
      %v1926 = vand.u32 %v1341, 4294901760
      %1927 = vmatpush1.xpose.msra.mxu0 %v1926
      %1928 = vmatprep.subr.mxu0 0.0
      %1929 = vmatpush1.xpose.msra.mxu0 0.0
      %1930 = vmatprep.subr.mxu0 0.0
      %1931 = vmatpush1.xpose.msra.mxu0 0.0
      %1932 = vmatprep.subr.mxu0 0.0
      %1933 = vmatpush1.xpose.msra.mxu0 0.0
      %1934 = vmatprep.subr.mxu0 0.0
      %1935 = vmatpush1.xpose.msra.mxu0 0.0
      %1936 = vmatprep.subr.mxu0 0.0
      %1937 = vmatpush1.xpose.msra.mxu0 0.0
      %1938 = vmatprep.subr.mxu0 0.0
      %1939 = vmatpush1.xpose.msra.mxu0 0.0
      %1940 = vmatprep.subr.mxu0 0.0
      %1941 = vmatpush1.xpose.msra.mxu0 0.0
      %1942 = vmatprep.subr.mxu0 0.0
      %1943 = vmatpush1.xpose.msra.mxu0 0.0
      %1944 = vmatprep.subr.mxu0 0.0
      %1945 = vmatpush1.xpose.msra.mxu0 0.0
      %1946 = vmatprep.subr.mxu0 0.0
      %1947 = vmatpush1.xpose.msra.mxu0 0.0
      %1948 = vmatprep.subr.mxu0 0.0
      %1949 = vmatpush1.xpose.msra.mxu0 0.0
      %1950 = vmatprep.subr.mxu0 0.0
      %1951 = vmatpush1.xpose.msra.mxu0 0.0
      %1952 = vmatprep.subr.mxu0 0.0
      %1953 = vmatpush1.xpose.msra.mxu0 0.0
      %1954 = vmatprep.subr.mxu0 0.0
      %1955 = vmatpush1.xpose.msra.mxu0 0.0
      %1956 = vmatprep.subr.mxu0 0.0
      %1957 = vmatpush1.xpose.msra.mxu0 0.0
      %1958 = vmatprep.subr.mxu0 0.0
      %1959 = vmatpush1.xpose.msra.mxu0 0.0
      %1960 = vmatprep.subr.mxu0 0.0
      %1961 = vmatpush1.xpose.msra.mxu0 0.0
      %1962 = vmatprep.subr.mxu0 0.0
      %1963 = vmatpush1.xpose.msra.mxu0 0.0
      %1964 = vmatprep.subr.mxu0 0.0
      %1965 = vmatpush1.xpose.msra.mxu0 0.0
      %1966 = vmatprep.subr.mxu0 0.0
      %1967 = vmatpush1.xpose.msra.mxu0 0.0
      %1968 = vmatprep.subr.mxu0 0.0
      %1969 = vmatpush1.xpose.msra.mxu0 0.0
      %1970 = vmatprep.subr.mxu0 0.0
      %1971 = vmatpush1.xpose.msra.mxu0 0.0
      %1972 = vmatprep.subr.mxu0 0.0
      %1973 = vmatpush1.xpose.msra.mxu0 0.0
      %1974 = vmatprep.subr.mxu0 0.0
      %1975 = vmatpush1.xpose.msra.mxu0 0.0
      %1976 = vmatprep.subr.mxu0 0.0
      %1977 = vmatpush1.xpose.msra.mxu0 0.0
      %1978 = vmatprep.subr.mxu0 0.0
      %1979 = vmatpush1.xpose.msra.mxu0 0.0
      %1980 = vmatprep.subr.mxu0 0.0
      %1981 = vmatpush1.xpose.msra.mxu0 0.0
      %1982 = vmatprep.mubr.f32.mxu0 0.0
      %v1983 = vand.u32 %v1323, 4294901760
      %1984 = vmatmul.mubr.f32.gmra.mrb[0].mxu0 %v1983
      %v1985 = vpop.f32.mrb[0].mxu0
      %v1986 = vadd.f32 %v1886, %v1985
      %v1987 = vpop.f32.mrb[0].mxu0
      %1988 = vmatprep.mubr.f32.mxu0 0.0
      %v1989 = vand.u32 %v1325, 4294901760
      %1990 = vmatmul.mubr.f32.gmra.mrb[0].mxu0 %v1989
      %v1991 = vpop.f32.mrb[0].mxu0
      %v1992 = vadd.f32 %v1892, %v1991
      %v1993 = vpop.f32.mrb[0].mxu0
      %1994 = vmatprep.mubr.f32.mxu0 0.0
      %v1995 = vand.u32 %v1327, 4294901760
      %1996 = vmatmul.mubr.f32.gmra.mrb[0].mxu0 %v1995
      %v1997 = vpop.f32.mrb[0].mxu0
      %v1998 = vadd.f32 %v1898, %v1997
      %v1999 = vpop.f32.mrb[0].mxu0
      %2000 = vmatprep.mubr.f32.mxu0 0.0
      %v2001 = vand.u32 %v1329, 4294901760
      %2002 = vmatmul.mubr.f32.gmra.mrb[0].mxu0 %v2001
      %v2003 = vpop.f32.mrb[0].mxu0
      %v2004 = vadd.f32 %v1904, %v2003
      %v2005 = vpop.f32.mrb[0].mxu0
      %2006 = vmatprep.mubr.f32.mxu0 0.0
      %v2007 = vand.u32 %v1331, 4294901760
      %2008 = vmatmul.mubr.f32.gmra.mrb[0].mxu0 %v2007
      %v2009 = vpop.f32.mrb[0].mxu0
      %v2010 = vadd.f32 %v1910, %v2009
      %v2011 = vpop.f32.mrb[0].mxu0
      %2012 = vdwg.mxu0
      %v2013 = vmul.f32 %v1986, 0.5
      %v2014 = vmul.f32 %v1992, 0.5
      %v2015 = vmul.f32 %v1998, 0.5
      %v2016 = vmul.f32 %v2004, 0.5
      %v2017 = vmul.f32 %v2010, 0.5
      %v2018 = vadd.f32 %v2013, %v1302
      %v2019 = vadd.f32 %v2014, %v1303
      %v2020 = vadd.f32 %v2015, %v1304
      %v2021 = vadd.f32 %v2016, %v1305
      %v2022 = vadd.f32 %v2017, %v1306
      %vm2023 = vcmask 293888
      %v2024 = vsel %vm2023, %v2018, -inf
      %2025 = vmax.xlane.f32.xlu0 %v2024
      %v2026 = vpop.xlane.xlu0 %2025
      %v2027 = vsel %vm2023, %v2019, -inf
      %2028 = vmax.xlane.f32.xlu0 %v2027
      %v2029 = vpop.xlane.xlu0 %2028
      %v2030 = vsel %vm2023, %v2020, -inf
      %2031 = vmax.xlane.f32.xlu0 %v2030
      %v2032 = vpop.xlane.xlu0 %2031
      %v2033 = vsel %vm2023, %v2021, -inf
      %2034 = vmax.xlane.f32.xlu0 %v2033
      %v2035 = vpop.xlane.xlu0 %2034
      %vm2036 = vcmask 289792
      %v2037 = vsel %vm2036, %v2022, -inf
      %2038 = vmax.xlane.f32.xlu0 %v2037
      %v2039 = vpop.xlane.xlu0 %2038
      %v2040 = vsub.f32 %v2018, %v2026
      %v2041 = vsub.f32 %v2019, %v2029
      %v2042 = vsub.f32 %v2020, %v2032
      %v2043 = vsub.f32 %v2021, %v2035
      %v2044 = vsub.f32 %v2022, %v2039
      %v2045 = vmul.f32 %v2040, 1.442695
      %v2046 = vpow.pop %v2045
      %v2047 = vmul.f32 %v2041, 1.442695
      %v2048 = vpow.pop %v2047
      %v2049 = vmul.f32 %v2042, 1.442695
      %v2050 = vpow.pop %v2049
      %v2051 = vmul.f32 %v2043, 1.442695
      %v2052 = vpow.pop %v2051
      %v2053 = vmul.f32 %v2044, 1.442695
      %v2054 = vpow.pop %v2053
      %v2055 = vsel %vm2023, %v2046, 0.0
      %2056 = vadd.xlane.f32.xlu0 %v2055
      %v2057 = vpop.xlane.xlu0 %2056
      %v2058 = vsel %vm2023, %v2048, 0.0
      %2059 = vadd.xlane.f32.xlu0 %v2058
      %v2060 = vpop.xlane.xlu0 %2059
      %v2061 = vsel %vm2023, %v2050, 0.0
      %2062 = vadd.xlane.f32.xlu0 %v2061
      %v2063 = vpop.xlane.xlu0 %2062
      %v2064 = vsel %vm2023, %v2052, 0.0
      %2065 = vadd.xlane.f32.xlu0 %v2064
      %v2066 = vpop.xlane.xlu0 %2065
      %v2067 = vsel %vm2036, %v2054, 0.0
      %2068 = vadd.xlane.f32.xlu0 %v2067
      %v2069 = vpop.xlane.xlu0 %2068
      %v2070 = vrcp.pop %v2057
      %v2071 = vmul.f32 %v2046, %v2070
      %v2072 = vrcp.pop %v2060
      %v2073 = vmul.f32 %v2048, %v2072
      %v2074 = vrcp.pop %v2063
      %v2075 = vmul.f32 %v2050, %v2074
      %v2076 = vrcp.pop %v2066
      %v2077 = vmul.f32 %v2052, %v2076
      %v2078 = vrcp.pop %v2069
      %v2079 = vmul.f32 %v2054, %v2078
      %2080 = vrot.lane.b32.xlu0 %v1275, 96
      %v2081 = vpop.permute.xlu0 %2080
      %2082 = vrot.lane.b32.xlu0 %v1281, 96
      %v2083 = vpop.permute.xlu0 %2082
      %2084 = vrot.lane.b32.xlu0 %v1287, 96
      %v2085 = vpop.permute.xlu0 %2084
      %2086 = vrot.lane.b32.xlu0 %v1293, 96
      %v2087 = vpop.permute.xlu0 %2086
      %2088 = vrot.lane.b32.xlu0 %v1299, 96
      %v2089 = vpop.permute.xlu0 %2088
      %v2095 = vsel %vm2023, %v2071, 0
      %v2098 = vsel %vm2023, %v2073, 0
      %v2101 = vsel %vm2023, %v2075, 0
      %v2104 = vsel %vm2023, %v2077, 0
      %v2107 = vsel %vm2023, %v2079, 0
      %vm2109 = vcmask 1043456
      %v2110 = vsel %vm2109, %v2089, 0
      %2112 = vmatprep.subr.mxu0 0.0
      %v2113 = vand.u32 %v2081, 4294901760
      %2114 = vmatpush1.msra.mxu0 %v2113
      %2115 = vmatprep.subr.mxu0 0.0
      %v2116 = vand.u32 %v2083, 4294901760
      %2117 = vmatpush1.msra.mxu0 %v2116
      %2118 = vmatprep.subr.mxu0 0.0
      %v2119 = vand.u32 %v2085, 4294901760
      %2120 = vmatpush1.msra.mxu0 %v2119
      %2121 = vmatprep.subr.mxu0 0.0
      %v2122 = vand.u32 %v2087, 4294901760
      %2123 = vmatpush1.msra.mxu0 %v2122
      %2124 = vmatprep.subr.mxu0 0.0
      %v2125 = vand.u32 %v2110, 4294901760
      %2126 = vmatpush1.msra.mxu0 %v2125
      %2127 = vmatprep.subr.mxu0 0.0
      %2128 = vmatpush1.msra.mxu0 0.0
      %2129 = vmatprep.subr.mxu0 0.0
      %2130 = vmatpush1.msra.mxu0 0.0
      %2131 = vmatprep.subr.mxu0 0.0
      %2132 = vmatpush1.msra.mxu0 0.0
      %2133 = vmatprep.subr.mxu0 0.0
      %2134 = vmatpush1.msra.mxu0 0.0
      %2135 = vmatprep.subr.mxu0 0.0
      %2136 = vmatpush1.msra.mxu0 0.0
      %2137 = vmatprep.subr.mxu0 0.0
      %2138 = vmatpush1.msra.mxu0 0.0
      %2139 = vmatprep.subr.mxu0 0.0
      %2140 = vmatpush1.msra.mxu0 0.0
      %2141 = vmatprep.subr.mxu0 0.0
      %2142 = vmatpush1.msra.mxu0 0.0
      %2143 = vmatprep.subr.mxu0 0.0
      %2144 = vmatpush1.msra.mxu0 0.0
      %2145 = vmatprep.subr.mxu0 0.0
      %2146 = vmatpush1.msra.mxu0 0.0
      %2147 = vmatprep.subr.mxu0 0.0
      %2148 = vmatpush1.msra.mxu0 0.0
      %2149 = vmatprep.subr.mxu0 0.0
      %2150 = vmatpush1.msra.mxu0 0.0
      %2151 = vmatprep.subr.mxu0 0.0
      %2152 = vmatpush1.msra.mxu0 0.0
      %2153 = vmatprep.subr.mxu0 0.0
      %2154 = vmatpush1.msra.mxu0 0.0
      %2155 = vmatprep.subr.mxu0 0.0
      %2156 = vmatpush1.msra.mxu0 0.0
      %2157 = vmatprep.subr.mxu0 0.0
      %2158 = vmatpush1.msra.mxu0 0.0
      %2159 = vmatprep.subr.mxu0 0.0
      %2160 = vmatpush1.msra.mxu0 0.0
      %2161 = vmatprep.subr.mxu0 0.0
      %2162 = vmatpush1.msra.mxu0 0.0
      %2163 = vmatprep.subr.mxu0 0.0
      %2164 = vmatpush1.msra.mxu0 0.0
      %2165 = vmatprep.subr.mxu0 0.0
      %2166 = vmatpush1.msra.mxu0 0.0
      %2167 = vmatprep.subr.mxu0 0.0
      %2168 = vmatpush1.msra.mxu0 0.0
      %2169 = vmatprep.subr.mxu0 0.0
      %2170 = vmatpush1.msra.mxu0 0.0
      %2171 = vmatprep.subr.mxu0 0.0
      %2172 = vmatpush1.msra.mxu0 0.0
      %2173 = vmatprep.subr.mxu0 0.0
      %2174 = vmatpush1.msra.mxu0 0.0
      %2175 = vmatprep.subr.mxu0 0.0
      %2176 = vmatpush1.msra.mxu0 0.0
      %2177 = vmatprep.subr.mxu0 0.0
      %2178 = vmatpush1.msra.mxu0 0.0
      %2179 = vmatprep.subr.mxu0 0.0
      %2180 = vmatpush1.msra.mxu0 0.0
      %2181 = vmatprep.mubr.f32.mxu0 0.0
      %v2182 = vand.u32 %v2095, 4294901760
      %v2183 = vsub.f32 %v2095, %v2182
      %v2184 = vand.u32 %v2183, 4294901760
      %v2185 = vsub.f32 %v2183, %v2184
      %v2186 = vand.u32 %v2185, 4294901760
      %2187 = vmatmul.mubr.f32.gmra.mrb[0].mxu0 %v2186
      %v2188 = vpop.f32.mrb[0].mxu0
      %v2189 = vadd.f32 0.0, %v2188
      %v2190 = vpop.f32.mrb[0].mxu0
      %2191 = vmatprep.mubr.f32.mxu0 0.0
      %v2192 = vand.u32 %v2098, 4294901760
      %v2193 = vsub.f32 %v2098, %v2192
      %v2194 = vand.u32 %v2193, 4294901760
      %v2195 = vsub.f32 %v2193, %v2194
      %v2196 = vand.u32 %v2195, 4294901760
      %2197 = vmatmul.mubr.f32.gmra.mrb[0].mxu0 %v2196
      %v2198 = vpop.f32.mrb[0].mxu0
      %v2199 = vadd.f32 0.0, %v2198
      %v2200 = vpop.f32.mrb[0].mxu0
      %2201 = vmatprep.mubr.f32.mxu0 0.0
      %v2202 = vand.u32 %v2101, 4294901760
      %v2203 = vsub.f32 %v2101, %v2202
      %v2204 = vand.u32 %v2203, 4294901760
      %v2205 = vsub.f32 %v2203, %v2204
      %v2206 = vand.u32 %v2205, 4294901760
      %2207 = vmatmul.mubr.f32.gmra.mrb[0].mxu0 %v2206
      %v2208 = vpop.f32.mrb[0].mxu0
      %v2209 = vadd.f32 0.0, %v2208
      %v2210 = vpop.f32.mrb[0].mxu0
      %2211 = vmatprep.mubr.f32.mxu0 0.0
      %v2212 = vand.u32 %v2104, 4294901760
      %v2213 = vsub.f32 %v2104, %v2212
      %v2214 = vand.u32 %v2213, 4294901760
      %v2215 = vsub.f32 %v2213, %v2214
      %v2216 = vand.u32 %v2215, 4294901760
      %2217 = vmatmul.mubr.f32.gmra.mrb[0].mxu0 %v2216
      %v2218 = vpop.f32.mrb[0].mxu0
      %v2219 = vadd.f32 0.0, %v2218
      %v2220 = vpop.f32.mrb[0].mxu0
      %2221 = vmatprep.mubr.f32.mxu0 0.0
      %v2222 = vand.u32 %v2107, 4294901760
      %v2223 = vsub.f32 %v2107, %v2222
      %v2224 = vand.u32 %v2223, 4294901760
      %v2225 = vsub.f32 %v2223, %v2224
      %v2226 = vand.u32 %v2225, 4294901760
      %2227 = vmatmul.mubr.f32.gmra.mrb[0].mxu0 %v2226
      %v2228 = vpop.f32.mrb[0].mxu0
      %v2229 = vadd.f32 0.0, %v2228
      %v2230 = vpop.f32.mrb[0].mxu0
      %2231 = vdwg.mxu0
      %2232 = vmatprep.subr.mxu0 0.0
      %v2233 = vand.u32 %v2081, 4294901760
      %v2234 = vsub.f32 %v2081, %v2233
      %v2235 = vand.u32 %v2234, 4294901760
      %v2236 = vsub.f32 %v2234, %v2235
      %v2237 = vand.u32 %v2236, 4294901760
      %2238 = vmatpush1.msra.mxu0 %v2237
      %2239 = vmatprep.subr.mxu0 0.0
      %v2240 = vand.u32 %v2083, 4294901760
      %v2241 = vsub.f32 %v2083, %v2240
      %v2242 = vand.u32 %v2241, 4294901760
      %v2243 = vsub.f32 %v2241, %v2242
      %v2244 = vand.u32 %v2243, 4294901760
      %2245 = vmatpush1.msra.mxu0 %v2244
      %2246 = vmatprep.subr.mxu0 0.0
      %v2247 = vand.u32 %v2085, 4294901760
      %v2248 = vsub.f32 %v2085, %v2247
      %v2249 = vand.u32 %v2248, 4294901760
      %v2250 = vsub.f32 %v2248, %v2249
      %v2251 = vand.u32 %v2250, 4294901760
      %2252 = vmatpush1.msra.mxu0 %v2251
      %2253 = vmatprep.subr.mxu0 0.0
      %v2254 = vand.u32 %v2087, 4294901760
      %v2255 = vsub.f32 %v2087, %v2254
      %v2256 = vand.u32 %v2255, 4294901760
      %v2257 = vsub.f32 %v2255, %v2256
      %v2258 = vand.u32 %v2257, 4294901760
      %2259 = vmatpush1.msra.mxu0 %v2258
      %2260 = vmatprep.subr.mxu0 0.0
      %v2261 = vand.u32 %v2110, 4294901760
      %v2262 = vsub.f32 %v2110, %v2261
      %v2263 = vand.u32 %v2262, 4294901760
      %v2264 = vsub.f32 %v2262, %v2263
      %v2265 = vand.u32 %v2264, 4294901760
      %2266 = vmatpush1.msra.mxu0 %v2265
      %2267 = vmatprep.subr.mxu0 0.0
      %2268 = vmatpush1.msra.mxu0 0.0
      %2269 = vmatprep.subr.mxu0 0.0
      %2270 = vmatpush1.msra.mxu0 0.0
      %2271 = vmatprep.subr.mxu0 0.0
      %2272 = vmatpush1.msra.mxu0 0.0
      %2273 = vmatprep.subr.mxu0 0.0
      %2274 = vmatpush1.msra.mxu0 0.0
      %2275 = vmatprep.subr.mxu0 0.0
      %2276 = vmatpush1.msra.mxu0 0.0
      %2277 = vmatprep.subr.mxu0 0.0
      %2278 = vmatpush1.msra.mxu0 0.0
      %2279 = vmatprep.subr.mxu0 0.0
      %2280 = vmatpush1.msra.mxu0 0.0
      %2281 = vmatprep.subr.mxu0 0.0
      %2282 = vmatpush1.msra.mxu0 0.0
      %2283 = vmatprep.subr.mxu0 0.0
      %2284 = vmatpush1.msra.mxu0 0.0
      %2285 = vmatprep.subr.mxu0 0.0
      %2286 = vmatpush1.msra.mxu0 0.0
      %2287 = vmatprep.subr.mxu0 0.0
      %2288 = vmatpush1.msra.mxu0 0.0
      %2289 = vmatprep.subr.mxu0 0.0
      %2290 = vmatpush1.msra.mxu0 0.0
      %2291 = vmatprep.subr.mxu0 0.0
      %2292 = vmatpush1.msra.mxu0 0.0
      %2293 = vmatprep.subr.mxu0 0.0
      %2294 = vmatpush1.msra.mxu0 0.0
      %2295 = vmatprep.subr.mxu0 0.0
      %2296 = vmatpush1.msra.mxu0 0.0
      %2297 = vmatprep.subr.mxu0 0.0
      %2298 = vmatpush1.msra.mxu0 0.0
      %2299 = vmatprep.subr.mxu0 0.0
      %2300 = vmatpush1.msra.mxu0 0.0
      %2301 = vmatprep.subr.mxu0 0.0
      %2302 = vmatpush1.msra.mxu0 0.0
      %2303 = vmatprep.subr.mxu0 0.0
      %2304 = vmatpush1.msra.mxu0 0.0
      %2305 = vmatprep.subr.mxu0 0.0
      %2306 = vmatpush1.msra.mxu0 0.0
      %2307 = vmatprep.subr.mxu0 0.0
      %2308 = vmatpush1.msra.mxu0 0.0
      %2309 = vmatprep.subr.mxu0 0.0
      %2310 = vmatpush1.msra.mxu0 0.0
      %2311 = vmatprep.subr.mxu0 0.0
      %2312 = vmatpush1.msra.mxu0 0.0
      %2313 = vmatprep.subr.mxu0 0.0
      %2314 = vmatpush1.msra.mxu0 0.0
      %2315 = vmatprep.subr.mxu0 0.0
      %2316 = vmatpush1.msra.mxu0 0.0
      %2317 = vmatprep.subr.mxu0 0.0
      %2318 = vmatpush1.msra.mxu0 0.0
      %2319 = vmatprep.subr.mxu0 0.0
      %2320 = vmatpush1.msra.mxu0 0.0
      %2321 = vmatprep.mubr.f32.mxu0 0.0
      %v2322 = vand.u32 %v2095, 4294901760
      %2323 = vmatmul.mubr.f32.gmra.mrb[0].mxu0 %v2322
      %v2324 = vpop.f32.mrb[0].mxu0
      %v2325 = vadd.f32 %v2189, %v2324
      %v2326 = vpop.f32.mrb[0].mxu0
      %2327 = vmatprep.mubr.f32.mxu0 0.0
      %v2328 = vand.u32 %v2098, 4294901760
      %2329 = vmatmul.mubr.f32.gmra.mrb[0].mxu0 %v2328
      %v2330 = vpop.f32.mrb[0].mxu0
      %v2331 = vadd.f32 %v2199, %v2330
      %v2332 = vpop.f32.mrb[0].mxu0
      %2333 = vmatprep.mubr.f32.mxu0 0.0
      %v2334 = vand.u32 %v2101, 4294901760
      %2335 = vmatmul.mubr.f32.gmra.mrb[0].mxu0 %v2334
      %v2336 = vpop.f32.mrb[0].mxu0
      %v2337 = vadd.f32 %v2209, %v2336
      %v2338 = vpop.f32.mrb[0].mxu0
      %2339 = vmatprep.mubr.f32.mxu0 0.0
      %v2340 = vand.u32 %v2104, 4294901760
      %2341 = vmatmul.mubr.f32.gmra.mrb[0].mxu0 %v2340
      %v2342 = vpop.f32.mrb[0].mxu0
      %v2343 = vadd.f32 %v2219, %v2342
      %v2344 = vpop.f32.mrb[0].mxu0
      %2345 = vmatprep.mubr.f32.mxu0 0.0
      %v2346 = vand.u32 %v2107, 4294901760
      %2347 = vmatmul.mubr.f32.gmra.mrb[0].mxu0 %v2346
      %v2348 = vpop.f32.mrb[0].mxu0
      %v2349 = vadd.f32 %v2229, %v2348
      %v2350 = vpop.f32.mrb[0].mxu0
      %2351 = vdwg.mxu0
      %2352 = vmatprep.subr.mxu0 0.0
      %v2353 = vand.u32 %v2081, 4294901760
      %v2354 = vsub.f32 %v2081, %v2353
      %2355 = vmatpush1.msra.mxu0 %v2354
      %2356 = vmatprep.subr.mxu0 0.0
      %v2357 = vand.u32 %v2083, 4294901760
      %v2358 = vsub.f32 %v2083, %v2357
      %2359 = vmatpush1.msra.mxu0 %v2358
      %2360 = vmatprep.subr.mxu0 0.0
      %v2361 = vand.u32 %v2085, 4294901760
      %v2362 = vsub.f32 %v2085, %v2361
      %2363 = vmatpush1.msra.mxu0 %v2362
      %2364 = vmatprep.subr.mxu0 0.0
      %v2365 = vand.u32 %v2087, 4294901760
      %v2366 = vsub.f32 %v2087, %v2365
      %2367 = vmatpush1.msra.mxu0 %v2366
      %2368 = vmatprep.subr.mxu0 0.0
      %v2369 = vand.u32 %v2110, 4294901760
      %v2370 = vsub.f32 %v2110, %v2369
      %2371 = vmatpush1.msra.mxu0 %v2370
      %2372 = vmatprep.subr.mxu0 0.0
      %2373 = vmatpush1.msra.mxu0 0.0
      %2374 = vmatprep.subr.mxu0 0.0
      %2375 = vmatpush1.msra.mxu0 0.0
      %2376 = vmatprep.subr.mxu0 0.0
      %2377 = vmatpush1.msra.mxu0 0.0
      %2378 = vmatprep.subr.mxu0 0.0
      %2379 = vmatpush1.msra.mxu0 0.0
      %2380 = vmatprep.subr.mxu0 0.0
      %2381 = vmatpush1.msra.mxu0 0.0
      %2382 = vmatprep.subr.mxu0 0.0
      %2383 = vmatpush1.msra.mxu0 0.0
      %2384 = vmatprep.subr.mxu0 0.0
      %2385 = vmatpush1.msra.mxu0 0.0
      %2386 = vmatprep.subr.mxu0 0.0
      %2387 = vmatpush1.msra.mxu0 0.0
      %2388 = vmatprep.subr.mxu0 0.0
      %2389 = vmatpush1.msra.mxu0 0.0
      %2390 = vmatprep.subr.mxu0 0.0
      %2391 = vmatpush1.msra.mxu0 0.0
      %2392 = vmatprep.subr.mxu0 0.0
      %2393 = vmatpush1.msra.mxu0 0.0
      %2394 = vmatprep.subr.mxu0 0.0
      %2395 = vmatpush1.msra.mxu0 0.0
      %2396 = vmatprep.subr.mxu0 0.0
      %2397 = vmatpush1.msra.mxu0 0.0
      %2398 = vmatprep.subr.mxu0 0.0
      %2399 = vmatpush1.msra.mxu0 0.0
      %2400 = vmatprep.subr.mxu0 0.0
      %2401 = vmatpush1.msra.mxu0 0.0
      %2402 = vmatprep.subr.mxu0 0.0
      %2403 = vmatpush1.msra.mxu0 0.0
      %2404 = vmatprep.subr.mxu0 0.0
      %2405 = vmatpush1.msra.mxu0 0.0
      %2406 = vmatprep.subr.mxu0 0.0
      %2407 = vmatpush1.msra.mxu0 0.0
      %2408 = vmatprep.subr.mxu0 0.0
      %2409 = vmatpush1.msra.mxu0 0.0
      %2410 = vmatprep.subr.mxu0 0.0
      %2411 = vmatpush1.msra.mxu0 0.0
      %2412 = vmatprep.subr.mxu0 0.0
      %2413 = vmatpush1.msra.mxu0 0.0
      %2414 = vmatprep.subr.mxu0 0.0
      %2415 = vmatpush1.msra.mxu0 0.0
      %2416 = vmatprep.subr.mxu0 0.0
      %2417 = vmatpush1.msra.mxu0 0.0
      %2418 = vmatprep.subr.mxu0 0.0
      %2419 = vmatpush1.msra.mxu0 0.0
      %2420 = vmatprep.subr.mxu0 0.0
      %2421 = vmatpush1.msra.mxu0 0.0
      %2422 = vmatprep.subr.mxu0 0.0
      %2423 = vmatpush1.msra.mxu0 0.0
      %2424 = vmatprep.subr.mxu0 0.0
      %2425 = vmatpush1.msra.mxu0 0.0
      %2426 = vmatprep.mubr.f32.mxu0 0.0
      %v2427 = vand.u32 %v2095, 4294901760
      %v2428 = vsub.f32 %v2095, %v2427
      %2429 = vmatmul.mubr.f32.gmra.mrb[0].mxu0 %v2428
      %v2430 = vpop.f32.mrb[0].mxu0
      %v2431 = vadd.f32 %v2325, %v2430
      %v2432 = vpop.f32.mrb[0].mxu0
      %2433 = vmatprep.mubr.f32.mxu0 0.0
      %v2434 = vand.u32 %v2098, 4294901760
      %v2435 = vsub.f32 %v2098, %v2434
      %2436 = vmatmul.mubr.f32.gmra.mrb[0].mxu0 %v2435
      %v2437 = vpop.f32.mrb[0].mxu0
      %v2438 = vadd.f32 %v2331, %v2437
      %v2439 = vpop.f32.mrb[0].mxu0
      %2440 = vmatprep.mubr.f32.mxu0 0.0
      %v2441 = vand.u32 %v2101, 4294901760
      %v2442 = vsub.f32 %v2101, %v2441
      %2443 = vmatmul.mubr.f32.gmra.mrb[0].mxu0 %v2442
      %v2444 = vpop.f32.mrb[0].mxu0
      %v2445 = vadd.f32 %v2337, %v2444
      %v2446 = vpop.f32.mrb[0].mxu0
      %2447 = vmatprep.mubr.f32.mxu0 0.0
      %v2448 = vand.u32 %v2104, 4294901760
      %v2449 = vsub.f32 %v2104, %v2448
      %2450 = vmatmul.mubr.f32.gmra.mrb[0].mxu0 %v2449
      %v2451 = vpop.f32.mrb[0].mxu0
      %v2452 = vadd.f32 %v2343, %v2451
      %v2453 = vpop.f32.mrb[0].mxu0
      %2454 = vmatprep.mubr.f32.mxu0 0.0
      %v2455 = vand.u32 %v2107, 4294901760
      %v2456 = vsub.f32 %v2107, %v2455
      %2457 = vmatmul.mubr.f32.gmra.mrb[0].mxu0 %v2456
      %v2458 = vpop.f32.mrb[0].mxu0
      %v2459 = vadd.f32 %v2349, %v2458
      %v2460 = vpop.f32.mrb[0].mxu0
      %2461 = vdwg.mxu0
      %2462 = vmatprep.subr.mxu0 0.0
      %v2463 = vand.u32 %v2081, 4294901760
      %2464 = vmatpush1.msra.mxu0 %v2463
      %2465 = vmatprep.subr.mxu0 0.0
      %v2466 = vand.u32 %v2083, 4294901760
      %2467 = vmatpush1.msra.mxu0 %v2466
      %2468 = vmatprep.subr.mxu0 0.0
      %v2469 = vand.u32 %v2085, 4294901760
      %2470 = vmatpush1.msra.mxu0 %v2469
      %2471 = vmatprep.subr.mxu0 0.0
      %v2472 = vand.u32 %v2087, 4294901760
      %2473 = vmatpush1.msra.mxu0 %v2472
      %2474 = vmatprep.subr.mxu0 0.0
      %v2475 = vand.u32 %v2110, 4294901760
      %2476 = vmatpush1.msra.mxu0 %v2475
      %2477 = vmatprep.subr.mxu0 0.0
      %2478 = vmatpush1.msra.mxu0 0.0
      %2479 = vmatprep.subr.mxu0 0.0
      %2480 = vmatpush1.msra.mxu0 0.0
      %2481 = vmatprep.subr.mxu0 0.0
      %2482 = vmatpush1.msra.mxu0 0.0
      %2483 = vmatprep.subr.mxu0 0.0
      %2484 = vmatpush1.msra.mxu0 0.0
      %2485 = vmatprep.subr.mxu0 0.0
      %2486 = vmatpush1.msra.mxu0 0.0
      %2487 = vmatprep.subr.mxu0 0.0
      %2488 = vmatpush1.msra.mxu0 0.0
      %2489 = vmatprep.subr.mxu0 0.0
      %2490 = vmatpush1.msra.mxu0 0.0
      %2491 = vmatprep.subr.mxu0 0.0
      %2492 = vmatpush1.msra.mxu0 0.0
      %2493 = vmatprep.subr.mxu0 0.0
      %2494 = vmatpush1.msra.mxu0 0.0
      %2495 = vmatprep.subr.mxu0 0.0
      %2496 = vmatpush1.msra.mxu0 0.0
      %2497 = vmatprep.subr.mxu0 0.0
      %2498 = vmatpush1.msra.mxu0 0.0
      %2499 = vmatprep.subr.mxu0 0.0
      %2500 = vmatpush1.msra.mxu0 0.0
      %2501 = vmatprep.subr.mxu0 0.0
      %2502 = vmatpush1.msra.mxu0 0.0
      %2503 = vmatprep.subr.mxu0 0.0
      %2504 = vmatpush1.msra.mxu0 0.0
      %2505 = vmatprep.subr.mxu0 0.0
      %2506 = vmatpush1.msra.mxu0 0.0
      %2507 = vmatprep.subr.mxu0 0.0
      %2508 = vmatpush1.msra.mxu0 0.0
      %2509 = vmatprep.subr.mxu0 0.0
      %2510 = vmatpush1.msra.mxu0 0.0
      %2511 = vmatprep.subr.mxu0 0.0
      %2512 = vmatpush1.msra.mxu0 0.0
      %2513 = vmatprep.subr.mxu0 0.0
      %2514 = vmatpush1.msra.mxu0 0.0
      %2515 = vmatprep.subr.mxu0 0.0
      %2516 = vmatpush1.msra.mxu0 0.0
      %2517 = vmatprep.subr.mxu0 0.0
      %2518 = vmatpush1.msra.mxu0 0.0
      %2519 = vmatprep.subr.mxu0 0.0
      %2520 = vmatpush1.msra.mxu0 0.0
      %2521 = vmatprep.subr.mxu0 0.0
      %2522 = vmatpush1.msra.mxu0 0.0
      %2523 = vmatprep.subr.mxu0 0.0
      %2524 = vmatpush1.msra.mxu0 0.0
      %2525 = vmatprep.subr.mxu0 0.0
      %2526 = vmatpush1.msra.mxu0 0.0
      %2527 = vmatprep.subr.mxu0 0.0
      %2528 = vmatpush1.msra.mxu0 0.0
      %2529 = vmatprep.subr.mxu0 0.0
      %2530 = vmatpush1.msra.mxu0 0.0
      %2531 = vmatprep.mubr.f32.mxu0 0.0
      %v2532 = vand.u32 %v2095, 4294901760
      %v2533 = vsub.f32 %v2095, %v2532
      %v2534 = vand.u32 %v2533, 4294901760
      %2535 = vmatmul.mubr.f32.gmra.mrb[0].mxu0 %v2534
      %v2536 = vpop.f32.mrb[0].mxu0
      %v2537 = vadd.f32 %v2431, %v2536
      %v2538 = vpop.f32.mrb[0].mxu0
      %2539 = vmatprep.mubr.f32.mxu0 0.0
      %v2540 = vand.u32 %v2098, 4294901760
      %v2541 = vsub.f32 %v2098, %v2540
      %v2542 = vand.u32 %v2541, 4294901760
      %2543 = vmatmul.mubr.f32.gmra.mrb[0].mxu0 %v2542
      %v2544 = vpop.f32.mrb[0].mxu0
      %v2545 = vadd.f32 %v2438, %v2544
      %v2546 = vpop.f32.mrb[0].mxu0
      %2547 = vmatprep.mubr.f32.mxu0 0.0
      %v2548 = vand.u32 %v2101, 4294901760
      %v2549 = vsub.f32 %v2101, %v2548
      %v2550 = vand.u32 %v2549, 4294901760
      %2551 = vmatmul.mubr.f32.gmra.mrb[0].mxu0 %v2550
      %v2552 = vpop.f32.mrb[0].mxu0
      %v2553 = vadd.f32 %v2445, %v2552
      %v2554 = vpop.f32.mrb[0].mxu0
      %2555 = vmatprep.mubr.f32.mxu0 0.0
      %v2556 = vand.u32 %v2104, 4294901760
      %v2557 = vsub.f32 %v2104, %v2556
      %v2558 = vand.u32 %v2557, 4294901760
      %2559 = vmatmul.mubr.f32.gmra.mrb[0].mxu0 %v2558
      %v2560 = vpop.f32.mrb[0].mxu0
      %v2561 = vadd.f32 %v2452, %v2560
      %v2562 = vpop.f32.mrb[0].mxu0
      %2563 = vmatprep.mubr.f32.mxu0 0.0
      %v2564 = vand.u32 %v2107, 4294901760
      %v2565 = vsub.f32 %v2107, %v2564
      %v2566 = vand.u32 %v2565, 4294901760
      %2567 = vmatmul.mubr.f32.gmra.mrb[0].mxu0 %v2566
      %v2568 = vpop.f32.mrb[0].mxu0
      %v2569 = vadd.f32 %v2459, %v2568
      %v2570 = vpop.f32.mrb[0].mxu0
      %2571 = vdwg.mxu0
      %2572 = vmatprep.subr.mxu0 0.0
      %v2573 = vand.u32 %v2081, 4294901760
      %v2574 = vsub.f32 %v2081, %v2573
      %v2575 = vand.u32 %v2574, 4294901760
      %2576 = vmatpush1.msra.mxu0 %v2575
      %2577 = vmatprep.subr.mxu0 0.0
      %v2578 = vand.u32 %v2083, 4294901760
      %v2579 = vsub.f32 %v2083, %v2578
      %v2580 = vand.u32 %v2579, 4294901760
      %2581 = vmatpush1.msra.mxu0 %v2580
      %2582 = vmatprep.subr.mxu0 0.0
      %v2583 = vand.u32 %v2085, 4294901760
      %v2584 = vsub.f32 %v2085, %v2583
      %v2585 = vand.u32 %v2584, 4294901760
      %2586 = vmatpush1.msra.mxu0 %v2585
      %2587 = vmatprep.subr.mxu0 0.0
      %v2588 = vand.u32 %v2087, 4294901760
      %v2589 = vsub.f32 %v2087, %v2588
      %v2590 = vand.u32 %v2589, 4294901760
      %2591 = vmatpush1.msra.mxu0 %v2590
      %2592 = vmatprep.subr.mxu0 0.0
      %v2593 = vand.u32 %v2110, 4294901760
      %v2594 = vsub.f32 %v2110, %v2593
      %v2595 = vand.u32 %v2594, 4294901760
      %2596 = vmatpush1.msra.mxu0 %v2595
      %2597 = vmatprep.subr.mxu0 0.0
      %2598 = vmatpush1.msra.mxu0 0.0
      %2599 = vmatprep.subr.mxu0 0.0
      %2600 = vmatpush1.msra.mxu0 0.0
      %2601 = vmatprep.subr.mxu0 0.0
      %2602 = vmatpush1.msra.mxu0 0.0
      %2603 = vmatprep.subr.mxu0 0.0
      %2604 = vmatpush1.msra.mxu0 0.0
      %2605 = vmatprep.subr.mxu0 0.0
      %2606 = vmatpush1.msra.mxu0 0.0
      %2607 = vmatprep.subr.mxu0 0.0
      %2608 = vmatpush1.msra.mxu0 0.0
      %2609 = vmatprep.subr.mxu0 0.0
      %2610 = vmatpush1.msra.mxu0 0.0
      %2611 = vmatprep.subr.mxu0 0.0
      %2612 = vmatpush1.msra.mxu0 0.0
      %2613 = vmatprep.subr.mxu0 0.0
      %2614 = vmatpush1.msra.mxu0 0.0
      %2615 = vmatprep.subr.mxu0 0.0
      %2616 = vmatpush1.msra.mxu0 0.0
      %2617 = vmatprep.subr.mxu0 0.0
      %2618 = vmatpush1.msra.mxu0 0.0
      %2619 = vmatprep.subr.mxu0 0.0
      %2620 = vmatpush1.msra.mxu0 0.0
      %2621 = vmatprep.subr.mxu0 0.0
      %2622 = vmatpush1.msra.mxu0 0.0
      %2623 = vmatprep.subr.mxu0 0.0
      %2624 = vmatpush1.msra.mxu0 0.0
      %2625 = vmatprep.subr.mxu0 0.0
      %2626 = vmatpush1.msra.mxu0 0.0
      %2627 = vmatprep.subr.mxu0 0.0
      %2628 = vmatpush1.msra.mxu0 0.0
      %2629 = vmatprep.subr.mxu0 0.0
      %2630 = vmatpush1.msra.mxu0 0.0
      %2631 = vmatprep.subr.mxu0 0.0
      %2632 = vmatpush1.msra.mxu0 0.0
      %2633 = vmatprep.subr.mxu0 0.0
      %2634 = vmatpush1.msra.mxu0 0.0
      %2635 = vmatprep.subr.mxu0 0.0
      %2636 = vmatpush1.msra.mxu0 0.0
      %2637 = vmatprep.subr.mxu0 0.0
      %2638 = vmatpush1.msra.mxu0 0.0
      %2639 = vmatprep.subr.mxu0 0.0
      %2640 = vmatpush1.msra.mxu0 0.0
      %2641 = vmatprep.subr.mxu0 0.0
      %2642 = vmatpush1.msra.mxu0 0.0
      %2643 = vmatprep.subr.mxu0 0.0
      %2644 = vmatpush1.msra.mxu0 0.0
      %2645 = vmatprep.subr.mxu0 0.0
      %2646 = vmatpush1.msra.mxu0 0.0
      %2647 = vmatprep.subr.mxu0 0.0
      %2648 = vmatpush1.msra.mxu0 0.0
      %2649 = vmatprep.subr.mxu0 0.0
      %2650 = vmatpush1.msra.mxu0 0.0
      %2651 = vmatprep.mubr.f32.mxu0 0.0
      %v2652 = vand.u32 %v2095, 4294901760
      %2653 = vmatmul.mubr.f32.gmra.mrb[0].mxu0 %v2652
      %v2654 = vpop.f32.mrb[0].mxu0
      %v2655 = vadd.f32 %v2537, %v2654
      %v2656 = vpop.f32.mrb[0].mxu0
      %2657 = vmatprep.mubr.f32.mxu0 0.0
      %v2658 = vand.u32 %v2098, 4294901760
      %2659 = vmatmul.mubr.f32.gmra.mrb[0].mxu0 %v2658
      %v2660 = vpop.f32.mrb[0].mxu0
      %v2661 = vadd.f32 %v2545, %v2660
      %v2662 = vpop.f32.mrb[0].mxu0
      %2663 = vmatprep.mubr.f32.mxu0 0.0
      %v2664 = vand.u32 %v2101, 4294901760
      %2665 = vmatmul.mubr.f32.gmra.mrb[0].mxu0 %v2664
      %v2666 = vpop.f32.mrb[0].mxu0
      %v2667 = vadd.f32 %v2553, %v2666
      %v2668 = vpop.f32.mrb[0].mxu0
      %2669 = vmatprep.mubr.f32.mxu0 0.0
      %v2670 = vand.u32 %v2104, 4294901760
      %2671 = vmatmul.mubr.f32.gmra.mrb[0].mxu0 %v2670
      %v2672 = vpop.f32.mrb[0].mxu0
      %v2673 = vadd.f32 %v2561, %v2672
      %v2674 = vpop.f32.mrb[0].mxu0
      %2675 = vmatprep.mubr.f32.mxu0 0.0
      %v2676 = vand.u32 %v2107, 4294901760
      %2677 = vmatmul.mubr.f32.gmra.mrb[0].mxu0 %v2676
      %v2678 = vpop.f32.mrb[0].mxu0
      %v2679 = vadd.f32 %v2569, %v2678
      %v2680 = vpop.f32.mrb[0].mxu0
      %2681 = vdwg.mxu0
      %2682 = vmatprep.subr.mxu0 0.0
      %v2683 = vand.u32 %v2081, 4294901760
      %2684 = vmatpush1.msra.mxu0 %v2683
      %2685 = vmatprep.subr.mxu0 0.0
      %v2686 = vand.u32 %v2083, 4294901760
      %2687 = vmatpush1.msra.mxu0 %v2686
      %2688 = vmatprep.subr.mxu0 0.0
      %v2689 = vand.u32 %v2085, 4294901760
      %2690 = vmatpush1.msra.mxu0 %v2689
      %2691 = vmatprep.subr.mxu0 0.0
      %v2692 = vand.u32 %v2087, 4294901760
      %2693 = vmatpush1.msra.mxu0 %v2692
      %2694 = vmatprep.subr.mxu0 0.0
      %v2695 = vand.u32 %v2110, 4294901760
      %2696 = vmatpush1.msra.mxu0 %v2695
      %2697 = vmatprep.subr.mxu0 0.0
      %2698 = vmatpush1.msra.mxu0 0.0
      %2699 = vmatprep.subr.mxu0 0.0
      %2700 = vmatpush1.msra.mxu0 0.0
      %2701 = vmatprep.subr.mxu0 0.0
      %2702 = vmatpush1.msra.mxu0 0.0
      %2703 = vmatprep.subr.mxu0 0.0
      %2704 = vmatpush1.msra.mxu0 0.0
      %2705 = vmatprep.subr.mxu0 0.0
      %2706 = vmatpush1.msra.mxu0 0.0
      %2707 = vmatprep.subr.mxu0 0.0
      %2708 = vmatpush1.msra.mxu0 0.0
      %2709 = vmatprep.subr.mxu0 0.0
      %2710 = vmatpush1.msra.mxu0 0.0
      %2711 = vmatprep.subr.mxu0 0.0
      %2712 = vmatpush1.msra.mxu0 0.0
      %2713 = vmatprep.subr.mxu0 0.0
      %2714 = vmatpush1.msra.mxu0 0.0
      %2715 = vmatprep.subr.mxu0 0.0
      %2716 = vmatpush1.msra.mxu0 0.0
      %2717 = vmatprep.subr.mxu0 0.0
      %2718 = vmatpush1.msra.mxu0 0.0
      %2719 = vmatprep.subr.mxu0 0.0
      %2720 = vmatpush1.msra.mxu0 0.0
      %2721 = vmatprep.subr.mxu0 0.0
      %2722 = vmatpush1.msra.mxu0 0.0
      %2723 = vmatprep.subr.mxu0 0.0
      %2724 = vmatpush1.msra.mxu0 0.0
      %2725 = vmatprep.subr.mxu0 0.0
      %2726 = vmatpush1.msra.mxu0 0.0
      %2727 = vmatprep.subr.mxu0 0.0
      %2728 = vmatpush1.msra.mxu0 0.0
      %2729 = vmatprep.subr.mxu0 0.0
      %2730 = vmatpush1.msra.mxu0 0.0
      %2731 = vmatprep.subr.mxu0 0.0
      %2732 = vmatpush1.msra.mxu0 0.0
      %2733 = vmatprep.subr.mxu0 0.0
      %2734 = vmatpush1.msra.mxu0 0.0
      %2735 = vmatprep.subr.mxu0 0.0
      %2736 = vmatpush1.msra.mxu0 0.0
      %2737 = vmatprep.subr.mxu0 0.0
      %2738 = vmatpush1.msra.mxu0 0.0
      %2739 = vmatprep.subr.mxu0 0.0
      %2740 = vmatpush1.msra.mxu0 0.0
      %2741 = vmatprep.subr.mxu0 0.0
      %2742 = vmatpush1.msra.mxu0 0.0
      %2743 = vmatprep.subr.mxu0 0.0
      %2744 = vmatpush1.msra.mxu0 0.0
      %2745 = vmatprep.subr.mxu0 0.0
      %2746 = vmatpush1.msra.mxu0 0.0
      %2747 = vmatprep.subr.mxu0 0.0
      %2748 = vmatpush1.msra.mxu0 0.0
      %2749 = vmatprep.subr.mxu0 0.0
      %2750 = vmatpush1.msra.mxu0 0.0
      %2751 = vmatprep.mubr.f32.mxu0 0.0
      %v2752 = vand.u32 %v2095, 4294901760
      %2753 = vmatmul.mubr.f32.gmra.mrb[0].mxu0 %v2752
      %v2754 = vpop.f32.mrb[0].mxu0
      %v2755 = vadd.f32 %v2655, %v2754
      %v2756 = vpop.f32.mrb[0].mxu0
      %2757 = vmatprep.mubr.f32.mxu0 0.0
      %v2758 = vand.u32 %v2098, 4294901760
      %2759 = vmatmul.mubr.f32.gmra.mrb[0].mxu0 %v2758
      %v2760 = vpop.f32.mrb[0].mxu0
      %v2761 = vadd.f32 %v2661, %v2760
      %v2762 = vpop.f32.mrb[0].mxu0
      %2763 = vmatprep.mubr.f32.mxu0 0.0
      %v2764 = vand.u32 %v2101, 4294901760
      %2765 = vmatmul.mubr.f32.gmra.mrb[0].mxu0 %v2764
      %v2766 = vpop.f32.mrb[0].mxu0
      %v2767 = vadd.f32 %v2667, %v2766
      %v2768 = vpop.f32.mrb[0].mxu0
      %2769 = vmatprep.mubr.f32.mxu0 0.0
      %v2770 = vand.u32 %v2104, 4294901760
      %2771 = vmatmul.mubr.f32.gmra.mrb[0].mxu0 %v2770
      %v2772 = vpop.f32.mrb[0].mxu0
      %v2773 = vadd.f32 %v2673, %v2772
      %v2774 = vpop.f32.mrb[0].mxu0
      %2775 = vmatprep.mubr.f32.mxu0 0.0
      %v2776 = vand.u32 %v2107, 4294901760
      %2777 = vmatmul.mubr.f32.gmra.mrb[0].mxu0 %v2776
      %v2778 = vpop.f32.mrb[0].mxu0
      %v2779 = vadd.f32 %v2679, %v2778
      %v2780 = vpop.f32.mrb[0].mxu0
      %2781 = vdwg.mxu0
      %v2782 = vld [vmem:[%s593] sm:$0xf]
      %2783 = vrot.lane.b32.xlu0 %v1275, 124
      %v2784 = vpop.permute.xlu0 %2783
      %2785 = vrot.lane.b32.xlu0 %v1281, 124
      %v2786 = vpop.permute.xlu0 %2785
      %2787 = vrot.lane.b32.xlu0 %v1287, 124
      %v2788 = vpop.permute.xlu0 %2787
      %2789 = vrot.lane.b32.xlu0 %v1293, 124
      %v2790 = vpop.permute.xlu0 %2789
      %2791 = vrot.lane.b32.xlu0 %v1299, 124
      %v2792 = vpop.permute.xlu0 %2791
      %2793 = vrot.lane.b32.xlu0 %v1275, 108
      %v2794 = vpop.permute.xlu0 %2793
      %2795 = vrot.lane.b32.xlu0 %v1281, 108
      %v2796 = vpop.permute.xlu0 %2795
      %2797 = vrot.lane.b32.xlu0 %v1287, 108
      %v2798 = vpop.permute.xlu0 %2797
      %2799 = vrot.lane.b32.xlu0 %v1293, 108
      %v2800 = vpop.permute.xlu0 %2799
      %2801 = vrot.lane.b32.xlu0 %v1299, 108
      %v2802 = vpop.permute.xlu0 %2801
      %v2803 = vsel %vm1322, %v2784, 0
      %v2805 = vsel %vm1322, %v2786, 0
      %v2807 = vsel %vm1322, %v2788, 0
      %v2809 = vsel %vm1322, %v2790, 0
      %v2811 = vsel %vm1322, %v2792, 0
      %v2813 = vsel %vm1322, %v2794, 0
      %v2815 = vsel %vm1322, %v2796, 0
      %v2817 = vsel %vm1322, %v2798, 0
      %v2819 = vsel %vm1322, %v2800, 0
      %v2821 = vsel %vm1322, %v2802, 0
      %2823 = vmatprep.subr.mxu0 0.0
      %v2824 = vand.u32 %v2813, 4294901760
      %2825 = vmatpush1.xpose.msra.mxu0 %v2824
      %2826 = vmatprep.subr.mxu0 0.0
      %v2827 = vand.u32 %v2815, 4294901760
      %2828 = vmatpush1.xpose.msra.mxu0 %v2827
      %2829 = vmatprep.subr.mxu0 0.0
      %v2830 = vand.u32 %v2817, 4294901760
      %2831 = vmatpush1.xpose.msra.mxu0 %v2830
      %2832 = vmatprep.subr.mxu0 0.0
      %v2833 = vand.u32 %v2819, 4294901760
      %2834 = vmatpush1.xpose.msra.mxu0 %v2833
      %2835 = vmatprep.subr.mxu0 0.0
      %v2836 = vand.u32 %v2821, 4294901760
      %2837 = vmatpush1.xpose.msra.mxu0 %v2836
      %2838 = vmatprep.subr.mxu0 0.0
      %2839 = vmatpush1.xpose.msra.mxu0 0.0
      %2840 = vmatprep.subr.mxu0 0.0
      %2841 = vmatpush1.xpose.msra.mxu0 0.0
      %2842 = vmatprep.subr.mxu0 0.0
      %2843 = vmatpush1.xpose.msra.mxu0 0.0
      %2844 = vmatprep.subr.mxu0 0.0
      %2845 = vmatpush1.xpose.msra.mxu0 0.0
      %2846 = vmatprep.subr.mxu0 0.0
      %2847 = vmatpush1.xpose.msra.mxu0 0.0
      %2848 = vmatprep.subr.mxu0 0.0
      %2849 = vmatpush1.xpose.msra.mxu0 0.0
      %2850 = vmatprep.subr.mxu0 0.0
      %2851 = vmatpush1.xpose.msra.mxu0 0.0
      %2852 = vmatprep.subr.mxu0 0.0
      %2853 = vmatpush1.xpose.msra.mxu0 0.0
      %2854 = vmatprep.subr.mxu0 0.0
      %2855 = vmatpush1.xpose.msra.mxu0 0.0
      %2856 = vmatprep.subr.mxu0 0.0
      %2857 = vmatpush1.xpose.msra.mxu0 0.0
      %2858 = vmatprep.subr.mxu0 0.0
      %2859 = vmatpush1.xpose.msra.mxu0 0.0
      %2860 = vmatprep.subr.mxu0 0.0
      %2861 = vmatpush1.xpose.msra.mxu0 0.0
      %2862 = vmatprep.subr.mxu0 0.0
      %2863 = vmatpush1.xpose.msra.mxu0 0.0
      %2864 = vmatprep.subr.mxu0 0.0
      %2865 = vmatpush1.xpose.msra.mxu0 0.0
      %2866 = vmatprep.subr.mxu0 0.0
      %2867 = vmatpush1.xpose.msra.mxu0 0.0
      %2868 = vmatprep.subr.mxu0 0.0
      %2869 = vmatpush1.xpose.msra.mxu0 0.0
      %2870 = vmatprep.subr.mxu0 0.0
      %2871 = vmatpush1.xpose.msra.mxu0 0.0
      %2872 = vmatprep.subr.mxu0 0.0
      %2873 = vmatpush1.xpose.msra.mxu0 0.0
      %2874 = vmatprep.subr.mxu0 0.0
      %2875 = vmatpush1.xpose.msra.mxu0 0.0
      %2876 = vmatprep.subr.mxu0 0.0
      %2877 = vmatpush1.xpose.msra.mxu0 0.0
      %2878 = vmatprep.subr.mxu0 0.0
      %2879 = vmatpush1.xpose.msra.mxu0 0.0
      %2880 = vmatprep.subr.mxu0 0.0
      %2881 = vmatpush1.xpose.msra.mxu0 0.0
      %2882 = vmatprep.subr.mxu0 0.0
      %2883 = vmatpush1.xpose.msra.mxu0 0.0
      %2884 = vmatprep.subr.mxu0 0.0
      %2885 = vmatpush1.xpose.msra.mxu0 0.0
      %2886 = vmatprep.subr.mxu0 0.0
      %2887 = vmatpush1.xpose.msra.mxu0 0.0
      %2888 = vmatprep.subr.mxu0 0.0
      %2889 = vmatpush1.xpose.msra.mxu0 0.0
      %2890 = vmatprep.subr.mxu0 0.0
      %2891 = vmatpush1.xpose.msra.mxu0 0.0
      %2892 = vmatprep.mubr.f32.mxu0 0.0
      %v2893 = vand.u32 %v2803, 4294901760
      %v2894 = vsub.f32 %v2803, %v2893
      %v2895 = vand.u32 %v2894, 4294901760
      %v2896 = vsub.f32 %v2894, %v2895
      %v2897 = vand.u32 %v2896, 4294901760
      %2898 = vmatmul.mubr.f32.gmra.mrb[0].mxu0 %v2897
      %v2899 = vpop.f32.mrb[0].mxu0
      %v2900 = vadd.f32 0.0, %v2899
      %v2901 = vpop.f32.mrb[0].mxu0
      %2902 = vmatprep.mubr.f32.mxu0 0.0
      %v2903 = vand.u32 %v2805, 4294901760
      %v2904 = vsub.f32 %v2805, %v2903
      %v2905 = vand.u32 %v2904, 4294901760
      %v2906 = vsub.f32 %v2904, %v2905
      %v2907 = vand.u32 %v2906, 4294901760
      %2908 = vmatmul.mubr.f32.gmra.mrb[0].mxu0 %v2907
      %v2909 = vpop.f32.mrb[0].mxu0
      %v2910 = vadd.f32 0.0, %v2909
      %v2911 = vpop.f32.mrb[0].mxu0
      %2912 = vmatprep.mubr.f32.mxu0 0.0
      %v2913 = vand.u32 %v2807, 4294901760
      %v2914 = vsub.f32 %v2807, %v2913
      %v2915 = vand.u32 %v2914, 4294901760
      %v2916 = vsub.f32 %v2914, %v2915
      %v2917 = vand.u32 %v2916, 4294901760
      %2918 = vmatmul.mubr.f32.gmra.mrb[0].mxu0 %v2917
      %v2919 = vpop.f32.mrb[0].mxu0
      %v2920 = vadd.f32 0.0, %v2919
      %v2921 = vpop.f32.mrb[0].mxu0
      %2922 = vmatprep.mubr.f32.mxu0 0.0
      %v2923 = vand.u32 %v2809, 4294901760
      %v2924 = vsub.f32 %v2809, %v2923
      %v2925 = vand.u32 %v2924, 4294901760
      %v2926 = vsub.f32 %v2924, %v2925
      %v2927 = vand.u32 %v2926, 4294901760
      %2928 = vmatmul.mubr.f32.gmra.mrb[0].mxu0 %v2927
      %v2929 = vpop.f32.mrb[0].mxu0
      %v2930 = vadd.f32 0.0, %v2929
      %v2931 = vpop.f32.mrb[0].mxu0
      %2932 = vmatprep.mubr.f32.mxu0 0.0
      %v2933 = vand.u32 %v2811, 4294901760
      %v2934 = vsub.f32 %v2811, %v2933
      %v2935 = vand.u32 %v2934, 4294901760
      %v2936 = vsub.f32 %v2934, %v2935
      %v2937 = vand.u32 %v2936, 4294901760
      %2938 = vmatmul.mubr.f32.gmra.mrb[0].mxu0 %v2937
      %v2939 = vpop.f32.mrb[0].mxu0
      %v2940 = vadd.f32 0.0, %v2939
      %v2941 = vpop.f32.mrb[0].mxu0
      %2942 = vdwg.mxu0
      %2943 = vmatprep.subr.mxu0 0.0
      %v2944 = vand.u32 %v2813, 4294901760
      %v2945 = vsub.f32 %v2813, %v2944
      %v2946 = vand.u32 %v2945, 4294901760
      %v2947 = vsub.f32 %v2945, %v2946
      %v2948 = vand.u32 %v2947, 4294901760
      %2949 = vmatpush1.xpose.msra.mxu0 %v2948
      %2950 = vmatprep.subr.mxu0 0.0
      %v2951 = vand.u32 %v2815, 4294901760
      %v2952 = vsub.f32 %v2815, %v2951
      %v2953 = vand.u32 %v2952, 4294901760
      %v2954 = vsub.f32 %v2952, %v2953
      %v2955 = vand.u32 %v2954, 4294901760
      %2956 = vmatpush1.xpose.msra.mxu0 %v2955
      %2957 = vmatprep.subr.mxu0 0.0
      %v2958 = vand.u32 %v2817, 4294901760
      %v2959 = vsub.f32 %v2817, %v2958
      %v2960 = vand.u32 %v2959, 4294901760
      %v2961 = vsub.f32 %v2959, %v2960
      %v2962 = vand.u32 %v2961, 4294901760
      %2963 = vmatpush1.xpose.msra.mxu0 %v2962
      %2964 = vmatprep.subr.mxu0 0.0
      %v2965 = vand.u32 %v2819, 4294901760
      %v2966 = vsub.f32 %v2819, %v2965
      %v2967 = vand.u32 %v2966, 4294901760
      %v2968 = vsub.f32 %v2966, %v2967
      %v2969 = vand.u32 %v2968, 4294901760
      %2970 = vmatpush1.xpose.msra.mxu0 %v2969
      %2971 = vmatprep.subr.mxu0 0.0
      %v2972 = vand.u32 %v2821, 4294901760
      %v2973 = vsub.f32 %v2821, %v2972
      %v2974 = vand.u32 %v2973, 4294901760
      %v2975 = vsub.f32 %v2973, %v2974
      %v2976 = vand.u32 %v2975, 4294901760
      %2977 = vmatpush1.xpose.msra.mxu0 %v2976
      %2978 = vmatprep.subr.mxu0 0.0
      %2979 = vmatpush1.xpose.msra.mxu0 0.0
      %2980 = vmatprep.subr.mxu0 0.0
      %2981 = vmatpush1.xpose.msra.mxu0 0.0
      %2982 = vmatprep.subr.mxu0 0.0
      %2983 = vmatpush1.xpose.msra.mxu0 0.0
      %2984 = vmatprep.subr.mxu0 0.0
      %2985 = vmatpush1.xpose.msra.mxu0 0.0
      %2986 = vmatprep.subr.mxu0 0.0
      %2987 = vmatpush1.xpose.msra.mxu0 0.0
      %2988 = vmatprep.subr.mxu0 0.0
      %2989 = vmatpush1.xpose.msra.mxu0 0.0
      %2990 = vmatprep.subr.mxu0 0.0
      %2991 = vmatpush1.xpose.msra.mxu0 0.0
      %2992 = vmatprep.subr.mxu0 0.0
      %2993 = vmatpush1.xpose.msra.mxu0 0.0
      %2994 = vmatprep.subr.mxu0 0.0
      %2995 = vmatpush1.xpose.msra.mxu0 0.0
      %2996 = vmatprep.subr.mxu0 0.0
      %2997 = vmatpush1.xpose.msra.mxu0 0.0
      %2998 = vmatprep.subr.mxu0 0.0
      %2999 = vmatpush1.xpose.msra.mxu0 0.0
      %3000 = vmatprep.subr.mxu0 0.0
      %3001 = vmatpush1.xpose.msra.mxu0 0.0
      %3002 = vmatprep.subr.mxu0 0.0
      %3003 = vmatpush1.xpose.msra.mxu0 0.0
      %3004 = vmatprep.subr.mxu0 0.0
      %3005 = vmatpush1.xpose.msra.mxu0 0.0
      %3006 = vmatprep.subr.mxu0 0.0
      %3007 = vmatpush1.xpose.msra.mxu0 0.0
      %3008 = vmatprep.subr.mxu0 0.0
      %3009 = vmatpush1.xpose.msra.mxu0 0.0
      %3010 = vmatprep.subr.mxu0 0.0
      %3011 = vmatpush1.xpose.msra.mxu0 0.0
      %3012 = vmatprep.subr.mxu0 0.0
      %3013 = vmatpush1.xpose.msra.mxu0 0.0
      %3014 = vmatprep.subr.mxu0 0.0
      %3015 = vmatpush1.xpose.msra.mxu0 0.0
      %3016 = vmatprep.subr.mxu0 0.0
      %3017 = vmatpush1.xpose.msra.mxu0 0.0
      %3018 = vmatprep.subr.mxu0 0.0
      %3019 = vmatpush1.xpose.msra.mxu0 0.0
      %3020 = vmatprep.subr.mxu0 0.0
      %3021 = vmatpush1.xpose.msra.mxu0 0.0
      %3022 = vmatprep.subr.mxu0 0.0
      %3023 = vmatpush1.xpose.msra.mxu0 0.0
      %3024 = vmatprep.subr.mxu0 0.0
      %3025 = vmatpush1.xpose.msra.mxu0 0.0
      %3026 = vmatprep.subr.mxu0 0.0
      %3027 = vmatpush1.xpose.msra.mxu0 0.0
      %3028 = vmatprep.subr.mxu0 0.0
      %3029 = vmatpush1.xpose.msra.mxu0 0.0
      %3030 = vmatprep.subr.mxu0 0.0
      %3031 = vmatpush1.xpose.msra.mxu0 0.0
      %3032 = vmatprep.mubr.f32.mxu0 0.0
      %v3033 = vand.u32 %v2803, 4294901760
      %3034 = vmatmul.mubr.f32.gmra.mrb[0].mxu0 %v3033
      %v3035 = vpop.f32.mrb[0].mxu0
      %v3036 = vadd.f32 %v2900, %v3035
      %v3037 = vpop.f32.mrb[0].mxu0
      %3038 = vmatprep.mubr.f32.mxu0 0.0
      %v3039 = vand.u32 %v2805, 4294901760
      %3040 = vmatmul.mubr.f32.gmra.mrb[0].mxu0 %v3039
      %v3041 = vpop.f32.mrb[0].mxu0
      %v3042 = vadd.f32 %v2910, %v3041
      %v3043 = vpop.f32.mrb[0].mxu0
      %3044 = vmatprep.mubr.f32.mxu0 0.0
      %v3045 = vand.u32 %v2807, 4294901760
      %3046 = vmatmul.mubr.f32.gmra.mrb[0].mxu0 %v3045
      %v3047 = vpop.f32.mrb[0].mxu0
      %v3048 = vadd.f32 %v2920, %v3047
      %v3049 = vpop.f32.mrb[0].mxu0
      %3050 = vmatprep.mubr.f32.mxu0 0.0
      %v3051 = vand.u32 %v2809, 4294901760
      %3052 = vmatmul.mubr.f32.gmra.mrb[0].mxu0 %v3051
      %v3053 = vpop.f32.mrb[0].mxu0
      %v3054 = vadd.f32 %v2930, %v3053
      %v3055 = vpop.f32.mrb[0].mxu0
      %3056 = vmatprep.mubr.f32.mxu0 0.0
      %v3057 = vand.u32 %v2811, 4294901760
      %3058 = vmatmul.mubr.f32.gmra.mrb[0].mxu0 %v3057
      %v3059 = vpop.f32.mrb[0].mxu0
      %v3060 = vadd.f32 %v2940, %v3059
      %v3061 = vpop.f32.mrb[0].mxu0
      %3062 = vdwg.mxu0
      %3063 = vmatprep.subr.mxu0 0.0
      %v3064 = vand.u32 %v2813, 4294901760
      %v3065 = vsub.f32 %v2813, %v3064
      %3066 = vmatpush1.xpose.msra.mxu0 %v3065
      %3067 = vmatprep.subr.mxu0 0.0
      %v3068 = vand.u32 %v2815, 4294901760
      %v3069 = vsub.f32 %v2815, %v3068
      %3070 = vmatpush1.xpose.msra.mxu0 %v3069
      %3071 = vmatprep.subr.mxu0 0.0
      %v3072 = vand.u32 %v2817, 4294901760
      %v3073 = vsub.f32 %v2817, %v3072
      %3074 = vmatpush1.xpose.msra.mxu0 %v3073
      %3075 = vmatprep.subr.mxu0 0.0
      %v3076 = vand.u32 %v2819, 4294901760
      %v3077 = vsub.f32 %v2819, %v3076
      %3078 = vmatpush1.xpose.msra.mxu0 %v3077
      %3079 = vmatprep.subr.mxu0 0.0
      %v3080 = vand.u32 %v2821, 4294901760
      %v3081 = vsub.f32 %v2821, %v3080
      %3082 = vmatpush1.xpose.msra.mxu0 %v3081
      %3083 = vmatprep.subr.mxu0 0.0
      %3084 = vmatpush1.xpose.msra.mxu0 0.0
      %3085 = vmatprep.subr.mxu0 0.0
      %3086 = vmatpush1.xpose.msra.mxu0 0.0
      %3087 = vmatprep.subr.mxu0 0.0
      %3088 = vmatpush1.xpose.msra.mxu0 0.0
      %3089 = vmatprep.subr.mxu0 0.0
      %3090 = vmatpush1.xpose.msra.mxu0 0.0
      %3091 = vmatprep.subr.mxu0 0.0
      %3092 = vmatpush1.xpose.msra.mxu0 0.0
      %3093 = vmatprep.subr.mxu0 0.0
      %3094 = vmatpush1.xpose.msra.mxu0 0.0
      %3095 = vmatprep.subr.mxu0 0.0
      %3096 = vmatpush1.xpose.msra.mxu0 0.0
      %3097 = vmatprep.subr.mxu0 0.0
      %3098 = vmatpush1.xpose.msra.mxu0 0.0
      %3099 = vmatprep.subr.mxu0 0.0
      %3100 = vmatpush1.xpose.msra.mxu0 0.0
      %3101 = vmatprep.subr.mxu0 0.0
      %3102 = vmatpush1.xpose.msra.mxu0 0.0
      %3103 = vmatprep.subr.mxu0 0.0
      %3104 = vmatpush1.xpose.msra.mxu0 0.0
      %3105 = vmatprep.subr.mxu0 0.0
      %3106 = vmatpush1.xpose.msra.mxu0 0.0
      %3107 = vmatprep.subr.mxu0 0.0
      %3108 = vmatpush1.xpose.msra.mxu0 0.0
      %3109 = vmatprep.subr.mxu0 0.0
      %3110 = vmatpush1.xpose.msra.mxu0 0.0
      %3111 = vmatprep.subr.mxu0 0.0
      %3112 = vmatpush1.xpose.msra.mxu0 0.0
      %3113 = vmatprep.subr.mxu0 0.0
      %3114 = vmatpush1.xpose.msra.mxu0 0.0
      %3115 = vmatprep.subr.mxu0 0.0
      %3116 = vmatpush1.xpose.msra.mxu0 0.0
      %3117 = vmatprep.subr.mxu0 0.0
      %3118 = vmatpush1.xpose.msra.mxu0 0.0
      %3119 = vmatprep.subr.mxu0 0.0
      %3120 = vmatpush1.xpose.msra.mxu0 0.0
      %3121 = vmatprep.subr.mxu0 0.0
      %3122 = vmatpush1.xpose.msra.mxu0 0.0
      %3123 = vmatprep.subr.mxu0 0.0
      %3124 = vmatpush1.xpose.msra.mxu0 0.0
      %3125 = vmatprep.subr.mxu0 0.0
      %3126 = vmatpush1.xpose.msra.mxu0 0.0
      %3127 = vmatprep.subr.mxu0 0.0
      %3128 = vmatpush1.xpose.msra.mxu0 0.0
      %3129 = vmatprep.subr.mxu0 0.0
      %3130 = vmatpush1.xpose.msra.mxu0 0.0
      %3131 = vmatprep.subr.mxu0 0.0
      %3132 = vmatpush1.xpose.msra.mxu0 0.0
      %3133 = vmatprep.subr.mxu0 0.0
      %3134 = vmatpush1.xpose.msra.mxu0 0.0
      %3135 = vmatprep.subr.mxu0 0.0
      %3136 = vmatpush1.xpose.msra.mxu0 0.0
      %3137 = vmatprep.mubr.f32.mxu0 0.0
      %v3138 = vand.u32 %v2803, 4294901760
      %v3139 = vsub.f32 %v2803, %v3138
      %3140 = vmatmul.mubr.f32.gmra.mrb[0].mxu0 %v3139
      %v3141 = vpop.f32.mrb[0].mxu0
      %v3142 = vadd.f32 %v3036, %v3141
      %v3143 = vpop.f32.mrb[0].mxu0
      %3144 = vmatprep.mubr.f32.mxu0 0.0
      %v3145 = vand.u32 %v2805, 4294901760
      %v3146 = vsub.f32 %v2805, %v3145
      %3147 = vmatmul.mubr.f32.gmra.mrb[0].mxu0 %v3146
      %v3148 = vpop.f32.mrb[0].mxu0
      %v3149 = vadd.f32 %v3042, %v3148
      %v3150 = vpop.f32.mrb[0].mxu0
      %3151 = vmatprep.mubr.f32.mxu0 0.0
      %v3152 = vand.u32 %v2807, 4294901760
      %v3153 = vsub.f32 %v2807, %v3152
      %3154 = vmatmul.mubr.f32.gmra.mrb[0].mxu0 %v3153
      %v3155 = vpop.f32.mrb[0].mxu0
      %v3156 = vadd.f32 %v3048, %v3155
      %v3157 = vpop.f32.mrb[0].mxu0
      %3158 = vmatprep.mubr.f32.mxu0 0.0
      %v3159 = vand.u32 %v2809, 4294901760
      %v3160 = vsub.f32 %v2809, %v3159
      %3161 = vmatmul.mubr.f32.gmra.mrb[0].mxu0 %v3160
      %v3162 = vpop.f32.mrb[0].mxu0
      %v3163 = vadd.f32 %v3054, %v3162
      %v3164 = vpop.f32.mrb[0].mxu0
      %3165 = vmatprep.mubr.f32.mxu0 0.0
      %v3166 = vand.u32 %v2811, 4294901760
      %v3167 = vsub.f32 %v2811, %v3166
      %3168 = vmatmul.mubr.f32.gmra.mrb[0].mxu0 %v3167
      %v3169 = vpop.f32.mrb[0].mxu0
      %v3170 = vadd.f32 %v3060, %v3169
      %v3171 = vpop.f32.mrb[0].mxu0
      %3172 = vdwg.mxu0
      %3173 = vmatprep.subr.mxu0 0.0
      %v3174 = vand.u32 %v2813, 4294901760
      %3175 = vmatpush1.xpose.msra.mxu0 %v3174
      %3176 = vmatprep.subr.mxu0 0.0
      %v3177 = vand.u32 %v2815, 4294901760
      %3178 = vmatpush1.xpose.msra.mxu0 %v3177
      %3179 = vmatprep.subr.mxu0 0.0
      %v3180 = vand.u32 %v2817, 4294901760
      %3181 = vmatpush1.xpose.msra.mxu0 %v3180
      %3182 = vmatprep.subr.mxu0 0.0
      %v3183 = vand.u32 %v2819, 4294901760
      %3184 = vmatpush1.xpose.msra.mxu0 %v3183
      %3185 = vmatprep.subr.mxu0 0.0
      %v3186 = vand.u32 %v2821, 4294901760
      %3187 = vmatpush1.xpose.msra.mxu0 %v3186
      %3188 = vmatprep.subr.mxu0 0.0
      %3189 = vmatpush1.xpose.msra.mxu0 0.0
      %3190 = vmatprep.subr.mxu0 0.0
      %3191 = vmatpush1.xpose.msra.mxu0 0.0
      %3192 = vmatprep.subr.mxu0 0.0
      %3193 = vmatpush1.xpose.msra.mxu0 0.0
      %3194 = vmatprep.subr.mxu0 0.0
      %3195 = vmatpush1.xpose.msra.mxu0 0.0
      %3196 = vmatprep.subr.mxu0 0.0
      %3197 = vmatpush1.xpose.msra.mxu0 0.0
      %3198 = vmatprep.subr.mxu0 0.0
      %3199 = vmatpush1.xpose.msra.mxu0 0.0
      %3200 = vmatprep.subr.mxu0 0.0
      %3201 = vmatpush1.xpose.msra.mxu0 0.0
      %3202 = vmatprep.subr.mxu0 0.0
      %3203 = vmatpush1.xpose.msra.mxu0 0.0
      %3204 = vmatprep.subr.mxu0 0.0
      %3205 = vmatpush1.xpose.msra.mxu0 0.0
      %3206 = vmatprep.subr.mxu0 0.0
      %3207 = vmatpush1.xpose.msra.mxu0 0.0
      %3208 = vmatprep.subr.mxu0 0.0
      %3209 = vmatpush1.xpose.msra.mxu0 0.0
      %3210 = vmatprep.subr.mxu0 0.0
      %3211 = vmatpush1.xpose.msra.mxu0 0.0
      %3212 = vmatprep.subr.mxu0 0.0
      %3213 = vmatpush1.xpose.msra.mxu0 0.0
      %3214 = vmatprep.subr.mxu0 0.0
      %3215 = vmatpush1.xpose.msra.mxu0 0.0
      %3216 = vmatprep.subr.mxu0 0.0
      %3217 = vmatpush1.xpose.msra.mxu0 0.0
      %3218 = vmatprep.subr.mxu0 0.0
      %3219 = vmatpush1.xpose.msra.mxu0 0.0
      %3220 = vmatprep.subr.mxu0 0.0
      %3221 = vmatpush1.xpose.msra.mxu0 0.0
      %3222 = vmatprep.subr.mxu0 0.0
      %3223 = vmatpush1.xpose.msra.mxu0 0.0
      %3224 = vmatprep.subr.mxu0 0.0
      %3225 = vmatpush1.xpose.msra.mxu0 0.0
      %3226 = vmatprep.subr.mxu0 0.0
      %3227 = vmatpush1.xpose.msra.mxu0 0.0
      %3228 = vmatprep.subr.mxu0 0.0
      %3229 = vmatpush1.xpose.msra.mxu0 0.0
      %3230 = vmatprep.subr.mxu0 0.0
      %3231 = vmatpush1.xpose.msra.mxu0 0.0
      %3232 = vmatprep.subr.mxu0 0.0
      %3233 = vmatpush1.xpose.msra.mxu0 0.0
      %3234 = vmatprep.subr.mxu0 0.0
      %3235 = vmatpush1.xpose.msra.mxu0 0.0
      %3236 = vmatprep.subr.mxu0 0.0
      %3237 = vmatpush1.xpose.msra.mxu0 0.0
      %3238 = vmatprep.subr.mxu0 0.0
      %3239 = vmatpush1.xpose.msra.mxu0 0.0
      %3240 = vmatprep.subr.mxu0 0.0
      %3241 = vmatpush1.xpose.msra.mxu0 0.0
      %3242 = vmatprep.mubr.f32.mxu0 0.0
      %v3243 = vand.u32 %v2803, 4294901760
      %v3244 = vsub.f32 %v2803, %v3243
      %v3245 = vand.u32 %v3244, 4294901760
      %3246 = vmatmul.mubr.f32.gmra.mrb[0].mxu0 %v3245
      %v3247 = vpop.f32.mrb[0].mxu0
      %v3248 = vadd.f32 %v3142, %v3247
      %v3249 = vpop.f32.mrb[0].mxu0
      %3250 = vmatprep.mubr.f32.mxu0 0.0
      %v3251 = vand.u32 %v2805, 4294901760
      %v3252 = vsub.f32 %v2805, %v3251
      %v3253 = vand.u32 %v3252, 4294901760
      %3254 = vmatmul.mubr.f32.gmra.mrb[0].mxu0 %v3253
      %v3255 = vpop.f32.mrb[0].mxu0
      %v3256 = vadd.f32 %v3149, %v3255
      %v3257 = vpop.f32.mrb[0].mxu0
      %3258 = vmatprep.mubr.f32.mxu0 0.0
      %v3259 = vand.u32 %v2807, 4294901760
      %v3260 = vsub.f32 %v2807, %v3259
      %v3261 = vand.u32 %v3260, 4294901760
      %3262 = vmatmul.mubr.f32.gmra.mrb[0].mxu0 %v3261
      %v3263 = vpop.f32.mrb[0].mxu0
      %v3264 = vadd.f32 %v3156, %v3263
      %v3265 = vpop.f32.mrb[0].mxu0
      %3266 = vmatprep.mubr.f32.mxu0 0.0
      %v3267 = vand.u32 %v2809, 4294901760
      %v3268 = vsub.f32 %v2809, %v3267
      %v3269 = vand.u32 %v3268, 4294901760
      %3270 = vmatmul.mubr.f32.gmra.mrb[0].mxu0 %v3269
      %v3271 = vpop.f32.mrb[0].mxu0
      %v3272 = vadd.f32 %v3163, %v3271
      %v3273 = vpop.f32.mrb[0].mxu0
      %3274 = vmatprep.mubr.f32.mxu0 0.0
      %v3275 = vand.u32 %v2811, 4294901760
      %v3276 = vsub.f32 %v2811, %v3275
      %v3277 = vand.u32 %v3276, 4294901760
      %3278 = vmatmul.mubr.f32.gmra.mrb[0].mxu0 %v3277
      %v3279 = vpop.f32.mrb[0].mxu0
      %v3280 = vadd.f32 %v3170, %v3279
      %v3281 = vpop.f32.mrb[0].mxu0
      %3282 = vdwg.mxu0
      %3283 = vmatprep.subr.mxu0 0.0
      %v3284 = vand.u32 %v2813, 4294901760
      %v3285 = vsub.f32 %v2813, %v3284
      %v3286 = vand.u32 %v3285, 4294901760
      %3287 = vmatpush1.xpose.msra.mxu0 %v3286
      %3288 = vmatprep.subr.mxu0 0.0
      %v3289 = vand.u32 %v2815, 4294901760
      %v3290 = vsub.f32 %v2815, %v3289
      %v3291 = vand.u32 %v3290, 4294901760
      %3292 = vmatpush1.xpose.msra.mxu0 %v3291
      %3293 = vmatprep.subr.mxu0 0.0
      %v3294 = vand.u32 %v2817, 4294901760
      %v3295 = vsub.f32 %v2817, %v3294
      %v3296 = vand.u32 %v3295, 4294901760
      %3297 = vmatpush1.xpose.msra.mxu0 %v3296
      %3298 = vmatprep.subr.mxu0 0.0
      %v3299 = vand.u32 %v2819, 4294901760
      %v3300 = vsub.f32 %v2819, %v3299
      %v3301 = vand.u32 %v3300, 4294901760
      %3302 = vmatpush1.xpose.msra.mxu0 %v3301
      %3303 = vmatprep.subr.mxu0 0.0
      %v3304 = vand.u32 %v2821, 4294901760
      %v3305 = vsub.f32 %v2821, %v3304
      %v3306 = vand.u32 %v3305, 4294901760
      %3307 = vmatpush1.xpose.msra.mxu0 %v3306
      %3308 = vmatprep.subr.mxu0 0.0
      %3309 = vmatpush1.xpose.msra.mxu0 0.0
      %3310 = vmatprep.subr.mxu0 0.0
      %3311 = vmatpush1.xpose.msra.mxu0 0.0
      %3312 = vmatprep.subr.mxu0 0.0
      %3313 = vmatpush1.xpose.msra.mxu0 0.0
      %3314 = vmatprep.subr.mxu0 0.0
      %3315 = vmatpush1.xpose.msra.mxu0 0.0
      %3316 = vmatprep.subr.mxu0 0.0
      %3317 = vmatpush1.xpose.msra.mxu0 0.0
      %3318 = vmatprep.subr.mxu0 0.0
      %3319 = vmatpush1.xpose.msra.mxu0 0.0
      %3320 = vmatprep.subr.mxu0 0.0
      %3321 = vmatpush1.xpose.msra.mxu0 0.0
      %3322 = vmatprep.subr.mxu0 0.0
      %3323 = vmatpush1.xpose.msra.mxu0 0.0
      %3324 = vmatprep.subr.mxu0 0.0
      %3325 = vmatpush1.xpose.msra.mxu0 0.0
      %3326 = vmatprep.subr.mxu0 0.0
      %3327 = vmatpush1.xpose.msra.mxu0 0.0
      %3328 = vmatprep.subr.mxu0 0.0
      %3329 = vmatpush1.xpose.msra.mxu0 0.0
      %3330 = vmatprep.subr.mxu0 0.0
      %3331 = vmatpush1.xpose.msra.mxu0 0.0
      %3332 = vmatprep.subr.mxu0 0.0
      %3333 = vmatpush1.xpose.msra.mxu0 0.0
      %3334 = vmatprep.subr.mxu0 0.0
      %3335 = vmatpush1.xpose.msra.mxu0 0.0
      %3336 = vmatprep.subr.mxu0 0.0
      %3337 = vmatpush1.xpose.msra.mxu0 0.0
      %3338 = vmatprep.subr.mxu0 0.0
      %3339 = vmatpush1.xpose.msra.mxu0 0.0
      %3340 = vmatprep.subr.mxu0 0.0
      %3341 = vmatpush1.xpose.msra.mxu0 0.0
      %3342 = vmatprep.subr.mxu0 0.0
      %3343 = vmatpush1.xpose.msra.mxu0 0.0
      %3344 = vmatprep.subr.mxu0 0.0
      %3345 = vmatpush1.xpose.msra.mxu0 0.0
      %3346 = vmatprep.subr.mxu0 0.0
      %3347 = vmatpush1.xpose.msra.mxu0 0.0
      %3348 = vmatprep.subr.mxu0 0.0
      %3349 = vmatpush1.xpose.msra.mxu0 0.0
      %3350 = vmatprep.subr.mxu0 0.0
      %3351 = vmatpush1.xpose.msra.mxu0 0.0
      %3352 = vmatprep.subr.mxu0 0.0
      %3353 = vmatpush1.xpose.msra.mxu0 0.0
      %3354 = vmatprep.subr.mxu0 0.0
      %3355 = vmatpush1.xpose.msra.mxu0 0.0
      %3356 = vmatprep.subr.mxu0 0.0
      %3357 = vmatpush1.xpose.msra.mxu0 0.0
      %3358 = vmatprep.subr.mxu0 0.0
      %3359 = vmatpush1.xpose.msra.mxu0 0.0
      %3360 = vmatprep.subr.mxu0 0.0
      %3361 = vmatpush1.xpose.msra.mxu0 0.0
      %3362 = vmatprep.mubr.f32.mxu0 0.0
      %v3363 = vand.u32 %v2803, 4294901760
      %3364 = vmatmul.mubr.f32.gmra.mrb[0].mxu0 %v3363
      %v3365 = vpop.f32.mrb[0].mxu0
      %v3366 = vadd.f32 %v3248, %v3365
      %v3367 = vpop.f32.mrb[0].mxu0
      %3368 = vmatprep.mubr.f32.mxu0 0.0
      %v3369 = vand.u32 %v2805, 4294901760
      %3370 = vmatmul.mubr.f32.gmra.mrb[0].mxu0 %v3369
      %v3371 = vpop.f32.mrb[0].mxu0
      %v3372 = vadd.f32 %v3256, %v3371
      %v3373 = vpop.f32.mrb[0].mxu0
      %3374 = vmatprep.mubr.f32.mxu0 0.0
      %v3375 = vand.u32 %v2807, 4294901760
      %3376 = vmatmul.mubr.f32.gmra.mrb[0].mxu0 %v3375
      %v3377 = vpop.f32.mrb[0].mxu0
      %v3378 = vadd.f32 %v3264, %v3377
      %v3379 = vpop.f32.mrb[0].mxu0
      %3380 = vmatprep.mubr.f32.mxu0 0.0
      %v3381 = vand.u32 %v2809, 4294901760
      %3382 = vmatmul.mubr.f32.gmra.mrb[0].mxu0 %v3381
      %v3383 = vpop.f32.mrb[0].mxu0
      %v3384 = vadd.f32 %v3272, %v3383
      %v3385 = vpop.f32.mrb[0].mxu0
      %3386 = vmatprep.mubr.f32.mxu0 0.0
      %v3387 = vand.u32 %v2811, 4294901760
      %3388 = vmatmul.mubr.f32.gmra.mrb[0].mxu0 %v3387
      %v3389 = vpop.f32.mrb[0].mxu0
      %v3390 = vadd.f32 %v3280, %v3389
      %v3391 = vpop.f32.mrb[0].mxu0
      %3392 = vdwg.mxu0
      %3393 = vmatprep.subr.mxu0 0.0
      %v3394 = vand.u32 %v2813, 4294901760
      %3395 = vmatpush1.xpose.msra.mxu0 %v3394
      %3396 = vmatprep.subr.mxu0 0.0
      %v3397 = vand.u32 %v2815, 4294901760
      %3398 = vmatpush1.xpose.msra.mxu0 %v3397
      %3399 = vmatprep.subr.mxu0 0.0
      %v3400 = vand.u32 %v2817, 4294901760
      %3401 = vmatpush1.xpose.msra.mxu0 %v3400
      %3402 = vmatprep.subr.mxu0 0.0
      %v3403 = vand.u32 %v2819, 4294901760
      %3404 = vmatpush1.xpose.msra.mxu0 %v3403
      %3405 = vmatprep.subr.mxu0 0.0
      %v3406 = vand.u32 %v2821, 4294901760
      %3407 = vmatpush1.xpose.msra.mxu0 %v3406
      %3408 = vmatprep.subr.mxu0 0.0
      %3409 = vmatpush1.xpose.msra.mxu0 0.0
      %3410 = vmatprep.subr.mxu0 0.0
      %3411 = vmatpush1.xpose.msra.mxu0 0.0
      %3412 = vmatprep.subr.mxu0 0.0
      %3413 = vmatpush1.xpose.msra.mxu0 0.0
      %3414 = vmatprep.subr.mxu0 0.0
      %3415 = vmatpush1.xpose.msra.mxu0 0.0
      %3416 = vmatprep.subr.mxu0 0.0
      %3417 = vmatpush1.xpose.msra.mxu0 0.0
      %3418 = vmatprep.subr.mxu0 0.0
      %3419 = vmatpush1.xpose.msra.mxu0 0.0
      %3420 = vmatprep.subr.mxu0 0.0
      %3421 = vmatpush1.xpose.msra.mxu0 0.0
      %3422 = vmatprep.subr.mxu0 0.0
      %3423 = vmatpush1.xpose.msra.mxu0 0.0
      %3424 = vmatprep.subr.mxu0 0.0
      %3425 = vmatpush1.xpose.msra.mxu0 0.0
      %3426 = vmatprep.subr.mxu0 0.0
      %3427 = vmatpush1.xpose.msra.mxu0 0.0
      %3428 = vmatprep.subr.mxu0 0.0
      %3429 = vmatpush1.xpose.msra.mxu0 0.0
      %3430 = vmatprep.subr.mxu0 0.0
      %3431 = vmatpush1.xpose.msra.mxu0 0.0
      %3432 = vmatprep.subr.mxu0 0.0
      %3433 = vmatpush1.xpose.msra.mxu0 0.0
      %3434 = vmatprep.subr.mxu0 0.0
      %3435 = vmatpush1.xpose.msra.mxu0 0.0
      %3436 = vmatprep.subr.mxu0 0.0
      %3437 = vmatpush1.xpose.msra.mxu0 0.0
      %3438 = vmatprep.subr.mxu0 0.0
      %3439 = vmatpush1.xpose.msra.mxu0 0.0
      %3440 = vmatprep.subr.mxu0 0.0
      %3441 = vmatpush1.xpose.msra.mxu0 0.0
      %3442 = vmatprep.subr.mxu0 0.0
      %3443 = vmatpush1.xpose.msra.mxu0 0.0
      %3444 = vmatprep.subr.mxu0 0.0
      %3445 = vmatpush1.xpose.msra.mxu0 0.0
      %3446 = vmatprep.subr.mxu0 0.0
      %3447 = vmatpush1.xpose.msra.mxu0 0.0
      %3448 = vmatprep.subr.mxu0 0.0
      %3449 = vmatpush1.xpose.msra.mxu0 0.0
      %3450 = vmatprep.subr.mxu0 0.0
      %3451 = vmatpush1.xpose.msra.mxu0 0.0
      %3452 = vmatprep.subr.mxu0 0.0
      %3453 = vmatpush1.xpose.msra.mxu0 0.0
      %3454 = vmatprep.subr.mxu0 0.0
      %3455 = vmatpush1.xpose.msra.mxu0 0.0
      %3456 = vmatprep.subr.mxu0 0.0
      %3457 = vmatpush1.xpose.msra.mxu0 0.0
      %3458 = vmatprep.subr.mxu0 0.0
      %3459 = vmatpush1.xpose.msra.mxu0 0.0
      %3460 = vmatprep.subr.mxu0 0.0
      %3461 = vmatpush1.xpose.msra.mxu0 0.0
      %3462 = vmatprep.mubr.f32.mxu0 0.0
      %v3463 = vand.u32 %v2803, 4294901760
      %3464 = vmatmul.mubr.f32.gmra.mrb[0].mxu0 %v3463
      %v3465 = vpop.f32.mrb[0].mxu0
      %v3466 = vadd.f32 %v3366, %v3465
      %v3467 = vpop.f32.mrb[0].mxu0
      %3468 = vmatprep.mubr.f32.mxu0 0.0
      %v3469 = vand.u32 %v2805, 4294901760
      %3470 = vmatmul.mubr.f32.gmra.mrb[0].mxu0 %v3469
      %v3471 = vpop.f32.mrb[0].mxu0
      %v3472 = vadd.f32 %v3372, %v3471
      %v3473 = vpop.f32.mrb[0].mxu0
      %3474 = vmatprep.mubr.f32.mxu0 0.0
      %v3475 = vand.u32 %v2807, 4294901760
      %3476 = vmatmul.mubr.f32.gmra.mrb[0].mxu0 %v3475
      %v3477 = vpop.f32.mrb[0].mxu0
      %v3478 = vadd.f32 %v3378, %v3477
      %v3479 = vpop.f32.mrb[0].mxu0
      %3480 = vmatprep.mubr.f32.mxu0 0.0
      %v3481 = vand.u32 %v2809, 4294901760
      %3482 = vmatmul.mubr.f32.gmra.mrb[0].mxu0 %v3481
      %v3483 = vpop.f32.mrb[0].mxu0
      %v3484 = vadd.f32 %v3384, %v3483
      %v3485 = vpop.f32.mrb[0].mxu0
      %3486 = vmatprep.mubr.f32.mxu0 0.0
      %v3487 = vand.u32 %v2811, 4294901760
      %3488 = vmatmul.mubr.f32.gmra.mrb[0].mxu0 %v3487
      %v3489 = vpop.f32.mrb[0].mxu0
      %v3490 = vadd.f32 %v3390, %v3489
      %v3491 = vpop.f32.mrb[0].mxu0
      %3492 = vdwg.mxu0
      %v3493 = vmul.f32 %v3466, 0.5
      %v3494 = vmul.f32 %v3472, 0.5
      %v3495 = vmul.f32 %v3478, 0.5
      %v3496 = vmul.f32 %v3484, 0.5
      %v3497 = vmul.f32 %v3490, 0.5
      %v3498 = vadd.f32 %v3493, %v1302
      %v3499 = vadd.f32 %v3494, %v1303
      %v3500 = vadd.f32 %v3495, %v1304
      %v3501 = vadd.f32 %v3496, %v1305
      %v3502 = vadd.f32 %v3497, %v1306
      %v3503 = vsel %vm2023, %v3498, -inf
      %3504 = vmax.xlane.f32.xlu0 %v3503
      %v3505 = vpop.xlane.xlu0 %3504
      %v3506 = vsel %vm2023, %v3499, -inf
      %3507 = vmax.xlane.f32.xlu0 %v3506
      %v3508 = vpop.xlane.xlu0 %3507
      %v3509 = vsel %vm2023, %v3500, -inf
      %3510 = vmax.xlane.f32.xlu0 %v3509
      %v3511 = vpop.xlane.xlu0 %3510
      %v3512 = vsel %vm2023, %v3501, -inf
      %3513 = vmax.xlane.f32.xlu0 %v3512
      %v3514 = vpop.xlane.xlu0 %3513
      %v3515 = vsel %vm2036, %v3502, -inf
      %3516 = vmax.xlane.f32.xlu0 %v3515
      %v3517 = vpop.xlane.xlu0 %3516
      %v3518 = vsub.f32 %v3498, %v3505
      %v3519 = vsub.f32 %v3499, %v3508
      %v3520 = vsub.f32 %v3500, %v3511
      %v3521 = vsub.f32 %v3501, %v3514
      %v3522 = vsub.f32 %v3502, %v3517
      %v3523 = vmul.f32 %v3518, 1.442695
      %v3524 = vpow.pop %v3523
      %v3525 = vmul.f32 %v3519, 1.442695
      %v3526 = vpow.pop %v3525
      %v3527 = vmul.f32 %v3520, 1.442695
      %v3528 = vpow.pop %v3527
      %v3529 = vmul.f32 %v3521, 1.442695
      %v3530 = vpow.pop %v3529
      %v3531 = vmul.f32 %v3522, 1.442695
      %v3532 = vpow.pop %v3531
      %v3533 = vsel %vm2023, %v3524, 0.0
      %3534 = vadd.xlane.f32.xlu0 %v3533
      %v3535 = vpop.xlane.xlu0 %3534
      %v3536 = vsel %vm2023, %v3526, 0.0
      %3537 = vadd.xlane.f32.xlu0 %v3536
      %v3538 = vpop.xlane.xlu0 %3537
      %v3539 = vsel %vm2023, %v3528, 0.0
      %3540 = vadd.xlane.f32.xlu0 %v3539
      %v3541 = vpop.xlane.xlu0 %3540
      %v3542 = vsel %vm2023, %v3530, 0.0
      %3543 = vadd.xlane.f32.xlu0 %v3542
      %v3544 = vpop.xlane.xlu0 %3543
      %v3545 = vsel %vm2036, %v3532, 0.0
      %3546 = vadd.xlane.f32.xlu0 %v3545
      %v3547 = vpop.xlane.xlu0 %3546
      %v3548 = vrcp.pop %v3535
      %v3549 = vmul.f32 %v3524, %v3548
      %v3550 = vrcp.pop %v3538
      %v3551 = vmul.f32 %v3526, %v3550
      %v3552 = vrcp.pop %v3541
      %v3553 = vmul.f32 %v3528, %v3552
      %v3554 = vrcp.pop %v3544
      %v3555 = vmul.f32 %v3530, %v3554
      %v3556 = vrcp.pop %v3547
      %v3557 = vmul.f32 %v3532, %v3556
      %3558 = vrot.lane.b32.xlu0 %v1275, 92
      %v3559 = vpop.permute.xlu0 %3558
      %3560 = vrot.lane.b32.xlu0 %v1281, 92
      %v3561 = vpop.permute.xlu0 %3560
      %3562 = vrot.lane.b32.xlu0 %v1287, 92
      %v3563 = vpop.permute.xlu0 %3562
      %3564 = vrot.lane.b32.xlu0 %v1293, 92
      %v3565 = vpop.permute.xlu0 %3564
      %3566 = vrot.lane.b32.xlu0 %v1299, 92
      %v3567 = vpop.permute.xlu0 %3566
      %v3573 = vsel %vm2023, %v3549, 0
      %v3576 = vsel %vm2023, %v3551, 0
      %v3579 = vsel %vm2023, %v3553, 0
      %v3582 = vsel %vm2023, %v3555, 0
      %v3585 = vsel %vm2023, %v3557, 0
      %v3587 = vsel %vm2109, %v3567, 0
      %3589 = vmatprep.subr.mxu0 0.0
      %v3590 = vand.u32 %v3559, 4294901760
      %3591 = vmatpush1.msra.mxu0 %v3590
      %3592 = vmatprep.subr.mxu0 0.0
      %v3593 = vand.u32 %v3561, 4294901760
      %3594 = vmatpush1.msra.mxu0 %v3593
      %3595 = vmatprep.subr.mxu0 0.0
      %v3596 = vand.u32 %v3563, 4294901760
      %3597 = vmatpush1.msra.mxu0 %v3596
      %3598 = vmatprep.subr.mxu0 0.0
      %v3599 = vand.u32 %v3565, 4294901760
      %3600 = vmatpush1.msra.mxu0 %v3599
      %3601 = vmatprep.subr.mxu0 0.0
      %v3602 = vand.u32 %v3587, 4294901760
      %3603 = vmatpush1.msra.mxu0 %v3602
      %3604 = vmatprep.subr.mxu0 0.0
      %3605 = vmatpush1.msra.mxu0 0.0
      %3606 = vmatprep.subr.mxu0 0.0
      %3607 = vmatpush1.msra.mxu0 0.0
      %3608 = vmatprep.subr.mxu0 0.0
      %3609 = vmatpush1.msra.mxu0 0.0
      %3610 = vmatprep.subr.mxu0 0.0
      %3611 = vmatpush1.msra.mxu0 0.0
      %3612 = vmatprep.subr.mxu0 0.0
      %3613 = vmatpush1.msra.mxu0 0.0
      %3614 = vmatprep.subr.mxu0 0.0
      %3615 = vmatpush1.msra.mxu0 0.0
      %3616 = vmatprep.subr.mxu0 0.0
      %3617 = vmatpush1.msra.mxu0 0.0
      %3618 = vmatprep.subr.mxu0 0.0
      %3619 = vmatpush1.msra.mxu0 0.0
      %3620 = vmatprep.subr.mxu0 0.0
      %3621 = vmatpush1.msra.mxu0 0.0
      %3622 = vmatprep.subr.mxu0 0.0
      %3623 = vmatpush1.msra.mxu0 0.0
      %3624 = vmatprep.subr.mxu0 0.0
      %3625 = vmatpush1.msra.mxu0 0.0
      %3626 = vmatprep.subr.mxu0 0.0
      %3627 = vmatpush1.msra.mxu0 0.0
      %3628 = vmatprep.subr.mxu0 0.0
      %3629 = vmatpush1.msra.mxu0 0.0
      %3630 = vmatprep.subr.mxu0 0.0
      %3631 = vmatpush1.msra.mxu0 0.0
      %3632 = vmatprep.subr.mxu0 0.0
      %3633 = vmatpush1.msra.mxu0 0.0
      %3634 = vmatprep.subr.mxu0 0.0
      %3635 = vmatpush1.msra.mxu0 0.0
      %3636 = vmatprep.subr.mxu0 0.0
      %3637 = vmatpush1.msra.mxu0 0.0
      %3638 = vmatprep.subr.mxu0 0.0
      %3639 = vmatpush1.msra.mxu0 0.0
      %3640 = vmatprep.subr.mxu0 0.0
      %3641 = vmatpush1.msra.mxu0 0.0
      %3642 = vmatprep.subr.mxu0 0.0
      %3643 = vmatpush1.msra.mxu0 0.0
      %3644 = vmatprep.subr.mxu0 0.0
      %3645 = vmatpush1.msra.mxu0 0.0
      %3646 = vmatprep.subr.mxu0 0.0
      %3647 = vmatpush1.msra.mxu0 0.0
      %3648 = vmatprep.subr.mxu0 0.0
      %3649 = vmatpush1.msra.mxu0 0.0
      %3650 = vmatprep.subr.mxu0 0.0
      %3651 = vmatpush1.msra.mxu0 0.0
      %3652 = vmatprep.subr.mxu0 0.0
      %3653 = vmatpush1.msra.mxu0 0.0
      %3654 = vmatprep.subr.mxu0 0.0
      %3655 = vmatpush1.msra.mxu0 0.0
      %3656 = vmatprep.subr.mxu0 0.0
      %3657 = vmatpush1.msra.mxu0 0.0
      %3658 = vmatprep.mubr.f32.mxu0 0.0
      %v3659 = vand.u32 %v3573, 4294901760
      %v3660 = vsub.f32 %v3573, %v3659
      %v3661 = vand.u32 %v3660, 4294901760
      %v3662 = vsub.f32 %v3660, %v3661
      %v3663 = vand.u32 %v3662, 4294901760
      %3664 = vmatmul.mubr.f32.gmra.mrb[0].mxu0 %v3663
      %v3665 = vpop.f32.mrb[0].mxu0
      %v3666 = vadd.f32 0.0, %v3665
      %v3667 = vpop.f32.mrb[0].mxu0
      %3668 = vmatprep.mubr.f32.mxu0 0.0
      %v3669 = vand.u32 %v3576, 4294901760
      %v3670 = vsub.f32 %v3576, %v3669
      %v3671 = vand.u32 %v3670, 4294901760
      %v3672 = vsub.f32 %v3670, %v3671
      %v3673 = vand.u32 %v3672, 4294901760
      %3674 = vmatmul.mubr.f32.gmra.mrb[0].mxu0 %v3673
      %v3675 = vpop.f32.mrb[0].mxu0
      %v3676 = vadd.f32 0.0, %v3675
      %v3677 = vpop.f32.mrb[0].mxu0
      %3678 = vmatprep.mubr.f32.mxu0 0.0
      %v3679 = vand.u32 %v3579, 4294901760
      %v3680 = vsub.f32 %v3579, %v3679
      %v3681 = vand.u32 %v3680, 4294901760
      %v3682 = vsub.f32 %v3680, %v3681
      %v3683 = vand.u32 %v3682, 4294901760
      %3684 = vmatmul.mubr.f32.gmra.mrb[0].mxu0 %v3683
      %v3685 = vpop.f32.mrb[0].mxu0
      %v3686 = vadd.f32 0.0, %v3685
      %v3687 = vpop.f32.mrb[0].mxu0
      %3688 = vmatprep.mubr.f32.mxu0 0.0
      %v3689 = vand.u32 %v3582, 4294901760
      %v3690 = vsub.f32 %v3582, %v3689
      %v3691 = vand.u32 %v3690, 4294901760
      %v3692 = vsub.f32 %v3690, %v3691
      %v3693 = vand.u32 %v3692, 4294901760
      %3694 = vmatmul.mubr.f32.gmra.mrb[0].mxu0 %v3693
      %v3695 = vpop.f32.mrb[0].mxu0
      %v3696 = vadd.f32 0.0, %v3695
      %v3697 = vpop.f32.mrb[0].mxu0
      %3698 = vmatprep.mubr.f32.mxu0 0.0
      %v3699 = vand.u32 %v3585, 4294901760
      %v3700 = vsub.f32 %v3585, %v3699
      %v3701 = vand.u32 %v3700, 4294901760
      %v3702 = vsub.f32 %v3700, %v3701
      %v3703 = vand.u32 %v3702, 4294901760
      %3704 = vmatmul.mubr.f32.gmra.mrb[0].mxu0 %v3703
      %v3705 = vpop.f32.mrb[0].mxu0
      %v3706 = vadd.f32 0.0, %v3705
      %v3707 = vpop.f32.mrb[0].mxu0
      %3708 = vdwg.mxu0
      %3709 = vmatprep.subr.mxu0 0.0
      %v3710 = vand.u32 %v3559, 4294901760
      %v3711 = vsub.f32 %v3559, %v3710
      %v3712 = vand.u32 %v3711, 4294901760
      %v3713 = vsub.f32 %v3711, %v3712
      %v3714 = vand.u32 %v3713, 4294901760
      %3715 = vmatpush1.msra.mxu0 %v3714
      %3716 = vmatprep.subr.mxu0 0.0
      %v3717 = vand.u32 %v3561, 4294901760
      %v3718 = vsub.f32 %v3561, %v3717
      %v3719 = vand.u32 %v3718, 4294901760
      %v3720 = vsub.f32 %v3718, %v3719
      %v3721 = vand.u32 %v3720, 4294901760
      %3722 = vmatpush1.msra.mxu0 %v3721
      %3723 = vmatprep.subr.mxu0 0.0
      %v3724 = vand.u32 %v3563, 4294901760
      %v3725 = vsub.f32 %v3563, %v3724
      %v3726 = vand.u32 %v3725, 4294901760
      %v3727 = vsub.f32 %v3725, %v3726
      %v3728 = vand.u32 %v3727, 4294901760
      %3729 = vmatpush1.msra.mxu0 %v3728
      %3730 = vmatprep.subr.mxu0 0.0
      %v3731 = vand.u32 %v3565, 4294901760
      %v3732 = vsub.f32 %v3565, %v3731
      %v3733 = vand.u32 %v3732, 4294901760
      %v3734 = vsub.f32 %v3732, %v3733
      %v3735 = vand.u32 %v3734, 4294901760
      %3736 = vmatpush1.msra.mxu0 %v3735
      %3737 = vmatprep.subr.mxu0 0.0
      %v3738 = vand.u32 %v3587, 4294901760
      %v3739 = vsub.f32 %v3587, %v3738
      %v3740 = vand.u32 %v3739, 4294901760
      %v3741 = vsub.f32 %v3739, %v3740
      %v3742 = vand.u32 %v3741, 4294901760
      %3743 = vmatpush1.msra.mxu0 %v3742
      %3744 = vmatprep.subr.mxu0 0.0
      %3745 = vmatpush1.msra.mxu0 0.0
      %3746 = vmatprep.subr.mxu0 0.0
      %3747 = vmatpush1.msra.mxu0 0.0
      %3748 = vmatprep.subr.mxu0 0.0
      %3749 = vmatpush1.msra.mxu0 0.0
      %3750 = vmatprep.subr.mxu0 0.0
      %3751 = vmatpush1.msra.mxu0 0.0
      %3752 = vmatprep.subr.mxu0 0.0
      %3753 = vmatpush1.msra.mxu0 0.0
      %3754 = vmatprep.subr.mxu0 0.0
      %3755 = vmatpush1.msra.mxu0 0.0
      %3756 = vmatprep.subr.mxu0 0.0
      %3757 = vmatpush1.msra.mxu0 0.0
      %3758 = vmatprep.subr.mxu0 0.0
      %3759 = vmatpush1.msra.mxu0 0.0
      %3760 = vmatprep.subr.mxu0 0.0
      %3761 = vmatpush1.msra.mxu0 0.0
      %3762 = vmatprep.subr.mxu0 0.0
      %3763 = vmatpush1.msra.mxu0 0.0
      %3764 = vmatprep.subr.mxu0 0.0
      %3765 = vmatpush1.msra.mxu0 0.0
      %3766 = vmatprep.subr.mxu0 0.0
      %3767 = vmatpush1.msra.mxu0 0.0
      %3768 = vmatprep.subr.mxu0 0.0
      %3769 = vmatpush1.msra.mxu0 0.0
      %3770 = vmatprep.subr.mxu0 0.0
      %3771 = vmatpush1.msra.mxu0 0.0
      %3772 = vmatprep.subr.mxu0 0.0
      %3773 = vmatpush1.msra.mxu0 0.0
      %3774 = vmatprep.subr.mxu0 0.0
      %3775 = vmatpush1.msra.mxu0 0.0
      %3776 = vmatprep.subr.mxu0 0.0
      %3777 = vmatpush1.msra.mxu0 0.0
      %3778 = vmatprep.subr.mxu0 0.0
      %3779 = vmatpush1.msra.mxu0 0.0
      %3780 = vmatprep.subr.mxu0 0.0
      %3781 = vmatpush1.msra.mxu0 0.0
      %3782 = vmatprep.subr.mxu0 0.0
      %3783 = vmatpush1.msra.mxu0 0.0
      %3784 = vmatprep.subr.mxu0 0.0
      %3785 = vmatpush1.msra.mxu0 0.0
      %3786 = vmatprep.subr.mxu0 0.0
      %3787 = vmatpush1.msra.mxu0 0.0
      %3788 = vmatprep.subr.mxu0 0.0
      %3789 = vmatpush1.msra.mxu0 0.0
      %3790 = vmatprep.subr.mxu0 0.0
      %3791 = vmatpush1.msra.mxu0 0.0
      %3792 = vmatprep.subr.mxu0 0.0
      %3793 = vmatpush1.msra.mxu0 0.0
      %3794 = vmatprep.subr.mxu0 0.0
      %3795 = vmatpush1.msra.mxu0 0.0
      %3796 = vmatprep.subr.mxu0 0.0
      %3797 = vmatpush1.msra.mxu0 0.0
      %3798 = vmatprep.mubr.f32.mxu0 0.0
      %v3799 = vand.u32 %v3573, 4294901760
      %3800 = vmatmul.mubr.f32.gmra.mrb[0].mxu0 %v3799
      %v3801 = vpop.f32.mrb[0].mxu0
      %v3802 = vadd.f32 %v3666, %v3801
      %v3803 = vpop.f32.mrb[0].mxu0
      %3804 = vmatprep.mubr.f32.mxu0 0.0
      %v3805 = vand.u32 %v3576, 4294901760
      %3806 = vmatmul.mubr.f32.gmra.mrb[0].mxu0 %v3805
      %v3807 = vpop.f32.mrb[0].mxu0
      %v3808 = vadd.f32 %v3676, %v3807
      %v3809 = vpop.f32.mrb[0].mxu0
      %3810 = vmatprep.mubr.f32.mxu0 0.0
      %v3811 = vand.u32 %v3579, 4294901760
      %3812 = vmatmul.mubr.f32.gmra.mrb[0].mxu0 %v3811
      %v3813 = vpop.f32.mrb[0].mxu0
      %v3814 = vadd.f32 %v3686, %v3813
      %v3815 = vpop.f32.mrb[0].mxu0
      %3816 = vmatprep.mubr.f32.mxu0 0.0
      %v3817 = vand.u32 %v3582, 4294901760
      %3818 = vmatmul.mubr.f32.gmra.mrb[0].mxu0 %v3817
      %v3819 = vpop.f32.mrb[0].mxu0
      %v3820 = vadd.f32 %v3696, %v3819
      %v3821 = vpop.f32.mrb[0].mxu0
      %3822 = vmatprep.mubr.f32.mxu0 0.0
      %v3823 = vand.u32 %v3585, 4294901760
      %3824 = vmatmul.mubr.f32.gmra.mrb[0].mxu0 %v3823
      %v3825 = vpop.f32.mrb[0].mxu0
      %v3826 = vadd.f32 %v3706, %v3825
      %v3827 = vpop.f32.mrb[0].mxu0
      %3828 = vdwg.mxu0
      %3829 = vmatprep.subr.mxu0 0.0
      %v3830 = vand.u32 %v3559, 4294901760
      %v3831 = vsub.f32 %v3559, %v3830
      %3832 = vmatpush1.msra.mxu0 %v3831
      %3833 = vmatprep.subr.mxu0 0.0
      %v3834 = vand.u32 %v3561, 4294901760
      %v3835 = vsub.f32 %v3561, %v3834
      %3836 = vmatpush1.msra.mxu0 %v3835
      %3837 = vmatprep.subr.mxu0 0.0
      %v3838 = vand.u32 %v3563, 4294901760
      %v3839 = vsub.f32 %v3563, %v3838
      %3840 = vmatpush1.msra.mxu0 %v3839
      %3841 = vmatprep.subr.mxu0 0.0
      %v3842 = vand.u32 %v3565, 4294901760
      %v3843 = vsub.f32 %v3565, %v3842
      %3844 = vmatpush1.msra.mxu0 %v3843
      %3845 = vmatprep.subr.mxu0 0.0
      %v3846 = vand.u32 %v3587, 4294901760
      %v3847 = vsub.f32 %v3587, %v3846
      %3848 = vmatpush1.msra.mxu0 %v3847
      %3849 = vmatprep.subr.mxu0 0.0
      %3850 = vmatpush1.msra.mxu0 0.0
      %3851 = vmatprep.subr.mxu0 0.0
      %3852 = vmatpush1.msra.mxu0 0.0
      %3853 = vmatprep.subr.mxu0 0.0
      %3854 = vmatpush1.msra.mxu0 0.0
      %3855 = vmatprep.subr.mxu0 0.0
      %3856 = vmatpush1.msra.mxu0 0.0
      %3857 = vmatprep.subr.mxu0 0.0
      %3858 = vmatpush1.msra.mxu0 0.0
      %3859 = vmatprep.subr.mxu0 0.0
      %3860 = vmatpush1.msra.mxu0 0.0
      %3861 = vmatprep.subr.mxu0 0.0
      %3862 = vmatpush1.msra.mxu0 0.0
      %3863 = vmatprep.subr.mxu0 0.0
      %3864 = vmatpush1.msra.mxu0 0.0
      %3865 = vmatprep.subr.mxu0 0.0
      %3866 = vmatpush1.msra.mxu0 0.0
      %3867 = vmatprep.subr.mxu0 0.0
      %3868 = vmatpush1.msra.mxu0 0.0
      %3869 = vmatprep.subr.mxu0 0.0
      %3870 = vmatpush1.msra.mxu0 0.0
      %3871 = vmatprep.subr.mxu0 0.0
      %3872 = vmatpush1.msra.mxu0 0.0
      %3873 = vmatprep.subr.mxu0 0.0
      %3874 = vmatpush1.msra.mxu0 0.0
      %3875 = vmatprep.subr.mxu0 0.0
      %3876 = vmatpush1.msra.mxu0 0.0
      %3877 = vmatprep.subr.mxu0 0.0
      %3878 = vmatpush1.msra.mxu0 0.0
      %3879 = vmatprep.subr.mxu0 0.0
      %3880 = vmatpush1.msra.mxu0 0.0
      %3881 = vmatprep.subr.mxu0 0.0
      %3882 = vmatpush1.msra.mxu0 0.0
      %3883 = vmatprep.subr.mxu0 0.0
      %3884 = vmatpush1.msra.mxu0 0.0
      %3885 = vmatprep.subr.mxu0 0.0
      %3886 = vmatpush1.msra.mxu0 0.0
      %3887 = vmatprep.subr.mxu0 0.0
      %3888 = vmatpush1.msra.mxu0 0.0
      %3889 = vmatprep.subr.mxu0 0.0
      %3890 = vmatpush1.msra.mxu0 0.0
      %3891 = vmatprep.subr.mxu0 0.0
      %3892 = vmatpush1.msra.mxu0 0.0
      %3893 = vmatprep.subr.mxu0 0.0
      %3894 = vmatpush1.msra.mxu0 0.0
      %3895 = vmatprep.subr.mxu0 0.0
      %3896 = vmatpush1.msra.mxu0 0.0
      %3897 = vmatprep.subr.mxu0 0.0
      %3898 = vmatpush1.msra.mxu0 0.0
      %3899 = vmatprep.subr.mxu0 0.0
      %3900 = vmatpush1.msra.mxu0 0.0
      %3901 = vmatprep.subr.mxu0 0.0
      %3902 = vmatpush1.msra.mxu0 0.0
      %3903 = vmatprep.mubr.f32.mxu0 0.0
      %v3904 = vand.u32 %v3573, 4294901760
      %v3905 = vsub.f32 %v3573, %v3904
      %3906 = vmatmul.mubr.f32.gmra.mrb[0].mxu0 %v3905
      %v3907 = vpop.f32.mrb[0].mxu0
      %v3908 = vadd.f32 %v3802, %v3907
      %v3909 = vpop.f32.mrb[0].mxu0
      %3910 = vmatprep.mubr.f32.mxu0 0.0
      %v3911 = vand.u32 %v3576, 4294901760
      %v3912 = vsub.f32 %v3576, %v3911
      %3913 = vmatmul.mubr.f32.gmra.mrb[0].mxu0 %v3912
      %v3914 = vpop.f32.mrb[0].mxu0
      %v3915 = vadd.f32 %v3808, %v3914
      %v3916 = vpop.f32.mrb[0].mxu0
      %3917 = vmatprep.mubr.f32.mxu0 0.0
      %v3918 = vand.u32 %v3579, 4294901760
      %v3919 = vsub.f32 %v3579, %v3918
      %3920 = vmatmul.mubr.f32.gmra.mrb[0].mxu0 %v3919
      %v3921 = vpop.f32.mrb[0].mxu0
      %v3922 = vadd.f32 %v3814, %v3921
      %v3923 = vpop.f32.mrb[0].mxu0
      %3924 = vmatprep.mubr.f32.mxu0 0.0
      %v3925 = vand.u32 %v3582, 4294901760
      %v3926 = vsub.f32 %v3582, %v3925
      %3927 = vmatmul.mubr.f32.gmra.mrb[0].mxu0 %v3926
      %v3928 = vpop.f32.mrb[0].mxu0
      %v3929 = vadd.f32 %v3820, %v3928
      %v3930 = vpop.f32.mrb[0].mxu0
      %3931 = vmatprep.mubr.f32.mxu0 0.0
      %v3932 = vand.u32 %v3585, 4294901760
      %v3933 = vsub.f32 %v3585, %v3932
      %3934 = vmatmul.mubr.f32.gmra.mrb[0].mxu0 %v3933
      %v3935 = vpop.f32.mrb[0].mxu0
      %v3936 = vadd.f32 %v3826, %v3935
      %v3937 = vpop.f32.mrb[0].mxu0
      %3938 = vdwg.mxu0
      %3939 = vmatprep.subr.mxu0 0.0
      %v3940 = vand.u32 %v3559, 4294901760
      %3941 = vmatpush1.msra.mxu0 %v3940
      %3942 = vmatprep.subr.mxu0 0.0
      %v3943 = vand.u32 %v3561, 4294901760
      %3944 = vmatpush1.msra.mxu0 %v3943
      %3945 = vmatprep.subr.mxu0 0.0
      %v3946 = vand.u32 %v3563, 4294901760
      %3947 = vmatpush1.msra.mxu0 %v3946
      %3948 = vmatprep.subr.mxu0 0.0
      %v3949 = vand.u32 %v3565, 4294901760
      %3950 = vmatpush1.msra.mxu0 %v3949
      %3951 = vmatprep.subr.mxu0 0.0
      %v3952 = vand.u32 %v3587, 4294901760
      %3953 = vmatpush1.msra.mxu0 %v3952
      %3954 = vmatprep.subr.mxu0 0.0
      %3955 = vmatpush1.msra.mxu0 0.0
      %3956 = vmatprep.subr.mxu0 0.0
      %3957 = vmatpush1.msra.mxu0 0.0
      %3958 = vmatprep.subr.mxu0 0.0
      %3959 = vmatpush1.msra.mxu0 0.0
      %3960 = vmatprep.subr.mxu0 0.0
      %3961 = vmatpush1.msra.mxu0 0.0
      %3962 = vmatprep.subr.mxu0 0.0
      %3963 = vmatpush1.msra.mxu0 0.0
      %3964 = vmatprep.subr.mxu0 0.0
      %3965 = vmatpush1.msra.mxu0 0.0
      %3966 = vmatprep.subr.mxu0 0.0
      %3967 = vmatpush1.msra.mxu0 0.0
      %3968 = vmatprep.subr.mxu0 0.0
      %3969 = vmatpush1.msra.mxu0 0.0
      %3970 = vmatprep.subr.mxu0 0.0
      %3971 = vmatpush1.msra.mxu0 0.0
      %3972 = vmatprep.subr.mxu0 0.0
      %3973 = vmatpush1.msra.mxu0 0.0
      %3974 = vmatprep.subr.mxu0 0.0
      %3975 = vmatpush1.msra.mxu0 0.0
      %3976 = vmatprep.subr.mxu0 0.0
      %3977 = vmatpush1.msra.mxu0 0.0
      %3978 = vmatprep.subr.mxu0 0.0
      %3979 = vmatpush1.msra.mxu0 0.0
      %3980 = vmatprep.subr.mxu0 0.0
      %3981 = vmatpush1.msra.mxu0 0.0
      %3982 = vmatprep.subr.mxu0 0.0
      %3983 = vmatpush1.msra.mxu0 0.0
      %3984 = vmatprep.subr.mxu0 0.0
      %3985 = vmatpush1.msra.mxu0 0.0
      %3986 = vmatprep.subr.mxu0 0.0
      %3987 = vmatpush1.msra.mxu0 0.0
      %3988 = vmatprep.subr.mxu0 0.0
      %3989 = vmatpush1.msra.mxu0 0.0
      %3990 = vmatprep.subr.mxu0 0.0
      %3991 = vmatpush1.msra.mxu0 0.0
      %3992 = vmatprep.subr.mxu0 0.0
      %3993 = vmatpush1.msra.mxu0 0.0
      %3994 = vmatprep.subr.mxu0 0.0
      %3995 = vmatpush1.msra.mxu0 0.0
      %3996 = vmatprep.subr.mxu0 0.0
      %3997 = vmatpush1.msra.mxu0 0.0
      %3998 = vmatprep.subr.mxu0 0.0
      %3999 = vmatpush1.msra.mxu0 0.0
      %4000 = vmatprep.subr.mxu0 0.0
      %4001 = vmatpush1.msra.mxu0 0.0
      %4002 = vmatprep.subr.mxu0 0.0
      %4003 = vmatpush1.msra.mxu0 0.0
      %4004 = vmatprep.subr.mxu0 0.0
      %4005 = vmatpush1.msra.mxu0 0.0
      %4006 = vmatprep.subr.mxu0 0.0
      %4007 = vmatpush1.msra.mxu0 0.0
      %4008 = vmatprep.mubr.f32.mxu0 0.0
      %v4009 = vand.u32 %v3573, 4294901760
      %v4010 = vsub.f32 %v3573, %v4009
      %v4011 = vand.u32 %v4010, 4294901760
      %4012 = vmatmul.mubr.f32.gmra.mrb[0].mxu0 %v4011
      %v4013 = vpop.f32.mrb[0].mxu0
      %v4014 = vadd.f32 %v3908, %v4013
      %v4015 = vpop.f32.mrb[0].mxu0
      %4016 = vmatprep.mubr.f32.mxu0 0.0
      %v4017 = vand.u32 %v3576, 4294901760
      %v4018 = vsub.f32 %v3576, %v4017
      %v4019 = vand.u32 %v4018, 4294901760
      %4020 = vmatmul.mubr.f32.gmra.mrb[0].mxu0 %v4019
      %v4021 = vpop.f32.mrb[0].mxu0
      %v4022 = vadd.f32 %v3915, %v4021
      %v4023 = vpop.f32.mrb[0].mxu0
      %4024 = vmatprep.mubr.f32.mxu0 0.0
      %v4025 = vand.u32 %v3579, 4294901760
      %v4026 = vsub.f32 %v3579, %v4025
      %v4027 = vand.u32 %v4026, 4294901760
      %4028 = vmatmul.mubr.f32.gmra.mrb[0].mxu0 %v4027
      %v4029 = vpop.f32.mrb[0].mxu0
      %v4030 = vadd.f32 %v3922, %v4029
      %v4031 = vpop.f32.mrb[0].mxu0
      %4032 = vmatprep.mubr.f32.mxu0 0.0
      %v4033 = vand.u32 %v3582, 4294901760
      %v4034 = vsub.f32 %v3582, %v4033
      %v4035 = vand.u32 %v4034, 4294901760
      %4036 = vmatmul.mubr.f32.gmra.mrb[0].mxu0 %v4035
      %v4037 = vpop.f32.mrb[0].mxu0
      %v4038 = vadd.f32 %v3929, %v4037
      %v4039 = vpop.f32.mrb[0].mxu0
      %4040 = vmatprep.mubr.f32.mxu0 0.0
      %v4041 = vand.u32 %v3585, 4294901760
      %v4042 = vsub.f32 %v3585, %v4041
      %v4043 = vand.u32 %v4042, 4294901760
      %4044 = vmatmul.mubr.f32.gmra.mrb[0].mxu0 %v4043
      %v4045 = vpop.f32.mrb[0].mxu0
      %v4046 = vadd.f32 %v3936, %v4045
      %v4047 = vpop.f32.mrb[0].mxu0
      %4048 = vdwg.mxu0
      %4049 = vmatprep.subr.mxu0 0.0
      %v4050 = vand.u32 %v3559, 4294901760
      %v4051 = vsub.f32 %v3559, %v4050
      %v4052 = vand.u32 %v4051, 4294901760
      %4053 = vmatpush1.msra.mxu0 %v4052
      %4054 = vmatprep.subr.mxu0 0.0
      %v4055 = vand.u32 %v3561, 4294901760
      %v4056 = vsub.f32 %v3561, %v4055
      %v4057 = vand.u32 %v4056, 4294901760
      %4058 = vmatpush1.msra.mxu0 %v4057
      %4059 = vmatprep.subr.mxu0 0.0
      %v4060 = vand.u32 %v3563, 4294901760
      %v4061 = vsub.f32 %v3563, %v4060
      %v4062 = vand.u32 %v4061, 4294901760
      %4063 = vmatpush1.msra.mxu0 %v4062
      %4064 = vmatprep.subr.mxu0 0.0
      %v4065 = vand.u32 %v3565, 4294901760
      %v4066 = vsub.f32 %v3565, %v4065
      %v4067 = vand.u32 %v4066, 4294901760
      %4068 = vmatpush1.msra.mxu0 %v4067
      %4069 = vmatprep.subr.mxu0 0.0
      %v4070 = vand.u32 %v3587, 4294901760
      %v4071 = vsub.f32 %v3587, %v4070
      %v4072 = vand.u32 %v4071, 4294901760
      %4073 = vmatpush1.msra.mxu0 %v4072
      %4074 = vmatprep.subr.mxu0 0.0
      %4075 = vmatpush1.msra.mxu0 0.0
      %4076 = vmatprep.subr.mxu0 0.0
      %4077 = vmatpush1.msra.mxu0 0.0
      %4078 = vmatprep.subr.mxu0 0.0
      %4079 = vmatpush1.msra.mxu0 0.0
      %4080 = vmatprep.subr.mxu0 0.0
      %4081 = vmatpush1.msra.mxu0 0.0
      %4082 = vmatprep.subr.mxu0 0.0
      %4083 = vmatpush1.msra.mxu0 0.0
      %4084 = vmatprep.subr.mxu0 0.0
      %4085 = vmatpush1.msra.mxu0 0.0
      %4086 = vmatprep.subr.mxu0 0.0
      %4087 = vmatpush1.msra.mxu0 0.0
      %4088 = vmatprep.subr.mxu0 0.0
      %4089 = vmatpush1.msra.mxu0 0.0
      %4090 = vmatprep.subr.mxu0 0.0
      %4091 = vmatpush1.msra.mxu0 0.0
      %4092 = vmatprep.subr.mxu0 0.0
      %4093 = vmatpush1.msra.mxu0 0.0
      %4094 = vmatprep.subr.mxu0 0.0
      %4095 = vmatpush1.msra.mxu0 0.0
      %4096 = vmatprep.subr.mxu0 0.0
      %4097 = vmatpush1.msra.mxu0 0.0
      %4098 = vmatprep.subr.mxu0 0.0
      %4099 = vmatpush1.msra.mxu0 0.0
      %4100 = vmatprep.subr.mxu0 0.0
      %4101 = vmatpush1.msra.mxu0 0.0
      %4102 = vmatprep.subr.mxu0 0.0
      %4103 = vmatpush1.msra.mxu0 0.0
      %4104 = vmatprep.subr.mxu0 0.0
      %4105 = vmatpush1.msra.mxu0 0.0
      %4106 = vmatprep.subr.mxu0 0.0
      %4107 = vmatpush1.msra.mxu0 0.0
      %4108 = vmatprep.subr.mxu0 0.0
      %4109 = vmatpush1.msra.mxu0 0.0
      %4110 = vmatprep.subr.mxu0 0.0
      %4111 = vmatpush1.msra.mxu0 0.0
      %4112 = vmatprep.subr.mxu0 0.0
      %4113 = vmatpush1.msra.mxu0 0.0
      %4114 = vmatprep.subr.mxu0 0.0
      %4115 = vmatpush1.msra.mxu0 0.0
      %4116 = vmatprep.subr.mxu0 0.0
      %4117 = vmatpush1.msra.mxu0 0.0
      %4118 = vmatprep.subr.mxu0 0.0
      %4119 = vmatpush1.msra.mxu0 0.0
      %4120 = vmatprep.subr.mxu0 0.0
      %4121 = vmatpush1.msra.mxu0 0.0
      %4122 = vmatprep.subr.mxu0 0.0
      %4123 = vmatpush1.msra.mxu0 0.0
      %4124 = vmatprep.subr.mxu0 0.0
      %4125 = vmatpush1.msra.mxu0 0.0
      %4126 = vmatprep.subr.mxu0 0.0
      %4127 = vmatpush1.msra.mxu0 0.0
      %4128 = vmatprep.mubr.f32.mxu0 0.0
      %v4129 = vand.u32 %v3573, 4294901760
      %4130 = vmatmul.mubr.f32.gmra.mrb[0].mxu0 %v4129
      %v4131 = vpop.f32.mrb[0].mxu0
      %v4132 = vadd.f32 %v4014, %v4131
      %v4133 = vpop.f32.mrb[0].mxu0
      %4134 = vmatprep.mubr.f32.mxu0 0.0
      %v4135 = vand.u32 %v3576, 4294901760
      %4136 = vmatmul.mubr.f32.gmra.mrb[0].mxu0 %v4135
      %v4137 = vpop.f32.mrb[0].mxu0
      %v4138 = vadd.f32 %v4022, %v4137
      %v4139 = vpop.f32.mrb[0].mxu0
      %4140 = vmatprep.mubr.f32.mxu0 0.0
      %v4141 = vand.u32 %v3579, 4294901760
      %4142 = vmatmul.mubr.f32.gmra.mrb[0].mxu0 %v4141
      %v4143 = vpop.f32.mrb[0].mxu0
      %v4144 = vadd.f32 %v4030, %v4143
      %v4145 = vpop.f32.mrb[0].mxu0
      %4146 = vmatprep.mubr.f32.mxu0 0.0
      %v4147 = vand.u32 %v3582, 4294901760
      %4148 = vmatmul.mubr.f32.gmra.mrb[0].mxu0 %v4147
      %v4149 = vpop.f32.mrb[0].mxu0
      %v4150 = vadd.f32 %v4038, %v4149
      %v4151 = vpop.f32.mrb[0].mxu0
      %4152 = vmatprep.mubr.f32.mxu0 0.0
      %v4153 = vand.u32 %v3585, 4294901760
      %4154 = vmatmul.mubr.f32.gmra.mrb[0].mxu0 %v4153
      %v4155 = vpop.f32.mrb[0].mxu0
      %v4156 = vadd.f32 %v4046, %v4155
      %v4157 = vpop.f32.mrb[0].mxu0
      %4158 = vdwg.mxu0
      %4159 = vmatprep.subr.mxu0 0.0
      %v4160 = vand.u32 %v3559, 4294901760
      %4161 = vmatpush1.msra.mxu0 %v4160
      %4162 = vmatprep.subr.mxu0 0.0
      %v4163 = vand.u32 %v3561, 4294901760
      %4164 = vmatpush1.msra.mxu0 %v4163
      %4165 = vmatprep.subr.mxu0 0.0
      %v4166 = vand.u32 %v3563, 4294901760
      %4167 = vmatpush1.msra.mxu0 %v4166
      %4168 = vmatprep.subr.mxu0 0.0
      %v4169 = vand.u32 %v3565, 4294901760
      %4170 = vmatpush1.msra.mxu0 %v4169
      %4171 = vmatprep.subr.mxu0 0.0
      %v4172 = vand.u32 %v3587, 4294901760
      %4173 = vmatpush1.msra.mxu0 %v4172
      %4174 = vmatprep.subr.mxu0 0.0
      %4175 = vmatpush1.msra.mxu0 0.0
      %4176 = vmatprep.subr.mxu0 0.0
      %4177 = vmatpush1.msra.mxu0 0.0
      %4178 = vmatprep.subr.mxu0 0.0
      %4179 = vmatpush1.msra.mxu0 0.0
      %4180 = vmatprep.subr.mxu0 0.0
      %4181 = vmatpush1.msra.mxu0 0.0
      %4182 = vmatprep.subr.mxu0 0.0
      %4183 = vmatpush1.msra.mxu0 0.0
      %4184 = vmatprep.subr.mxu0 0.0
      %4185 = vmatpush1.msra.mxu0 0.0
      %4186 = vmatprep.subr.mxu0 0.0
      %4187 = vmatpush1.msra.mxu0 0.0
      %4188 = vmatprep.subr.mxu0 0.0
      %4189 = vmatpush1.msra.mxu0 0.0
      %4190 = vmatprep.subr.mxu0 0.0
      %4191 = vmatpush1.msra.mxu0 0.0
      %4192 = vmatprep.subr.mxu0 0.0
      %4193 = vmatpush1.msra.mxu0 0.0
      %4194 = vmatprep.subr.mxu0 0.0
      %4195 = vmatpush1.msra.mxu0 0.0
      %4196 = vmatprep.subr.mxu0 0.0
      %4197 = vmatpush1.msra.mxu0 0.0
      %4198 = vmatprep.subr.mxu0 0.0
      %4199 = vmatpush1.msra.mxu0 0.0
      %4200 = vmatprep.subr.mxu0 0.0
      %4201 = vmatpush1.msra.mxu0 0.0
      %4202 = vmatprep.subr.mxu0 0.0
      %4203 = vmatpush1.msra.mxu0 0.0
      %4204 = vmatprep.subr.mxu0 0.0
      %4205 = vmatpush1.msra.mxu0 0.0
      %4206 = vmatprep.subr.mxu0 0.0
      %4207 = vmatpush1.msra.mxu0 0.0
      %4208 = vmatprep.subr.mxu0 0.0
      %4209 = vmatpush1.msra.mxu0 0.0
      %4210 = vmatprep.subr.mxu0 0.0
      %4211 = vmatpush1.msra.mxu0 0.0
      %4212 = vmatprep.subr.mxu0 0.0
      %4213 = vmatpush1.msra.mxu0 0.0
      %4214 = vmatprep.subr.mxu0 0.0
      %4215 = vmatpush1.msra.mxu0 0.0
      %4216 = vmatprep.subr.mxu0 0.0
      %4217 = vmatpush1.msra.mxu0 0.0
      %4218 = vmatprep.subr.mxu0 0.0
      %4219 = vmatpush1.msra.mxu0 0.0
      %4220 = vmatprep.subr.mxu0 0.0
      %4221 = vmatpush1.msra.mxu0 0.0
      %4222 = vmatprep.subr.mxu0 0.0
      %4223 = vmatpush1.msra.mxu0 0.0
      %4224 = vmatprep.subr.mxu0 0.0
      %4225 = vmatpush1.msra.mxu0 0.0
      %4226 = vmatprep.subr.mxu0 0.0
      %4227 = vmatpush1.msra.mxu0 0.0
      %4228 = vmatprep.mubr.f32.mxu0 0.0
      %v4229 = vand.u32 %v3573, 4294901760
      %4230 = vmatmul.mubr.f32.gmra.mrb[0].mxu0 %v4229
      %v4231 = vpop.f32.mrb[0].mxu0
      %v4232 = vadd.f32 %v4132, %v4231
      %v4233 = vpop.f32.mrb[0].mxu0
      %4234 = vmatprep.mubr.f32.mxu0 0.0
      %v4235 = vand.u32 %v3576, 4294901760
      %4236 = vmatmul.mubr.f32.gmra.mrb[0].mxu0 %v4235
      %v4237 = vpop.f32.mrb[0].mxu0
      %v4238 = vadd.f32 %v4138, %v4237
      %v4239 = vpop.f32.mrb[0].mxu0
      %4240 = vmatprep.mubr.f32.mxu0 0.0
      %v4241 = vand.u32 %v3579, 4294901760
      %4242 = vmatmul.mubr.f32.gmra.mrb[0].mxu0 %v4241
      %v4243 = vpop.f32.mrb[0].mxu0
      %v4244 = vadd.f32 %v4144, %v4243
      %v4245 = vpop.f32.mrb[0].mxu0
      %4246 = vmatprep.mubr.f32.mxu0 0.0
      %v4247 = vand.u32 %v3582, 4294901760
      %4248 = vmatmul.mubr.f32.gmra.mrb[0].mxu0 %v4247
      %v4249 = vpop.f32.mrb[0].mxu0
      %v4250 = vadd.f32 %v4150, %v4249
      %v4251 = vpop.f32.mrb[0].mxu0
      %4252 = vmatprep.mubr.f32.mxu0 0.0
      %v4253 = vand.u32 %v3585, 4294901760
      %4254 = vmatmul.mubr.f32.gmra.mrb[0].mxu0 %v4253
      %v4255 = vpop.f32.mrb[0].mxu0
      %v4256 = vadd.f32 %v4156, %v4255
      %v4257 = vpop.f32.mrb[0].mxu0
      %4258 = vdwg.mxu0
      %v4259 = vld [vmem:[%s593 + $0x4] sm:$0xf]
      %v4261 = vsel %vm1322, %v4232, 0
      %v4264 = vsel %vm1322, %v4238, 0
      %v4267 = vsel %vm1322, %v4244, 0
      %v4270 = vsel %vm1322, %v4250, 0
      %v4273 = vsel %vm1322, %v4256, 0
      %v4276 = vsel %vm2109, %v4259, 0
      %4278 = vmatprep.subr.mxu0 0.0
      %v4279 = vand.u32 %v4276, 4294901760
      %4280 = vmatpush1.msra.mxu0 %v4279
      %4281 = vmatprep.subr.mxu0 0.0
      %4282 = vmatpush1.msra.mxu0 0.0
      %4283 = vmatprep.subr.mxu0 0.0
      %4284 = vmatpush1.msra.mxu0 0.0
      %4285 = vmatprep.subr.mxu0 0.0
      %4286 = vmatpush1.msra.mxu0 0.0
      %4287 = vmatprep.subr.mxu0 0.0
      %4288 = vmatpush1.msra.mxu0 0.0
      %4289 = vmatprep.subr.mxu0 0.0
      %4290 = vmatpush1.msra.mxu0 0.0
      %4291 = vmatprep.subr.mxu0 0.0
      %4292 = vmatpush1.msra.mxu0 0.0
      %4293 = vmatprep.subr.mxu0 0.0
      %4294 = vmatpush1.msra.mxu0 0.0
      %4295 = vmatprep.subr.mxu0 0.0
      %4296 = vmatpush1.msra.mxu0 0.0
      %4297 = vmatprep.subr.mxu0 0.0
      %4298 = vmatpush1.msra.mxu0 0.0
      %4299 = vmatprep.subr.mxu0 0.0
      %4300 = vmatpush1.msra.mxu0 0.0
      %4301 = vmatprep.subr.mxu0 0.0
      %4302 = vmatpush1.msra.mxu0 0.0
      %4303 = vmatprep.subr.mxu0 0.0
      %4304 = vmatpush1.msra.mxu0 0.0
      %4305 = vmatprep.subr.mxu0 0.0
      %4306 = vmatpush1.msra.mxu0 0.0
      %4307 = vmatprep.subr.mxu0 0.0
      %4308 = vmatpush1.msra.mxu0 0.0
      %4309 = vmatprep.subr.mxu0 0.0
      %4310 = vmatpush1.msra.mxu0 0.0
      %4311 = vmatprep.subr.mxu0 0.0
      %4312 = vmatpush1.msra.mxu0 0.0
      %4313 = vmatprep.subr.mxu0 0.0
      %4314 = vmatpush1.msra.mxu0 0.0
      %4315 = vmatprep.subr.mxu0 0.0
      %4316 = vmatpush1.msra.mxu0 0.0
      %4317 = vmatprep.subr.mxu0 0.0
      %4318 = vmatpush1.msra.mxu0 0.0
      %4319 = vmatprep.subr.mxu0 0.0
      %4320 = vmatpush1.msra.mxu0 0.0
      %4321 = vmatprep.subr.mxu0 0.0
      %4322 = vmatpush1.msra.mxu0 0.0
      %4323 = vmatprep.subr.mxu0 0.0
      %4324 = vmatpush1.msra.mxu0 0.0
      %4325 = vmatprep.subr.mxu0 0.0
      %4326 = vmatpush1.msra.mxu0 0.0
      %4327 = vmatprep.subr.mxu0 0.0
      %4328 = vmatpush1.msra.mxu0 0.0
      %4329 = vmatprep.subr.mxu0 0.0
      %4330 = vmatpush1.msra.mxu0 0.0
      %4331 = vmatprep.subr.mxu0 0.0
      %4332 = vmatpush1.msra.mxu0 0.0
      %4333 = vmatprep.subr.mxu0 0.0
      %4334 = vmatpush1.msra.mxu0 0.0
      %4335 = vmatprep.subr.mxu0 0.0
      %4336 = vmatpush1.msra.mxu0 0.0
      %4337 = vmatprep.subr.mxu0 0.0
      %4338 = vmatpush1.msra.mxu0 0.0
      %4339 = vmatprep.subr.mxu0 0.0
      %4340 = vmatpush1.msra.mxu0 0.0
      %4341 = vmatprep.subr.mxu0 0.0
      %4342 = vmatpush1.msra.mxu0 0.0
      %4343 = vmatprep.mubr.f32.mxu0 0.0
      %v4344 = vand.u32 %v4261, 4294901760
      %v4345 = vsub.f32 %v4261, %v4344
      %v4346 = vand.u32 %v4345, 4294901760
      %v4347 = vsub.f32 %v4345, %v4346
      %v4348 = vand.u32 %v4347, 4294901760
      %4349 = vmatmul.mubr.f32.gmra.mrb[0].mxu0 %v4348
      %v4350 = vpop.f32.mrb[0].mxu0
      %v4351 = vadd.f32 0.0, %v4350
      %v4352 = vpop.f32.mrb[0].mxu0
      %4353 = vmatprep.mubr.f32.mxu0 0.0
      %v4354 = vand.u32 %v4264, 4294901760
      %v4355 = vsub.f32 %v4264, %v4354
      %v4356 = vand.u32 %v4355, 4294901760
      %v4357 = vsub.f32 %v4355, %v4356
      %v4358 = vand.u32 %v4357, 4294901760
      %4359 = vmatmul.mubr.f32.gmra.mrb[0].mxu0 %v4358
      %v4360 = vpop.f32.mrb[0].mxu0
      %v4361 = vadd.f32 0.0, %v4360
      %v4362 = vpop.f32.mrb[0].mxu0
      %4363 = vmatprep.mubr.f32.mxu0 0.0
      %v4364 = vand.u32 %v4267, 4294901760
      %v4365 = vsub.f32 %v4267, %v4364
      %v4366 = vand.u32 %v4365, 4294901760
      %v4367 = vsub.f32 %v4365, %v4366
      %v4368 = vand.u32 %v4367, 4294901760
      %4369 = vmatmul.mubr.f32.gmra.mrb[0].mxu0 %v4368
      %v4370 = vpop.f32.mrb[0].mxu0
      %v4371 = vadd.f32 0.0, %v4370
      %v4372 = vpop.f32.mrb[0].mxu0
      %4373 = vmatprep.mubr.f32.mxu0 0.0
      %v4374 = vand.u32 %v4270, 4294901760
      %v4375 = vsub.f32 %v4270, %v4374
      %v4376 = vand.u32 %v4375, 4294901760
      %v4377 = vsub.f32 %v4375, %v4376
      %v4378 = vand.u32 %v4377, 4294901760
      %4379 = vmatmul.mubr.f32.gmra.mrb[0].mxu0 %v4378
      %v4380 = vpop.f32.mrb[0].mxu0
      %v4381 = vadd.f32 0.0, %v4380
      %v4382 = vpop.f32.mrb[0].mxu0
      %4383 = vmatprep.mubr.f32.mxu0 0.0
      %v4384 = vand.u32 %v4273, 4294901760
      %v4385 = vsub.f32 %v4273, %v4384
      %v4386 = vand.u32 %v4385, 4294901760
      %v4387 = vsub.f32 %v4385, %v4386
      %v4388 = vand.u32 %v4387, 4294901760
      %4389 = vmatmul.mubr.f32.gmra.mrb[0].mxu0 %v4388
      %v4390 = vpop.f32.mrb[0].mxu0
      %v4391 = vadd.f32 0.0, %v4390
      %v4392 = vpop.f32.mrb[0].mxu0
      %4393 = vdwg.mxu0
      %4394 = vmatprep.subr.mxu0 0.0
      %v4395 = vand.u32 %v4276, 4294901760
      %v4396 = vsub.f32 %v4276, %v4395
      %v4397 = vand.u32 %v4396, 4294901760
      %v4398 = vsub.f32 %v4396, %v4397
      %v4399 = vand.u32 %v4398, 4294901760
      %4400 = vmatpush1.msra.mxu0 %v4399
      %4401 = vmatprep.subr.mxu0 0.0
      %4402 = vmatpush1.msra.mxu0 0.0
      %4403 = vmatprep.subr.mxu0 0.0
      %4404 = vmatpush1.msra.mxu0 0.0
      %4405 = vmatprep.subr.mxu0 0.0
      %4406 = vmatpush1.msra.mxu0 0.0
      %4407 = vmatprep.subr.mxu0 0.0
      %4408 = vmatpush1.msra.mxu0 0.0
      %4409 = vmatprep.subr.mxu0 0.0
      %4410 = vmatpush1.msra.mxu0 0.0
      %4411 = vmatprep.subr.mxu0 0.0
      %4412 = vmatpush1.msra.mxu0 0.0
      %4413 = vmatprep.subr.mxu0 0.0
      %4414 = vmatpush1.msra.mxu0 0.0
      %4415 = vmatprep.subr.mxu0 0.0
      %4416 = vmatpush1.msra.mxu0 0.0
      %4417 = vmatprep.subr.mxu0 0.0
      %4418 = vmatpush1.msra.mxu0 0.0
      %4419 = vmatprep.subr.mxu0 0.0
      %4420 = vmatpush1.msra.mxu0 0.0
      %4421 = vmatprep.subr.mxu0 0.0
      %4422 = vmatpush1.msra.mxu0 0.0
      %4423 = vmatprep.subr.mxu0 0.0
      %4424 = vmatpush1.msra.mxu0 0.0
      %4425 = vmatprep.subr.mxu0 0.0
      %4426 = vmatpush1.msra.mxu0 0.0
      %4427 = vmatprep.subr.mxu0 0.0
      %4428 = vmatpush1.msra.mxu0 0.0
      %4429 = vmatprep.subr.mxu0 0.0
      %4430 = vmatpush1.msra.mxu0 0.0
      %4431 = vmatprep.subr.mxu0 0.0
      %4432 = vmatpush1.msra.mxu0 0.0
      %4433 = vmatprep.subr.mxu0 0.0
      %4434 = vmatpush1.msra.mxu0 0.0
      %4435 = vmatprep.subr.mxu0 0.0
      %4436 = vmatpush1.msra.mxu0 0.0
      %4437 = vmatprep.subr.mxu0 0.0
      %4438 = vmatpush1.msra.mxu0 0.0
      %4439 = vmatprep.subr.mxu0 0.0
      %4440 = vmatpush1.msra.mxu0 0.0
      %4441 = vmatprep.subr.mxu0 0.0
      %4442 = vmatpush1.msra.mxu0 0.0
      %4443 = vmatprep.subr.mxu0 0.0
      %4444 = vmatpush1.msra.mxu0 0.0
      %4445 = vmatprep.subr.mxu0 0.0
      %4446 = vmatpush1.msra.mxu0 0.0
      %4447 = vmatprep.subr.mxu0 0.0
      %4448 = vmatpush1.msra.mxu0 0.0
      %4449 = vmatprep.subr.mxu0 0.0
      %4450 = vmatpush1.msra.mxu0 0.0
      %4451 = vmatprep.subr.mxu0 0.0
      %4452 = vmatpush1.msra.mxu0 0.0
      %4453 = vmatprep.subr.mxu0 0.0
      %4454 = vmatpush1.msra.mxu0 0.0
      %4455 = vmatprep.subr.mxu0 0.0
      %4456 = vmatpush1.msra.mxu0 0.0
      %4457 = vmatprep.subr.mxu0 0.0
      %4458 = vmatpush1.msra.mxu0 0.0
      %4459 = vmatprep.subr.mxu0 0.0
      %4460 = vmatpush1.msra.mxu0 0.0
      %4461 = vmatprep.subr.mxu0 0.0
      %4462 = vmatpush1.msra.mxu0 0.0
      %4463 = vmatprep.mubr.f32.mxu0 0.0
      %v4464 = vand.u32 %v4261, 4294901760
      %4465 = vmatmul.mubr.f32.gmra.mrb[0].mxu0 %v4464
      %v4466 = vpop.f32.mrb[0].mxu0
      %v4467 = vadd.f32 %v4351, %v4466
      %v4468 = vpop.f32.mrb[0].mxu0
      %4469 = vmatprep.mubr.f32.mxu0 0.0
      %v4470 = vand.u32 %v4264, 4294901760
      %4471 = vmatmul.mubr.f32.gmra.mrb[0].mxu0 %v4470
      %v4472 = vpop.f32.mrb[0].mxu0
      %v4473 = vadd.f32 %v4361, %v4472
      %v4474 = vpop.f32.mrb[0].mxu0
      %4475 = vmatprep.mubr.f32.mxu0 0.0
      %v4476 = vand.u32 %v4267, 4294901760
      %4477 = vmatmul.mubr.f32.gmra.mrb[0].mxu0 %v4476
      %v4478 = vpop.f32.mrb[0].mxu0
      %v4479 = vadd.f32 %v4371, %v4478
      %v4480 = vpop.f32.mrb[0].mxu0
      %4481 = vmatprep.mubr.f32.mxu0 0.0
      %v4482 = vand.u32 %v4270, 4294901760
      %4483 = vmatmul.mubr.f32.gmra.mrb[0].mxu0 %v4482
      %v4484 = vpop.f32.mrb[0].mxu0
      %v4485 = vadd.f32 %v4381, %v4484
      %v4486 = vpop.f32.mrb[0].mxu0
      %4487 = vmatprep.mubr.f32.mxu0 0.0
      %v4488 = vand.u32 %v4273, 4294901760
      %4489 = vmatmul.mubr.f32.gmra.mrb[0].mxu0 %v4488
      %v4490 = vpop.f32.mrb[0].mxu0
      %v4491 = vadd.f32 %v4391, %v4490
      %v4492 = vpop.f32.mrb[0].mxu0
      %4493 = vdwg.mxu0
      %4494 = vmatprep.subr.mxu0 0.0
      %v4495 = vand.u32 %v4276, 4294901760
      %v4496 = vsub.f32 %v4276, %v4495
      %4497 = vmatpush1.msra.mxu0 %v4496
      %4498 = vmatprep.subr.mxu0 0.0
      %4499 = vmatpush1.msra.mxu0 0.0
      %4500 = vmatprep.subr.mxu0 0.0
      %4501 = vmatpush1.msra.mxu0 0.0
      %4502 = vmatprep.subr.mxu0 0.0
      %4503 = vmatpush1.msra.mxu0 0.0
      %4504 = vmatprep.subr.mxu0 0.0
      %4505 = vmatpush1.msra.mxu0 0.0
      %4506 = vmatprep.subr.mxu0 0.0
      %4507 = vmatpush1.msra.mxu0 0.0
      %4508 = vmatprep.subr.mxu0 0.0
      %4509 = vmatpush1.msra.mxu0 0.0
      %4510 = vmatprep.subr.mxu0 0.0
      %4511 = vmatpush1.msra.mxu0 0.0
      %4512 = vmatprep.subr.mxu0 0.0
      %4513 = vmatpush1.msra.mxu0 0.0
      %4514 = vmatprep.subr.mxu0 0.0
      %4515 = vmatpush1.msra.mxu0 0.0
      %4516 = vmatprep.subr.mxu0 0.0
      %4517 = vmatpush1.msra.mxu0 0.0
      %4518 = vmatprep.subr.mxu0 0.0
      %4519 = vmatpush1.msra.mxu0 0.0
      %4520 = vmatprep.subr.mxu0 0.0
      %4521 = vmatpush1.msra.mxu0 0.0
      %4522 = vmatprep.subr.mxu0 0.0
      %4523 = vmatpush1.msra.mxu0 0.0
      %4524 = vmatprep.subr.mxu0 0.0
      %4525 = vmatpush1.msra.mxu0 0.0
      %4526 = vmatprep.subr.mxu0 0.0
      %4527 = vmatpush1.msra.mxu0 0.0
      %4528 = vmatprep.subr.mxu0 0.0
      %4529 = vmatpush1.msra.mxu0 0.0
      %4530 = vmatprep.subr.mxu0 0.0
      %4531 = vmatpush1.msra.mxu0 0.0
      %4532 = vmatprep.subr.mxu0 0.0
      %4533 = vmatpush1.msra.mxu0 0.0
      %4534 = vmatprep.subr.mxu0 0.0
      %4535 = vmatpush1.msra.mxu0 0.0
      %4536 = vmatprep.subr.mxu0 0.0
      %4537 = vmatpush1.msra.mxu0 0.0
      %4538 = vmatprep.subr.mxu0 0.0
      %4539 = vmatpush1.msra.mxu0 0.0
      %4540 = vmatprep.subr.mxu0 0.0
      %4541 = vmatpush1.msra.mxu0 0.0
      %4542 = vmatprep.subr.mxu0 0.0
      %4543 = vmatpush1.msra.mxu0 0.0
      %4544 = vmatprep.subr.mxu0 0.0
      %4545 = vmatpush1.msra.mxu0 0.0
      %4546 = vmatprep.subr.mxu0 0.0
      %4547 = vmatpush1.msra.mxu0 0.0
      %4548 = vmatprep.subr.mxu0 0.0
      %4549 = vmatpush1.msra.mxu0 0.0
      %4550 = vmatprep.subr.mxu0 0.0
      %4551 = vmatpush1.msra.mxu0 0.0
      %4552 = vmatprep.subr.mxu0 0.0
      %4553 = vmatpush1.msra.mxu0 0.0
      %4554 = vmatprep.subr.mxu0 0.0
      %4555 = vmatpush1.msra.mxu0 0.0
      %4556 = vmatprep.subr.mxu0 0.0
      %4557 = vmatpush1.msra.mxu0 0.0
      %4558 = vmatprep.subr.mxu0 0.0
      %4559 = vmatpush1.msra.mxu0 0.0
      %4560 = vmatprep.mubr.f32.mxu0 0.0
      %v4561 = vand.u32 %v4261, 4294901760
      %v4562 = vsub.f32 %v4261, %v4561
      %4563 = vmatmul.mubr.f32.gmra.mrb[0].mxu0 %v4562
      %v4564 = vpop.f32.mrb[0].mxu0
      %v4565 = vadd.f32 %v4467, %v4564
      %v4566 = vpop.f32.mrb[0].mxu0
      %4567 = vmatprep.mubr.f32.mxu0 0.0
      %v4568 = vand.u32 %v4264, 4294901760
      %v4569 = vsub.f32 %v4264, %v4568
      %4570 = vmatmul.mubr.f32.gmra.mrb[0].mxu0 %v4569
      %v4571 = vpop.f32.mrb[0].mxu0
      %v4572 = vadd.f32 %v4473, %v4571
      %v4573 = vpop.f32.mrb[0].mxu0
      %4574 = vmatprep.mubr.f32.mxu0 0.0
      %v4575 = vand.u32 %v4267, 4294901760
      %v4576 = vsub.f32 %v4267, %v4575
      %4577 = vmatmul.mubr.f32.gmra.mrb[0].mxu0 %v4576
      %v4578 = vpop.f32.mrb[0].mxu0
      %v4579 = vadd.f32 %v4479, %v4578
      %v4580 = vpop.f32.mrb[0].mxu0
      %4581 = vmatprep.mubr.f32.mxu0 0.0
      %v4582 = vand.u32 %v4270, 4294901760
      %v4583 = vsub.f32 %v4270, %v4582
      %4584 = vmatmul.mubr.f32.gmra.mrb[0].mxu0 %v4583
      %v4585 = vpop.f32.mrb[0].mxu0
      %v4586 = vadd.f32 %v4485, %v4585
      %v4587 = vpop.f32.mrb[0].mxu0
      %4588 = vmatprep.mubr.f32.mxu0 0.0
      %v4589 = vand.u32 %v4273, 4294901760
      %v4590 = vsub.f32 %v4273, %v4589
      %4591 = vmatmul.mubr.f32.gmra.mrb[0].mxu0 %v4590
      %v4592 = vpop.f32.mrb[0].mxu0
      %v4593 = vadd.f32 %v4491, %v4592
      %v4594 = vpop.f32.mrb[0].mxu0
      %4595 = vdwg.mxu0
      %4596 = vmatprep.subr.mxu0 0.0
      %v4597 = vand.u32 %v4276, 4294901760
      %4598 = vmatpush1.msra.mxu0 %v4597
      %4599 = vmatprep.subr.mxu0 0.0
      %4600 = vmatpush1.msra.mxu0 0.0
      %4601 = vmatprep.subr.mxu0 0.0
      %4602 = vmatpush1.msra.mxu0 0.0
      %4603 = vmatprep.subr.mxu0 0.0
      %4604 = vmatpush1.msra.mxu0 0.0
      %4605 = vmatprep.subr.mxu0 0.0
      %4606 = vmatpush1.msra.mxu0 0.0
      %4607 = vmatprep.subr.mxu0 0.0
      %4608 = vmatpush1.msra.mxu0 0.0
      %4609 = vmatprep.subr.mxu0 0.0
      %4610 = vmatpush1.msra.mxu0 0.0
      %4611 = vmatprep.subr.mxu0 0.0
      %4612 = vmatpush1.msra.mxu0 0.0
      %4613 = vmatprep.subr.mxu0 0.0
      %4614 = vmatpush1.msra.mxu0 0.0
      %4615 = vmatprep.subr.mxu0 0.0
      %4616 = vmatpush1.msra.mxu0 0.0
      %4617 = vmatprep.subr.mxu0 0.0
      %4618 = vmatpush1.msra.mxu0 0.0
      %4619 = vmatprep.subr.mxu0 0.0
      %4620 = vmatpush1.msra.mxu0 0.0
      %4621 = vmatprep.subr.mxu0 0.0
      %4622 = vmatpush1.msra.mxu0 0.0
      %4623 = vmatprep.subr.mxu0 0.0
      %4624 = vmatpush1.msra.mxu0 0.0
      %4625 = vmatprep.subr.mxu0 0.0
      %4626 = vmatpush1.msra.mxu0 0.0
      %4627 = vmatprep.subr.mxu0 0.0
      %4628 = vmatpush1.msra.mxu0 0.0
      %4629 = vmatprep.subr.mxu0 0.0
      %4630 = vmatpush1.msra.mxu0 0.0
      %4631 = vmatprep.subr.mxu0 0.0
      %4632 = vmatpush1.msra.mxu0 0.0
      %4633 = vmatprep.subr.mxu0 0.0
      %4634 = vmatpush1.msra.mxu0 0.0
      %4635 = vmatprep.subr.mxu0 0.0
      %4636 = vmatpush1.msra.mxu0 0.0
      %4637 = vmatprep.subr.mxu0 0.0
      %4638 = vmatpush1.msra.mxu0 0.0
      %4639 = vmatprep.subr.mxu0 0.0
      %4640 = vmatpush1.msra.mxu0 0.0
      %4641 = vmatprep.subr.mxu0 0.0
      %4642 = vmatpush1.msra.mxu0 0.0
      %4643 = vmatprep.subr.mxu0 0.0
      %4644 = vmatpush1.msra.mxu0 0.0
      %4645 = vmatprep.subr.mxu0 0.0
      %4646 = vmatpush1.msra.mxu0 0.0
      %4647 = vmatprep.subr.mxu0 0.0
      %4648 = vmatpush1.msra.mxu0 0.0
      %4649 = vmatprep.subr.mxu0 0.0
      %4650 = vmatpush1.msra.mxu0 0.0
      %4651 = vmatprep.subr.mxu0 0.0
      %4652 = vmatpush1.msra.mxu0 0.0
      %4653 = vmatprep.subr.mxu0 0.0
      %4654 = vmatpush1.msra.mxu0 0.0
      %4655 = vmatprep.subr.mxu0 0.0
      %4656 = vmatpush1.msra.mxu0 0.0
      %4657 = vmatprep.subr.mxu0 0.0
      %4658 = vmatpush1.msra.mxu0 0.0
      %4659 = vmatprep.subr.mxu0 0.0
      %4660 = vmatpush1.msra.mxu0 0.0
      %4661 = vmatprep.mubr.f32.mxu0 0.0
      %v4662 = vand.u32 %v4261, 4294901760
      %v4663 = vsub.f32 %v4261, %v4662
      %v4664 = vand.u32 %v4663, 4294901760
      %4665 = vmatmul.mubr.f32.gmra.mrb[0].mxu0 %v4664
      %v4666 = vpop.f32.mrb[0].mxu0
      %v4667 = vadd.f32 %v4565, %v4666
      %v4668 = vpop.f32.mrb[0].mxu0
      %4669 = vmatprep.mubr.f32.mxu0 0.0
      %v4670 = vand.u32 %v4264, 4294901760
      %v4671 = vsub.f32 %v4264, %v4670
      %v4672 = vand.u32 %v4671, 4294901760
      %4673 = vmatmul.mubr.f32.gmra.mrb[0].mxu0 %v4672
      %v4674 = vpop.f32.mrb[0].mxu0
      %v4675 = vadd.f32 %v4572, %v4674
      %v4676 = vpop.f32.mrb[0].mxu0
      %4677 = vmatprep.mubr.f32.mxu0 0.0
      %v4678 = vand.u32 %v4267, 4294901760
      %v4679 = vsub.f32 %v4267, %v4678
      %v4680 = vand.u32 %v4679, 4294901760
      %4681 = vmatmul.mubr.f32.gmra.mrb[0].mxu0 %v4680
      %v4682 = vpop.f32.mrb[0].mxu0
      %v4683 = vadd.f32 %v4579, %v4682
      %v4684 = vpop.f32.mrb[0].mxu0
      %4685 = vmatprep.mubr.f32.mxu0 0.0
      %v4686 = vand.u32 %v4270, 4294901760
      %v4687 = vsub.f32 %v4270, %v4686
      %v4688 = vand.u32 %v4687, 4294901760
      %4689 = vmatmul.mubr.f32.gmra.mrb[0].mxu0 %v4688
      %v4690 = vpop.f32.mrb[0].mxu0
      %v4691 = vadd.f32 %v4586, %v4690
      %v4692 = vpop.f32.mrb[0].mxu0
      %4693 = vmatprep.mubr.f32.mxu0 0.0
      %v4694 = vand.u32 %v4273, 4294901760
      %v4695 = vsub.f32 %v4273, %v4694
      %v4696 = vand.u32 %v4695, 4294901760
      %4697 = vmatmul.mubr.f32.gmra.mrb[0].mxu0 %v4696
      %v4698 = vpop.f32.mrb[0].mxu0
      %v4699 = vadd.f32 %v4593, %v4698
      %v4700 = vpop.f32.mrb[0].mxu0
      %4701 = vdwg.mxu0
      %4702 = vmatprep.subr.mxu0 0.0
      %v4703 = vand.u32 %v4276, 4294901760
      %v4704 = vsub.f32 %v4276, %v4703
      %v4705 = vand.u32 %v4704, 4294901760
      %4706 = vmatpush1.msra.mxu0 %v4705
      %4707 = vmatprep.subr.mxu0 0.0
      %4708 = vmatpush1.msra.mxu0 0.0
      %4709 = vmatprep.subr.mxu0 0.0
      %4710 = vmatpush1.msra.mxu0 0.0
      %4711 = vmatprep.subr.mxu0 0.0
      %4712 = vmatpush1.msra.mxu0 0.0
      %4713 = vmatprep.subr.mxu0 0.0
      %4714 = vmatpush1.msra.mxu0 0.0
      %4715 = vmatprep.subr.mxu0 0.0
      %4716 = vmatpush1.msra.mxu0 0.0
      %4717 = vmatprep.subr.mxu0 0.0
      %4718 = vmatpush1.msra.mxu0 0.0
      %4719 = vmatprep.subr.mxu0 0.0
      %4720 = vmatpush1.msra.mxu0 0.0
      %4721 = vmatprep.subr.mxu0 0.0
      %4722 = vmatpush1.msra.mxu0 0.0
      %4723 = vmatprep.subr.mxu0 0.0
      %4724 = vmatpush1.msra.mxu0 0.0
      %4725 = vmatprep.subr.mxu0 0.0
      %4726 = vmatpush1.msra.mxu0 0.0
      %4727 = vmatprep.subr.mxu0 0.0
      %4728 = vmatpush1.msra.mxu0 0.0
      %4729 = vmatprep.subr.mxu0 0.0
      %4730 = vmatpush1.msra.mxu0 0.0
      %4731 = vmatprep.subr.mxu0 0.0
      %4732 = vmatpush1.msra.mxu0 0.0
      %4733 = vmatprep.subr.mxu0 0.0
      %4734 = vmatpush1.msra.mxu0 0.0
      %4735 = vmatprep.subr.mxu0 0.0
      %4736 = vmatpush1.msra.mxu0 0.0
      %4737 = vmatprep.subr.mxu0 0.0
      %4738 = vmatpush1.msra.mxu0 0.0
      %4739 = vmatprep.subr.mxu0 0.0
      %4740 = vmatpush1.msra.mxu0 0.0
      %4741 = vmatprep.subr.mxu0 0.0
      %4742 = vmatpush1.msra.mxu0 0.0
      %4743 = vmatprep.subr.mxu0 0.0
      %4744 = vmatpush1.msra.mxu0 0.0
      %4745 = vmatprep.subr.mxu0 0.0
      %4746 = vmatpush1.msra.mxu0 0.0
      %4747 = vmatprep.subr.mxu0 0.0
      %4748 = vmatpush1.msra.mxu0 0.0
      %4749 = vmatprep.subr.mxu0 0.0
      %4750 = vmatpush1.msra.mxu0 0.0
      %4751 = vmatprep.subr.mxu0 0.0
      %4752 = vmatpush1.msra.mxu0 0.0
      %4753 = vmatprep.subr.mxu0 0.0
      %4754 = vmatpush1.msra.mxu0 0.0
      %4755 = vmatprep.subr.mxu0 0.0
      %4756 = vmatpush1.msra.mxu0 0.0
      %4757 = vmatprep.subr.mxu0 0.0
      %4758 = vmatpush1.msra.mxu0 0.0
      %4759 = vmatprep.subr.mxu0 0.0
      %4760 = vmatpush1.msra.mxu0 0.0
      %4761 = vmatprep.subr.mxu0 0.0
      %4762 = vmatpush1.msra.mxu0 0.0
      %4763 = vmatprep.subr.mxu0 0.0
      %4764 = vmatpush1.msra.mxu0 0.0
      %4765 = vmatprep.subr.mxu0 0.0
      %4766 = vmatpush1.msra.mxu0 0.0
      %4767 = vmatprep.subr.mxu0 0.0
      %4768 = vmatpush1.msra.mxu0 0.0
      %4769 = vmatprep.mubr.f32.mxu0 0.0
      %v4770 = vand.u32 %v4261, 4294901760
      %4771 = vmatmul.mubr.f32.gmra.mrb[0].mxu0 %v4770
      %v4772 = vpop.f32.mrb[0].mxu0
      %v4773 = vadd.f32 %v4667, %v4772
      %v4774 = vpop.f32.mrb[0].mxu0
      %4775 = vmatprep.mubr.f32.mxu0 0.0
      %v4776 = vand.u32 %v4264, 4294901760
      %4777 = vmatmul.mubr.f32.gmra.mrb[0].mxu0 %v4776
      %v4778 = vpop.f32.mrb[0].mxu0
      %v4779 = vadd.f32 %v4675, %v4778
      %v4780 = vpop.f32.mrb[0].mxu0
      %4781 = vmatprep.mubr.f32.mxu0 0.0
      %v4782 = vand.u32 %v4267, 4294901760
      %4783 = vmatmul.mubr.f32.gmra.mrb[0].mxu0 %v4782
      %v4784 = vpop.f32.mrb[0].mxu0
      %v4785 = vadd.f32 %v4683, %v4784
      %v4786 = vpop.f32.mrb[0].mxu0
      %4787 = vmatprep.mubr.f32.mxu0 0.0
      %v4788 = vand.u32 %v4270, 4294901760
      %4789 = vmatmul.mubr.f32.gmra.mrb[0].mxu0 %v4788
      %v4790 = vpop.f32.mrb[0].mxu0
      %v4791 = vadd.f32 %v4691, %v4790
      %v4792 = vpop.f32.mrb[0].mxu0
      %4793 = vmatprep.mubr.f32.mxu0 0.0
      %v4794 = vand.u32 %v4273, 4294901760
      %4795 = vmatmul.mubr.f32.gmra.mrb[0].mxu0 %v4794
      %v4796 = vpop.f32.mrb[0].mxu0
      %v4797 = vadd.f32 %v4699, %v4796
      %v4798 = vpop.f32.mrb[0].mxu0
      %4799 = vdwg.mxu0
      %4800 = vmatprep.subr.mxu0 0.0
      %v4801 = vand.u32 %v4276, 4294901760
      %4802 = vmatpush1.msra.mxu0 %v4801
      %4803 = vmatprep.subr.mxu0 0.0
      %4804 = vmatpush1.msra.mxu0 0.0
      %4805 = vmatprep.subr.mxu0 0.0
      %4806 = vmatpush1.msra.mxu0 0.0
      %4807 = vmatprep.subr.mxu0 0.0
      %4808 = vmatpush1.msra.mxu0 0.0
      %4809 = vmatprep.subr.mxu0 0.0
      %4810 = vmatpush1.msra.mxu0 0.0
      %4811 = vmatprep.subr.mxu0 0.0
      %4812 = vmatpush1.msra.mxu0 0.0
      %4813 = vmatprep.subr.mxu0 0.0
      %4814 = vmatpush1.msra.mxu0 0.0
      %4815 = vmatprep.subr.mxu0 0.0
      %4816 = vmatpush1.msra.mxu0 0.0
      %4817 = vmatprep.subr.mxu0 0.0
      %4818 = vmatpush1.msra.mxu0 0.0
      %4819 = vmatprep.subr.mxu0 0.0
      %4820 = vmatpush1.msra.mxu0 0.0
      %4821 = vmatprep.subr.mxu0 0.0
      %4822 = vmatpush1.msra.mxu0 0.0
      %4823 = vmatprep.subr.mxu0 0.0
      %4824 = vmatpush1.msra.mxu0 0.0
      %4825 = vmatprep.subr.mxu0 0.0
      %4826 = vmatpush1.msra.mxu0 0.0
      %4827 = vmatprep.subr.mxu0 0.0
      %4828 = vmatpush1.msra.mxu0 0.0
      %4829 = vmatprep.subr.mxu0 0.0
      %4830 = vmatpush1.msra.mxu0 0.0
      %4831 = vmatprep.subr.mxu0 0.0
      %4832 = vmatpush1.msra.mxu0 0.0
      %4833 = vmatprep.subr.mxu0 0.0
      %4834 = vmatpush1.msra.mxu0 0.0
      %4835 = vmatprep.subr.mxu0 0.0
      %4836 = vmatpush1.msra.mxu0 0.0
      %4837 = vmatprep.subr.mxu0 0.0
      %4838 = vmatpush1.msra.mxu0 0.0
      %4839 = vmatprep.subr.mxu0 0.0
      %4840 = vmatpush1.msra.mxu0 0.0
      %4841 = vmatprep.subr.mxu0 0.0
      %4842 = vmatpush1.msra.mxu0 0.0
      %4843 = vmatprep.subr.mxu0 0.0
      %4844 = vmatpush1.msra.mxu0 0.0
      %4845 = vmatprep.subr.mxu0 0.0
      %4846 = vmatpush1.msra.mxu0 0.0
      %4847 = vmatprep.subr.mxu0 0.0
      %4848 = vmatpush1.msra.mxu0 0.0
      %4849 = vmatprep.subr.mxu0 0.0
      %4850 = vmatpush1.msra.mxu0 0.0
      %4851 = vmatprep.subr.mxu0 0.0
      %4852 = vmatpush1.msra.mxu0 0.0
      %4853 = vmatprep.subr.mxu0 0.0
      %4854 = vmatpush1.msra.mxu0 0.0
      %4855 = vmatprep.subr.mxu0 0.0
      %4856 = vmatpush1.msra.mxu0 0.0
      %4857 = vmatprep.subr.mxu0 0.0
      %4858 = vmatpush1.msra.mxu0 0.0
      %4859 = vmatprep.subr.mxu0 0.0
      %4860 = vmatpush1.msra.mxu0 0.0
      %4861 = vmatprep.subr.mxu0 0.0
      %4862 = vmatpush1.msra.mxu0 0.0
      %4863 = vmatprep.subr.mxu0 0.0
      %4864 = vmatpush1.msra.mxu0 0.0
      %4865 = vmatprep.mubr.f32.mxu0 0.0
      %v4866 = vand.u32 %v4261, 4294901760
      %4867 = vmatmul.mubr.f32.gmra.mrb[0].mxu0 %v4866
      %v4868 = vpop.f32.mrb[0].mxu0
      %v4869 = vadd.f32 %v4773, %v4868
      %v4870 = vpop.f32.mrb[0].mxu0
      %4871 = vmatprep.mubr.f32.mxu0 0.0
      %v4872 = vand.u32 %v4264, 4294901760
      %4873 = vmatmul.mubr.f32.gmra.mrb[0].mxu0 %v4872
      %v4874 = vpop.f32.mrb[0].mxu0
      %v4875 = vadd.f32 %v4779, %v4874
      %v4876 = vpop.f32.mrb[0].mxu0
      %4877 = vmatprep.mubr.f32.mxu0 0.0
      %v4878 = vand.u32 %v4267, 4294901760
      %4879 = vmatmul.mubr.f32.gmra.mrb[0].mxu0 %v4878
      %v4880 = vpop.f32.mrb[0].mxu0
      %v4881 = vadd.f32 %v4785, %v4880
      %v4882 = vpop.f32.mrb[0].mxu0
      %4883 = vmatprep.mubr.f32.mxu0 0.0
      %v4884 = vand.u32 %v4270, 4294901760
      %4885 = vmatmul.mubr.f32.gmra.mrb[0].mxu0 %v4884
      %v4886 = vpop.f32.mrb[0].mxu0
      %v4887 = vadd.f32 %v4791, %v4886
      %v4888 = vpop.f32.mrb[0].mxu0
      %4889 = vmatprep.mubr.f32.mxu0 0.0
      %v4890 = vand.u32 %v4273, 4294901760
      %4891 = vmatmul.mubr.f32.gmra.mrb[0].mxu0 %v4890
      %v4892 = vpop.f32.mrb[0].mxu0
      %v4893 = vadd.f32 %v4797, %v4892
      %v4894 = vpop.f32.mrb[0].mxu0
      %4895 = vdwg.mxu0
      %v4897 = vsel %vm1322, %v2755, 0
      %v4900 = vsel %vm1322, %v2761, 0
      %v4903 = vsel %vm1322, %v2767, 0
      %v4906 = vsel %vm1322, %v2773, 0
      %v4909 = vsel %vm1322, %v2779, 0
      %v4912 = vsel %vm2109, %v2782, 0
      %4914 = vmatprep.subr.mxu0 0.0
      %v4915 = vand.u32 %v4912, 4294901760
      %4916 = vmatpush1.msra.mxu0 %v4915
      %4917 = vmatprep.subr.mxu0 0.0
      %4918 = vmatpush1.msra.mxu0 0.0
      %4919 = vmatprep.subr.mxu0 0.0
      %4920 = vmatpush1.msra.mxu0 0.0
      %4921 = vmatprep.subr.mxu0 0.0
      %4922 = vmatpush1.msra.mxu0 0.0
      %4923 = vmatprep.subr.mxu0 0.0
      %4924 = vmatpush1.msra.mxu0 0.0
      %4925 = vmatprep.subr.mxu0 0.0
      %4926 = vmatpush1.msra.mxu0 0.0
      %4927 = vmatprep.subr.mxu0 0.0
      %4928 = vmatpush1.msra.mxu0 0.0
      %4929 = vmatprep.subr.mxu0 0.0
      %4930 = vmatpush1.msra.mxu0 0.0
      %4931 = vmatprep.subr.mxu0 0.0
      %4932 = vmatpush1.msra.mxu0 0.0
      %4933 = vmatprep.subr.mxu0 0.0
      %4934 = vmatpush1.msra.mxu0 0.0
      %4935 = vmatprep.subr.mxu0 0.0
      %4936 = vmatpush1.msra.mxu0 0.0
      %4937 = vmatprep.subr.mxu0 0.0
      %4938 = vmatpush1.msra.mxu0 0.0
      %4939 = vmatprep.subr.mxu0 0.0
      %4940 = vmatpush1.msra.mxu0 0.0
      %4941 = vmatprep.subr.mxu0 0.0
      %4942 = vmatpush1.msra.mxu0 0.0
      %4943 = vmatprep.subr.mxu0 0.0
      %4944 = vmatpush1.msra.mxu0 0.0
      %4945 = vmatprep.subr.mxu0 0.0
      %4946 = vmatpush1.msra.mxu0 0.0
      %4947 = vmatprep.subr.mxu0 0.0
      %4948 = vmatpush1.msra.mxu0 0.0
      %4949 = vmatprep.subr.mxu0 0.0
      %4950 = vmatpush1.msra.mxu0 0.0
      %4951 = vmatprep.subr.mxu0 0.0
      %4952 = vmatpush1.msra.mxu0 0.0
      %4953 = vmatprep.subr.mxu0 0.0
      %4954 = vmatpush1.msra.mxu0 0.0
      %4955 = vmatprep.subr.mxu0 0.0
      %4956 = vmatpush1.msra.mxu0 0.0
      %4957 = vmatprep.subr.mxu0 0.0
      %4958 = vmatpush1.msra.mxu0 0.0
      %4959 = vmatprep.subr.mxu0 0.0
      %4960 = vmatpush1.msra.mxu0 0.0
      %4961 = vmatprep.subr.mxu0 0.0
      %4962 = vmatpush1.msra.mxu0 0.0
      %4963 = vmatprep.subr.mxu0 0.0
      %4964 = vmatpush1.msra.mxu0 0.0
      %4965 = vmatprep.subr.mxu0 0.0
      %4966 = vmatpush1.msra.mxu0 0.0
      %4967 = vmatprep.subr.mxu0 0.0
      %4968 = vmatpush1.msra.mxu0 0.0
      %4969 = vmatprep.subr.mxu0 0.0
      %4970 = vmatpush1.msra.mxu0 0.0
      %4971 = vmatprep.subr.mxu0 0.0
      %4972 = vmatpush1.msra.mxu0 0.0
      %4973 = vmatprep.subr.mxu0 0.0
      %4974 = vmatpush1.msra.mxu0 0.0
      %4975 = vmatprep.subr.mxu0 0.0
      %4976 = vmatpush1.msra.mxu0 0.0
      %4977 = vmatprep.subr.mxu0 0.0
      %4978 = vmatpush1.msra.mxu0 0.0
      %4979 = vmatprep.mubr.f32.mxu0 0.0
      %v4980 = vand.u32 %v4897, 4294901760
      %v4981 = vsub.f32 %v4897, %v4980
      %v4982 = vand.u32 %v4981, 4294901760
      %v4983 = vsub.f32 %v4981, %v4982
      %v4984 = vand.u32 %v4983, 4294901760
      %4985 = vmatmul.mubr.f32.gmra.mrb[0].mxu0 %v4984
      %v4986 = vpop.f32.mrb[0].mxu0
      %v4987 = vadd.f32 %v4869, %v4986
      %v4988 = vpop.f32.mrb[0].mxu0
      %4989 = vmatprep.mubr.f32.mxu0 0.0
      %v4990 = vand.u32 %v4900, 4294901760
      %v4991 = vsub.f32 %v4900, %v4990
      %v4992 = vand.u32 %v4991, 4294901760
      %v4993 = vsub.f32 %v4991, %v4992
      %v4994 = vand.u32 %v4993, 4294901760
      %4995 = vmatmul.mubr.f32.gmra.mrb[0].mxu0 %v4994
      %v4996 = vpop.f32.mrb[0].mxu0
      %v4997 = vadd.f32 %v4875, %v4996
      %v4998 = vpop.f32.mrb[0].mxu0
      %4999 = vmatprep.mubr.f32.mxu0 0.0
      %v5000 = vand.u32 %v4903, 4294901760
      %v5001 = vsub.f32 %v4903, %v5000
      %v5002 = vand.u32 %v5001, 4294901760
      %v5003 = vsub.f32 %v5001, %v5002
      %v5004 = vand.u32 %v5003, 4294901760
      %5005 = vmatmul.mubr.f32.gmra.mrb[0].mxu0 %v5004
      %v5006 = vpop.f32.mrb[0].mxu0
      %v5007 = vadd.f32 %v4881, %v5006
      %v5008 = vpop.f32.mrb[0].mxu0
      %5009 = vmatprep.mubr.f32.mxu0 0.0
      %v5010 = vand.u32 %v4906, 4294901760
      %v5011 = vsub.f32 %v4906, %v5010
      %v5012 = vand.u32 %v5011, 4294901760
      %v5013 = vsub.f32 %v5011, %v5012
      %v5014 = vand.u32 %v5013, 4294901760
      %5015 = vmatmul.mubr.f32.gmra.mrb[0].mxu0 %v5014
      %v5016 = vpop.f32.mrb[0].mxu0
      %v5017 = vadd.f32 %v4887, %v5016
      %v5018 = vpop.f32.mrb[0].mxu0
      %5019 = vmatprep.mubr.f32.mxu0 0.0
      %v5020 = vand.u32 %v4909, 4294901760
      %v5021 = vsub.f32 %v4909, %v5020
      %v5022 = vand.u32 %v5021, 4294901760
      %v5023 = vsub.f32 %v5021, %v5022
      %v5024 = vand.u32 %v5023, 4294901760
      %5025 = vmatmul.mubr.f32.gmra.mrb[0].mxu0 %v5024
      %v5026 = vpop.f32.mrb[0].mxu0
      %v5027 = vadd.f32 %v4893, %v5026
      %v5028 = vpop.f32.mrb[0].mxu0
      %5029 = vdwg.mxu0
      %5030 = vmatprep.subr.mxu0 0.0
      %v5031 = vand.u32 %v4912, 4294901760
      %v5032 = vsub.f32 %v4912, %v5031
      %v5033 = vand.u32 %v5032, 4294901760
      %v5034 = vsub.f32 %v5032, %v5033
      %v5035 = vand.u32 %v5034, 4294901760
      %5036 = vmatpush1.msra.mxu0 %v5035
      %5037 = vmatprep.subr.mxu0 0.0
      %5038 = vmatpush1.msra.mxu0 0.0
      %5039 = vmatprep.subr.mxu0 0.0
      %5040 = vmatpush1.msra.mxu0 0.0
      %5041 = vmatprep.subr.mxu0 0.0
      %5042 = vmatpush1.msra.mxu0 0.0
      %5043 = vmatprep.subr.mxu0 0.0
      %5044 = vmatpush1.msra.mxu0 0.0
      %5045 = vmatprep.subr.mxu0 0.0
      %5046 = vmatpush1.msra.mxu0 0.0
      %5047 = vmatprep.subr.mxu0 0.0
      %5048 = vmatpush1.msra.mxu0 0.0
      %5049 = vmatprep.subr.mxu0 0.0
      %5050 = vmatpush1.msra.mxu0 0.0
      %5051 = vmatprep.subr.mxu0 0.0
      %5052 = vmatpush1.msra.mxu0 0.0
      %5053 = vmatprep.subr.mxu0 0.0
      %5054 = vmatpush1.msra.mxu0 0.0
      %5055 = vmatprep.subr.mxu0 0.0
      %5056 = vmatpush1.msra.mxu0 0.0
      %5057 = vmatprep.subr.mxu0 0.0
      %5058 = vmatpush1.msra.mxu0 0.0
      %5059 = vmatprep.subr.mxu0 0.0
      %5060 = vmatpush1.msra.mxu0 0.0
      %5061 = vmatprep.subr.mxu0 0.0
      %5062 = vmatpush1.msra.mxu0 0.0
      %5063 = vmatprep.subr.mxu0 0.0
      %5064 = vmatpush1.msra.mxu0 0.0
      %5065 = vmatprep.subr.mxu0 0.0
      %5066 = vmatpush1.msra.mxu0 0.0
      %5067 = vmatprep.subr.mxu0 0.0
      %5068 = vmatpush1.msra.mxu0 0.0
      %5069 = vmatprep.subr.mxu0 0.0
      %5070 = vmatpush1.msra.mxu0 0.0
      %5071 = vmatprep.subr.mxu0 0.0
      %5072 = vmatpush1.msra.mxu0 0.0
      %5073 = vmatprep.subr.mxu0 0.0
      %5074 = vmatpush1.msra.mxu0 0.0
      %5075 = vmatprep.subr.mxu0 0.0
      %5076 = vmatpush1.msra.mxu0 0.0
      %5077 = vmatprep.subr.mxu0 0.0
      %5078 = vmatpush1.msra.mxu0 0.0
      %5079 = vmatprep.subr.mxu0 0.0
      %5080 = vmatpush1.msra.mxu0 0.0
      %5081 = vmatprep.subr.mxu0 0.0
      %5082 = vmatpush1.msra.mxu0 0.0
      %5083 = vmatprep.subr.mxu0 0.0
      %5084 = vmatpush1.msra.mxu0 0.0
      %5085 = vmatprep.subr.mxu0 0.0
      %5086 = vmatpush1.msra.mxu0 0.0
      %5087 = vmatprep.subr.mxu0 0.0
      %5088 = vmatpush1.msra.mxu0 0.0
      %5089 = vmatprep.subr.mxu0 0.0
      %5090 = vmatpush1.msra.mxu0 0.0
      %5091 = vmatprep.subr.mxu0 0.0
      %5092 = vmatpush1.msra.mxu0 0.0
      %5093 = vmatprep.subr.mxu0 0.0
      %5094 = vmatpush1.msra.mxu0 0.0
      %5095 = vmatprep.subr.mxu0 0.0
      %5096 = vmatpush1.msra.mxu0 0.0
      %5097 = vmatprep.subr.mxu0 0.0
      %5098 = vmatpush1.msra.mxu0 0.0
      %5099 = vmatprep.mubr.f32.mxu0 0.0
      %v5100 = vand.u32 %v4897, 4294901760
      %5101 = vmatmul.mubr.f32.gmra.mrb[0].mxu0 %v5100
      %v5102 = vpop.f32.mrb[0].mxu0
      %v5103 = vadd.f32 %v4987, %v5102
      %v5104 = vpop.f32.mrb[0].mxu0
      %5105 = vmatprep.mubr.f32.mxu0 0.0
      %v5106 = vand.u32 %v4900, 4294901760
      %5107 = vmatmul.mubr.f32.gmra.mrb[0].mxu0 %v5106
      %v5108 = vpop.f32.mrb[0].mxu0
      %v5109 = vadd.f32 %v4997, %v5108
      %v5110 = vpop.f32.mrb[0].mxu0
      %5111 = vmatprep.mubr.f32.mxu0 0.0
      %v5112 = vand.u32 %v4903, 4294901760
      %5113 = vmatmul.mubr.f32.gmra.mrb[0].mxu0 %v5112
      %v5114 = vpop.f32.mrb[0].mxu0
      %v5115 = vadd.f32 %v5007, %v5114
      %v5116 = vpop.f32.mrb[0].mxu0
      %5117 = vmatprep.mubr.f32.mxu0 0.0
      %v5118 = vand.u32 %v4906, 4294901760
      %5119 = vmatmul.mubr.f32.gmra.mrb[0].mxu0 %v5118
      %v5120 = vpop.f32.mrb[0].mxu0
      %v5121 = vadd.f32 %v5017, %v5120
      %v5122 = vpop.f32.mrb[0].mxu0
      %5123 = vmatprep.mubr.f32.mxu0 0.0
      %v5124 = vand.u32 %v4909, 4294901760
      %5125 = vmatmul.mubr.f32.gmra.mrb[0].mxu0 %v5124
      %v5126 = vpop.f32.mrb[0].mxu0
      %v5127 = vadd.f32 %v5027, %v5126
      %v5128 = vpop.f32.mrb[0].mxu0
      %5129 = vdwg.mxu0
      %5130 = vmatprep.subr.mxu0 0.0
      %v5131 = vand.u32 %v4912, 4294901760
      %v5132 = vsub.f32 %v4912, %v5131
      %5133 = vmatpush1.msra.mxu0 %v5132
      %5134 = vmatprep.subr.mxu0 0.0
      %5135 = vmatpush1.msra.mxu0 0.0
      %5136 = vmatprep.subr.mxu0 0.0
      %5137 = vmatpush1.msra.mxu0 0.0
      %5138 = vmatprep.subr.mxu0 0.0
      %5139 = vmatpush1.msra.mxu0 0.0
      %5140 = vmatprep.subr.mxu0 0.0
      %5141 = vmatpush1.msra.mxu0 0.0
      %5142 = vmatprep.subr.mxu0 0.0
      %5143 = vmatpush1.msra.mxu0 0.0
      %5144 = vmatprep.subr.mxu0 0.0
      %5145 = vmatpush1.msra.mxu0 0.0
      %5146 = vmatprep.subr.mxu0 0.0
      %5147 = vmatpush1.msra.mxu0 0.0
      %5148 = vmatprep.subr.mxu0 0.0
      %5149 = vmatpush1.msra.mxu0 0.0
      %5150 = vmatprep.subr.mxu0 0.0
      %5151 = vmatpush1.msra.mxu0 0.0
      %5152 = vmatprep.subr.mxu0 0.0
      %5153 = vmatpush1.msra.mxu0 0.0
      %5154 = vmatprep.subr.mxu0 0.0
      %5155 = vmatpush1.msra.mxu0 0.0
      %5156 = vmatprep.subr.mxu0 0.0
      %5157 = vmatpush1.msra.mxu0 0.0
      %5158 = vmatprep.subr.mxu0 0.0
      %5159 = vmatpush1.msra.mxu0 0.0
      %5160 = vmatprep.subr.mxu0 0.0
      %5161 = vmatpush1.msra.mxu0 0.0
      %5162 = vmatprep.subr.mxu0 0.0
      %5163 = vmatpush1.msra.mxu0 0.0
      %5164 = vmatprep.subr.mxu0 0.0
      %5165 = vmatpush1.msra.mxu0 0.0
      %5166 = vmatprep.subr.mxu0 0.0
      %5167 = vmatpush1.msra.mxu0 0.0
      %5168 = vmatprep.subr.mxu0 0.0
      %5169 = vmatpush1.msra.mxu0 0.0
      %5170 = vmatprep.subr.mxu0 0.0
      %5171 = vmatpush1.msra.mxu0 0.0
      %5172 = vmatprep.subr.mxu0 0.0
      %5173 = vmatpush1.msra.mxu0 0.0
      %5174 = vmatprep.subr.mxu0 0.0
      %5175 = vmatpush1.msra.mxu0 0.0
      %5176 = vmatprep.subr.mxu0 0.0
      %5177 = vmatpush1.msra.mxu0 0.0
      %5178 = vmatprep.subr.mxu0 0.0
      %5179 = vmatpush1.msra.mxu0 0.0
      %5180 = vmatprep.subr.mxu0 0.0
      %5181 = vmatpush1.msra.mxu0 0.0
      %5182 = vmatprep.subr.mxu0 0.0
      %5183 = vmatpush1.msra.mxu0 0.0
      %5184 = vmatprep.subr.mxu0 0.0
      %5185 = vmatpush1.msra.mxu0 0.0
      %5186 = vmatprep.subr.mxu0 0.0
      %5187 = vmatpush1.msra.mxu0 0.0
      %5188 = vmatprep.subr.mxu0 0.0
      %5189 = vmatpush1.msra.mxu0 0.0
      %5190 = vmatprep.subr.mxu0 0.0
      %5191 = vmatpush1.msra.mxu0 0.0
      %5192 = vmatprep.subr.mxu0 0.0
      %5193 = vmatpush1.msra.mxu0 0.0
      %5194 = vmatprep.subr.mxu0 0.0
      %5195 = vmatpush1.msra.mxu0 0.0
      %5196 = vmatprep.mubr.f32.mxu0 0.0
      %v5197 = vand.u32 %v4897, 4294901760
      %v5198 = vsub.f32 %v4897, %v5197
      %5199 = vmatmul.mubr.f32.gmra.mrb[0].mxu0 %v5198
      %v5200 = vpop.f32.mrb[0].mxu0
      %v5201 = vadd.f32 %v5103, %v5200
      %v5202 = vpop.f32.mrb[0].mxu0
      %5203 = vmatprep.mubr.f32.mxu0 0.0
      %v5204 = vand.u32 %v4900, 4294901760
      %v5205 = vsub.f32 %v4900, %v5204
      %5206 = vmatmul.mubr.f32.gmra.mrb[0].mxu0 %v5205
      %v5207 = vpop.f32.mrb[0].mxu0
      %v5208 = vadd.f32 %v5109, %v5207
      %v5209 = vpop.f32.mrb[0].mxu0
      %5210 = vmatprep.mubr.f32.mxu0 0.0
      %v5211 = vand.u32 %v4903, 4294901760
      %v5212 = vsub.f32 %v4903, %v5211
      %5213 = vmatmul.mubr.f32.gmra.mrb[0].mxu0 %v5212
      %v5214 = vpop.f32.mrb[0].mxu0
      %v5215 = vadd.f32 %v5115, %v5214
      %v5216 = vpop.f32.mrb[0].mxu0
      %5217 = vmatprep.mubr.f32.mxu0 0.0
      %v5218 = vand.u32 %v4906, 4294901760
      %v5219 = vsub.f32 %v4906, %v5218
      %5220 = vmatmul.mubr.f32.gmra.mrb[0].mxu0 %v5219
      %v5221 = vpop.f32.mrb[0].mxu0
      %v5222 = vadd.f32 %v5121, %v5221
      %v5223 = vpop.f32.mrb[0].mxu0
      %5224 = vmatprep.mubr.f32.mxu0 0.0
      %v5225 = vand.u32 %v4909, 4294901760
      %v5226 = vsub.f32 %v4909, %v5225
      %5227 = vmatmul.mubr.f32.gmra.mrb[0].mxu0 %v5226
      %v5228 = vpop.f32.mrb[0].mxu0
      %v5229 = vadd.f32 %v5127, %v5228
      %v5230 = vpop.f32.mrb[0].mxu0
      %5231 = vdwg.mxu0
      %5232 = vmatprep.subr.mxu0 0.0
      %v5233 = vand.u32 %v4912, 4294901760
      %5234 = vmatpush1.msra.mxu0 %v5233
      %5235 = vmatprep.subr.mxu0 0.0
      %5236 = vmatpush1.msra.mxu0 0.0
      %5237 = vmatprep.subr.mxu0 0.0
      %5238 = vmatpush1.msra.mxu0 0.0
      %5239 = vmatprep.subr.mxu0 0.0
      %5240 = vmatpush1.msra.mxu0 0.0
      %5241 = vmatprep.subr.mxu0 0.0
      %5242 = vmatpush1.msra.mxu0 0.0
      %5243 = vmatprep.subr.mxu0 0.0
      %5244 = vmatpush1.msra.mxu0 0.0
      %5245 = vmatprep.subr.mxu0 0.0
      %5246 = vmatpush1.msra.mxu0 0.0
      %5247 = vmatprep.subr.mxu0 0.0
      %5248 = vmatpush1.msra.mxu0 0.0
      %5249 = vmatprep.subr.mxu0 0.0
      %5250 = vmatpush1.msra.mxu0 0.0
      %5251 = vmatprep.subr.mxu0 0.0
      %5252 = vmatpush1.msra.mxu0 0.0
      %5253 = vmatprep.subr.mxu0 0.0
      %5254 = vmatpush1.msra.mxu0 0.0
      %5255 = vmatprep.subr.mxu0 0.0
      %5256 = vmatpush1.msra.mxu0 0.0
      %5257 = vmatprep.subr.mxu0 0.0
      %5258 = vmatpush1.msra.mxu0 0.0
      %5259 = vmatprep.subr.mxu0 0.0
      %5260 = vmatpush1.msra.mxu0 0.0
      %5261 = vmatprep.subr.mxu0 0.0
      %5262 = vmatpush1.msra.mxu0 0.0
      %5263 = vmatprep.subr.mxu0 0.0
      %5264 = vmatpush1.msra.mxu0 0.0
      %5265 = vmatprep.subr.mxu0 0.0
      %5266 = vmatpush1.msra.mxu0 0.0
      %5267 = vmatprep.subr.mxu0 0.0
      %5268 = vmatpush1.msra.mxu0 0.0
      %5269 = vmatprep.subr.mxu0 0.0
      %5270 = vmatpush1.msra.mxu0 0.0
      %5271 = vmatprep.subr.mxu0 0.0
      %5272 = vmatpush1.msra.mxu0 0.0
      %5273 = vmatprep.subr.mxu0 0.0
      %5274 = vmatpush1.msra.mxu0 0.0
      %5275 = vmatprep.subr.mxu0 0.0
      %5276 = vmatpush1.msra.mxu0 0.0
      %5277 = vmatprep.subr.mxu0 0.0
      %5278 = vmatpush1.msra.mxu0 0.0
      %5279 = vmatprep.subr.mxu0 0.0
      %5280 = vmatpush1.msra.mxu0 0.0
      %5281 = vmatprep.subr.mxu0 0.0
      %5282 = vmatpush1.msra.mxu0 0.0
      %5283 = vmatprep.subr.mxu0 0.0
      %5284 = vmatpush1.msra.mxu0 0.0
      %5285 = vmatprep.subr.mxu0 0.0
      %5286 = vmatpush1.msra.mxu0 0.0
      %5287 = vmatprep.subr.mxu0 0.0
      %5288 = vmatpush1.msra.mxu0 0.0
      %5289 = vmatprep.subr.mxu0 0.0
      %5290 = vmatpush1.msra.mxu0 0.0
      %5291 = vmatprep.subr.mxu0 0.0
      %5292 = vmatpush1.msra.mxu0 0.0
      %5293 = vmatprep.subr.mxu0 0.0
      %5294 = vmatpush1.msra.mxu0 0.0
      %5295 = vmatprep.subr.mxu0 0.0
      %5296 = vmatpush1.msra.mxu0 0.0
      %5297 = vmatprep.mubr.f32.mxu0 0.0
      %v5298 = vand.u32 %v4897, 4294901760
      %v5299 = vsub.f32 %v4897, %v5298
      %v5300 = vand.u32 %v5299, 4294901760
      %5301 = vmatmul.mubr.f32.gmra.mrb[0].mxu0 %v5300
      %v5302 = vpop.f32.mrb[0].mxu0
      %v5303 = vadd.f32 %v5201, %v5302
      %v5304 = vpop.f32.mrb[0].mxu0
      %5305 = vmatprep.mubr.f32.mxu0 0.0
      %v5306 = vand.u32 %v4900, 4294901760
      %v5307 = vsub.f32 %v4900, %v5306
      %v5308 = vand.u32 %v5307, 4294901760
      %5309 = vmatmul.mubr.f32.gmra.mrb[0].mxu0 %v5308
      %v5310 = vpop.f32.mrb[0].mxu0
      %v5311 = vadd.f32 %v5208, %v5310
      %v5312 = vpop.f32.mrb[0].mxu0
      %5313 = vmatprep.mubr.f32.mxu0 0.0
      %v5314 = vand.u32 %v4903, 4294901760
      %v5315 = vsub.f32 %v4903, %v5314
      %v5316 = vand.u32 %v5315, 4294901760
      %5317 = vmatmul.mubr.f32.gmra.mrb[0].mxu0 %v5316
      %v5318 = vpop.f32.mrb[0].mxu0
      %v5319 = vadd.f32 %v5215, %v5318
      %v5320 = vpop.f32.mrb[0].mxu0
      %5321 = vmatprep.mubr.f32.mxu0 0.0
      %v5322 = vand.u32 %v4906, 4294901760
      %v5323 = vsub.f32 %v4906, %v5322
      %v5324 = vand.u32 %v5323, 4294901760
      %5325 = vmatmul.mubr.f32.gmra.mrb[0].mxu0 %v5324
      %v5326 = vpop.f32.mrb[0].mxu0
      %v5327 = vadd.f32 %v5222, %v5326
      %v5328 = vpop.f32.mrb[0].mxu0
      %5329 = vmatprep.mubr.f32.mxu0 0.0
      %v5330 = vand.u32 %v4909, 4294901760
      %v5331 = vsub.f32 %v4909, %v5330
      %v5332 = vand.u32 %v5331, 4294901760
      %5333 = vmatmul.mubr.f32.gmra.mrb[0].mxu0 %v5332
      %v5334 = vpop.f32.mrb[0].mxu0
      %v5335 = vadd.f32 %v5229, %v5334
      %v5336 = vpop.f32.mrb[0].mxu0
      %5337 = vdwg.mxu0
      %5338 = vmatprep.subr.mxu0 0.0
      %v5339 = vand.u32 %v4912, 4294901760
      %v5340 = vsub.f32 %v4912, %v5339
      %v5341 = vand.u32 %v5340, 4294901760
      %5342 = vmatpush1.msra.mxu0 %v5341
      %5343 = vmatprep.subr.mxu0 0.0
      %5344 = vmatpush1.msra.mxu0 0.0
      %5345 = vmatprep.subr.mxu0 0.0
      %5346 = vmatpush1.msra.mxu0 0.0
      %5347 = vmatprep.subr.mxu0 0.0
      %5348 = vmatpush1.msra.mxu0 0.0
      %5349 = vmatprep.subr.mxu0 0.0
      %5350 = vmatpush1.msra.mxu0 0.0
      %5351 = vmatprep.subr.mxu0 0.0
      %5352 = vmatpush1.msra.mxu0 0.0
      %5353 = vmatprep.subr.mxu0 0.0
      %5354 = vmatpush1.msra.mxu0 0.0
      %5355 = vmatprep.subr.mxu0 0.0
      %5356 = vmatpush1.msra.mxu0 0.0
      %5357 = vmatprep.subr.mxu0 0.0
      %5358 = vmatpush1.msra.mxu0 0.0
      %5359 = vmatprep.subr.mxu0 0.0
      %5360 = vmatpush1.msra.mxu0 0.0
      %5361 = vmatprep.subr.mxu0 0.0
      %5362 = vmatpush1.msra.mxu0 0.0
      %5363 = vmatprep.subr.mxu0 0.0
      %5364 = vmatpush1.msra.mxu0 0.0
      %5365 = vmatprep.subr.mxu0 0.0
      %5366 = vmatpush1.msra.mxu0 0.0
      %5367 = vmatprep.subr.mxu0 0.0
      %5368 = vmatpush1.msra.mxu0 0.0
      %5369 = vmatprep.subr.mxu0 0.0
      %5370 = vmatpush1.msra.mxu0 0.0
      %5371 = vmatprep.subr.mxu0 0.0
      %5372 = vmatpush1.msra.mxu0 0.0
      %5373 = vmatprep.subr.mxu0 0.0
      %5374 = vmatpush1.msra.mxu0 0.0
      %5375 = vmatprep.subr.mxu0 0.0
      %5376 = vmatpush1.msra.mxu0 0.0
      %5377 = vmatprep.subr.mxu0 0.0
      %5378 = vmatpush1.msra.mxu0 0.0
      %5379 = vmatprep.subr.mxu0 0.0
      %5380 = vmatpush1.msra.mxu0 0.0
      %5381 = vmatprep.subr.mxu0 0.0
      %5382 = vmatpush1.msra.mxu0 0.0
      %5383 = vmatprep.subr.mxu0 0.0
      %5384 = vmatpush1.msra.mxu0 0.0
      %5385 = vmatprep.subr.mxu0 0.0
      %5386 = vmatpush1.msra.mxu0 0.0
      %5387 = vmatprep.subr.mxu0 0.0
      %5388 = vmatpush1.msra.mxu0 0.0
      %5389 = vmatprep.subr.mxu0 0.0
      %5390 = vmatpush1.msra.mxu0 0.0
      %5391 = vmatprep.subr.mxu0 0.0
      %5392 = vmatpush1.msra.mxu0 0.0
      %5393 = vmatprep.subr.mxu0 0.0
      %5394 = vmatpush1.msra.mxu0 0.0
      %5395 = vmatprep.subr.mxu0 0.0
      %5396 = vmatpush1.msra.mxu0 0.0
      %5397 = vmatprep.subr.mxu0 0.0
      %5398 = vmatpush1.msra.mxu0 0.0
      %5399 = vmatprep.subr.mxu0 0.0
      %5400 = vmatpush1.msra.mxu0 0.0
      %5401 = vmatprep.subr.mxu0 0.0
      %5402 = vmatpush1.msra.mxu0 0.0
      %5403 = vmatprep.subr.mxu0 0.0
      %5404 = vmatpush1.msra.mxu0 0.0
      %5405 = vmatprep.mubr.f32.mxu0 0.0
      %v5406 = vand.u32 %v4897, 4294901760
      %5407 = vmatmul.mubr.f32.gmra.mrb[0].mxu0 %v5406
      %v5408 = vpop.f32.mrb[0].mxu0
      %v5409 = vadd.f32 %v5303, %v5408
      %v5410 = vpop.f32.mrb[0].mxu0
      %5411 = vmatprep.mubr.f32.mxu0 0.0
      %v5412 = vand.u32 %v4900, 4294901760
      %5413 = vmatmul.mubr.f32.gmra.mrb[0].mxu0 %v5412
      %v5414 = vpop.f32.mrb[0].mxu0
      %v5415 = vadd.f32 %v5311, %v5414
      %v5416 = vpop.f32.mrb[0].mxu0
      %5417 = vmatprep.mubr.f32.mxu0 0.0
      %v5418 = vand.u32 %v4903, 4294901760
      %5419 = vmatmul.mubr.f32.gmra.mrb[0].mxu0 %v5418
      %v5420 = vpop.f32.mrb[0].mxu0
      %v5421 = vadd.f32 %v5319, %v5420
      %v5422 = vpop.f32.mrb[0].mxu0
      %5423 = vmatprep.mubr.f32.mxu0 0.0
      %v5424 = vand.u32 %v4906, 4294901760
      %5425 = vmatmul.mubr.f32.gmra.mrb[0].mxu0 %v5424
      %v5426 = vpop.f32.mrb[0].mxu0
      %v5427 = vadd.f32 %v5327, %v5426
      %v5428 = vpop.f32.mrb[0].mxu0
      %5429 = vmatprep.mubr.f32.mxu0 0.0
      %v5430 = vand.u32 %v4909, 4294901760
      %5431 = vmatmul.mubr.f32.gmra.mrb[0].mxu0 %v5430
      %v5432 = vpop.f32.mrb[0].mxu0
      %v5433 = vadd.f32 %v5335, %v5432
      %v5434 = vpop.f32.mrb[0].mxu0
      %5435 = vdwg.mxu0
      %5436 = vmatprep.subr.mxu0 0.0
      %v5437 = vand.u32 %v4912, 4294901760
      %5438 = vmatpush1.msra.mxu0 %v5437
      %5439 = vmatprep.subr.mxu0 0.0
      %5440 = vmatpush1.msra.mxu0 0.0
      %5441 = vmatprep.subr.mxu0 0.0
      %5442 = vmatpush1.msra.mxu0 0.0
      %5443 = vmatprep.subr.mxu0 0.0
      %5444 = vmatpush1.msra.mxu0 0.0
      %5445 = vmatprep.subr.mxu0 0.0
      %5446 = vmatpush1.msra.mxu0 0.0
      %5447 = vmatprep.subr.mxu0 0.0
      %5448 = vmatpush1.msra.mxu0 0.0
      %5449 = vmatprep.subr.mxu0 0.0
      %5450 = vmatpush1.msra.mxu0 0.0
      %5451 = vmatprep.subr.mxu0 0.0
      %5452 = vmatpush1.msra.mxu0 0.0
      %5453 = vmatprep.subr.mxu0 0.0
      %5454 = vmatpush1.msra.mxu0 0.0
      %5455 = vmatprep.subr.mxu0 0.0
      %5456 = vmatpush1.msra.mxu0 0.0
      %5457 = vmatprep.subr.mxu0 0.0
      %5458 = vmatpush1.msra.mxu0 0.0
      %5459 = vmatprep.subr.mxu0 0.0
      %5460 = vmatpush1.msra.mxu0 0.0
      %5461 = vmatprep.subr.mxu0 0.0
      %5462 = vmatpush1.msra.mxu0 0.0
      %5463 = vmatprep.subr.mxu0 0.0
      %5464 = vmatpush1.msra.mxu0 0.0
      %5465 = vmatprep.subr.mxu0 0.0
      %5466 = vmatpush1.msra.mxu0 0.0
      %5467 = vmatprep.subr.mxu0 0.0
      %5468 = vmatpush1.msra.mxu0 0.0
      %5469 = vmatprep.subr.mxu0 0.0
      %5470 = vmatpush1.msra.mxu0 0.0
      %5471 = vmatprep.subr.mxu0 0.0
      %5472 = vmatpush1.msra.mxu0 0.0
      %5473 = vmatprep.subr.mxu0 0.0
      %5474 = vmatpush1.msra.mxu0 0.0
      %5475 = vmatprep.subr.mxu0 0.0
      %5476 = vmatpush1.msra.mxu0 0.0
      %5477 = vmatprep.subr.mxu0 0.0
      %5478 = vmatpush1.msra.mxu0 0.0
      %5479 = vmatprep.subr.mxu0 0.0
      %5480 = vmatpush1.msra.mxu0 0.0
      %5481 = vmatprep.subr.mxu0 0.0
      %5482 = vmatpush1.msra.mxu0 0.0
      %5483 = vmatprep.subr.mxu0 0.0
      %5484 = vmatpush1.msra.mxu0 0.0
      %5485 = vmatprep.subr.mxu0 0.0
      %5486 = vmatpush1.msra.mxu0 0.0
      %5487 = vmatprep.subr.mxu0 0.0
      %5488 = vmatpush1.msra.mxu0 0.0
      %5489 = vmatprep.subr.mxu0 0.0
      %5490 = vmatpush1.msra.mxu0 0.0
      %5491 = vmatprep.subr.mxu0 0.0
      %5492 = vmatpush1.msra.mxu0 0.0
      %5493 = vmatprep.subr.mxu0 0.0
      %5494 = vmatpush1.msra.mxu0 0.0
      %5495 = vmatprep.subr.mxu0 0.0
      %5496 = vmatpush1.msra.mxu0 0.0
      %5497 = vmatprep.subr.mxu0 0.0
      %5498 = vmatpush1.msra.mxu0 0.0
      %5499 = vmatprep.subr.mxu0 0.0
      %5500 = vmatpush1.msra.mxu0 0.0
      %5501 = vmatprep.mubr.f32.mxu0 0.0
      %v5502 = vand.u32 %v4897, 4294901760
      %5503 = vmatmul.mubr.f32.gmra.mrb[0].mxu0 %v5502
      %v5504 = vpop.f32.mrb[0].mxu0
      %v5505 = vadd.f32 %v5409, %v5504
      %v5506 = vpop.f32.mrb[0].mxu0
      %5507 = vmatprep.mubr.f32.mxu0 0.0
      %v5508 = vand.u32 %v4900, 4294901760
      %5509 = vmatmul.mubr.f32.gmra.mrb[0].mxu0 %v5508
      %v5510 = vpop.f32.mrb[0].mxu0
      %v5511 = vadd.f32 %v5415, %v5510
      %v5512 = vpop.f32.mrb[0].mxu0
      %5513 = vmatprep.mubr.f32.mxu0 0.0
      %v5514 = vand.u32 %v4903, 4294901760
      %5515 = vmatmul.mubr.f32.gmra.mrb[0].mxu0 %v5514
      %v5516 = vpop.f32.mrb[0].mxu0
      %v5517 = vadd.f32 %v5421, %v5516
      %v5518 = vpop.f32.mrb[0].mxu0
      %5519 = vmatprep.mubr.f32.mxu0 0.0
      %v5520 = vand.u32 %v4906, 4294901760
      %5521 = vmatmul.mubr.f32.gmra.mrb[0].mxu0 %v5520
      %v5522 = vpop.f32.mrb[0].mxu0
      %v5523 = vadd.f32 %v5427, %v5522
      %v5524 = vpop.f32.mrb[0].mxu0
      %5525 = vmatprep.mubr.f32.mxu0 0.0
      %v5526 = vand.u32 %v4909, 4294901760
      %5527 = vmatmul.mubr.f32.gmra.mrb[0].mxu0 %v5526
      %v5528 = vpop.f32.mrb[0].mxu0
      %v5529 = vadd.f32 %v5433, %v5528
      %v5530 = vpop.f32.mrb[0].mxu0
      %5531 = vdwg.mxu0
      %5532 = vrot.lane.b32.xlu0 %v1275, 120
      %v5533 = vpop.permute.xlu0 %5532
      %5534 = vrot.lane.b32.xlu0 %v1281, 120
      %v5535 = vpop.permute.xlu0 %5534
      %5536 = vrot.lane.b32.xlu0 %v1287, 120
      %v5537 = vpop.permute.xlu0 %5536
      %5538 = vrot.lane.b32.xlu0 %v1293, 120
      %v5539 = vpop.permute.xlu0 %5538
      %5540 = vrot.lane.b32.xlu0 %v1299, 120
      %v5541 = vpop.permute.xlu0 %5540
      %5542 = vrot.lane.b32.xlu0 %v1275, 104
      %v5543 = vpop.permute.xlu0 %5542
      %5544 = vrot.lane.b32.xlu0 %v1281, 104
      %v5545 = vpop.permute.xlu0 %5544
      %5546 = vrot.lane.b32.xlu0 %v1287, 104
      %v5547 = vpop.permute.xlu0 %5546
      %5548 = vrot.lane.b32.xlu0 %v1293, 104
      %v5549 = vpop.permute.xlu0 %5548
      %5550 = vrot.lane.b32.xlu0 %v1299, 104
      %v5551 = vpop.permute.xlu0 %5550
      %v5552 = vsel %vm1322, %v5533, 0
      %v5554 = vsel %vm1322, %v5535, 0
      %v5556 = vsel %vm1322, %v5537, 0
      %v5558 = vsel %vm1322, %v5539, 0
      %v5560 = vsel %vm1322, %v5541, 0
      %v5562 = vsel %vm1322, %v5543, 0
      %v5564 = vsel %vm1322, %v5545, 0
      %v5566 = vsel %vm1322, %v5547, 0
      %v5568 = vsel %vm1322, %v5549, 0
      %v5570 = vsel %vm1322, %v5551, 0
      %5572 = vmatprep.subr.mxu0 0.0
      %v5573 = vand.u32 %v5562, 4294901760
      %5574 = vmatpush1.xpose.msra.mxu0 %v5573
      %5575 = vmatprep.subr.mxu0 0.0
      %v5576 = vand.u32 %v5564, 4294901760
      %5577 = vmatpush1.xpose.msra.mxu0 %v5576
      %5578 = vmatprep.subr.mxu0 0.0
      %v5579 = vand.u32 %v5566, 4294901760
      %5580 = vmatpush1.xpose.msra.mxu0 %v5579
      %5581 = vmatprep.subr.mxu0 0.0
      %v5582 = vand.u32 %v5568, 4294901760
      %5583 = vmatpush1.xpose.msra.mxu0 %v5582
      %5584 = vmatprep.subr.mxu0 0.0
      %v5585 = vand.u32 %v5570, 4294901760
      %5586 = vmatpush1.xpose.msra.mxu0 %v5585
      %5587 = vmatprep.subr.mxu0 0.0
      %5588 = vmatpush1.xpose.msra.mxu0 0.0
      %5589 = vmatprep.subr.mxu0 0.0
      %5590 = vmatpush1.xpose.msra.mxu0 0.0
      %5591 = vmatprep.subr.mxu0 0.0
      %5592 = vmatpush1.xpose.msra.mxu0 0.0
      %5593 = vmatprep.subr.mxu0 0.0
      %5594 = vmatpush1.xpose.msra.mxu0 0.0
      %5595 = vmatprep.subr.mxu0 0.0
      %5596 = vmatpush1.xpose.msra.mxu0 0.0
      %5597 = vmatprep.subr.mxu0 0.0
      %5598 = vmatpush1.xpose.msra.mxu0 0.0
      %5599 = vmatprep.subr.mxu0 0.0
      %5600 = vmatpush1.xpose.msra.mxu0 0.0
      %5601 = vmatprep.subr.mxu0 0.0
      %5602 = vmatpush1.xpose.msra.mxu0 0.0
      %5603 = vmatprep.subr.mxu0 0.0
      %5604 = vmatpush1.xpose.msra.mxu0 0.0
      %5605 = vmatprep.subr.mxu0 0.0
      %5606 = vmatpush1.xpose.msra.mxu0 0.0
      %5607 = vmatprep.subr.mxu0 0.0
      %5608 = vmatpush1.xpose.msra.mxu0 0.0
      %5609 = vmatprep.subr.mxu0 0.0
      %5610 = vmatpush1.xpose.msra.mxu0 0.0
      %5611 = vmatprep.subr.mxu0 0.0
      %5612 = vmatpush1.xpose.msra.mxu0 0.0
      %5613 = vmatprep.subr.mxu0 0.0
      %5614 = vmatpush1.xpose.msra.mxu0 0.0
      %5615 = vmatprep.subr.mxu0 0.0
      %5616 = vmatpush1.xpose.msra.mxu0 0.0
      %5617 = vmatprep.subr.mxu0 0.0
      %5618 = vmatpush1.xpose.msra.mxu0 0.0
      %5619 = vmatprep.subr.mxu0 0.0
      %5620 = vmatpush1.xpose.msra.mxu0 0.0
      %5621 = vmatprep.subr.mxu0 0.0
      %5622 = vmatpush1.xpose.msra.mxu0 0.0
      %5623 = vmatprep.subr.mxu0 0.0
      %5624 = vmatpush1.xpose.msra.mxu0 0.0
      %5625 = vmatprep.subr.mxu0 0.0
      %5626 = vmatpush1.xpose.msra.mxu0 0.0
      %5627 = vmatprep.subr.mxu0 0.0
      %5628 = vmatpush1.xpose.msra.mxu0 0.0
      %5629 = vmatprep.subr.mxu0 0.0
      %5630 = vmatpush1.xpose.msra.mxu0 0.0
      %5631 = vmatprep.subr.mxu0 0.0
      %5632 = vmatpush1.xpose.msra.mxu0 0.0
      %5633 = vmatprep.subr.mxu0 0.0
      %5634 = vmatpush1.xpose.msra.mxu0 0.0
      %5635 = vmatprep.subr.mxu0 0.0
      %5636 = vmatpush1.xpose.msra.mxu0 0.0
      %5637 = vmatprep.subr.mxu0 0.0
      %5638 = vmatpush1.xpose.msra.mxu0 0.0
      %5639 = vmatprep.subr.mxu0 0.0
      %5640 = vmatpush1.xpose.msra.mxu0 0.0
      %5641 = vmatprep.mubr.f32.mxu0 0.0
      %v5642 = vand.u32 %v5552, 4294901760
      %v5643 = vsub.f32 %v5552, %v5642
      %v5644 = vand.u32 %v5643, 4294901760
      %v5645 = vsub.f32 %v5643, %v5644
      %v5646 = vand.u32 %v5645, 4294901760
      %5647 = vmatmul.mubr.f32.gmra.mrb[0].mxu0 %v5646
      %v5648 = vpop.f32.mrb[0].mxu0
      %v5649 = vadd.f32 0.0, %v5648
      %v5650 = vpop.f32.mrb[0].mxu0
      %5651 = vmatprep.mubr.f32.mxu0 0.0
      %v5652 = vand.u32 %v5554, 4294901760
      %v5653 = vsub.f32 %v5554, %v5652
      %v5654 = vand.u32 %v5653, 4294901760
      %v5655 = vsub.f32 %v5653, %v5654
      %v5656 = vand.u32 %v5655, 4294901760
      %5657 = vmatmul.mubr.f32.gmra.mrb[0].mxu0 %v5656
      %v5658 = vpop.f32.mrb[0].mxu0
      %v5659 = vadd.f32 0.0, %v5658
      %v5660 = vpop.f32.mrb[0].mxu0
      %5661 = vmatprep.mubr.f32.mxu0 0.0
      %v5662 = vand.u32 %v5556, 4294901760
      %v5663 = vsub.f32 %v5556, %v5662
      %v5664 = vand.u32 %v5663, 4294901760
      %v5665 = vsub.f32 %v5663, %v5664
      %v5666 = vand.u32 %v5665, 4294901760
      %5667 = vmatmul.mubr.f32.gmra.mrb[0].mxu0 %v5666
      %v5668 = vpop.f32.mrb[0].mxu0
      %v5669 = vadd.f32 0.0, %v5668
      %v5670 = vpop.f32.mrb[0].mxu0
      %5671 = vmatprep.mubr.f32.mxu0 0.0
      %v5672 = vand.u32 %v5558, 4294901760
      %v5673 = vsub.f32 %v5558, %v5672
      %v5674 = vand.u32 %v5673, 4294901760
      %v5675 = vsub.f32 %v5673, %v5674
      %v5676 = vand.u32 %v5675, 4294901760
      %5677 = vmatmul.mubr.f32.gmra.mrb[0].mxu0 %v5676
      %v5678 = vpop.f32.mrb[0].mxu0
      %v5679 = vadd.f32 0.0, %v5678
      %v5680 = vpop.f32.mrb[0].mxu0
      %5681 = vmatprep.mubr.f32.mxu0 0.0
      %v5682 = vand.u32 %v5560, 4294901760
      %v5683 = vsub.f32 %v5560, %v5682
      %v5684 = vand.u32 %v5683, 4294901760
      %v5685 = vsub.f32 %v5683, %v5684
      %v5686 = vand.u32 %v5685, 4294901760
      %5687 = vmatmul.mubr.f32.gmra.mrb[0].mxu0 %v5686
      %v5688 = vpop.f32.mrb[0].mxu0
      %v5689 = vadd.f32 0.0, %v5688
      %v5690 = vpop.f32.mrb[0].mxu0
      %5691 = vdwg.mxu0
      %5692 = vmatprep.subr.mxu0 0.0
      %v5693 = vand.u32 %v5562, 4294901760
      %v5694 = vsub.f32 %v5562, %v5693
      %v5695 = vand.u32 %v5694, 4294901760
      %v5696 = vsub.f32 %v5694, %v5695
      %v5697 = vand.u32 %v5696, 4294901760
      %5698 = vmatpush1.xpose.msra.mxu0 %v5697
      %5699 = vmatprep.subr.mxu0 0.0
      %v5700 = vand.u32 %v5564, 4294901760
      %v5701 = vsub.f32 %v5564, %v5700
      %v5702 = vand.u32 %v5701, 4294901760
      %v5703 = vsub.f32 %v5701, %v5702
      %v5704 = vand.u32 %v5703, 4294901760
      %5705 = vmatpush1.xpose.msra.mxu0 %v5704
      %5706 = vmatprep.subr.mxu0 0.0
      %v5707 = vand.u32 %v5566, 4294901760
      %v5708 = vsub.f32 %v5566, %v5707
      %v5709 = vand.u32 %v5708, 4294901760
      %v5710 = vsub.f32 %v5708, %v5709
      %v5711 = vand.u32 %v5710, 4294901760
      %5712 = vmatpush1.xpose.msra.mxu0 %v5711
      %5713 = vmatprep.subr.mxu0 0.0
      %v5714 = vand.u32 %v5568, 4294901760
      %v5715 = vsub.f32 %v5568, %v5714
      %v5716 = vand.u32 %v5715, 4294901760
      %v5717 = vsub.f32 %v5715, %v5716
      %v5718 = vand.u32 %v5717, 4294901760
      %5719 = vmatpush1.xpose.msra.mxu0 %v5718
      %5720 = vmatprep.subr.mxu0 0.0
      %v5721 = vand.u32 %v5570, 4294901760
      %v5722 = vsub.f32 %v5570, %v5721
      %v5723 = vand.u32 %v5722, 4294901760
      %v5724 = vsub.f32 %v5722, %v5723
      %v5725 = vand.u32 %v5724, 4294901760
      %5726 = vmatpush1.xpose.msra.mxu0 %v5725
      %5727 = vmatprep.subr.mxu0 0.0
      %5728 = vmatpush1.xpose.msra.mxu0 0.0
      %5729 = vmatprep.subr.mxu0 0.0
      %5730 = vmatpush1.xpose.msra.mxu0 0.0
      %5731 = vmatprep.subr.mxu0 0.0
      %5732 = vmatpush1.xpose.msra.mxu0 0.0
      %5733 = vmatprep.subr.mxu0 0.0
      %5734 = vmatpush1.xpose.msra.mxu0 0.0
      %5735 = vmatprep.subr.mxu0 0.0
      %5736 = vmatpush1.xpose.msra.mxu0 0.0
      %5737 = vmatprep.subr.mxu0 0.0
      %5738 = vmatpush1.xpose.msra.mxu0 0.0
      %5739 = vmatprep.subr.mxu0 0.0
      %5740 = vmatpush1.xpose.msra.mxu0 0.0
      %5741 = vmatprep.subr.mxu0 0.0
      %5742 = vmatpush1.xpose.msra.mxu0 0.0
      %5743 = vmatprep.subr.mxu0 0.0
      %5744 = vmatpush1.xpose.msra.mxu0 0.0
      %5745 = vmatprep.subr.mxu0 0.0
      %5746 = vmatpush1.xpose.msra.mxu0 0.0
      %5747 = vmatprep.subr.mxu0 0.0
      %5748 = vmatpush1.xpose.msra.mxu0 0.0
      %5749 = vmatprep.subr.mxu0 0.0
      %5750 = vmatpush1.xpose.msra.mxu0 0.0
      %5751 = vmatprep.subr.mxu0 0.0
      %5752 = vmatpush1.xpose.msra.mxu0 0.0
      %5753 = vmatprep.subr.mxu0 0.0
      %5754 = vmatpush1.xpose.msra.mxu0 0.0
      %5755 = vmatprep.subr.mxu0 0.0
      %5756 = vmatpush1.xpose.msra.mxu0 0.0
      %5757 = vmatprep.subr.mxu0 0.0
      %5758 = vmatpush1.xpose.msra.mxu0 0.0
      %5759 = vmatprep.subr.mxu0 0.0
      %5760 = vmatpush1.xpose.msra.mxu0 0.0
      %5761 = vmatprep.subr.mxu0 0.0
      %5762 = vmatpush1.xpose.msra.mxu0 0.0
      %5763 = vmatprep.subr.mxu0 0.0
      %5764 = vmatpush1.xpose.msra.mxu0 0.0
      %5765 = vmatprep.subr.mxu0 0.0
      %5766 = vmatpush1.xpose.msra.mxu0 0.0
      %5767 = vmatprep.subr.mxu0 0.0
      %5768 = vmatpush1.xpose.msra.mxu0 0.0
      %5769 = vmatprep.subr.mxu0 0.0
      %5770 = vmatpush1.xpose.msra.mxu0 0.0
      %5771 = vmatprep.subr.mxu0 0.0
      %5772 = vmatpush1.xpose.msra.mxu0 0.0
      %5773 = vmatprep.subr.mxu0 0.0
      %5774 = vmatpush1.xpose.msra.mxu0 0.0
      %5775 = vmatprep.subr.mxu0 0.0
      %5776 = vmatpush1.xpose.msra.mxu0 0.0
      %5777 = vmatprep.subr.mxu0 0.0
      %5778 = vmatpush1.xpose.msra.mxu0 0.0
      %5779 = vmatprep.subr.mxu0 0.0
      %5780 = vmatpush1.xpose.msra.mxu0 0.0
      %5781 = vmatprep.mubr.f32.mxu0 0.0
      %v5782 = vand.u32 %v5552, 4294901760
      %5783 = vmatmul.mubr.f32.gmra.mrb[0].mxu0 %v5782
      %v5784 = vpop.f32.mrb[0].mxu0
      %v5785 = vadd.f32 %v5649, %v5784
      %v5786 = vpop.f32.mrb[0].mxu0
      %5787 = vmatprep.mubr.f32.mxu0 0.0
      %v5788 = vand.u32 %v5554, 4294901760
      %5789 = vmatmul.mubr.f32.gmra.mrb[0].mxu0 %v5788
      %v5790 = vpop.f32.mrb[0].mxu0
      %v5791 = vadd.f32 %v5659, %v5790
      %v5792 = vpop.f32.mrb[0].mxu0
      %5793 = vmatprep.mubr.f32.mxu0 0.0
      %v5794 = vand.u32 %v5556, 4294901760
      %5795 = vmatmul.mubr.f32.gmra.mrb[0].mxu0 %v5794
      %v5796 = vpop.f32.mrb[0].mxu0
      %v5797 = vadd.f32 %v5669, %v5796
      %v5798 = vpop.f32.mrb[0].mxu0
      %5799 = vmatprep.mubr.f32.mxu0 0.0
      %v5800 = vand.u32 %v5558, 4294901760
      %5801 = vmatmul.mubr.f32.gmra.mrb[0].mxu0 %v5800
      %v5802 = vpop.f32.mrb[0].mxu0
      %v5803 = vadd.f32 %v5679, %v5802
      %v5804 = vpop.f32.mrb[0].mxu0
      %5805 = vmatprep.mubr.f32.mxu0 0.0
      %v5806 = vand.u32 %v5560, 4294901760
      %5807 = vmatmul.mubr.f32.gmra.mrb[0].mxu0 %v5806
      %v5808 = vpop.f32.mrb[0].mxu0
      %v5809 = vadd.f32 %v5689, %v5808
      %v5810 = vpop.f32.mrb[0].mxu0
      %5811 = vdwg.mxu0
      %5812 = vmatprep.subr.mxu0 0.0
      %v5813 = vand.u32 %v5562, 4294901760
      %v5814 = vsub.f32 %v5562, %v5813
      %5815 = vmatpush1.xpose.msra.mxu0 %v5814
      %5816 = vmatprep.subr.mxu0 0.0
      %v5817 = vand.u32 %v5564, 4294901760
      %v5818 = vsub.f32 %v5564, %v5817
      %5819 = vmatpush1.xpose.msra.mxu0 %v5818
      %5820 = vmatprep.subr.mxu0 0.0
      %v5821 = vand.u32 %v5566, 4294901760
      %v5822 = vsub.f32 %v5566, %v5821
      %5823 = vmatpush1.xpose.msra.mxu0 %v5822
      %5824 = vmatprep.subr.mxu0 0.0
      %v5825 = vand.u32 %v5568, 4294901760
      %v5826 = vsub.f32 %v5568, %v5825
      %5827 = vmatpush1.xpose.msra.mxu0 %v5826
      %5828 = vmatprep.subr.mxu0 0.0
      %v5829 = vand.u32 %v5570, 4294901760
      %v5830 = vsub.f32 %v5570, %v5829
      %5831 = vmatpush1.xpose.msra.mxu0 %v5830
      %5832 = vmatprep.subr.mxu0 0.0
      %5833 = vmatpush1.xpose.msra.mxu0 0.0
      %5834 = vmatprep.subr.mxu0 0.0
      %5835 = vmatpush1.xpose.msra.mxu0 0.0
      %5836 = vmatprep.subr.mxu0 0.0
      %5837 = vmatpush1.xpose.msra.mxu0 0.0
      %5838 = vmatprep.subr.mxu0 0.0
      %5839 = vmatpush1.xpose.msra.mxu0 0.0
      %5840 = vmatprep.subr.mxu0 0.0
      %5841 = vmatpush1.xpose.msra.mxu0 0.0
      %5842 = vmatprep.subr.mxu0 0.0
      %5843 = vmatpush1.xpose.msra.mxu0 0.0
      %5844 = vmatprep.subr.mxu0 0.0
      %5845 = vmatpush1.xpose.msra.mxu0 0.0
      %5846 = vmatprep.subr.mxu0 0.0
      %5847 = vmatpush1.xpose.msra.mxu0 0.0
      %5848 = vmatprep.subr.mxu0 0.0
      %5849 = vmatpush1.xpose.msra.mxu0 0.0
      %5850 = vmatprep.subr.mxu0 0.0
      %5851 = vmatpush1.xpose.msra.mxu0 0.0
      %5852 = vmatprep.subr.mxu0 0.0
      %5853 = vmatpush1.xpose.msra.mxu0 0.0
      %5854 = vmatprep.subr.mxu0 0.0
      %5855 = vmatpush1.xpose.msra.mxu0 0.0
      %5856 = vmatprep.subr.mxu0 0.0
      %5857 = vmatpush1.xpose.msra.mxu0 0.0
      %5858 = vmatprep.subr.mxu0 0.0
      %5859 = vmatpush1.xpose.msra.mxu0 0.0
      %5860 = vmatprep.subr.mxu0 0.0
      %5861 = vmatpush1.xpose.msra.mxu0 0.0
      %5862 = vmatprep.subr.mxu0 0.0
      %5863 = vmatpush1.xpose.msra.mxu0 0.0
      %5864 = vmatprep.subr.mxu0 0.0
      %5865 = vmatpush1.xpose.msra.mxu0 0.0
      %5866 = vmatprep.subr.mxu0 0.0
      %5867 = vmatpush1.xpose.msra.mxu0 0.0
      %5868 = vmatprep.subr.mxu0 0.0
      %5869 = vmatpush1.xpose.msra.mxu0 0.0
      %5870 = vmatprep.subr.mxu0 0.0
      %5871 = vmatpush1.xpose.msra.mxu0 0.0
      %5872 = vmatprep.subr.mxu0 0.0
      %5873 = vmatpush1.xpose.msra.mxu0 0.0
      %5874 = vmatprep.subr.mxu0 0.0
      %5875 = vmatpush1.xpose.msra.mxu0 0.0
      %5876 = vmatprep.subr.mxu0 0.0
      %5877 = vmatpush1.xpose.msra.mxu0 0.0
      %5878 = vmatprep.subr.mxu0 0.0
      %5879 = vmatpush1.xpose.msra.mxu0 0.0
      %5880 = vmatprep.subr.mxu0 0.0
      %5881 = vmatpush1.xpose.msra.mxu0 0.0
      %5882 = vmatprep.subr.mxu0 0.0
      %5883 = vmatpush1.xpose.msra.mxu0 0.0
      %5884 = vmatprep.subr.mxu0 0.0
      %5885 = vmatpush1.xpose.msra.mxu0 0.0
      %5886 = vmatprep.mubr.f32.mxu0 0.0
      %v5887 = vand.u32 %v5552, 4294901760
      %v5888 = vsub.f32 %v5552, %v5887
      %5889 = vmatmul.mubr.f32.gmra.mrb[0].mxu0 %v5888
      %v5890 = vpop.f32.mrb[0].mxu0
      %v5891 = vadd.f32 %v5785, %v5890
      %v5892 = vpop.f32.mrb[0].mxu0
      %5893 = vmatprep.mubr.f32.mxu0 0.0
      %v5894 = vand.u32 %v5554, 4294901760
      %v5895 = vsub.f32 %v5554, %v5894
      %5896 = vmatmul.mubr.f32.gmra.mrb[0].mxu0 %v5895
      %v5897 = vpop.f32.mrb[0].mxu0
      %v5898 = vadd.f32 %v5791, %v5897
      %v5899 = vpop.f32.mrb[0].mxu0
      %5900 = vmatprep.mubr.f32.mxu0 0.0
      %v5901 = vand.u32 %v5556, 4294901760
      %v5902 = vsub.f32 %v5556, %v5901
      %5903 = vmatmul.mubr.f32.gmra.mrb[0].mxu0 %v5902
      %v5904 = vpop.f32.mrb[0].mxu0
      %v5905 = vadd.f32 %v5797, %v5904
      %v5906 = vpop.f32.mrb[0].mxu0
      %5907 = vmatprep.mubr.f32.mxu0 0.0
      %v5908 = vand.u32 %v5558, 4294901760
      %v5909 = vsub.f32 %v5558, %v5908
      %5910 = vmatmul.mubr.f32.gmra.mrb[0].mxu0 %v5909
      %v5911 = vpop.f32.mrb[0].mxu0
      %v5912 = vadd.f32 %v5803, %v5911
      %v5913 = vpop.f32.mrb[0].mxu0
      %5914 = vmatprep.mubr.f32.mxu0 0.0
      %v5915 = vand.u32 %v5560, 4294901760
      %v5916 = vsub.f32 %v5560, %v5915
      %5917 = vmatmul.mubr.f32.gmra.mrb[0].mxu0 %v5916
      %v5918 = vpop.f32.mrb[0].mxu0
      %v5919 = vadd.f32 %v5809, %v5918
      %v5920 = vpop.f32.mrb[0].mxu0
      %5921 = vdwg.mxu0
      %5922 = vmatprep.subr.mxu0 0.0
      %v5923 = vand.u32 %v5562, 4294901760
      %5924 = vmatpush1.xpose.msra.mxu0 %v5923
      %5925 = vmatprep.subr.mxu0 0.0
      %v5926 = vand.u32 %v5564, 4294901760
      %5927 = vmatpush1.xpose.msra.mxu0 %v5926
      %5928 = vmatprep.subr.mxu0 0.0
      %v5929 = vand.u32 %v5566, 4294901760
      %5930 = vmatpush1.xpose.msra.mxu0 %v5929
      %5931 = vmatprep.subr.mxu0 0.0
      %v5932 = vand.u32 %v5568, 4294901760
      %5933 = vmatpush1.xpose.msra.mxu0 %v5932
      %5934 = vmatprep.subr.mxu0 0.0
      %v5935 = vand.u32 %v5570, 4294901760
      %5936 = vmatpush1.xpose.msra.mxu0 %v5935
      %5937 = vmatprep.subr.mxu0 0.0
      %5938 = vmatpush1.xpose.msra.mxu0 0.0
      %5939 = vmatprep.subr.mxu0 0.0
      %5940 = vmatpush1.xpose.msra.mxu0 0.0
      %5941 = vmatprep.subr.mxu0 0.0
      %5942 = vmatpush1.xpose.msra.mxu0 0.0
      %5943 = vmatprep.subr.mxu0 0.0
      %5944 = vmatpush1.xpose.msra.mxu0 0.0
      %5945 = vmatprep.subr.mxu0 0.0
      %5946 = vmatpush1.xpose.msra.mxu0 0.0
      %5947 = vmatprep.subr.mxu0 0.0
      %5948 = vmatpush1.xpose.msra.mxu0 0.0
      %5949 = vmatprep.subr.mxu0 0.0
      %5950 = vmatpush1.xpose.msra.mxu0 0.0
      %5951 = vmatprep.subr.mxu0 0.0
      %5952 = vmatpush1.xpose.msra.mxu0 0.0
      %5953 = vmatprep.subr.mxu0 0.0
      %5954 = vmatpush1.xpose.msra.mxu0 0.0
      %5955 = vmatprep.subr.mxu0 0.0
      %5956 = vmatpush1.xpose.msra.mxu0 0.0
      %5957 = vmatprep.subr.mxu0 0.0
      %5958 = vmatpush1.xpose.msra.mxu0 0.0
      %5959 = vmatprep.subr.mxu0 0.0
      %5960 = vmatpush1.xpose.msra.mxu0 0.0
      %5961 = vmatprep.subr.mxu0 0.0
      %5962 = vmatpush1.xpose.msra.mxu0 0.0
      %5963 = vmatprep.subr.mxu0 0.0
      %5964 = vmatpush1.xpose.msra.mxu0 0.0
      %5965 = vmatprep.subr.mxu0 0.0
      %5966 = vmatpush1.xpose.msra.mxu0 0.0
      %5967 = vmatprep.subr.mxu0 0.0
      %5968 = vmatpush1.xpose.msra.mxu0 0.0
      %5969 = vmatprep.subr.mxu0 0.0
      %5970 = vmatpush1.xpose.msra.mxu0 0.0
      %5971 = vmatprep.subr.mxu0 0.0
      %5972 = vmatpush1.xpose.msra.mxu0 0.0
      %5973 = vmatprep.subr.mxu0 0.0
      %5974 = vmatpush1.xpose.msra.mxu0 0.0
      %5975 = vmatprep.subr.mxu0 0.0
      %5976 = vmatpush1.xpose.msra.mxu0 0.0
      %5977 = vmatprep.subr.mxu0 0.0
      %5978 = vmatpush1.xpose.msra.mxu0 0.0
      %5979 = vmatprep.subr.mxu0 0.0
      %5980 = vmatpush1.xpose.msra.mxu0 0.0
      %5981 = vmatprep.subr.mxu0 0.0
      %5982 = vmatpush1.xpose.msra.mxu0 0.0
      %5983 = vmatprep.subr.mxu0 0.0
      %5984 = vmatpush1.xpose.msra.mxu0 0.0
      %5985 = vmatprep.subr.mxu0 0.0
      %5986 = vmatpush1.xpose.msra.mxu0 0.0
      %5987 = vmatprep.subr.mxu0 0.0
      %5988 = vmatpush1.xpose.msra.mxu0 0.0
      %5989 = vmatprep.subr.mxu0 0.0
      %5990 = vmatpush1.xpose.msra.mxu0 0.0
      %5991 = vmatprep.mubr.f32.mxu0 0.0
      %v5992 = vand.u32 %v5552, 4294901760
      %v5993 = vsub.f32 %v5552, %v5992
      %v5994 = vand.u32 %v5993, 4294901760
      %5995 = vmatmul.mubr.f32.gmra.mrb[0].mxu0 %v5994
      %v5996 = vpop.f32.mrb[0].mxu0
      %v5997 = vadd.f32 %v5891, %v5996
      %v5998 = vpop.f32.mrb[0].mxu0
      %5999 = vmatprep.mubr.f32.mxu0 0.0
      %v6000 = vand.u32 %v5554, 4294901760
      %v6001 = vsub.f32 %v5554, %v6000
      %v6002 = vand.u32 %v6001, 4294901760
      %6003 = vmatmul.mubr.f32.gmra.mrb[0].mxu0 %v6002
      %v6004 = vpop.f32.mrb[0].mxu0
      %v6005 = vadd.f32 %v5898, %v6004
      %v6006 = vpop.f32.mrb[0].mxu0
      %6007 = vmatprep.mubr.f32.mxu0 0.0
      %v6008 = vand.u32 %v5556, 4294901760
      %v6009 = vsub.f32 %v5556, %v6008
      %v6010 = vand.u32 %v6009, 4294901760
      %6011 = vmatmul.mubr.f32.gmra.mrb[0].mxu0 %v6010
      %v6012 = vpop.f32.mrb[0].mxu0
      %v6013 = vadd.f32 %v5905, %v6012
      %v6014 = vpop.f32.mrb[0].mxu0
      %6015 = vmatprep.mubr.f32.mxu0 0.0
      %v6016 = vand.u32 %v5558, 4294901760
      %v6017 = vsub.f32 %v5558, %v6016
      %v6018 = vand.u32 %v6017, 4294901760
      %6019 = vmatmul.mubr.f32.gmra.mrb[0].mxu0 %v6018
      %v6020 = vpop.f32.mrb[0].mxu0
      %v6021 = vadd.f32 %v5912, %v6020
      %v6022 = vpop.f32.mrb[0].mxu0
      %6023 = vmatprep.mubr.f32.mxu0 0.0
      %v6024 = vand.u32 %v5560, 4294901760
      %v6025 = vsub.f32 %v5560, %v6024
      %v6026 = vand.u32 %v6025, 4294901760
      %6027 = vmatmul.mubr.f32.gmra.mrb[0].mxu0 %v6026
      %v6028 = vpop.f32.mrb[0].mxu0
      %v6029 = vadd.f32 %v5919, %v6028
      %v6030 = vpop.f32.mrb[0].mxu0
      %6031 = vdwg.mxu0
      %6032 = vmatprep.subr.mxu0 0.0
      %v6033 = vand.u32 %v5562, 4294901760
      %v6034 = vsub.f32 %v5562, %v6033
      %v6035 = vand.u32 %v6034, 4294901760
      %6036 = vmatpush1.xpose.msra.mxu0 %v6035
      %6037 = vmatprep.subr.mxu0 0.0
      %v6038 = vand.u32 %v5564, 4294901760
      %v6039 = vsub.f32 %v5564, %v6038
      %v6040 = vand.u32 %v6039, 4294901760
      %6041 = vmatpush1.xpose.msra.mxu0 %v6040
      %6042 = vmatprep.subr.mxu0 0.0
      %v6043 = vand.u32 %v5566, 4294901760
      %v6044 = vsub.f32 %v5566, %v6043
      %v6045 = vand.u32 %v6044, 4294901760
      %6046 = vmatpush1.xpose.msra.mxu0 %v6045
      %6047 = vmatprep.subr.mxu0 0.0
      %v6048 = vand.u32 %v5568, 4294901760
      %v6049 = vsub.f32 %v5568, %v6048
      %v6050 = vand.u32 %v6049, 4294901760
      %6051 = vmatpush1.xpose.msra.mxu0 %v6050
      %6052 = vmatprep.subr.mxu0 0.0
      %v6053 = vand.u32 %v5570, 4294901760
      %v6054 = vsub.f32 %v5570, %v6053
      %v6055 = vand.u32 %v6054, 4294901760
      %6056 = vmatpush1.xpose.msra.mxu0 %v6055
      %6057 = vmatprep.subr.mxu0 0.0
      %6058 = vmatpush1.xpose.msra.mxu0 0.0
      %6059 = vmatprep.subr.mxu0 0.0
      %6060 = vmatpush1.xpose.msra.mxu0 0.0
      %6061 = vmatprep.subr.mxu0 0.0
      %6062 = vmatpush1.xpose.msra.mxu0 0.0
      %6063 = vmatprep.subr.mxu0 0.0
      %6064 = vmatpush1.xpose.msra.mxu0 0.0
      %6065 = vmatprep.subr.mxu0 0.0
      %6066 = vmatpush1.xpose.msra.mxu0 0.0
      %6067 = vmatprep.subr.mxu0 0.0
      %6068 = vmatpush1.xpose.msra.mxu0 0.0
      %6069 = vmatprep.subr.mxu0 0.0
      %6070 = vmatpush1.xpose.msra.mxu0 0.0
      %6071 = vmatprep.subr.mxu0 0.0
      %6072 = vmatpush1.xpose.msra.mxu0 0.0
      %6073 = vmatprep.subr.mxu0 0.0
      %6074 = vmatpush1.xpose.msra.mxu0 0.0
      %6075 = vmatprep.subr.mxu0 0.0
      %6076 = vmatpush1.xpose.msra.mxu0 0.0
      %6077 = vmatprep.subr.mxu0 0.0
      %6078 = vmatpush1.xpose.msra.mxu0 0.0
      %6079 = vmatprep.subr.mxu0 0.0
      %6080 = vmatpush1.xpose.msra.mxu0 0.0
      %6081 = vmatprep.subr.mxu0 0.0
      %6082 = vmatpush1.xpose.msra.mxu0 0.0
      %6083 = vmatprep.subr.mxu0 0.0
      %6084 = vmatpush1.xpose.msra.mxu0 0.0
      %6085 = vmatprep.subr.mxu0 0.0
      %6086 = vmatpush1.xpose.msra.mxu0 0.0
      %6087 = vmatprep.subr.mxu0 0.0
      %6088 = vmatpush1.xpose.msra.mxu0 0.0
      %6089 = vmatprep.subr.mxu0 0.0
      %6090 = vmatpush1.xpose.msra.mxu0 0.0
      %6091 = vmatprep.subr.mxu0 0.0
      %6092 = vmatpush1.xpose.msra.mxu0 0.0
      %6093 = vmatprep.subr.mxu0 0.0
      %6094 = vmatpush1.xpose.msra.mxu0 0.0
      %6095 = vmatprep.subr.mxu0 0.0
      %6096 = vmatpush1.xpose.msra.mxu0 0.0
      %6097 = vmatprep.subr.mxu0 0.0
      %6098 = vmatpush1.xpose.msra.mxu0 0.0
      %6099 = vmatprep.subr.mxu0 0.0
      %6100 = vmatpush1.xpose.msra.mxu0 0.0
      %6101 = vmatprep.subr.mxu0 0.0
      %6102 = vmatpush1.xpose.msra.mxu0 0.0
      %6103 = vmatprep.subr.mxu0 0.0
      %6104 = vmatpush1.xpose.msra.mxu0 0.0
      %6105 = vmatprep.subr.mxu0 0.0
      %6106 = vmatpush1.xpose.msra.mxu0 0.0
      %6107 = vmatprep.subr.mxu0 0.0
      %6108 = vmatpush1.xpose.msra.mxu0 0.0
      %6109 = vmatprep.subr.mxu0 0.0
      %6110 = vmatpush1.xpose.msra.mxu0 0.0
      %6111 = vmatprep.mubr.f32.mxu0 0.0
      %v6112 = vand.u32 %v5552, 4294901760
      %6113 = vmatmul.mubr.f32.gmra.mrb[0].mxu0 %v6112
      %v6114 = vpop.f32.mrb[0].mxu0
      %v6115 = vadd.f32 %v5997, %v6114
      %v6116 = vpop.f32.mrb[0].mxu0
      %6117 = vmatprep.mubr.f32.mxu0 0.0
      %v6118 = vand.u32 %v5554, 4294901760
      %6119 = vmatmul.mubr.f32.gmra.mrb[0].mxu0 %v6118
      %v6120 = vpop.f32.mrb[0].mxu0
      %v6121 = vadd.f32 %v6005, %v6120
      %v6122 = vpop.f32.mrb[0].mxu0
      %6123 = vmatprep.mubr.f32.mxu0 0.0
      %v6124 = vand.u32 %v5556, 4294901760
      %6125 = vmatmul.mubr.f32.gmra.mrb[0].mxu0 %v6124
      %v6126 = vpop.f32.mrb[0].mxu0
      %v6127 = vadd.f32 %v6013, %v6126
      %v6128 = vpop.f32.mrb[0].mxu0
      %6129 = vmatprep.mubr.f32.mxu0 0.0
      %v6130 = vand.u32 %v5558, 4294901760
      %6131 = vmatmul.mubr.f32.gmra.mrb[0].mxu0 %v6130
      %v6132 = vpop.f32.mrb[0].mxu0
      %v6133 = vadd.f32 %v6021, %v6132
      %v6134 = vpop.f32.mrb[0].mxu0
      %6135 = vmatprep.mubr.f32.mxu0 0.0
      %v6136 = vand.u32 %v5560, 4294901760
      %6137 = vmatmul.mubr.f32.gmra.mrb[0].mxu0 %v6136
      %v6138 = vpop.f32.mrb[0].mxu0
      %v6139 = vadd.f32 %v6029, %v6138
      %v6140 = vpop.f32.mrb[0].mxu0
      %6141 = vdwg.mxu0
      %6142 = vmatprep.subr.mxu0 0.0
      %v6143 = vand.u32 %v5562, 4294901760
      %6144 = vmatpush1.xpose.msra.mxu0 %v6143
      %6145 = vmatprep.subr.mxu0 0.0
      %v6146 = vand.u32 %v5564, 4294901760
      %6147 = vmatpush1.xpose.msra.mxu0 %v6146
      %6148 = vmatprep.subr.mxu0 0.0
      %v6149 = vand.u32 %v5566, 4294901760
      %6150 = vmatpush1.xpose.msra.mxu0 %v6149
      %6151 = vmatprep.subr.mxu0 0.0
      %v6152 = vand.u32 %v5568, 4294901760
      %6153 = vmatpush1.xpose.msra.mxu0 %v6152
      %6154 = vmatprep.subr.mxu0 0.0
      %v6155 = vand.u32 %v5570, 4294901760
      %6156 = vmatpush1.xpose.msra.mxu0 %v6155
      %6157 = vmatprep.subr.mxu0 0.0
      %6158 = vmatpush1.xpose.msra.mxu0 0.0
      %6159 = vmatprep.subr.mxu0 0.0
      %6160 = vmatpush1.xpose.msra.mxu0 0.0
      %6161 = vmatprep.subr.mxu0 0.0
      %6162 = vmatpush1.xpose.msra.mxu0 0.0
      %6163 = vmatprep.subr.mxu0 0.0
      %6164 = vmatpush1.xpose.msra.mxu0 0.0
      %6165 = vmatprep.subr.mxu0 0.0
      %6166 = vmatpush1.xpose.msra.mxu0 0.0
      %6167 = vmatprep.subr.mxu0 0.0
      %6168 = vmatpush1.xpose.msra.mxu0 0.0
      %6169 = vmatprep.subr.mxu0 0.0
      %6170 = vmatpush1.xpose.msra.mxu0 0.0
      %6171 = vmatprep.subr.mxu0 0.0
      %6172 = vmatpush1.xpose.msra.mxu0 0.0
      %6173 = vmatprep.subr.mxu0 0.0
      %6174 = vmatpush1.xpose.msra.mxu0 0.0
      %6175 = vmatprep.subr.mxu0 0.0
      %6176 = vmatpush1.xpose.msra.mxu0 0.0
      %6177 = vmatprep.subr.mxu0 0.0
      %6178 = vmatpush1.xpose.msra.mxu0 0.0
      %6179 = vmatprep.subr.mxu0 0.0
      %6180 = vmatpush1.xpose.msra.mxu0 0.0
      %6181 = vmatprep.subr.mxu0 0.0
      %6182 = vmatpush1.xpose.msra.mxu0 0.0
      %6183 = vmatprep.subr.mxu0 0.0
      %6184 = vmatpush1.xpose.msra.mxu0 0.0
      %6185 = vmatprep.subr.mxu0 0.0
      %6186 = vmatpush1.xpose.msra.mxu0 0.0
      %6187 = vmatprep.subr.mxu0 0.0
      %6188 = vmatpush1.xpose.msra.mxu0 0.0
      %6189 = vmatprep.subr.mxu0 0.0
      %6190 = vmatpush1.xpose.msra.mxu0 0.0
      %6191 = vmatprep.subr.mxu0 0.0
      %6192 = vmatpush1.xpose.msra.mxu0 0.0
      %6193 = vmatprep.subr.mxu0 0.0
      %6194 = vmatpush1.xpose.msra.mxu0 0.0
      %6195 = vmatprep.subr.mxu0 0.0
      %6196 = vmatpush1.xpose.msra.mxu0 0.0
      %6197 = vmatprep.subr.mxu0 0.0
      %6198 = vmatpush1.xpose.msra.mxu0 0.0
      %6199 = vmatprep.subr.mxu0 0.0
      %6200 = vmatpush1.xpose.msra.mxu0 0.0
      %6201 = vmatprep.subr.mxu0 0.0
      %6202 = vmatpush1.xpose.msra.mxu0 0.0
      %6203 = vmatprep.subr.mxu0 0.0
      %6204 = vmatpush1.xpose.msra.mxu0 0.0
      %6205 = vmatprep.subr.mxu0 0.0
      %6206 = vmatpush1.xpose.msra.mxu0 0.0
      %6207 = vmatprep.subr.mxu0 0.0
      %6208 = vmatpush1.xpose.msra.mxu0 0.0
      %6209 = vmatprep.subr.mxu0 0.0
      %6210 = vmatpush1.xpose.msra.mxu0 0.0
      %6211 = vmatprep.mubr.f32.mxu0 0.0
      %v6212 = vand.u32 %v5552, 4294901760
      %6213 = vmatmul.mubr.f32.gmra.mrb[0].mxu0 %v6212
      %v6214 = vpop.f32.mrb[0].mxu0
      %v6215 = vadd.f32 %v6115, %v6214
      %v6216 = vpop.f32.mrb[0].mxu0
      %6217 = vmatprep.mubr.f32.mxu0 0.0
      %v6218 = vand.u32 %v5554, 4294901760
      %6219 = vmatmul.mubr.f32.gmra.mrb[0].mxu0 %v6218
      %v6220 = vpop.f32.mrb[0].mxu0
      %v6221 = vadd.f32 %v6121, %v6220
      %v6222 = vpop.f32.mrb[0].mxu0
      %6223 = vmatprep.mubr.f32.mxu0 0.0
      %v6224 = vand.u32 %v5556, 4294901760
      %6225 = vmatmul.mubr.f32.gmra.mrb[0].mxu0 %v6224
      %v6226 = vpop.f32.mrb[0].mxu0
      %v6227 = vadd.f32 %v6127, %v6226
      %v6228 = vpop.f32.mrb[0].mxu0
      %6229 = vmatprep.mubr.f32.mxu0 0.0
      %v6230 = vand.u32 %v5558, 4294901760
      %6231 = vmatmul.mubr.f32.gmra.mrb[0].mxu0 %v6230
      %v6232 = vpop.f32.mrb[0].mxu0
      %v6233 = vadd.f32 %v6133, %v6232
      %v6234 = vpop.f32.mrb[0].mxu0
      %6235 = vmatprep.mubr.f32.mxu0 0.0
      %v6236 = vand.u32 %v5560, 4294901760
      %6237 = vmatmul.mubr.f32.gmra.mrb[0].mxu0 %v6236
      %v6238 = vpop.f32.mrb[0].mxu0
      %v6239 = vadd.f32 %v6139, %v6238
      %v6240 = vpop.f32.mrb[0].mxu0
      %6241 = vdwg.mxu0
      %v6242 = vmul.f32 %v6215, 0.5
      %v6243 = vmul.f32 %v6221, 0.5
      %v6244 = vmul.f32 %v6227, 0.5
      %v6245 = vmul.f32 %v6233, 0.5
      %v6246 = vmul.f32 %v6239, 0.5
      %v6247 = vadd.f32 %v6242, %v1302
      %v6248 = vadd.f32 %v6243, %v1303
      %v6249 = vadd.f32 %v6244, %v1304
      %v6250 = vadd.f32 %v6245, %v1305
      %v6251 = vadd.f32 %v6246, %v1306
      %v6252 = vsel %vm2023, %v6247, -inf
      %6253 = vmax.xlane.f32.xlu0 %v6252
      %v6254 = vpop.xlane.xlu0 %6253
      %v6255 = vsel %vm2023, %v6248, -inf
      %6256 = vmax.xlane.f32.xlu0 %v6255
      %v6257 = vpop.xlane.xlu0 %6256
      %v6258 = vsel %vm2023, %v6249, -inf
      %6259 = vmax.xlane.f32.xlu0 %v6258
      %v6260 = vpop.xlane.xlu0 %6259
      %v6261 = vsel %vm2023, %v6250, -inf
      %6262 = vmax.xlane.f32.xlu0 %v6261
      %v6263 = vpop.xlane.xlu0 %6262
      %v6264 = vsel %vm2036, %v6251, -inf
      %6265 = vmax.xlane.f32.xlu0 %v6264
      %v6266 = vpop.xlane.xlu0 %6265
      %v6267 = vsub.f32 %v6247, %v6254
      %v6268 = vsub.f32 %v6248, %v6257
      %v6269 = vsub.f32 %v6249, %v6260
      %v6270 = vsub.f32 %v6250, %v6263
      %v6271 = vsub.f32 %v6251, %v6266
      %v6272 = vmul.f32 %v6267, 1.442695
      %v6273 = vpow.pop %v6272
      %v6274 = vmul.f32 %v6268, 1.442695
      %v6275 = vpow.pop %v6274
      %v6276 = vmul.f32 %v6269, 1.442695
      %v6277 = vpow.pop %v6276
      %v6278 = vmul.f32 %v6270, 1.442695
      %v6279 = vpow.pop %v6278
      %v6280 = vmul.f32 %v6271, 1.442695
      %v6281 = vpow.pop %v6280
      %v6282 = vsel %vm2023, %v6273, 0.0
      %6283 = vadd.xlane.f32.xlu0 %v6282
      %v6284 = vpop.xlane.xlu0 %6283
      %v6285 = vsel %vm2023, %v6275, 0.0
      %6286 = vadd.xlane.f32.xlu0 %v6285
      %v6287 = vpop.xlane.xlu0 %6286
      %v6288 = vsel %vm2023, %v6277, 0.0
      %6289 = vadd.xlane.f32.xlu0 %v6288
      %v6290 = vpop.xlane.xlu0 %6289
      %v6291 = vsel %vm2023, %v6279, 0.0
      %6292 = vadd.xlane.f32.xlu0 %v6291
      %v6293 = vpop.xlane.xlu0 %6292
      %v6294 = vsel %vm2036, %v6281, 0.0
      %6295 = vadd.xlane.f32.xlu0 %v6294
      %v6296 = vpop.xlane.xlu0 %6295
      %v6297 = vrcp.pop %v6284
      %v6298 = vmul.f32 %v6273, %v6297
      %v6299 = vrcp.pop %v6287
      %v6300 = vmul.f32 %v6275, %v6299
      %v6301 = vrcp.pop %v6290
      %v6302 = vmul.f32 %v6277, %v6301
      %v6303 = vrcp.pop %v6293
      %v6304 = vmul.f32 %v6279, %v6303
      %v6305 = vrcp.pop %v6296
      %v6306 = vmul.f32 %v6281, %v6305
      %6307 = vrot.lane.b32.xlu0 %v1275, 88
      %v6308 = vpop.permute.xlu0 %6307
      %6309 = vrot.lane.b32.xlu0 %v1281, 88
      %v6310 = vpop.permute.xlu0 %6309
      %6311 = vrot.lane.b32.xlu0 %v1287, 88
      %v6312 = vpop.permute.xlu0 %6311
      %6313 = vrot.lane.b32.xlu0 %v1293, 88
      %v6314 = vpop.permute.xlu0 %6313
      %6315 = vrot.lane.b32.xlu0 %v1299, 88
      %v6316 = vpop.permute.xlu0 %6315
      %v6322 = vsel %vm2023, %v6298, 0
      %v6325 = vsel %vm2023, %v6300, 0
      %v6328 = vsel %vm2023, %v6302, 0
      %v6331 = vsel %vm2023, %v6304, 0
      %v6334 = vsel %vm2023, %v6306, 0
      %v6336 = vsel %vm2109, %v6316, 0
      %6338 = vmatprep.subr.mxu0 0.0
      %v6339 = vand.u32 %v6308, 4294901760
      %6340 = vmatpush1.msra.mxu0 %v6339
      %6341 = vmatprep.subr.mxu0 0.0
      %v6342 = vand.u32 %v6310, 4294901760
      %6343 = vmatpush1.msra.mxu0 %v6342
      %6344 = vmatprep.subr.mxu0 0.0
      %v6345 = vand.u32 %v6312, 4294901760
      %6346 = vmatpush1.msra.mxu0 %v6345
      %6347 = vmatprep.subr.mxu0 0.0
      %v6348 = vand.u32 %v6314, 4294901760
      %6349 = vmatpush1.msra.mxu0 %v6348
      %6350 = vmatprep.subr.mxu0 0.0
      %v6351 = vand.u32 %v6336, 4294901760
      %6352 = vmatpush1.msra.mxu0 %v6351
      %6353 = vmatprep.subr.mxu0 0.0
      %6354 = vmatpush1.msra.mxu0 0.0
      %6355 = vmatprep.subr.mxu0 0.0
      %6356 = vmatpush1.msra.mxu0 0.0
      %6357 = vmatprep.subr.mxu0 0.0
      %6358 = vmatpush1.msra.mxu0 0.0
      %6359 = vmatprep.subr.mxu0 0.0
      %6360 = vmatpush1.msra.mxu0 0.0
      %6361 = vmatprep.subr.mxu0 0.0
      %6362 = vmatpush1.msra.mxu0 0.0
      %6363 = vmatprep.subr.mxu0 0.0
      %6364 = vmatpush1.msra.mxu0 0.0
      %6365 = vmatprep.subr.mxu0 0.0
      %6366 = vmatpush1.msra.mxu0 0.0
      %6367 = vmatprep.subr.mxu0 0.0
      %6368 = vmatpush1.msra.mxu0 0.0
      %6369 = vmatprep.subr.mxu0 0.0
      %6370 = vmatpush1.msra.mxu0 0.0
      %6371 = vmatprep.subr.mxu0 0.0
      %6372 = vmatpush1.msra.mxu0 0.0
      %6373 = vmatprep.subr.mxu0 0.0
      %6374 = vmatpush1.msra.mxu0 0.0
      %6375 = vmatprep.subr.mxu0 0.0
      %6376 = vmatpush1.msra.mxu0 0.0
      %6377 = vmatprep.subr.mxu0 0.0
      %6378 = vmatpush1.msra.mxu0 0.0
      %6379 = vmatprep.subr.mxu0 0.0
      %6380 = vmatpush1.msra.mxu0 0.0
      %6381 = vmatprep.subr.mxu0 0.0
      %6382 = vmatpush1.msra.mxu0 0.0
      %6383 = vmatprep.subr.mxu0 0.0
      %6384 = vmatpush1.msra.mxu0 0.0
      %6385 = vmatprep.subr.mxu0 0.0
      %6386 = vmatpush1.msra.mxu0 0.0
      %6387 = vmatprep.subr.mxu0 0.0
      %6388 = vmatpush1.msra.mxu0 0.0
      %6389 = vmatprep.subr.mxu0 0.0
      %6390 = vmatpush1.msra.mxu0 0.0
      %6391 = vmatprep.subr.mxu0 0.0
      %6392 = vmatpush1.msra.mxu0 0.0
      %6393 = vmatprep.subr.mxu0 0.0
      %6394 = vmatpush1.msra.mxu0 0.0
      %6395 = vmatprep.subr.mxu0 0.0
      %6396 = vmatpush1.msra.mxu0 0.0
      %6397 = vmatprep.subr.mxu0 0.0
      %6398 = vmatpush1.msra.mxu0 0.0
      %6399 = vmatprep.subr.mxu0 0.0
      %6400 = vmatpush1.msra.mxu0 0.0
      %6401 = vmatprep.subr.mxu0 0.0
      %6402 = vmatpush1.msra.mxu0 0.0
      %6403 = vmatprep.subr.mxu0 0.0
      %6404 = vmatpush1.msra.mxu0 0.0
      %6405 = vmatprep.subr.mxu0 0.0
      %6406 = vmatpush1.msra.mxu0 0.0
      %6407 = vmatprep.mubr.f32.mxu0 0.0
      %v6408 = vand.u32 %v6322, 4294901760
      %v6409 = vsub.f32 %v6322, %v6408
      %v6410 = vand.u32 %v6409, 4294901760
      %v6411 = vsub.f32 %v6409, %v6410
      %v6412 = vand.u32 %v6411, 4294901760
      %6413 = vmatmul.mubr.f32.gmra.mrb[0].mxu0 %v6412
      %v6414 = vpop.f32.mrb[0].mxu0
      %v6415 = vadd.f32 0.0, %v6414
      %v6416 = vpop.f32.mrb[0].mxu0
      %6417 = vmatprep.mubr.f32.mxu0 0.0
      %v6418 = vand.u32 %v6325, 4294901760
      %v6419 = vsub.f32 %v6325, %v6418
      %v6420 = vand.u32 %v6419, 4294901760
      %v6421 = vsub.f32 %v6419, %v6420
      %v6422 = vand.u32 %v6421, 4294901760
      %6423 = vmatmul.mubr.f32.gmra.mrb[0].mxu0 %v6422
      %v6424 = vpop.f32.mrb[0].mxu0
      %v6425 = vadd.f32 0.0, %v6424
      %v6426 = vpop.f32.mrb[0].mxu0
      %6427 = vmatprep.mubr.f32.mxu0 0.0
      %v6428 = vand.u32 %v6328, 4294901760
      %v6429 = vsub.f32 %v6328, %v6428
      %v6430 = vand.u32 %v6429, 4294901760
      %v6431 = vsub.f32 %v6429, %v6430
      %v6432 = vand.u32 %v6431, 4294901760
      %6433 = vmatmul.mubr.f32.gmra.mrb[0].mxu0 %v6432
      %v6434 = vpop.f32.mrb[0].mxu0
      %v6435 = vadd.f32 0.0, %v6434
      %v6436 = vpop.f32.mrb[0].mxu0
      %6437 = vmatprep.mubr.f32.mxu0 0.0
      %v6438 = vand.u32 %v6331, 4294901760
      %v6439 = vsub.f32 %v6331, %v6438
      %v6440 = vand.u32 %v6439, 4294901760
      %v6441 = vsub.f32 %v6439, %v6440
      %v6442 = vand.u32 %v6441, 4294901760
      %6443 = vmatmul.mubr.f32.gmra.mrb[0].mxu0 %v6442
      %v6444 = vpop.f32.mrb[0].mxu0
      %v6445 = vadd.f32 0.0, %v6444
      %v6446 = vpop.f32.mrb[0].mxu0
      %6447 = vmatprep.mubr.f32.mxu0 0.0
      %v6448 = vand.u32 %v6334, 4294901760
      %v6449 = vsub.f32 %v6334, %v6448
      %v6450 = vand.u32 %v6449, 4294901760
      %v6451 = vsub.f32 %v6449, %v6450
      %v6452 = vand.u32 %v6451, 4294901760
      %6453 = vmatmul.mubr.f32.gmra.mrb[0].mxu0 %v6452
      %v6454 = vpop.f32.mrb[0].mxu0
      %v6455 = vadd.f32 0.0, %v6454
      %v6456 = vpop.f32.mrb[0].mxu0
      %6457 = vdwg.mxu0
      %6458 = vmatprep.subr.mxu0 0.0
      %v6459 = vand.u32 %v6308, 4294901760
      %v6460 = vsub.f32 %v6308, %v6459
      %v6461 = vand.u32 %v6460, 4294901760
      %v6462 = vsub.f32 %v6460, %v6461
      %v6463 = vand.u32 %v6462, 4294901760
      %6464 = vmatpush1.msra.mxu0 %v6463
      %6465 = vmatprep.subr.mxu0 0.0
      %v6466 = vand.u32 %v6310, 4294901760
      %v6467 = vsub.f32 %v6310, %v6466
      %v6468 = vand.u32 %v6467, 4294901760
      %v6469 = vsub.f32 %v6467, %v6468
      %v6470 = vand.u32 %v6469, 4294901760
      %6471 = vmatpush1.msra.mxu0 %v6470
      %6472 = vmatprep.subr.mxu0 0.0
      %v6473 = vand.u32 %v6312, 4294901760
      %v6474 = vsub.f32 %v6312, %v6473
      %v6475 = vand.u32 %v6474, 4294901760
      %v6476 = vsub.f32 %v6474, %v6475
      %v6477 = vand.u32 %v6476, 4294901760
      %6478 = vmatpush1.msra.mxu0 %v6477
      %6479 = vmatprep.subr.mxu0 0.0
      %v6480 = vand.u32 %v6314, 4294901760
      %v6481 = vsub.f32 %v6314, %v6480
      %v6482 = vand.u32 %v6481, 4294901760
      %v6483 = vsub.f32 %v6481, %v6482
      %v6484 = vand.u32 %v6483, 4294901760
      %6485 = vmatpush1.msra.mxu0 %v6484
      %6486 = vmatprep.subr.mxu0 0.0
      %v6487 = vand.u32 %v6336, 4294901760
      %v6488 = vsub.f32 %v6336, %v6487
      %v6489 = vand.u32 %v6488, 4294901760
      %v6490 = vsub.f32 %v6488, %v6489
      %v6491 = vand.u32 %v6490, 4294901760
      %6492 = vmatpush1.msra.mxu0 %v6491
      %6493 = vmatprep.subr.mxu0 0.0
      %6494 = vmatpush1.msra.mxu0 0.0
      %6495 = vmatprep.subr.mxu0 0.0
      %6496 = vmatpush1.msra.mxu0 0.0
      %6497 = vmatprep.subr.mxu0 0.0
      %6498 = vmatpush1.msra.mxu0 0.0
      %6499 = vmatprep.subr.mxu0 0.0
      %6500 = vmatpush1.msra.mxu0 0.0
      %6501 = vmatprep.subr.mxu0 0.0
      %6502 = vmatpush1.msra.mxu0 0.0
      %6503 = vmatprep.subr.mxu0 0.0
      %6504 = vmatpush1.msra.mxu0 0.0
      %6505 = vmatprep.subr.mxu0 0.0
      %6506 = vmatpush1.msra.mxu0 0.0
      %6507 = vmatprep.subr.mxu0 0.0
      %6508 = vmatpush1.msra.mxu0 0.0
      %6509 = vmatprep.subr.mxu0 0.0
      %6510 = vmatpush1.msra.mxu0 0.0
      %6511 = vmatprep.subr.mxu0 0.0
      %6512 = vmatpush1.msra.mxu0 0.0
      %6513 = vmatprep.subr.mxu0 0.0
      %6514 = vmatpush1.msra.mxu0 0.0
      %6515 = vmatprep.subr.mxu0 0.0
      %6516 = vmatpush1.msra.mxu0 0.0
      %6517 = vmatprep.subr.mxu0 0.0
      %6518 = vmatpush1.msra.mxu0 0.0
      %6519 = vmatprep.subr.mxu0 0.0
      %6520 = vmatpush1.msra.mxu0 0.0
      %6521 = vmatprep.subr.mxu0 0.0
      %6522 = vmatpush1.msra.mxu0 0.0
      %6523 = vmatprep.subr.mxu0 0.0
      %6524 = vmatpush1.msra.mxu0 0.0
      %6525 = vmatprep.subr.mxu0 0.0
      %6526 = vmatpush1.msra.mxu0 0.0
      %6527 = vmatprep.subr.mxu0 0.0
      %6528 = vmatpush1.msra.mxu0 0.0
      %6529 = vmatprep.subr.mxu0 0.0
      %6530 = vmatpush1.msra.mxu0 0.0
      %6531 = vmatprep.subr.mxu0 0.0
      %6532 = vmatpush1.msra.mxu0 0.0
      %6533 = vmatprep.subr.mxu0 0.0
      %6534 = vmatpush1.msra.mxu0 0.0
      %6535 = vmatprep.subr.mxu0 0.0
      %6536 = vmatpush1.msra.mxu0 0.0
      %6537 = vmatprep.subr.mxu0 0.0
      %6538 = vmatpush1.msra.mxu0 0.0
      %6539 = vmatprep.subr.mxu0 0.0
      %6540 = vmatpush1.msra.mxu0 0.0
      %6541 = vmatprep.subr.mxu0 0.0
      %6542 = vmatpush1.msra.mxu0 0.0
      %6543 = vmatprep.subr.mxu0 0.0
      %6544 = vmatpush1.msra.mxu0 0.0
      %6545 = vmatprep.subr.mxu0 0.0
      %6546 = vmatpush1.msra.mxu0 0.0
      %6547 = vmatprep.mubr.f32.mxu0 0.0
      %v6548 = vand.u32 %v6322, 4294901760
      %6549 = vmatmul.mubr.f32.gmra.mrb[0].mxu0 %v6548
      %v6550 = vpop.f32.mrb[0].mxu0
      %v6551 = vadd.f32 %v6415, %v6550
      %v6552 = vpop.f32.mrb[0].mxu0
      %6553 = vmatprep.mubr.f32.mxu0 0.0
      %v6554 = vand.u32 %v6325, 4294901760
      %6555 = vmatmul.mubr.f32.gmra.mrb[0].mxu0 %v6554
      %v6556 = vpop.f32.mrb[0].mxu0
      %v6557 = vadd.f32 %v6425, %v6556
      %v6558 = vpop.f32.mrb[0].mxu0
      %6559 = vmatprep.mubr.f32.mxu0 0.0
      %v6560 = vand.u32 %v6328, 4294901760
      %6561 = vmatmul.mubr.f32.gmra.mrb[0].mxu0 %v6560
      %v6562 = vpop.f32.mrb[0].mxu0
      %v6563 = vadd.f32 %v6435, %v6562
      %v6564 = vpop.f32.mrb[0].mxu0
      %6565 = vmatprep.mubr.f32.mxu0 0.0
      %v6566 = vand.u32 %v6331, 4294901760
      %6567 = vmatmul.mubr.f32.gmra.mrb[0].mxu0 %v6566
      %v6568 = vpop.f32.mrb[0].mxu0
      %v6569 = vadd.f32 %v6445, %v6568
      %v6570 = vpop.f32.mrb[0].mxu0
      %6571 = vmatprep.mubr.f32.mxu0 0.0
      %v6572 = vand.u32 %v6334, 4294901760
      %6573 = vmatmul.mubr.f32.gmra.mrb[0].mxu0 %v6572
      %v6574 = vpop.f32.mrb[0].mxu0
      %v6575 = vadd.f32 %v6455, %v6574
      %v6576 = vpop.f32.mrb[0].mxu0
      %6577 = vdwg.mxu0
      %6578 = vmatprep.subr.mxu0 0.0
      %v6579 = vand.u32 %v6308, 4294901760
      %v6580 = vsub.f32 %v6308, %v6579
      %6581 = vmatpush1.msra.mxu0 %v6580
      %6582 = vmatprep.subr.mxu0 0.0
      %v6583 = vand.u32 %v6310, 4294901760
      %v6584 = vsub.f32 %v6310, %v6583
      %6585 = vmatpush1.msra.mxu0 %v6584
      %6586 = vmatprep.subr.mxu0 0.0
      %v6587 = vand.u32 %v6312, 4294901760
      %v6588 = vsub.f32 %v6312, %v6587
      %6589 = vmatpush1.msra.mxu0 %v6588
      %6590 = vmatprep.subr.mxu0 0.0
      %v6591 = vand.u32 %v6314, 4294901760
      %v6592 = vsub.f32 %v6314, %v6591
      %6593 = vmatpush1.msra.mxu0 %v6592
      %6594 = vmatprep.subr.mxu0 0.0
      %v6595 = vand.u32 %v6336, 4294901760
      %v6596 = vsub.f32 %v6336, %v6595
      %6597 = vmatpush1.msra.mxu0 %v6596
      %6598 = vmatprep.subr.mxu0 0.0
      %6599 = vmatpush1.msra.mxu0 0.0
      %6600 = vmatprep.subr.mxu0 0.0
      %6601 = vmatpush1.msra.mxu0 0.0
      %6602 = vmatprep.subr.mxu0 0.0
      %6603 = vmatpush1.msra.mxu0 0.0
      %6604 = vmatprep.subr.mxu0 0.0
      %6605 = vmatpush1.msra.mxu0 0.0
      %6606 = vmatprep.subr.mxu0 0.0
      %6607 = vmatpush1.msra.mxu0 0.0
      %6608 = vmatprep.subr.mxu0 0.0
      %6609 = vmatpush1.msra.mxu0 0.0
      %6610 = vmatprep.subr.mxu0 0.0
      %6611 = vmatpush1.msra.mxu0 0.0
      %6612 = vmatprep.subr.mxu0 0.0
      %6613 = vmatpush1.msra.mxu0 0.0
      %6614 = vmatprep.subr.mxu0 0.0
      %6615 = vmatpush1.msra.mxu0 0.0
      %6616 = vmatprep.subr.mxu0 0.0
      %6617 = vmatpush1.msra.mxu0 0.0
      %6618 = vmatprep.subr.mxu0 0.0
      %6619 = vmatpush1.msra.mxu0 0.0
      %6620 = vmatprep.subr.mxu0 0.0
      %6621 = vmatpush1.msra.mxu0 0.0
      %6622 = vmatprep.subr.mxu0 0.0
      %6623 = vmatpush1.msra.mxu0 0.0
      %6624 = vmatprep.subr.mxu0 0.0
      %6625 = vmatpush1.msra.mxu0 0.0
      %6626 = vmatprep.subr.mxu0 0.0
      %6627 = vmatpush1.msra.mxu0 0.0
      %6628 = vmatprep.subr.mxu0 0.0
      %6629 = vmatpush1.msra.mxu0 0.0
      %6630 = vmatprep.subr.mxu0 0.0
      %6631 = vmatpush1.msra.mxu0 0.0
      %6632 = vmatprep.subr.mxu0 0.0
      %6633 = vmatpush1.msra.mxu0 0.0
      %6634 = vmatprep.subr.mxu0 0.0
      %6635 = vmatpush1.msra.mxu0 0.0
      %6636 = vmatprep.subr.mxu0 0.0
      %6637 = vmatpush1.msra.mxu0 0.0
      %6638 = vmatprep.subr.mxu0 0.0
      %6639 = vmatpush1.msra.mxu0 0.0
      %6640 = vmatprep.subr.mxu0 0.0
      %6641 = vmatpush1.msra.mxu0 0.0
      %6642 = vmatprep.subr.mxu0 0.0
      %6643 = vmatpush1.msra.mxu0 0.0
      %6644 = vmatprep.subr.mxu0 0.0
      %6645 = vmatpush1.msra.mxu0 0.0
      %6646 = vmatprep.subr.mxu0 0.0
      %6647 = vmatpush1.msra.mxu0 0.0
      %6648 = vmatprep.subr.mxu0 0.0
      %6649 = vmatpush1.msra.mxu0 0.0
      %6650 = vmatprep.subr.mxu0 0.0
      %6651 = vmatpush1.msra.mxu0 0.0
      %6652 = vmatprep.mubr.f32.mxu0 0.0
      %v6653 = vand.u32 %v6322, 4294901760
      %v6654 = vsub.f32 %v6322, %v6653
      %6655 = vmatmul.mubr.f32.gmra.mrb[0].mxu0 %v6654
      %v6656 = vpop.f32.mrb[0].mxu0
      %v6657 = vadd.f32 %v6551, %v6656
      %v6658 = vpop.f32.mrb[0].mxu0
      %6659 = vmatprep.mubr.f32.mxu0 0.0
      %v6660 = vand.u32 %v6325, 4294901760
      %v6661 = vsub.f32 %v6325, %v6660
      %6662 = vmatmul.mubr.f32.gmra.mrb[0].mxu0 %v6661
      %v6663 = vpop.f32.mrb[0].mxu0
      %v6664 = vadd.f32 %v6557, %v6663
      %v6665 = vpop.f32.mrb[0].mxu0
      %6666 = vmatprep.mubr.f32.mxu0 0.0
      %v6667 = vand.u32 %v6328, 4294901760
      %v6668 = vsub.f32 %v6328, %v6667
      %6669 = vmatmul.mubr.f32.gmra.mrb[0].mxu0 %v6668
      %v6670 = vpop.f32.mrb[0].mxu0
      %v6671 = vadd.f32 %v6563, %v6670
      %v6672 = vpop.f32.mrb[0].mxu0
      %6673 = vmatprep.mubr.f32.mxu0 0.0
      %v6674 = vand.u32 %v6331, 4294901760
      %v6675 = vsub.f32 %v6331, %v6674
      %6676 = vmatmul.mubr.f32.gmra.mrb[0].mxu0 %v6675
      %v6677 = vpop.f32.mrb[0].mxu0
      %v6678 = vadd.f32 %v6569, %v6677
      %v6679 = vpop.f32.mrb[0].mxu0
      %6680 = vmatprep.mubr.f32.mxu0 0.0
      %v6681 = vand.u32 %v6334, 4294901760
      %v6682 = vsub.f32 %v6334, %v6681
      %6683 = vmatmul.mubr.f32.gmra.mrb[0].mxu0 %v6682
      %v6684 = vpop.f32.mrb[0].mxu0
      %v6685 = vadd.f32 %v6575, %v6684
      %v6686 = vpop.f32.mrb[0].mxu0
      %6687 = vdwg.mxu0
      %6688 = vmatprep.subr.mxu0 0.0
      %v6689 = vand.u32 %v6308, 4294901760
      %6690 = vmatpush1.msra.mxu0 %v6689
      %6691 = vmatprep.subr.mxu0 0.0
      %v6692 = vand.u32 %v6310, 4294901760
      %6693 = vmatpush1.msra.mxu0 %v6692
      %6694 = vmatprep.subr.mxu0 0.0
      %v6695 = vand.u32 %v6312, 4294901760
      %6696 = vmatpush1.msra.mxu0 %v6695
      %6697 = vmatprep.subr.mxu0 0.0
      %v6698 = vand.u32 %v6314, 4294901760
      %6699 = vmatpush1.msra.mxu0 %v6698
      %6700 = vmatprep.subr.mxu0 0.0
      %v6701 = vand.u32 %v6336, 4294901760
      %6702 = vmatpush1.msra.mxu0 %v6701
      %6703 = vmatprep.subr.mxu0 0.0
      %6704 = vmatpush1.msra.mxu0 0.0
      %6705 = vmatprep.subr.mxu0 0.0
      %6706 = vmatpush1.msra.mxu0 0.0
      %6707 = vmatprep.subr.mxu0 0.0
      %6708 = vmatpush1.msra.mxu0 0.0
      %6709 = vmatprep.subr.mxu0 0.0
      %6710 = vmatpush1.msra.mxu0 0.0
      %6711 = vmatprep.subr.mxu0 0.0
      %6712 = vmatpush1.msra.mxu0 0.0
      %6713 = vmatprep.subr.mxu0 0.0
      %6714 = vmatpush1.msra.mxu0 0.0
      %6715 = vmatprep.subr.mxu0 0.0
      %6716 = vmatpush1.msra.mxu0 0.0
      %6717 = vmatprep.subr.mxu0 0.0
      %6718 = vmatpush1.msra.mxu0 0.0
      %6719 = vmatprep.subr.mxu0 0.0
      %6720 = vmatpush1.msra.mxu0 0.0
      %6721 = vmatprep.subr.mxu0 0.0
      %6722 = vmatpush1.msra.mxu0 0.0
      %6723 = vmatprep.subr.mxu0 0.0
      %6724 = vmatpush1.msra.mxu0 0.0
      %6725 = vmatprep.subr.mxu0 0.0
      %6726 = vmatpush1.msra.mxu0 0.0
      %6727 = vmatprep.subr.mxu0 0.0
      %6728 = vmatpush1.msra.mxu0 0.0
      %6729 = vmatprep.subr.mxu0 0.0
      %6730 = vmatpush1.msra.mxu0 0.0
      %6731 = vmatprep.subr.mxu0 0.0
      %6732 = vmatpush1.msra.mxu0 0.0
      %6733 = vmatprep.subr.mxu0 0.0
      %6734 = vmatpush1.msra.mxu0 0.0
      %6735 = vmatprep.subr.mxu0 0.0
      %6736 = vmatpush1.msra.mxu0 0.0
      %6737 = vmatprep.subr.mxu0 0.0
      %6738 = vmatpush1.msra.mxu0 0.0
      %6739 = vmatprep.subr.mxu0 0.0
      %6740 = vmatpush1.msra.mxu0 0.0
      %6741 = vmatprep.subr.mxu0 0.0
      %6742 = vmatpush1.msra.mxu0 0.0
      %6743 = vmatprep.subr.mxu0 0.0
      %6744 = vmatpush1.msra.mxu0 0.0
      %6745 = vmatprep.subr.mxu0 0.0
      %6746 = vmatpush1.msra.mxu0 0.0
      %6747 = vmatprep.subr.mxu0 0.0
      %6748 = vmatpush1.msra.mxu0 0.0
      %6749 = vmatprep.subr.mxu0 0.0
      %6750 = vmatpush1.msra.mxu0 0.0
      %6751 = vmatprep.subr.mxu0 0.0
      %6752 = vmatpush1.msra.mxu0 0.0
      %6753 = vmatprep.subr.mxu0 0.0
      %6754 = vmatpush1.msra.mxu0 0.0
      %6755 = vmatprep.subr.mxu0 0.0
      %6756 = vmatpush1.msra.mxu0 0.0
      %6757 = vmatprep.mubr.f32.mxu0 0.0
      %v6758 = vand.u32 %v6322, 4294901760
      %v6759 = vsub.f32 %v6322, %v6758
      %v6760 = vand.u32 %v6759, 4294901760
      %6761 = vmatmul.mubr.f32.gmra.mrb[0].mxu0 %v6760
      %v6762 = vpop.f32.mrb[0].mxu0
      %v6763 = vadd.f32 %v6657, %v6762
      %v6764 = vpop.f32.mrb[0].mxu0
      %6765 = vmatprep.mubr.f32.mxu0 0.0
      %v6766 = vand.u32 %v6325, 4294901760
      %v6767 = vsub.f32 %v6325, %v6766
      %v6768 = vand.u32 %v6767, 4294901760
      %6769 = vmatmul.mubr.f32.gmra.mrb[0].mxu0 %v6768
      %v6770 = vpop.f32.mrb[0].mxu0
      %v6771 = vadd.f32 %v6664, %v6770
      %v6772 = vpop.f32.mrb[0].mxu0
      %6773 = vmatprep.mubr.f32.mxu0 0.0
      %v6774 = vand.u32 %v6328, 4294901760
      %v6775 = vsub.f32 %v6328, %v6774
      %v6776 = vand.u32 %v6775, 4294901760
      %6777 = vmatmul.mubr.f32.gmra.mrb[0].mxu0 %v6776
      %v6778 = vpop.f32.mrb[0].mxu0
      %v6779 = vadd.f32 %v6671, %v6778
      %v6780 = vpop.f32.mrb[0].mxu0
      %6781 = vmatprep.mubr.f32.mxu0 0.0
      %v6782 = vand.u32 %v6331, 4294901760
      %v6783 = vsub.f32 %v6331, %v6782
      %v6784 = vand.u32 %v6783, 4294901760
      %6785 = vmatmul.mubr.f32.gmra.mrb[0].mxu0 %v6784
      %v6786 = vpop.f32.mrb[0].mxu0
      %v6787 = vadd.f32 %v6678, %v6786
      %v6788 = vpop.f32.mrb[0].mxu0
      %6789 = vmatprep.mubr.f32.mxu0 0.0
      %v6790 = vand.u32 %v6334, 4294901760
      %v6791 = vsub.f32 %v6334, %v6790
      %v6792 = vand.u32 %v6791, 4294901760
      %6793 = vmatmul.mubr.f32.gmra.mrb[0].mxu0 %v6792
      %v6794 = vpop.f32.mrb[0].mxu0
      %v6795 = vadd.f32 %v6685, %v6794
      %v6796 = vpop.f32.mrb[0].mxu0
      %6797 = vdwg.mxu0
      %6798 = vmatprep.subr.mxu0 0.0
      %v6799 = vand.u32 %v6308, 4294901760
      %v6800 = vsub.f32 %v6308, %v6799
      %v6801 = vand.u32 %v6800, 4294901760
      %6802 = vmatpush1.msra.mxu0 %v6801
      %6803 = vmatprep.subr.mxu0 0.0
      %v6804 = vand.u32 %v6310, 4294901760
      %v6805 = vsub.f32 %v6310, %v6804
      %v6806 = vand.u32 %v6805, 4294901760
      %6807 = vmatpush1.msra.mxu0 %v6806
      %6808 = vmatprep.subr.mxu0 0.0
      %v6809 = vand.u32 %v6312, 4294901760
      %v6810 = vsub.f32 %v6312, %v6809
      %v6811 = vand.u32 %v6810, 4294901760
      %6812 = vmatpush1.msra.mxu0 %v6811
      %6813 = vmatprep.subr.mxu0 0.0
      %v6814 = vand.u32 %v6314, 4294901760
      %v6815 = vsub.f32 %v6314, %v6814
      %v6816 = vand.u32 %v6815, 4294901760
      %6817 = vmatpush1.msra.mxu0 %v6816
      %6818 = vmatprep.subr.mxu0 0.0
      %v6819 = vand.u32 %v6336, 4294901760
      %v6820 = vsub.f32 %v6336, %v6819
      %v6821 = vand.u32 %v6820, 4294901760
      %6822 = vmatpush1.msra.mxu0 %v6821
      %6823 = vmatprep.subr.mxu0 0.0
      %6824 = vmatpush1.msra.mxu0 0.0
      %6825 = vmatprep.subr.mxu0 0.0
      %6826 = vmatpush1.msra.mxu0 0.0
      %6827 = vmatprep.subr.mxu0 0.0
      %6828 = vmatpush1.msra.mxu0 0.0
      %6829 = vmatprep.subr.mxu0 0.0
      %6830 = vmatpush1.msra.mxu0 0.0
      %6831 = vmatprep.subr.mxu0 0.0
      %6832 = vmatpush1.msra.mxu0 0.0
      %6833 = vmatprep.subr.mxu0 0.0
      %6834 = vmatpush1.msra.mxu0 0.0
      %6835 = vmatprep.subr.mxu0 0.0
      %6836 = vmatpush1.msra.mxu0 0.0
      %6837 = vmatprep.subr.mxu0 0.0
      %6838 = vmatpush1.msra.mxu0 0.0
      %6839 = vmatprep.subr.mxu0 0.0
      %6840 = vmatpush1.msra.mxu0 0.0
      %6841 = vmatprep.subr.mxu0 0.0
      %6842 = vmatpush1.msra.mxu0 0.0
      %6843 = vmatprep.subr.mxu0 0.0
      %6844 = vmatpush1.msra.mxu0 0.0
      %6845 = vmatprep.subr.mxu0 0.0
      %6846 = vmatpush1.msra.mxu0 0.0
      %6847 = vmatprep.subr.mxu0 0.0
      %6848 = vmatpush1.msra.mxu0 0.0
      %6849 = vmatprep.subr.mxu0 0.0
      %6850 = vmatpush1.msra.mxu0 0.0
      %6851 = vmatprep.subr.mxu0 0.0
      %6852 = vmatpush1.msra.mxu0 0.0
      %6853 = vmatprep.subr.mxu0 0.0
      %6854 = vmatpush1.msra.mxu0 0.0
      %6855 = vmatprep.subr.mxu0 0.0
      %6856 = vmatpush1.msra.mxu0 0.0
      %6857 = vmatprep.subr.mxu0 0.0
      %6858 = vmatpush1.msra.mxu0 0.0
      %6859 = vmatprep.subr.mxu0 0.0
      %6860 = vmatpush1.msra.mxu0 0.0
      %6861 = vmatprep.subr.mxu0 0.0
      %6862 = vmatpush1.msra.mxu0 0.0
      %6863 = vmatprep.subr.mxu0 0.0
      %6864 = vmatpush1.msra.mxu0 0.0
      %6865 = vmatprep.subr.mxu0 0.0
      %6866 = vmatpush1.msra.mxu0 0.0
      %6867 = vmatprep.subr.mxu0 0.0
      %6868 = vmatpush1.msra.mxu0 0.0
      %6869 = vmatprep.subr.mxu0 0.0
      %6870 = vmatpush1.msra.mxu0 0.0
      %6871 = vmatprep.subr.mxu0 0.0
      %6872 = vmatpush1.msra.mxu0 0.0
      %6873 = vmatprep.subr.mxu0 0.0
      %6874 = vmatpush1.msra.mxu0 0.0
      %6875 = vmatprep.subr.mxu0 0.0
      %6876 = vmatpush1.msra.mxu0 0.0
      %6877 = vmatprep.mubr.f32.mxu0 0.0
      %v6878 = vand.u32 %v6322, 4294901760
      %6879 = vmatmul.mubr.f32.gmra.mrb[0].mxu0 %v6878
      %v6880 = vpop.f32.mrb[0].mxu0
      %v6881 = vadd.f32 %v6763, %v6880
      %v6882 = vpop.f32.mrb[0].mxu0
      %6883 = vmatprep.mubr.f32.mxu0 0.0
      %v6884 = vand.u32 %v6325, 4294901760
      %6885 = vmatmul.mubr.f32.gmra.mrb[0].mxu0 %v6884
      %v6886 = vpop.f32.mrb[0].mxu0
      %v6887 = vadd.f32 %v6771, %v6886
      %v6888 = vpop.f32.mrb[0].mxu0
      %6889 = vmatprep.mubr.f32.mxu0 0.0
      %v6890 = vand.u32 %v6328, 4294901760
      %6891 = vmatmul.mubr.f32.gmra.mrb[0].mxu0 %v6890
      %v6892 = vpop.f32.mrb[0].mxu0
      %v6893 = vadd.f32 %v6779, %v6892
      %v6894 = vpop.f32.mrb[0].mxu0
      %6895 = vmatprep.mubr.f32.mxu0 0.0
      %v6896 = vand.u32 %v6331, 4294901760
      %6897 = vmatmul.mubr.f32.gmra.mrb[0].mxu0 %v6896
      %v6898 = vpop.f32.mrb[0].mxu0
      %v6899 = vadd.f32 %v6787, %v6898
      %v6900 = vpop.f32.mrb[0].mxu0
      %6901 = vmatprep.mubr.f32.mxu0 0.0
      %v6902 = vand.u32 %v6334, 4294901760
      %6903 = vmatmul.mubr.f32.gmra.mrb[0].mxu0 %v6902
      %v6904 = vpop.f32.mrb[0].mxu0
      %v6905 = vadd.f32 %v6795, %v6904
      %v6906 = vpop.f32.mrb[0].mxu0
      %6907 = vdwg.mxu0
      %6908 = vmatprep.subr.mxu0 0.0
      %v6909 = vand.u32 %v6308, 4294901760
      %6910 = vmatpush1.msra.mxu0 %v6909
      %6911 = vmatprep.subr.mxu0 0.0
      %v6912 = vand.u32 %v6310, 4294901760
      %6913 = vmatpush1.msra.mxu0 %v6912
      %6914 = vmatprep.subr.mxu0 0.0
      %v6915 = vand.u32 %v6312, 4294901760
      %6916 = vmatpush1.msra.mxu0 %v6915
      %6917 = vmatprep.subr.mxu0 0.0
      %v6918 = vand.u32 %v6314, 4294901760
      %6919 = vmatpush1.msra.mxu0 %v6918
      %6920 = vmatprep.subr.mxu0 0.0
      %v6921 = vand.u32 %v6336, 4294901760
      %6922 = vmatpush1.msra.mxu0 %v6921
      %6923 = vmatprep.subr.mxu0 0.0
      %6924 = vmatpush1.msra.mxu0 0.0
      %6925 = vmatprep.subr.mxu0 0.0
      %6926 = vmatpush1.msra.mxu0 0.0
      %6927 = vmatprep.subr.mxu0 0.0
      %6928 = vmatpush1.msra.mxu0 0.0
      %6929 = vmatprep.subr.mxu0 0.0
      %6930 = vmatpush1.msra.mxu0 0.0
      %6931 = vmatprep.subr.mxu0 0.0
      %6932 = vmatpush1.msra.mxu0 0.0
      %6933 = vmatprep.subr.mxu0 0.0
      %6934 = vmatpush1.msra.mxu0 0.0
      %6935 = vmatprep.subr.mxu0 0.0
      %6936 = vmatpush1.msra.mxu0 0.0
      %6937 = vmatprep.subr.mxu0 0.0
      %6938 = vmatpush1.msra.mxu0 0.0
      %6939 = vmatprep.subr.mxu0 0.0
      %6940 = vmatpush1.msra.mxu0 0.0
      %6941 = vmatprep.subr.mxu0 0.0
      %6942 = vmatpush1.msra.mxu0 0.0
      %6943 = vmatprep.subr.mxu0 0.0
      %6944 = vmatpush1.msra.mxu0 0.0
      %6945 = vmatprep.subr.mxu0 0.0
      %6946 = vmatpush1.msra.mxu0 0.0
      %6947 = vmatprep.subr.mxu0 0.0
      %6948 = vmatpush1.msra.mxu0 0.0
      %6949 = vmatprep.subr.mxu0 0.0
      %6950 = vmatpush1.msra.mxu0 0.0
      %6951 = vmatprep.subr.mxu0 0.0
      %6952 = vmatpush1.msra.mxu0 0.0
      %6953 = vmatprep.subr.mxu0 0.0
      %6954 = vmatpush1.msra.mxu0 0.0
      %6955 = vmatprep.subr.mxu0 0.0
      %6956 = vmatpush1.msra.mxu0 0.0
      %6957 = vmatprep.subr.mxu0 0.0
      %6958 = vmatpush1.msra.mxu0 0.0
      %6959 = vmatprep.subr.mxu0 0.0
      %6960 = vmatpush1.msra.mxu0 0.0
      %6961 = vmatprep.subr.mxu0 0.0
      %6962 = vmatpush1.msra.mxu0 0.0
      %6963 = vmatprep.subr.mxu0 0.0
      %6964 = vmatpush1.msra.mxu0 0.0
      %6965 = vmatprep.subr.mxu0 0.0
      %6966 = vmatpush1.msra.mxu0 0.0
      %6967 = vmatprep.subr.mxu0 0.0
      %6968 = vmatpush1.msra.mxu0 0.0
      %6969 = vmatprep.subr.mxu0 0.0
      %6970 = vmatpush1.msra.mxu0 0.0
      %6971 = vmatprep.subr.mxu0 0.0
      %6972 = vmatpush1.msra.mxu0 0.0
      %6973 = vmatprep.subr.mxu0 0.0
      %6974 = vmatpush1.msra.mxu0 0.0
      %6975 = vmatprep.subr.mxu0 0.0
      %6976 = vmatpush1.msra.mxu0 0.0
      %6977 = vmatprep.mubr.f32.mxu0 0.0
      %v6978 = vand.u32 %v6322, 4294901760
      %6979 = vmatmul.mubr.f32.gmra.mrb[0].mxu0 %v6978
      %v6980 = vpop.f32.mrb[0].mxu0
      %v6981 = vadd.f32 %v6881, %v6980
      %v6982 = vpop.f32.mrb[0].mxu0
      %6983 = vmatprep.mubr.f32.mxu0 0.0
      %v6984 = vand.u32 %v6325, 4294901760
      %6985 = vmatmul.mubr.f32.gmra.mrb[0].mxu0 %v6984
      %v6986 = vpop.f32.mrb[0].mxu0
      %v6987 = vadd.f32 %v6887, %v6986
      %v6988 = vpop.f32.mrb[0].mxu0
      %6989 = vmatprep.mubr.f32.mxu0 0.0
      %v6990 = vand.u32 %v6328, 4294901760
      %6991 = vmatmul.mubr.f32.gmra.mrb[0].mxu0 %v6990
      %v6992 = vpop.f32.mrb[0].mxu0
      %v6993 = vadd.f32 %v6893, %v6992
      %v6994 = vpop.f32.mrb[0].mxu0
      %6995 = vmatprep.mubr.f32.mxu0 0.0
      %v6996 = vand.u32 %v6331, 4294901760
      %6997 = vmatmul.mubr.f32.gmra.mrb[0].mxu0 %v6996
      %v6998 = vpop.f32.mrb[0].mxu0
      %v6999 = vadd.f32 %v6899, %v6998
      %v7000 = vpop.f32.mrb[0].mxu0
      %7001 = vmatprep.mubr.f32.mxu0 0.0
      %v7002 = vand.u32 %v6334, 4294901760
      %7003 = vmatmul.mubr.f32.gmra.mrb[0].mxu0 %v7002
      %v7004 = vpop.f32.mrb[0].mxu0
      %v7005 = vadd.f32 %v6905, %v7004
      %v7006 = vpop.f32.mrb[0].mxu0
      %7007 = vdwg.mxu0
      %v7008 = vld [vmem:[%s593 + $0x8] sm:$0xf]
      %v7010 = vsel %vm1322, %v6981, 0
      %v7013 = vsel %vm1322, %v6987, 0
      %v7016 = vsel %vm1322, %v6993, 0
      %v7019 = vsel %vm1322, %v6999, 0
      %v7022 = vsel %vm1322, %v7005, 0
      %v7025 = vsel %vm2109, %v7008, 0
      %7027 = vmatprep.subr.mxu0 0.0
      %v7028 = vand.u32 %v7025, 4294901760
      %7029 = vmatpush1.msra.mxu0 %v7028
      %7030 = vmatprep.subr.mxu0 0.0
      %7031 = vmatpush1.msra.mxu0 0.0
      %7032 = vmatprep.subr.mxu0 0.0
      %7033 = vmatpush1.msra.mxu0 0.0
      %7034 = vmatprep.subr.mxu0 0.0
      %7035 = vmatpush1.msra.mxu0 0.0
      %7036 = vmatprep.subr.mxu0 0.0
      %7037 = vmatpush1.msra.mxu0 0.0
      %7038 = vmatprep.subr.mxu0 0.0
      %7039 = vmatpush1.msra.mxu0 0.0
      %7040 = vmatprep.subr.mxu0 0.0
      %7041 = vmatpush1.msra.mxu0 0.0
      %7042 = vmatprep.subr.mxu0 0.0
      %7043 = vmatpush1.msra.mxu0 0.0
      %7044 = vmatprep.subr.mxu0 0.0
      %7045 = vmatpush1.msra.mxu0 0.0
      %7046 = vmatprep.subr.mxu0 0.0
      %7047 = vmatpush1.msra.mxu0 0.0
      %7048 = vmatprep.subr.mxu0 0.0
      %7049 = vmatpush1.msra.mxu0 0.0
      %7050 = vmatprep.subr.mxu0 0.0
      %7051 = vmatpush1.msra.mxu0 0.0
      %7052 = vmatprep.subr.mxu0 0.0
      %7053 = vmatpush1.msra.mxu0 0.0
      %7054 = vmatprep.subr.mxu0 0.0
      %7055 = vmatpush1.msra.mxu0 0.0
      %7056 = vmatprep.subr.mxu0 0.0
      %7057 = vmatpush1.msra.mxu0 0.0
      %7058 = vmatprep.subr.mxu0 0.0
      %7059 = vmatpush1.msra.mxu0 0.0
      %7060 = vmatprep.subr.mxu0 0.0
      %7061 = vmatpush1.msra.mxu0 0.0
      %7062 = vmatprep.subr.mxu0 0.0
      %7063 = vmatpush1.msra.mxu0 0.0
      %7064 = vmatprep.subr.mxu0 0.0
      %7065 = vmatpush1.msra.mxu0 0.0
      %7066 = vmatprep.subr.mxu0 0.0
      %7067 = vmatpush1.msra.mxu0 0.0
      %7068 = vmatprep.subr.mxu0 0.0
      %7069 = vmatpush1.msra.mxu0 0.0
      %7070 = vmatprep.subr.mxu0 0.0
      %7071 = vmatpush1.msra.mxu0 0.0
      %7072 = vmatprep.subr.mxu0 0.0
      %7073 = vmatpush1.msra.mxu0 0.0
      %7074 = vmatprep.subr.mxu0 0.0
      %7075 = vmatpush1.msra.mxu0 0.0
      %7076 = vmatprep.subr.mxu0 0.0
      %7077 = vmatpush1.msra.mxu0 0.0
      %7078 = vmatprep.subr.mxu0 0.0
      %7079 = vmatpush1.msra.mxu0 0.0
      %7080 = vmatprep.subr.mxu0 0.0
      %7081 = vmatpush1.msra.mxu0 0.0
      %7082 = vmatprep.subr.mxu0 0.0
      %7083 = vmatpush1.msra.mxu0 0.0
      %7084 = vmatprep.subr.mxu0 0.0
      %7085 = vmatpush1.msra.mxu0 0.0
      %7086 = vmatprep.subr.mxu0 0.0
      %7087 = vmatpush1.msra.mxu0 0.0
      %7088 = vmatprep.subr.mxu0 0.0
      %7089 = vmatpush1.msra.mxu0 0.0
      %7090 = vmatprep.subr.mxu0 0.0
      %7091 = vmatpush1.msra.mxu0 0.0
      %7092 = vmatprep.mubr.f32.mxu0 0.0
      %v7093 = vand.u32 %v7010, 4294901760
      %v7094 = vsub.f32 %v7010, %v7093
      %v7095 = vand.u32 %v7094, 4294901760
      %v7096 = vsub.f32 %v7094, %v7095
      %v7097 = vand.u32 %v7096, 4294901760
      %7098 = vmatmul.mubr.f32.gmra.mrb[0].mxu0 %v7097
      %v7099 = vpop.f32.mrb[0].mxu0
      %v7100 = vadd.f32 0.0, %v7099
      %v7101 = vpop.f32.mrb[0].mxu0
      %7102 = vmatprep.mubr.f32.mxu0 0.0
      %v7103 = vand.u32 %v7013, 4294901760
      %v7104 = vsub.f32 %v7013, %v7103
      %v7105 = vand.u32 %v7104, 4294901760
      %v7106 = vsub.f32 %v7104, %v7105
      %v7107 = vand.u32 %v7106, 4294901760
      %7108 = vmatmul.mubr.f32.gmra.mrb[0].mxu0 %v7107
      %v7109 = vpop.f32.mrb[0].mxu0
      %v7110 = vadd.f32 0.0, %v7109
      %v7111 = vpop.f32.mrb[0].mxu0
      %7112 = vmatprep.mubr.f32.mxu0 0.0
      %v7113 = vand.u32 %v7016, 4294901760
      %v7114 = vsub.f32 %v7016, %v7113
      %v7115 = vand.u32 %v7114, 4294901760
      %v7116 = vsub.f32 %v7114, %v7115
      %v7117 = vand.u32 %v7116, 4294901760
      %7118 = vmatmul.mubr.f32.gmra.mrb[0].mxu0 %v7117
      %v7119 = vpop.f32.mrb[0].mxu0
      %v7120 = vadd.f32 0.0, %v7119
      %v7121 = vpop.f32.mrb[0].mxu0
      %7122 = vmatprep.mubr.f32.mxu0 0.0
      %v7123 = vand.u32 %v7019, 4294901760
      %v7124 = vsub.f32 %v7019, %v7123
      %v7125 = vand.u32 %v7124, 4294901760
      %v7126 = vsub.f32 %v7124, %v7125
      %v7127 = vand.u32 %v7126, 4294901760
      %7128 = vmatmul.mubr.f32.gmra.mrb[0].mxu0 %v7127
      %v7129 = vpop.f32.mrb[0].mxu0
      %v7130 = vadd.f32 0.0, %v7129
      %v7131 = vpop.f32.mrb[0].mxu0
      %7132 = vmatprep.mubr.f32.mxu0 0.0
      %v7133 = vand.u32 %v7022, 4294901760
      %v7134 = vsub.f32 %v7022, %v7133
      %v7135 = vand.u32 %v7134, 4294901760
      %v7136 = vsub.f32 %v7134, %v7135
      %v7137 = vand.u32 %v7136, 4294901760
      %7138 = vmatmul.mubr.f32.gmra.mrb[0].mxu0 %v7137
      %v7139 = vpop.f32.mrb[0].mxu0
      %v7140 = vadd.f32 0.0, %v7139
      %v7141 = vpop.f32.mrb[0].mxu0
      %7142 = vdwg.mxu0
      %7143 = vmatprep.subr.mxu0 0.0
      %v7144 = vand.u32 %v7025, 4294901760
      %v7145 = vsub.f32 %v7025, %v7144
      %v7146 = vand.u32 %v7145, 4294901760
      %v7147 = vsub.f32 %v7145, %v7146
      %v7148 = vand.u32 %v7147, 4294901760
      %7149 = vmatpush1.msra.mxu0 %v7148
      %7150 = vmatprep.subr.mxu0 0.0
      %7151 = vmatpush1.msra.mxu0 0.0
      %7152 = vmatprep.subr.mxu0 0.0
      %7153 = vmatpush1.msra.mxu0 0.0
      %7154 = vmatprep.subr.mxu0 0.0
      %7155 = vmatpush1.msra.mxu0 0.0
      %7156 = vmatprep.subr.mxu0 0.0
      %7157 = vmatpush1.msra.mxu0 0.0
      %7158 = vmatprep.subr.mxu0 0.0
      %7159 = vmatpush1.msra.mxu0 0.0
      %7160 = vmatprep.subr.mxu0 0.0
      %7161 = vmatpush1.msra.mxu0 0.0
      %7162 = vmatprep.subr.mxu0 0.0
      %7163 = vmatpush1.msra.mxu0 0.0
      %7164 = vmatprep.subr.mxu0 0.0
      %7165 = vmatpush1.msra.mxu0 0.0
      %7166 = vmatprep.subr.mxu0 0.0
      %7167 = vmatpush1.msra.mxu0 0.0
      %7168 = vmatprep.subr.mxu0 0.0
      %7169 = vmatpush1.msra.mxu0 0.0
      %7170 = vmatprep.subr.mxu0 0.0
      %7171 = vmatpush1.msra.mxu0 0.0
      %7172 = vmatprep.subr.mxu0 0.0
      %7173 = vmatpush1.msra.mxu0 0.0
      %7174 = vmatprep.subr.mxu0 0.0
      %7175 = vmatpush1.msra.mxu0 0.0
      %7176 = vmatprep.subr.mxu0 0.0
      %7177 = vmatpush1.msra.mxu0 0.0
      %7178 = vmatprep.subr.mxu0 0.0
      %7179 = vmatpush1.msra.mxu0 0.0
      %7180 = vmatprep.subr.mxu0 0.0
      %7181 = vmatpush1.msra.mxu0 0.0
      %7182 = vmatprep.subr.mxu0 0.0
      %7183 = vmatpush1.msra.mxu0 0.0
      %7184 = vmatprep.subr.mxu0 0.0
      %7185 = vmatpush1.msra.mxu0 0.0
      %7186 = vmatprep.subr.mxu0 0.0
      %7187 = vmatpush1.msra.mxu0 0.0
      %7188 = vmatprep.subr.mxu0 0.0
      %7189 = vmatpush1.msra.mxu0 0.0
      %7190 = vmatprep.subr.mxu0 0.0
      %7191 = vmatpush1.msra.mxu0 0.0
      %7192 = vmatprep.subr.mxu0 0.0
      %7193 = vmatpush1.msra.mxu0 0.0
      %7194 = vmatprep.subr.mxu0 0.0
      %7195 = vmatpush1.msra.mxu0 0.0
      %7196 = vmatprep.subr.mxu0 0.0
      %7197 = vmatpush1.msra.mxu0 0.0
      %7198 = vmatprep.subr.mxu0 0.0
      %7199 = vmatpush1.msra.mxu0 0.0
      %7200 = vmatprep.subr.mxu0 0.0
      %7201 = vmatpush1.msra.mxu0 0.0
      %7202 = vmatprep.subr.mxu0 0.0
      %7203 = vmatpush1.msra.mxu0 0.0
      %7204 = vmatprep.subr.mxu0 0.0
      %7205 = vmatpush1.msra.mxu0 0.0
      %7206 = vmatprep.subr.mxu0 0.0
      %7207 = vmatpush1.msra.mxu0 0.0
      %7208 = vmatprep.subr.mxu0 0.0
      %7209 = vmatpush1.msra.mxu0 0.0
      %7210 = vmatprep.subr.mxu0 0.0
      %7211 = vmatpush1.msra.mxu0 0.0
      %7212 = vmatprep.mubr.f32.mxu0 0.0
      %v7213 = vand.u32 %v7010, 4294901760
      %7214 = vmatmul.mubr.f32.gmra.mrb[0].mxu0 %v7213
      %v7215 = vpop.f32.mrb[0].mxu0
      %v7216 = vadd.f32 %v7100, %v7215
      %v7217 = vpop.f32.mrb[0].mxu0
      %7218 = vmatprep.mubr.f32.mxu0 0.0
      %v7219 = vand.u32 %v7013, 4294901760
      %7220 = vmatmul.mubr.f32.gmra.mrb[0].mxu0 %v7219
      %v7221 = vpop.f32.mrb[0].mxu0
      %v7222 = vadd.f32 %v7110, %v7221
      %v7223 = vpop.f32.mrb[0].mxu0
      %7224 = vmatprep.mubr.f32.mxu0 0.0
      %v7225 = vand.u32 %v7016, 4294901760
      %7226 = vmatmul.mubr.f32.gmra.mrb[0].mxu0 %v7225
      %v7227 = vpop.f32.mrb[0].mxu0
      %v7228 = vadd.f32 %v7120, %v7227
      %v7229 = vpop.f32.mrb[0].mxu0
      %7230 = vmatprep.mubr.f32.mxu0 0.0
      %v7231 = vand.u32 %v7019, 4294901760
      %7232 = vmatmul.mubr.f32.gmra.mrb[0].mxu0 %v7231
      %v7233 = vpop.f32.mrb[0].mxu0
      %v7234 = vadd.f32 %v7130, %v7233
      %v7235 = vpop.f32.mrb[0].mxu0
      %7236 = vmatprep.mubr.f32.mxu0 0.0
      %v7237 = vand.u32 %v7022, 4294901760
      %7238 = vmatmul.mubr.f32.gmra.mrb[0].mxu0 %v7237
      %v7239 = vpop.f32.mrb[0].mxu0
      %v7240 = vadd.f32 %v7140, %v7239
      %v7241 = vpop.f32.mrb[0].mxu0
      %7242 = vdwg.mxu0
      %7243 = vmatprep.subr.mxu0 0.0
      %v7244 = vand.u32 %v7025, 4294901760
      %v7245 = vsub.f32 %v7025, %v7244
      %7246 = vmatpush1.msra.mxu0 %v7245
      %7247 = vmatprep.subr.mxu0 0.0
      %7248 = vmatpush1.msra.mxu0 0.0
      %7249 = vmatprep.subr.mxu0 0.0
      %7250 = vmatpush1.msra.mxu0 0.0
      %7251 = vmatprep.subr.mxu0 0.0
      %7252 = vmatpush1.msra.mxu0 0.0
      %7253 = vmatprep.subr.mxu0 0.0
      %7254 = vmatpush1.msra.mxu0 0.0
      %7255 = vmatprep.subr.mxu0 0.0
      %7256 = vmatpush1.msra.mxu0 0.0
      %7257 = vmatprep.subr.mxu0 0.0
      %7258 = vmatpush1.msra.mxu0 0.0
      %7259 = vmatprep.subr.mxu0 0.0
      %7260 = vmatpush1.msra.mxu0 0.0
      %7261 = vmatprep.subr.mxu0 0.0
      %7262 = vmatpush1.msra.mxu0 0.0
      %7263 = vmatprep.subr.mxu0 0.0
      %7264 = vmatpush1.msra.mxu0 0.0
      %7265 = vmatprep.subr.mxu0 0.0
      %7266 = vmatpush1.msra.mxu0 0.0
      %7267 = vmatprep.subr.mxu0 0.0
      %7268 = vmatpush1.msra.mxu0 0.0
      %7269 = vmatprep.subr.mxu0 0.0
      %7270 = vmatpush1.msra.mxu0 0.0
      %7271 = vmatprep.subr.mxu0 0.0
      %7272 = vmatpush1.msra.mxu0 0.0
      %7273 = vmatprep.subr.mxu0 0.0
      %7274 = vmatpush1.msra.mxu0 0.0
      %7275 = vmatprep.subr.mxu0 0.0
      %7276 = vmatpush1.msra.mxu0 0.0
      %7277 = vmatprep.subr.mxu0 0.0
      %7278 = vmatpush1.msra.mxu0 0.0
      %7279 = vmatprep.subr.mxu0 0.0
      %7280 = vmatpush1.msra.mxu0 0.0
      %7281 = vmatprep.subr.mxu0 0.0
      %7282 = vmatpush1.msra.mxu0 0.0
      %7283 = vmatprep.subr.mxu0 0.0
      %7284 = vmatpush1.msra.mxu0 0.0
      %7285 = vmatprep.subr.mxu0 0.0
      %7286 = vmatpush1.msra.mxu0 0.0
      %7287 = vmatprep.subr.mxu0 0.0
      %7288 = vmatpush1.msra.mxu0 0.0
      %7289 = vmatprep.subr.mxu0 0.0
      %7290 = vmatpush1.msra.mxu0 0.0
      %7291 = vmatprep.subr.mxu0 0.0
      %7292 = vmatpush1.msra.mxu0 0.0
      %7293 = vmatprep.subr.mxu0 0.0
      %7294 = vmatpush1.msra.mxu0 0.0
      %7295 = vmatprep.subr.mxu0 0.0
      %7296 = vmatpush1.msra.mxu0 0.0
      %7297 = vmatprep.subr.mxu0 0.0
      %7298 = vmatpush1.msra.mxu0 0.0
      %7299 = vmatprep.subr.mxu0 0.0
      %7300 = vmatpush1.msra.mxu0 0.0
      %7301 = vmatprep.subr.mxu0 0.0
      %7302 = vmatpush1.msra.mxu0 0.0
      %7303 = vmatprep.subr.mxu0 0.0
      %7304 = vmatpush1.msra.mxu0 0.0
      %7305 = vmatprep.subr.mxu0 0.0
      %7306 = vmatpush1.msra.mxu0 0.0
      %7307 = vmatprep.subr.mxu0 0.0
      %7308 = vmatpush1.msra.mxu0 0.0
      %7309 = vmatprep.mubr.f32.mxu0 0.0
      %v7310 = vand.u32 %v7010, 4294901760
      %v7311 = vsub.f32 %v7010, %v7310
      %7312 = vmatmul.mubr.f32.gmra.mrb[0].mxu0 %v7311
      %v7313 = vpop.f32.mrb[0].mxu0
      %v7314 = vadd.f32 %v7216, %v7313
      %v7315 = vpop.f32.mrb[0].mxu0
      %7316 = vmatprep.mubr.f32.mxu0 0.0
      %v7317 = vand.u32 %v7013, 4294901760
      %v7318 = vsub.f32 %v7013, %v7317
      %7319 = vmatmul.mubr.f32.gmra.mrb[0].mxu0 %v7318
      %v7320 = vpop.f32.mrb[0].mxu0
      %v7321 = vadd.f32 %v7222, %v7320
      %v7322 = vpop.f32.mrb[0].mxu0
      %7323 = vmatprep.mubr.f32.mxu0 0.0
      %v7324 = vand.u32 %v7016, 4294901760
      %v7325 = vsub.f32 %v7016, %v7324
      %7326 = vmatmul.mubr.f32.gmra.mrb[0].mxu0 %v7325
      %v7327 = vpop.f32.mrb[0].mxu0
      %v7328 = vadd.f32 %v7228, %v7327
      %v7329 = vpop.f32.mrb[0].mxu0
      %7330 = vmatprep.mubr.f32.mxu0 0.0
      %v7331 = vand.u32 %v7019, 4294901760
      %v7332 = vsub.f32 %v7019, %v7331
      %7333 = vmatmul.mubr.f32.gmra.mrb[0].mxu0 %v7332
      %v7334 = vpop.f32.mrb[0].mxu0
      %v7335 = vadd.f32 %v7234, %v7334
      %v7336 = vpop.f32.mrb[0].mxu0
      %7337 = vmatprep.mubr.f32.mxu0 0.0
      %v7338 = vand.u32 %v7022, 4294901760
      %v7339 = vsub.f32 %v7022, %v7338
      %7340 = vmatmul.mubr.f32.gmra.mrb[0].mxu0 %v7339
      %v7341 = vpop.f32.mrb[0].mxu0
      %v7342 = vadd.f32 %v7240, %v7341
      %v7343 = vpop.f32.mrb[0].mxu0
      %7344 = vdwg.mxu0
      %7345 = vmatprep.subr.mxu0 0.0
      %v7346 = vand.u32 %v7025, 4294901760
      %7347 = vmatpush1.msra.mxu0 %v7346
      %7348 = vmatprep.subr.mxu0 0.0
      %7349 = vmatpush1.msra.mxu0 0.0
      %7350 = vmatprep.subr.mxu0 0.0
      %7351 = vmatpush1.msra.mxu0 0.0
      %7352 = vmatprep.subr.mxu0 0.0
      %7353 = vmatpush1.msra.mxu0 0.0
      %7354 = vmatprep.subr.mxu0 0.0
      %7355 = vmatpush1.msra.mxu0 0.0
      %7356 = vmatprep.subr.mxu0 0.0
      %7357 = vmatpush1.msra.mxu0 0.0
      %7358 = vmatprep.subr.mxu0 0.0
      %7359 = vmatpush1.msra.mxu0 0.0
      %7360 = vmatprep.subr.mxu0 0.0
      %7361 = vmatpush1.msra.mxu0 0.0
      %7362 = vmatprep.subr.mxu0 0.0
      %7363 = vmatpush1.msra.mxu0 0.0
      %7364 = vmatprep.subr.mxu0 0.0
      %7365 = vmatpush1.msra.mxu0 0.0
      %7366 = vmatprep.subr.mxu0 0.0
      %7367 = vmatpush1.msra.mxu0 0.0
      %7368 = vmatprep.subr.mxu0 0.0
      %7369 = vmatpush1.msra.mxu0 0.0
      %7370 = vmatprep.subr.mxu0 0.0
      %7371 = vmatpush1.msra.mxu0 0.0
      %7372 = vmatprep.subr.mxu0 0.0
      %7373 = vmatpush1.msra.mxu0 0.0
      %7374 = vmatprep.subr.mxu0 0.0
      %7375 = vmatpush1.msra.mxu0 0.0
      %7376 = vmatprep.subr.mxu0 0.0
      %7377 = vmatpush1.msra.mxu0 0.0
      %7378 = vmatprep.subr.mxu0 0.0
      %7379 = vmatpush1.msra.mxu0 0.0
      %7380 = vmatprep.subr.mxu0 0.0
      %7381 = vmatpush1.msra.mxu0 0.0
      %7382 = vmatprep.subr.mxu0 0.0
      %7383 = vmatpush1.msra.mxu0 0.0
      %7384 = vmatprep.subr.mxu0 0.0
      %7385 = vmatpush1.msra.mxu0 0.0
      %7386 = vmatprep.subr.mxu0 0.0
      %7387 = vmatpush1.msra.mxu0 0.0
      %7388 = vmatprep.subr.mxu0 0.0
      %7389 = vmatpush1.msra.mxu0 0.0
      %7390 = vmatprep.subr.mxu0 0.0
      %7391 = vmatpush1.msra.mxu0 0.0
      %7392 = vmatprep.subr.mxu0 0.0
      %7393 = vmatpush1.msra.mxu0 0.0
      %7394 = vmatprep.subr.mxu0 0.0
      %7395 = vmatpush1.msra.mxu0 0.0
      %7396 = vmatprep.subr.mxu0 0.0
      %7397 = vmatpush1.msra.mxu0 0.0
      %7398 = vmatprep.subr.mxu0 0.0
      %7399 = vmatpush1.msra.mxu0 0.0
      %7400 = vmatprep.subr.mxu0 0.0
      %7401 = vmatpush1.msra.mxu0 0.0
      %7402 = vmatprep.subr.mxu0 0.0
      %7403 = vmatpush1.msra.mxu0 0.0
      %7404 = vmatprep.subr.mxu0 0.0
      %7405 = vmatpush1.msra.mxu0 0.0
      %7406 = vmatprep.subr.mxu0 0.0
      %7407 = vmatpush1.msra.mxu0 0.0
      %7408 = vmatprep.subr.mxu0 0.0
      %7409 = vmatpush1.msra.mxu0 0.0
      %7410 = vmatprep.mubr.f32.mxu0 0.0
      %v7411 = vand.u32 %v7010, 4294901760
      %v7412 = vsub.f32 %v7010, %v7411
      %v7413 = vand.u32 %v7412, 4294901760
      %7414 = vmatmul.mubr.f32.gmra.mrb[0].mxu0 %v7413
      %v7415 = vpop.f32.mrb[0].mxu0
      %v7416 = vadd.f32 %v7314, %v7415
      %v7417 = vpop.f32.mrb[0].mxu0
      %7418 = vmatprep.mubr.f32.mxu0 0.0
      %v7419 = vand.u32 %v7013, 4294901760
      %v7420 = vsub.f32 %v7013, %v7419
      %v7421 = vand.u32 %v7420, 4294901760
      %7422 = vmatmul.mubr.f32.gmra.mrb[0].mxu0 %v7421
      %v7423 = vpop.f32.mrb[0].mxu0
      %v7424 = vadd.f32 %v7321, %v7423
      %v7425 = vpop.f32.mrb[0].mxu0
      %7426 = vmatprep.mubr.f32.mxu0 0.0
      %v7427 = vand.u32 %v7016, 4294901760
      %v7428 = vsub.f32 %v7016, %v7427
      %v7429 = vand.u32 %v7428, 4294901760
      %7430 = vmatmul.mubr.f32.gmra.mrb[0].mxu0 %v7429
      %v7431 = vpop.f32.mrb[0].mxu0
      %v7432 = vadd.f32 %v7328, %v7431
      %v7433 = vpop.f32.mrb[0].mxu0
      %7434 = vmatprep.mubr.f32.mxu0 0.0
      %v7435 = vand.u32 %v7019, 4294901760
      %v7436 = vsub.f32 %v7019, %v7435
      %v7437 = vand.u32 %v7436, 4294901760
      %7438 = vmatmul.mubr.f32.gmra.mrb[0].mxu0 %v7437
      %v7439 = vpop.f32.mrb[0].mxu0
      %v7440 = vadd.f32 %v7335, %v7439
      %v7441 = vpop.f32.mrb[0].mxu0
      %7442 = vmatprep.mubr.f32.mxu0 0.0
      %v7443 = vand.u32 %v7022, 4294901760
      %v7444 = vsub.f32 %v7022, %v7443
      %v7445 = vand.u32 %v7444, 4294901760
      %7446 = vmatmul.mubr.f32.gmra.mrb[0].mxu0 %v7445
      %v7447 = vpop.f32.mrb[0].mxu0
      %v7448 = vadd.f32 %v7342, %v7447
      %v7449 = vpop.f32.mrb[0].mxu0
      %7450 = vdwg.mxu0
      %7451 = vmatprep.subr.mxu0 0.0
      %v7452 = vand.u32 %v7025, 4294901760
      %v7453 = vsub.f32 %v7025, %v7452
      %v7454 = vand.u32 %v7453, 4294901760
      %7455 = vmatpush1.msra.mxu0 %v7454
      %7456 = vmatprep.subr.mxu0 0.0
      %7457 = vmatpush1.msra.mxu0 0.0
      %7458 = vmatprep.subr.mxu0 0.0
      %7459 = vmatpush1.msra.mxu0 0.0
      %7460 = vmatprep.subr.mxu0 0.0
      %7461 = vmatpush1.msra.mxu0 0.0
      %7462 = vmatprep.subr.mxu0 0.0
      %7463 = vmatpush1.msra.mxu0 0.0
      %7464 = vmatprep.subr.mxu0 0.0
      %7465 = vmatpush1.msra.mxu0 0.0
      %7466 = vmatprep.subr.mxu0 0.0
      %7467 = vmatpush1.msra.mxu0 0.0
      %7468 = vmatprep.subr.mxu0 0.0
      %7469 = vmatpush1.msra.mxu0 0.0
      %7470 = vmatprep.subr.mxu0 0.0
      %7471 = vmatpush1.msra.mxu0 0.0
      %7472 = vmatprep.subr.mxu0 0.0
      %7473 = vmatpush1.msra.mxu0 0.0
      %7474 = vmatprep.subr.mxu0 0.0
      %7475 = vmatpush1.msra.mxu0 0.0
      %7476 = vmatprep.subr.mxu0 0.0
      %7477 = vmatpush1.msra.mxu0 0.0
      %7478 = vmatprep.subr.mxu0 0.0
      %7479 = vmatpush1.msra.mxu0 0.0
      %7480 = vmatprep.subr.mxu0 0.0
      %7481 = vmatpush1.msra.mxu0 0.0
      %7482 = vmatprep.subr.mxu0 0.0
      %7483 = vmatpush1.msra.mxu0 0.0
      %7484 = vmatprep.subr.mxu0 0.0
      %7485 = vmatpush1.msra.mxu0 0.0
      %7486 = vmatprep.subr.mxu0 0.0
      %7487 = vmatpush1.msra.mxu0 0.0
      %7488 = vmatprep.subr.mxu0 0.0
      %7489 = vmatpush1.msra.mxu0 0.0
      %7490 = vmatprep.subr.mxu0 0.0
      %7491 = vmatpush1.msra.mxu0 0.0
      %7492 = vmatprep.subr.mxu0 0.0
      %7493 = vmatpush1.msra.mxu0 0.0
      %7494 = vmatprep.subr.mxu0 0.0
      %7495 = vmatpush1.msra.mxu0 0.0
      %7496 = vmatprep.subr.mxu0 0.0
      %7497 = vmatpush1.msra.mxu0 0.0
      %7498 = vmatprep.subr.mxu0 0.0
      %7499 = vmatpush1.msra.mxu0 0.0
      %7500 = vmatprep.subr.mxu0 0.0
      %7501 = vmatpush1.msra.mxu0 0.0
      %7502 = vmatprep.subr.mxu0 0.0
      %7503 = vmatpush1.msra.mxu0 0.0
      %7504 = vmatprep.subr.mxu0 0.0
      %7505 = vmatpush1.msra.mxu0 0.0
      %7506 = vmatprep.subr.mxu0 0.0
      %7507 = vmatpush1.msra.mxu0 0.0
      %7508 = vmatprep.subr.mxu0 0.0
      %7509 = vmatpush1.msra.mxu0 0.0
      %7510 = vmatprep.subr.mxu0 0.0
      %7511 = vmatpush1.msra.mxu0 0.0
      %7512 = vmatprep.subr.mxu0 0.0
      %7513 = vmatpush1.msra.mxu0 0.0
      %7514 = vmatprep.subr.mxu0 0.0
      %7515 = vmatpush1.msra.mxu0 0.0
      %7516 = vmatprep.subr.mxu0 0.0
      %7517 = vmatpush1.msra.mxu0 0.0
      %7518 = vmatprep.mubr.f32.mxu0 0.0
      %v7519 = vand.u32 %v7010, 4294901760
      %7520 = vmatmul.mubr.f32.gmra.mrb[0].mxu0 %v7519
      %v7521 = vpop.f32.mrb[0].mxu0
      %v7522 = vadd.f32 %v7416, %v7521
      %v7523 = vpop.f32.mrb[0].mxu0
      %7524 = vmatprep.mubr.f32.mxu0 0.0
      %v7525 = vand.u32 %v7013, 4294901760
      %7526 = vmatmul.mubr.f32.gmra.mrb[0].mxu0 %v7525
      %v7527 = vpop.f32.mrb[0].mxu0
      %v7528 = vadd.f32 %v7424, %v7527
      %v7529 = vpop.f32.mrb[0].mxu0
      %7530 = vmatprep.mubr.f32.mxu0 0.0
      %v7531 = vand.u32 %v7016, 4294901760
      %7532 = vmatmul.mubr.f32.gmra.mrb[0].mxu0 %v7531
      %v7533 = vpop.f32.mrb[0].mxu0
      %v7534 = vadd.f32 %v7432, %v7533
      %v7535 = vpop.f32.mrb[0].mxu0
      %7536 = vmatprep.mubr.f32.mxu0 0.0
      %v7537 = vand.u32 %v7019, 4294901760
      %7538 = vmatmul.mubr.f32.gmra.mrb[0].mxu0 %v7537
      %v7539 = vpop.f32.mrb[0].mxu0
      %v7540 = vadd.f32 %v7440, %v7539
      %v7541 = vpop.f32.mrb[0].mxu0
      %7542 = vmatprep.mubr.f32.mxu0 0.0
      %v7543 = vand.u32 %v7022, 4294901760
      %7544 = vmatmul.mubr.f32.gmra.mrb[0].mxu0 %v7543
      %v7545 = vpop.f32.mrb[0].mxu0
      %v7546 = vadd.f32 %v7448, %v7545
      %v7547 = vpop.f32.mrb[0].mxu0
      %7548 = vdwg.mxu0
      %7549 = vmatprep.subr.mxu0 0.0
      %v7550 = vand.u32 %v7025, 4294901760
      %7551 = vmatpush1.msra.mxu0 %v7550
      %7552 = vmatprep.subr.mxu0 0.0
      %7553 = vmatpush1.msra.mxu0 0.0
      %7554 = vmatprep.subr.mxu0 0.0
      %7555 = vmatpush1.msra.mxu0 0.0
      %7556 = vmatprep.subr.mxu0 0.0
      %7557 = vmatpush1.msra.mxu0 0.0
      %7558 = vmatprep.subr.mxu0 0.0
      %7559 = vmatpush1.msra.mxu0 0.0
      %7560 = vmatprep.subr.mxu0 0.0
      %7561 = vmatpush1.msra.mxu0 0.0
      %7562 = vmatprep.subr.mxu0 0.0
      %7563 = vmatpush1.msra.mxu0 0.0
      %7564 = vmatprep.subr.mxu0 0.0
      %7565 = vmatpush1.msra.mxu0 0.0
      %7566 = vmatprep.subr.mxu0 0.0
      %7567 = vmatpush1.msra.mxu0 0.0
      %7568 = vmatprep.subr.mxu0 0.0
      %7569 = vmatpush1.msra.mxu0 0.0
      %7570 = vmatprep.subr.mxu0 0.0
      %7571 = vmatpush1.msra.mxu0 0.0
      %7572 = vmatprep.subr.mxu0 0.0
      %7573 = vmatpush1.msra.mxu0 0.0
      %7574 = vmatprep.subr.mxu0 0.0
      %7575 = vmatpush1.msra.mxu0 0.0
      %7576 = vmatprep.subr.mxu0 0.0
      %7577 = vmatpush1.msra.mxu0 0.0
      %7578 = vmatprep.subr.mxu0 0.0
      %7579 = vmatpush1.msra.mxu0 0.0
      %7580 = vmatprep.subr.mxu0 0.0
      %7581 = vmatpush1.msra.mxu0 0.0
      %7582 = vmatprep.subr.mxu0 0.0
      %7583 = vmatpush1.msra.mxu0 0.0
      %7584 = vmatprep.subr.mxu0 0.0
      %7585 = vmatpush1.msra.mxu0 0.0
      %7586 = vmatprep.subr.mxu0 0.0
      %7587 = vmatpush1.msra.mxu0 0.0
      %7588 = vmatprep.subr.mxu0 0.0
      %7589 = vmatpush1.msra.mxu0 0.0
      %7590 = vmatprep.subr.mxu0 0.0
      %7591 = vmatpush1.msra.mxu0 0.0
      %7592 = vmatprep.subr.mxu0 0.0
      %7593 = vmatpush1.msra.mxu0 0.0
      %7594 = vmatprep.subr.mxu0 0.0
      %7595 = vmatpush1.msra.mxu0 0.0
      %7596 = vmatprep.subr.mxu0 0.0
      %7597 = vmatpush1.msra.mxu0 0.0
      %7598 = vmatprep.subr.mxu0 0.0
      %7599 = vmatpush1.msra.mxu0 0.0
      %7600 = vmatprep.subr.mxu0 0.0
      %7601 = vmatpush1.msra.mxu0 0.0
      %7602 = vmatprep.subr.mxu0 0.0
      %7603 = vmatpush1.msra.mxu0 0.0
      %7604 = vmatprep.subr.mxu0 0.0
      %7605 = vmatpush1.msra.mxu0 0.0
      %7606 = vmatprep.subr.mxu0 0.0
      %7607 = vmatpush1.msra.mxu0 0.0
      %7608 = vmatprep.subr.mxu0 0.0
      %7609 = vmatpush1.msra.mxu0 0.0
      %7610 = vmatprep.subr.mxu0 0.0
      %7611 = vmatpush1.msra.mxu0 0.0
      %7612 = vmatprep.subr.mxu0 0.0
      %7613 = vmatpush1.msra.mxu0 0.0
      %7614 = vmatprep.mubr.f32.mxu0 0.0
      %v7615 = vand.u32 %v7010, 4294901760
      %7616 = vmatmul.mubr.f32.gmra.mrb[0].mxu0 %v7615
      %v7617 = vpop.f32.mrb[0].mxu0
      %v7618 = vadd.f32 %v7522, %v7617
      %v7619 = vpop.f32.mrb[0].mxu0
      %7620 = vmatprep.mubr.f32.mxu0 0.0
      %v7621 = vand.u32 %v7013, 4294901760
      %7622 = vmatmul.mubr.f32.gmra.mrb[0].mxu0 %v7621
      %v7623 = vpop.f32.mrb[0].mxu0
      %v7624 = vadd.f32 %v7528, %v7623
      %v7625 = vpop.f32.mrb[0].mxu0
      %7626 = vmatprep.mubr.f32.mxu0 0.0
      %v7627 = vand.u32 %v7016, 4294901760
      %7628 = vmatmul.mubr.f32.gmra.mrb[0].mxu0 %v7627
      %v7629 = vpop.f32.mrb[0].mxu0
      %v7630 = vadd.f32 %v7534, %v7629
      %v7631 = vpop.f32.mrb[0].mxu0
      %7632 = vmatprep.mubr.f32.mxu0 0.0
      %v7633 = vand.u32 %v7019, 4294901760
      %7634 = vmatmul.mubr.f32.gmra.mrb[0].mxu0 %v7633
      %v7635 = vpop.f32.mrb[0].mxu0
      %v7636 = vadd.f32 %v7540, %v7635
      %v7637 = vpop.f32.mrb[0].mxu0
      %7638 = vmatprep.mubr.f32.mxu0 0.0
      %v7639 = vand.u32 %v7022, 4294901760
      %7640 = vmatmul.mubr.f32.gmra.mrb[0].mxu0 %v7639
      %v7641 = vpop.f32.mrb[0].mxu0
      %v7642 = vadd.f32 %v7546, %v7641
      %v7643 = vpop.f32.mrb[0].mxu0
      %7644 = vdwg.mxu0
      %v7645 = vadd.f32 %v5505, %v7618
      %v7646 = vadd.f32 %v5511, %v7624
      %v7647 = vadd.f32 %v5517, %v7630
      %v7648 = vadd.f32 %v5523, %v7636
      %v7649 = vadd.f32 %v5529, %v7642
      %7650 = vrot.lane.b32.xlu0 %v1275, 116
      %v7651 = vpop.permute.xlu0 %7650
      %7652 = vrot.lane.b32.xlu0 %v1281, 116
      %v7653 = vpop.permute.xlu0 %7652
      %7654 = vrot.lane.b32.xlu0 %v1287, 116
      %v7655 = vpop.permute.xlu0 %7654
      %7656 = vrot.lane.b32.xlu0 %v1293, 116
      %v7657 = vpop.permute.xlu0 %7656
      %7658 = vrot.lane.b32.xlu0 %v1299, 116
      %v7659 = vpop.permute.xlu0 %7658
      %7660 = vrot.lane.b32.xlu0 %v1275, 100
      %v7661 = vpop.permute.xlu0 %7660
      %7662 = vrot.lane.b32.xlu0 %v1281, 100
      %v7663 = vpop.permute.xlu0 %7662
      %7664 = vrot.lane.b32.xlu0 %v1287, 100
      %v7665 = vpop.permute.xlu0 %7664
      %7666 = vrot.lane.b32.xlu0 %v1293, 100
      %v7667 = vpop.permute.xlu0 %7666
      %7668 = vrot.lane.b32.xlu0 %v1299, 100
      %v7669 = vpop.permute.xlu0 %7668
      %v7670 = vsel %vm1322, %v7651, 0
      %v7672 = vsel %vm1322, %v7653, 0
      %v7674 = vsel %vm1322, %v7655, 0
      %v7676 = vsel %vm1322, %v7657, 0
      %v7678 = vsel %vm1322, %v7659, 0
      %v7680 = vsel %vm1322, %v7661, 0
      %v7682 = vsel %vm1322, %v7663, 0
      %v7684 = vsel %vm1322, %v7665, 0
      %v7686 = vsel %vm1322, %v7667, 0
      %v7688 = vsel %vm1322, %v7669, 0
      %7690 = vmatprep.subr.mxu0 0.0
      %v7691 = vand.u32 %v7680, 4294901760
      %7692 = vmatpush1.xpose.msra.mxu0 %v7691
      %7693 = vmatprep.subr.mxu0 0.0
      %v7694 = vand.u32 %v7682, 4294901760
      %7695 = vmatpush1.xpose.msra.mxu0 %v7694
      %7696 = vmatprep.subr.mxu0 0.0
      %v7697 = vand.u32 %v7684, 4294901760
      %7698 = vmatpush1.xpose.msra.mxu0 %v7697
      %7699 = vmatprep.subr.mxu0 0.0
      %v7700 = vand.u32 %v7686, 4294901760
      %7701 = vmatpush1.xpose.msra.mxu0 %v7700
      %7702 = vmatprep.subr.mxu0 0.0
      %v7703 = vand.u32 %v7688, 4294901760
      %7704 = vmatpush1.xpose.msra.mxu0 %v7703
      %7705 = vmatprep.subr.mxu0 0.0
      %7706 = vmatpush1.xpose.msra.mxu0 0.0
      %7707 = vmatprep.subr.mxu0 0.0
      %7708 = vmatpush1.xpose.msra.mxu0 0.0
      %7709 = vmatprep.subr.mxu0 0.0
      %7710 = vmatpush1.xpose.msra.mxu0 0.0
      %7711 = vmatprep.subr.mxu0 0.0
      %7712 = vmatpush1.xpose.msra.mxu0 0.0
      %7713 = vmatprep.subr.mxu0 0.0
      %7714 = vmatpush1.xpose.msra.mxu0 0.0
      %7715 = vmatprep.subr.mxu0 0.0
      %7716 = vmatpush1.xpose.msra.mxu0 0.0
      %7717 = vmatprep.subr.mxu0 0.0
      %7718 = vmatpush1.xpose.msra.mxu0 0.0
      %7719 = vmatprep.subr.mxu0 0.0
      %7720 = vmatpush1.xpose.msra.mxu0 0.0
      %7721 = vmatprep.subr.mxu0 0.0
      %7722 = vmatpush1.xpose.msra.mxu0 0.0
      %7723 = vmatprep.subr.mxu0 0.0
      %7724 = vmatpush1.xpose.msra.mxu0 0.0
      %7725 = vmatprep.subr.mxu0 0.0
      %7726 = vmatpush1.xpose.msra.mxu0 0.0
      %7727 = vmatprep.subr.mxu0 0.0
      %7728 = vmatpush1.xpose.msra.mxu0 0.0
      %7729 = vmatprep.subr.mxu0 0.0
      %7730 = vmatpush1.xpose.msra.mxu0 0.0
      %7731 = vmatprep.subr.mxu0 0.0
      %7732 = vmatpush1.xpose.msra.mxu0 0.0
      %7733 = vmatprep.subr.mxu0 0.0
      %7734 = vmatpush1.xpose.msra.mxu0 0.0
      %7735 = vmatprep.subr.mxu0 0.0
      %7736 = vmatpush1.xpose.msra.mxu0 0.0
      %7737 = vmatprep.subr.mxu0 0.0
      %7738 = vmatpush1.xpose.msra.mxu0 0.0
      %7739 = vmatprep.subr.mxu0 0.0
      %7740 = vmatpush1.xpose.msra.mxu0 0.0
      %7741 = vmatprep.subr.mxu0 0.0
      %7742 = vmatpush1.xpose.msra.mxu0 0.0
      %7743 = vmatprep.subr.mxu0 0.0
      %7744 = vmatpush1.xpose.msra.mxu0 0.0
      %7745 = vmatprep.subr.mxu0 0.0
      %7746 = vmatpush1.xpose.msra.mxu0 0.0
      %7747 = vmatprep.subr.mxu0 0.0
      %7748 = vmatpush1.xpose.msra.mxu0 0.0
      %7749 = vmatprep.subr.mxu0 0.0
      %7750 = vmatpush1.xpose.msra.mxu0 0.0
      %7751 = vmatprep.subr.mxu0 0.0
      %7752 = vmatpush1.xpose.msra.mxu0 0.0
      %7753 = vmatprep.subr.mxu0 0.0
      %7754 = vmatpush1.xpose.msra.mxu0 0.0
      %7755 = vmatprep.subr.mxu0 0.0
      %7756 = vmatpush1.xpose.msra.mxu0 0.0
      %7757 = vmatprep.subr.mxu0 0.0
      %7758 = vmatpush1.xpose.msra.mxu0 0.0
      %7759 = vmatprep.mubr.f32.mxu0 0.0
      %v7760 = vand.u32 %v7670, 4294901760
      %v7761 = vsub.f32 %v7670, %v7760
      %v7762 = vand.u32 %v7761, 4294901760
      %v7763 = vsub.f32 %v7761, %v7762
      %v7764 = vand.u32 %v7763, 4294901760
      %7765 = vmatmul.mubr.f32.gmra.mrb[0].mxu0 %v7764
      %v7766 = vpop.f32.mrb[0].mxu0
      %v7767 = vadd.f32 0.0, %v7766
      %v7768 = vpop.f32.mrb[0].mxu0
      %7769 = vmatprep.mubr.f32.mxu0 0.0
      %v7770 = vand.u32 %v7672, 4294901760
      %v7771 = vsub.f32 %v7672, %v7770
      %v7772 = vand.u32 %v7771, 4294901760
      %v7773 = vsub.f32 %v7771, %v7772
      %v7774 = vand.u32 %v7773, 4294901760
      %7775 = vmatmul.mubr.f32.gmra.mrb[0].mxu0 %v7774
      %v7776 = vpop.f32.mrb[0].mxu0
      %v7777 = vadd.f32 0.0, %v7776
      %v7778 = vpop.f32.mrb[0].mxu0
      %7779 = vmatprep.mubr.f32.mxu0 0.0
      %v7780 = vand.u32 %v7674, 4294901760
      %v7781 = vsub.f32 %v7674, %v7780
      %v7782 = vand.u32 %v7781, 4294901760
      %v7783 = vsub.f32 %v7781, %v7782
      %v7784 = vand.u32 %v7783, 4294901760
      %7785 = vmatmul.mubr.f32.gmra.mrb[0].mxu0 %v7784
      %v7786 = vpop.f32.mrb[0].mxu0
      %v7787 = vadd.f32 0.0, %v7786
      %v7788 = vpop.f32.mrb[0].mxu0
      %7789 = vmatprep.mubr.f32.mxu0 0.0
      %v7790 = vand.u32 %v7676, 4294901760
      %v7791 = vsub.f32 %v7676, %v7790
      %v7792 = vand.u32 %v7791, 4294901760
      %v7793 = vsub.f32 %v7791, %v7792
      %v7794 = vand.u32 %v7793, 4294901760
      %7795 = vmatmul.mubr.f32.gmra.mrb[0].mxu0 %v7794
      %v7796 = vpop.f32.mrb[0].mxu0
      %v7797 = vadd.f32 0.0, %v7796
      %v7798 = vpop.f32.mrb[0].mxu0
      %7799 = vmatprep.mubr.f32.mxu0 0.0
      %v7800 = vand.u32 %v7678, 4294901760
      %v7801 = vsub.f32 %v7678, %v7800
      %v7802 = vand.u32 %v7801, 4294901760
      %v7803 = vsub.f32 %v7801, %v7802
      %v7804 = vand.u32 %v7803, 4294901760
      %7805 = vmatmul.mubr.f32.gmra.mrb[0].mxu0 %v7804
      %v7806 = vpop.f32.mrb[0].mxu0
      %v7807 = vadd.f32 0.0, %v7806
      %v7808 = vpop.f32.mrb[0].mxu0
      %7809 = vdwg.mxu0
      %7810 = vmatprep.subr.mxu0 0.0
      %v7811 = vand.u32 %v7680, 4294901760
      %v7812 = vsub.f32 %v7680, %v7811
      %v7813 = vand.u32 %v7812, 4294901760
      %v7814 = vsub.f32 %v7812, %v7813
      %v7815 = vand.u32 %v7814, 4294901760
      %7816 = vmatpush1.xpose.msra.mxu0 %v7815
      %7817 = vmatprep.subr.mxu0 0.0
      %v7818 = vand.u32 %v7682, 4294901760
      %v7819 = vsub.f32 %v7682, %v7818
      %v7820 = vand.u32 %v7819, 4294901760
      %v7821 = vsub.f32 %v7819, %v7820
      %v7822 = vand.u32 %v7821, 4294901760
      %7823 = vmatpush1.xpose.msra.mxu0 %v7822
      %7824 = vmatprep.subr.mxu0 0.0
      %v7825 = vand.u32 %v7684, 4294901760
      %v7826 = vsub.f32 %v7684, %v7825
      %v7827 = vand.u32 %v7826, 4294901760
      %v7828 = vsub.f32 %v7826, %v7827
      %v7829 = vand.u32 %v7828, 4294901760
      %7830 = vmatpush1.xpose.msra.mxu0 %v7829
      %7831 = vmatprep.subr.mxu0 0.0
      %v7832 = vand.u32 %v7686, 4294901760
      %v7833 = vsub.f32 %v7686, %v7832
      %v7834 = vand.u32 %v7833, 4294901760
      %v7835 = vsub.f32 %v7833, %v7834
      %v7836 = vand.u32 %v7835, 4294901760
      %7837 = vmatpush1.xpose.msra.mxu0 %v7836
      %7838 = vmatprep.subr.mxu0 0.0
      %v7839 = vand.u32 %v7688, 4294901760
      %v7840 = vsub.f32 %v7688, %v7839
      %v7841 = vand.u32 %v7840, 4294901760
      %v7842 = vsub.f32 %v7840, %v7841
      %v7843 = vand.u32 %v7842, 4294901760
      %7844 = vmatpush1.xpose.msra.mxu0 %v7843
      %7845 = vmatprep.subr.mxu0 0.0
      %7846 = vmatpush1.xpose.msra.mxu0 0.0
      %7847 = vmatprep.subr.mxu0 0.0
      %7848 = vmatpush1.xpose.msra.mxu0 0.0
      %7849 = vmatprep.subr.mxu0 0.0
      %7850 = vmatpush1.xpose.msra.mxu0 0.0
      %7851 = vmatprep.subr.mxu0 0.0
      %7852 = vmatpush1.xpose.msra.mxu0 0.0
      %7853 = vmatprep.subr.mxu0 0.0
      %7854 = vmatpush1.xpose.msra.mxu0 0.0
      %7855 = vmatprep.subr.mxu0 0.0
      %7856 = vmatpush1.xpose.msra.mxu0 0.0
      %7857 = vmatprep.subr.mxu0 0.0
      %7858 = vmatpush1.xpose.msra.mxu0 0.0
      %7859 = vmatprep.subr.mxu0 0.0
      %7860 = vmatpush1.xpose.msra.mxu0 0.0
      %7861 = vmatprep.subr.mxu0 0.0
      %7862 = vmatpush1.xpose.msra.mxu0 0.0
      %7863 = vmatprep.subr.mxu0 0.0
      %7864 = vmatpush1.xpose.msra.mxu0 0.0
      %7865 = vmatprep.subr.mxu0 0.0
      %7866 = vmatpush1.xpose.msra.mxu0 0.0
      %7867 = vmatprep.subr.mxu0 0.0
      %7868 = vmatpush1.xpose.msra.mxu0 0.0
      %7869 = vmatprep.subr.mxu0 0.0
      %7870 = vmatpush1.xpose.msra.mxu0 0.0
      %7871 = vmatprep.subr.mxu0 0.0
      %7872 = vmatpush1.xpose.msra.mxu0 0.0
      %7873 = vmatprep.subr.mxu0 0.0
      %7874 = vmatpush1.xpose.msra.mxu0 0.0
      %7875 = vmatprep.subr.mxu0 0.0
      %7876 = vmatpush1.xpose.msra.mxu0 0.0
      %7877 = vmatprep.subr.mxu0 0.0
      %7878 = vmatpush1.xpose.msra.mxu0 0.0
      %7879 = vmatprep.subr.mxu0 0.0
      %7880 = vmatpush1.xpose.msra.mxu0 0.0
      %7881 = vmatprep.subr.mxu0 0.0
      %7882 = vmatpush1.xpose.msra.mxu0 0.0
      %7883 = vmatprep.subr.mxu0 0.0
      %7884 = vmatpush1.xpose.msra.mxu0 0.0
      %7885 = vmatprep.subr.mxu0 0.0
      %7886 = vmatpush1.xpose.msra.mxu0 0.0
      %7887 = vmatprep.subr.mxu0 0.0
      %7888 = vmatpush1.xpose.msra.mxu0 0.0
      %7889 = vmatprep.subr.mxu0 0.0
      %7890 = vmatpush1.xpose.msra.mxu0 0.0
      %7891 = vmatprep.subr.mxu0 0.0
      %7892 = vmatpush1.xpose.msra.mxu0 0.0
      %7893 = vmatprep.subr.mxu0 0.0
      %7894 = vmatpush1.xpose.msra.mxu0 0.0
      %7895 = vmatprep.subr.mxu0 0.0
      %7896 = vmatpush1.xpose.msra.mxu0 0.0
      %7897 = vmatprep.subr.mxu0 0.0
      %7898 = vmatpush1.xpose.msra.mxu0 0.0
      %7899 = vmatprep.mubr.f32.mxu0 0.0
      %v7900 = vand.u32 %v7670, 4294901760
      %7901 = vmatmul.mubr.f32.gmra.mrb[0].mxu0 %v7900
      %v7902 = vpop.f32.mrb[0].mxu0
      %v7903 = vadd.f32 %v7767, %v7902
      %v7904 = vpop.f32.mrb[0].mxu0
      %7905 = vmatprep.mubr.f32.mxu0 0.0
      %v7906 = vand.u32 %v7672, 4294901760
      %7907 = vmatmul.mubr.f32.gmra.mrb[0].mxu0 %v7906
      %v7908 = vpop.f32.mrb[0].mxu0
      %v7909 = vadd.f32 %v7777, %v7908
      %v7910 = vpop.f32.mrb[0].mxu0
      %7911 = vmatprep.mubr.f32.mxu0 0.0
      %v7912 = vand.u32 %v7674, 4294901760
      %7913 = vmatmul.mubr.f32.gmra.mrb[0].mxu0 %v7912
      %v7914 = vpop.f32.mrb[0].mxu0
      %v7915 = vadd.f32 %v7787, %v7914
      %v7916 = vpop.f32.mrb[0].mxu0
      %7917 = vmatprep.mubr.f32.mxu0 0.0
      %v7918 = vand.u32 %v7676, 4294901760
      %7919 = vmatmul.mubr.f32.gmra.mrb[0].mxu0 %v7918
      %v7920 = vpop.f32.mrb[0].mxu0
      %v7921 = vadd.f32 %v7797, %v7920
      %v7922 = vpop.f32.mrb[0].mxu0
      %7923 = vmatprep.mubr.f32.mxu0 0.0
      %v7924 = vand.u32 %v7678, 4294901760
      %7925 = vmatmul.mubr.f32.gmra.mrb[0].mxu0 %v7924
      %v7926 = vpop.f32.mrb[0].mxu0
      %v7927 = vadd.f32 %v7807, %v7926
      %v7928 = vpop.f32.mrb[0].mxu0
      %7929 = vdwg.mxu0
      %7930 = vmatprep.subr.mxu0 0.0
      %v7931 = vand.u32 %v7680, 4294901760
      %v7932 = vsub.f32 %v7680, %v7931
      %7933 = vmatpush1.xpose.msra.mxu0 %v7932
      %7934 = vmatprep.subr.mxu0 0.0
      %v7935 = vand.u32 %v7682, 4294901760
      %v7936 = vsub.f32 %v7682, %v7935
      %7937 = vmatpush1.xpose.msra.mxu0 %v7936
      %7938 = vmatprep.subr.mxu0 0.0
      %v7939 = vand.u32 %v7684, 4294901760
      %v7940 = vsub.f32 %v7684, %v7939
      %7941 = vmatpush1.xpose.msra.mxu0 %v7940
      %7942 = vmatprep.subr.mxu0 0.0
      %v7943 = vand.u32 %v7686, 4294901760
      %v7944 = vsub.f32 %v7686, %v7943
      %7945 = vmatpush1.xpose.msra.mxu0 %v7944
      %7946 = vmatprep.subr.mxu0 0.0
      %v7947 = vand.u32 %v7688, 4294901760
      %v7948 = vsub.f32 %v7688, %v7947
      %7949 = vmatpush1.xpose.msra.mxu0 %v7948
      %7950 = vmatprep.subr.mxu0 0.0
      %7951 = vmatpush1.xpose.msra.mxu0 0.0
      %7952 = vmatprep.subr.mxu0 0.0
      %7953 = vmatpush1.xpose.msra.mxu0 0.0
      %7954 = vmatprep.subr.mxu0 0.0
      %7955 = vmatpush1.xpose.msra.mxu0 0.0
      %7956 = vmatprep.subr.mxu0 0.0
      %7957 = vmatpush1.xpose.msra.mxu0 0.0
      %7958 = vmatprep.subr.mxu0 0.0
      %7959 = vmatpush1.xpose.msra.mxu0 0.0
      %7960 = vmatprep.subr.mxu0 0.0
      %7961 = vmatpush1.xpose.msra.mxu0 0.0
      %7962 = vmatprep.subr.mxu0 0.0
      %7963 = vmatpush1.xpose.msra.mxu0 0.0
      %7964 = vmatprep.subr.mxu0 0.0
      %7965 = vmatpush1.xpose.msra.mxu0 0.0
      %7966 = vmatprep.subr.mxu0 0.0
      %7967 = vmatpush1.xpose.msra.mxu0 0.0
      %7968 = vmatprep.subr.mxu0 0.0
      %7969 = vmatpush1.xpose.msra.mxu0 0.0
      %7970 = vmatprep.subr.mxu0 0.0
      %7971 = vmatpush1.xpose.msra.mxu0 0.0
      %7972 = vmatprep.subr.mxu0 0.0
      %7973 = vmatpush1.xpose.msra.mxu0 0.0
      %7974 = vmatprep.subr.mxu0 0.0
      %7975 = vmatpush1.xpose.msra.mxu0 0.0
      %7976 = vmatprep.subr.mxu0 0.0
      %7977 = vmatpush1.xpose.msra.mxu0 0.0
      %7978 = vmatprep.subr.mxu0 0.0
      %7979 = vmatpush1.xpose.msra.mxu0 0.0
      %7980 = vmatprep.subr.mxu0 0.0
      %7981 = vmatpush1.xpose.msra.mxu0 0.0
      %7982 = vmatprep.subr.mxu0 0.0
      %7983 = vmatpush1.xpose.msra.mxu0 0.0
      %7984 = vmatprep.subr.mxu0 0.0
      %7985 = vmatpush1.xpose.msra.mxu0 0.0
      %7986 = vmatprep.subr.mxu0 0.0
      %7987 = vmatpush1.xpose.msra.mxu0 0.0
      %7988 = vmatprep.subr.mxu0 0.0
      %7989 = vmatpush1.xpose.msra.mxu0 0.0
      %7990 = vmatprep.subr.mxu0 0.0
      %7991 = vmatpush1.xpose.msra.mxu0 0.0
      %7992 = vmatprep.subr.mxu0 0.0
      %7993 = vmatpush1.xpose.msra.mxu0 0.0
      %7994 = vmatprep.subr.mxu0 0.0
      %7995 = vmatpush1.xpose.msra.mxu0 0.0
      %7996 = vmatprep.subr.mxu0 0.0
      %7997 = vmatpush1.xpose.msra.mxu0 0.0
      %7998 = vmatprep.subr.mxu0 0.0
      %7999 = vmatpush1.xpose.msra.mxu0 0.0
      %8000 = vmatprep.subr.mxu0 0.0
      %8001 = vmatpush1.xpose.msra.mxu0 0.0
      %8002 = vmatprep.subr.mxu0 0.0
      %8003 = vmatpush1.xpose.msra.mxu0 0.0
      %8004 = vmatprep.mubr.f32.mxu0 0.0
      %v8005 = vand.u32 %v7670, 4294901760
      %v8006 = vsub.f32 %v7670, %v8005
      %8007 = vmatmul.mubr.f32.gmra.mrb[0].mxu0 %v8006
      %v8008 = vpop.f32.mrb[0].mxu0
      %v8009 = vadd.f32 %v7903, %v8008
      %v8010 = vpop.f32.mrb[0].mxu0
      %8011 = vmatprep.mubr.f32.mxu0 0.0
      %v8012 = vand.u32 %v7672, 4294901760
      %v8013 = vsub.f32 %v7672, %v8012
      %8014 = vmatmul.mubr.f32.gmra.mrb[0].mxu0 %v8013
      %v8015 = vpop.f32.mrb[0].mxu0
      %v8016 = vadd.f32 %v7909, %v8015
      %v8017 = vpop.f32.mrb[0].mxu0
      %8018 = vmatprep.mubr.f32.mxu0 0.0
      %v8019 = vand.u32 %v7674, 4294901760
      %v8020 = vsub.f32 %v7674, %v8019
      %8021 = vmatmul.mubr.f32.gmra.mrb[0].mxu0 %v8020
      %v8022 = vpop.f32.mrb[0].mxu0
      %v8023 = vadd.f32 %v7915, %v8022
      %v8024 = vpop.f32.mrb[0].mxu0
      %8025 = vmatprep.mubr.f32.mxu0 0.0
      %v8026 = vand.u32 %v7676, 4294901760
      %v8027 = vsub.f32 %v7676, %v8026
      %8028 = vmatmul.mubr.f32.gmra.mrb[0].mxu0 %v8027
      %v8029 = vpop.f32.mrb[0].mxu0
      %v8030 = vadd.f32 %v7921, %v8029
      %v8031 = vpop.f32.mrb[0].mxu0
      %8032 = vmatprep.mubr.f32.mxu0 0.0
      %v8033 = vand.u32 %v7678, 4294901760
      %v8034 = vsub.f32 %v7678, %v8033
      %8035 = vmatmul.mubr.f32.gmra.mrb[0].mxu0 %v8034
      %v8036 = vpop.f32.mrb[0].mxu0
      %v8037 = vadd.f32 %v7927, %v8036
      %v8038 = vpop.f32.mrb[0].mxu0
      %8039 = vdwg.mxu0
      %8040 = vmatprep.subr.mxu0 0.0
      %v8041 = vand.u32 %v7680, 4294901760
      %8042 = vmatpush1.xpose.msra.mxu0 %v8041
      %8043 = vmatprep.subr.mxu0 0.0
      %v8044 = vand.u32 %v7682, 4294901760
      %8045 = vmatpush1.xpose.msra.mxu0 %v8044
      %8046 = vmatprep.subr.mxu0 0.0
      %v8047 = vand.u32 %v7684, 4294901760
      %8048 = vmatpush1.xpose.msra.mxu0 %v8047
      %8049 = vmatprep.subr.mxu0 0.0
      %v8050 = vand.u32 %v7686, 4294901760
      %8051 = vmatpush1.xpose.msra.mxu0 %v8050
      %8052 = vmatprep.subr.mxu0 0.0
      %v8053 = vand.u32 %v7688, 4294901760
      %8054 = vmatpush1.xpose.msra.mxu0 %v8053
      %8055 = vmatprep.subr.mxu0 0.0
      %8056 = vmatpush1.xpose.msra.mxu0 0.0
      %8057 = vmatprep.subr.mxu0 0.0
      %8058 = vmatpush1.xpose.msra.mxu0 0.0
      %8059 = vmatprep.subr.mxu0 0.0
      %8060 = vmatpush1.xpose.msra.mxu0 0.0
      %8061 = vmatprep.subr.mxu0 0.0
      %8062 = vmatpush1.xpose.msra.mxu0 0.0
      %8063 = vmatprep.subr.mxu0 0.0
      %8064 = vmatpush1.xpose.msra.mxu0 0.0
      %8065 = vmatprep.subr.mxu0 0.0
      %8066 = vmatpush1.xpose.msra.mxu0 0.0
      %8067 = vmatprep.subr.mxu0 0.0
      %8068 = vmatpush1.xpose.msra.mxu0 0.0
      %8069 = vmatprep.subr.mxu0 0.0
      %8070 = vmatpush1.xpose.msra.mxu0 0.0
      %8071 = vmatprep.subr.mxu0 0.0
      %8072 = vmatpush1.xpose.msra.mxu0 0.0
      %8073 = vmatprep.subr.mxu0 0.0
      %8074 = vmatpush1.xpose.msra.mxu0 0.0
      %8075 = vmatprep.subr.mxu0 0.0
      %8076 = vmatpush1.xpose.msra.mxu0 0.0
      %8077 = vmatprep.subr.mxu0 0.0
      %8078 = vmatpush1.xpose.msra.mxu0 0.0
      %8079 = vmatprep.subr.mxu0 0.0
      %8080 = vmatpush1.xpose.msra.mxu0 0.0
      %8081 = vmatprep.subr.mxu0 0.0
      %8082 = vmatpush1.xpose.msra.mxu0 0.0
      %8083 = vmatprep.subr.mxu0 0.0
      %8084 = vmatpush1.xpose.msra.mxu0 0.0
      %8085 = vmatprep.subr.mxu0 0.0
      %8086 = vmatpush1.xpose.msra.mxu0 0.0
      %8087 = vmatprep.subr.mxu0 0.0
      %8088 = vmatpush1.xpose.msra.mxu0 0.0
      %8089 = vmatprep.subr.mxu0 0.0
      %8090 = vmatpush1.xpose.msra.mxu0 0.0
      %8091 = vmatprep.subr.mxu0 0.0
      %8092 = vmatpush1.xpose.msra.mxu0 0.0
      %8093 = vmatprep.subr.mxu0 0.0
      %8094 = vmatpush1.xpose.msra.mxu0 0.0
      %8095 = vmatprep.subr.mxu0 0.0
      %8096 = vmatpush1.xpose.msra.mxu0 0.0
      %8097 = vmatprep.subr.mxu0 0.0
      %8098 = vmatpush1.xpose.msra.mxu0 0.0
      %8099 = vmatprep.subr.mxu0 0.0
      %8100 = vmatpush1.xpose.msra.mxu0 0.0
      %8101 = vmatprep.subr.mxu0 0.0
      %8102 = vmatpush1.xpose.msra.mxu0 0.0
      %8103 = vmatprep.subr.mxu0 0.0
      %8104 = vmatpush1.xpose.msra.mxu0 0.0
      %8105 = vmatprep.subr.mxu0 0.0
      %8106 = vmatpush1.xpose.msra.mxu0 0.0
      %8107 = vmatprep.subr.mxu0 0.0
      %8108 = vmatpush1.xpose.msra.mxu0 0.0
      %8109 = vmatprep.mubr.f32.mxu0 0.0
      %v8110 = vand.u32 %v7670, 4294901760
      %v8111 = vsub.f32 %v7670, %v8110
      %v8112 = vand.u32 %v8111, 4294901760
      %8113 = vmatmul.mubr.f32.gmra.mrb[0].mxu0 %v8112
      %v8114 = vpop.f32.mrb[0].mxu0
      %v8115 = vadd.f32 %v8009, %v8114
      %v8116 = vpop.f32.mrb[0].mxu0
      %8117 = vmatprep.mubr.f32.mxu0 0.0
      %v8118 = vand.u32 %v7672, 4294901760
      %v8119 = vsub.f32 %v7672, %v8118
      %v8120 = vand.u32 %v8119, 4294901760
      %8121 = vmatmul.mubr.f32.gmra.mrb[0].mxu0 %v8120
      %v8122 = vpop.f32.mrb[0].mxu0
      %v8123 = vadd.f32 %v8016, %v8122
      %v8124 = vpop.f32.mrb[0].mxu0
      %8125 = vmatprep.mubr.f32.mxu0 0.0
      %v8126 = vand.u32 %v7674, 4294901760
      %v8127 = vsub.f32 %v7674, %v8126
      %v8128 = vand.u32 %v8127, 4294901760
      %8129 = vmatmul.mubr.f32.gmra.mrb[0].mxu0 %v8128
      %v8130 = vpop.f32.mrb[0].mxu0
      %v8131 = vadd.f32 %v8023, %v8130
      %v8132 = vpop.f32.mrb[0].mxu0
      %8133 = vmatprep.mubr.f32.mxu0 0.0
      %v8134 = vand.u32 %v7676, 4294901760
      %v8135 = vsub.f32 %v7676, %v8134
      %v8136 = vand.u32 %v8135, 4294901760
      %8137 = vmatmul.mubr.f32.gmra.mrb[0].mxu0 %v8136
      %v8138 = vpop.f32.mrb[0].mxu0
      %v8139 = vadd.f32 %v8030, %v8138
      %v8140 = vpop.f32.mrb[0].mxu0
      %8141 = vmatprep.mubr.f32.mxu0 0.0
      %v8142 = vand.u32 %v7678, 4294901760
      %v8143 = vsub.f32 %v7678, %v8142
      %v8144 = vand.u32 %v8143, 4294901760
      %8145 = vmatmul.mubr.f32.gmra.mrb[0].mxu0 %v8144
      %v8146 = vpop.f32.mrb[0].mxu0
      %v8147 = vadd.f32 %v8037, %v8146
      %v8148 = vpop.f32.mrb[0].mxu0
      %8149 = vdwg.mxu0
      %8150 = vmatprep.subr.mxu0 0.0
      %v8151 = vand.u32 %v7680, 4294901760
      %v8152 = vsub.f32 %v7680, %v8151
      %v8153 = vand.u32 %v8152, 4294901760
      %8154 = vmatpush1.xpose.msra.mxu0 %v8153
      %8155 = vmatprep.subr.mxu0 0.0
      %v8156 = vand.u32 %v7682, 4294901760
      %v8157 = vsub.f32 %v7682, %v8156
      %v8158 = vand.u32 %v8157, 4294901760
      %8159 = vmatpush1.xpose.msra.mxu0 %v8158
      %8160 = vmatprep.subr.mxu0 0.0
      %v8161 = vand.u32 %v7684, 4294901760
      %v8162 = vsub.f32 %v7684, %v8161
      %v8163 = vand.u32 %v8162, 4294901760
      %8164 = vmatpush1.xpose.msra.mxu0 %v8163
      %8165 = vmatprep.subr.mxu0 0.0
      %v8166 = vand.u32 %v7686, 4294901760
      %v8167 = vsub.f32 %v7686, %v8166
      %v8168 = vand.u32 %v8167, 4294901760
      %8169 = vmatpush1.xpose.msra.mxu0 %v8168
      %8170 = vmatprep.subr.mxu0 0.0
      %v8171 = vand.u32 %v7688, 4294901760
      %v8172 = vsub.f32 %v7688, %v8171
      %v8173 = vand.u32 %v8172, 4294901760
      %8174 = vmatpush1.xpose.msra.mxu0 %v8173
      %8175 = vmatprep.subr.mxu0 0.0
      %8176 = vmatpush1.xpose.msra.mxu0 0.0
      %8177 = vmatprep.subr.mxu0 0.0
      %8178 = vmatpush1.xpose.msra.mxu0 0.0
      %8179 = vmatprep.subr.mxu0 0.0
      %8180 = vmatpush1.xpose.msra.mxu0 0.0
      %8181 = vmatprep.subr.mxu0 0.0
      %8182 = vmatpush1.xpose.msra.mxu0 0.0
      %8183 = vmatprep.subr.mxu0 0.0
      %8184 = vmatpush1.xpose.msra.mxu0 0.0
      %8185 = vmatprep.subr.mxu0 0.0
      %8186 = vmatpush1.xpose.msra.mxu0 0.0
      %8187 = vmatprep.subr.mxu0 0.0
      %8188 = vmatpush1.xpose.msra.mxu0 0.0
      %8189 = vmatprep.subr.mxu0 0.0
      %8190 = vmatpush1.xpose.msra.mxu0 0.0
      %8191 = vmatprep.subr.mxu0 0.0
      %8192 = vmatpush1.xpose.msra.mxu0 0.0
      %8193 = vmatprep.subr.mxu0 0.0
      %8194 = vmatpush1.xpose.msra.mxu0 0.0
      %8195 = vmatprep.subr.mxu0 0.0
      %8196 = vmatpush1.xpose.msra.mxu0 0.0
      %8197 = vmatprep.subr.mxu0 0.0
      %8198 = vmatpush1.xpose.msra.mxu0 0.0
      %8199 = vmatprep.subr.mxu0 0.0
      %8200 = vmatpush1.xpose.msra.mxu0 0.0
      %8201 = vmatprep.subr.mxu0 0.0
      %8202 = vmatpush1.xpose.msra.mxu0 0.0
      %8203 = vmatprep.subr.mxu0 0.0
      %8204 = vmatpush1.xpose.msra.mxu0 0.0
      %8205 = vmatprep.subr.mxu0 0.0
      %8206 = vmatpush1.xpose.msra.mxu0 0.0
      %8207 = vmatprep.subr.mxu0 0.0
      %8208 = vmatpush1.xpose.msra.mxu0 0.0
      %8209 = vmatprep.subr.mxu0 0.0
      %8210 = vmatpush1.xpose.msra.mxu0 0.0
      %8211 = vmatprep.subr.mxu0 0.0
      %8212 = vmatpush1.xpose.msra.mxu0 0.0
      %8213 = vmatprep.subr.mxu0 0.0
      %8214 = vmatpush1.xpose.msra.mxu0 0.0
      %8215 = vmatprep.subr.mxu0 0.0
      %8216 = vmatpush1.xpose.msra.mxu0 0.0
      %8217 = vmatprep.subr.mxu0 0.0
      %8218 = vmatpush1.xpose.msra.mxu0 0.0
      %8219 = vmatprep.subr.mxu0 0.0
      %8220 = vmatpush1.xpose.msra.mxu0 0.0
      %8221 = vmatprep.subr.mxu0 0.0
      %8222 = vmatpush1.xpose.msra.mxu0 0.0
      %8223 = vmatprep.subr.mxu0 0.0
      %8224 = vmatpush1.xpose.msra.mxu0 0.0
      %8225 = vmatprep.subr.mxu0 0.0
      %8226 = vmatpush1.xpose.msra.mxu0 0.0
      %8227 = vmatprep.subr.mxu0 0.0
      %8228 = vmatpush1.xpose.msra.mxu0 0.0
      %8229 = vmatprep.mubr.f32.mxu0 0.0
      %v8230 = vand.u32 %v7670, 4294901760
      %8231 = vmatmul.mubr.f32.gmra.mrb[0].mxu0 %v8230
      %v8232 = vpop.f32.mrb[0].mxu0
      %v8233 = vadd.f32 %v8115, %v8232
      %v8234 = vpop.f32.mrb[0].mxu0
      %8235 = vmatprep.mubr.f32.mxu0 0.0
      %v8236 = vand.u32 %v7672, 4294901760
      %8237 = vmatmul.mubr.f32.gmra.mrb[0].mxu0 %v8236
      %v8238 = vpop.f32.mrb[0].mxu0
      %v8239 = vadd.f32 %v8123, %v8238
      %v8240 = vpop.f32.mrb[0].mxu0
      %8241 = vmatprep.mubr.f32.mxu0 0.0
      %v8242 = vand.u32 %v7674, 4294901760
      %8243 = vmatmul.mubr.f32.gmra.mrb[0].mxu0 %v8242
      %v8244 = vpop.f32.mrb[0].mxu0
      %v8245 = vadd.f32 %v8131, %v8244
      %v8246 = vpop.f32.mrb[0].mxu0
      %8247 = vmatprep.mubr.f32.mxu0 0.0
      %v8248 = vand.u32 %v7676, 4294901760
      %8249 = vmatmul.mubr.f32.gmra.mrb[0].mxu0 %v8248
      %v8250 = vpop.f32.mrb[0].mxu0
      %v8251 = vadd.f32 %v8139, %v8250
      %v8252 = vpop.f32.mrb[0].mxu0
      %8253 = vmatprep.mubr.f32.mxu0 0.0
      %v8254 = vand.u32 %v7678, 4294901760
      %8255 = vmatmul.mubr.f32.gmra.mrb[0].mxu0 %v8254
      %v8256 = vpop.f32.mrb[0].mxu0
      %v8257 = vadd.f32 %v8147, %v8256
      %v8258 = vpop.f32.mrb[0].mxu0
      %8259 = vdwg.mxu0
      %8260 = vmatprep.subr.mxu0 0.0
      %v8261 = vand.u32 %v7680, 4294901760
      %8262 = vmatpush1.xpose.msra.mxu0 %v8261
      %8263 = vmatprep.subr.mxu0 0.0
      %v8264 = vand.u32 %v7682, 4294901760
      %8265 = vmatpush1.xpose.msra.mxu0 %v8264
      %8266 = vmatprep.subr.mxu0 0.0
      %v8267 = vand.u32 %v7684, 4294901760
      %8268 = vmatpush1.xpose.msra.mxu0 %v8267
      %8269 = vmatprep.subr.mxu0 0.0
      %v8270 = vand.u32 %v7686, 4294901760
      %8271 = vmatpush1.xpose.msra.mxu0 %v8270
      %8272 = vmatprep.subr.mxu0 0.0
      %v8273 = vand.u32 %v7688, 4294901760
      %8274 = vmatpush1.xpose.msra.mxu0 %v8273
      %8275 = vmatprep.subr.mxu0 0.0
      %8276 = vmatpush1.xpose.msra.mxu0 0.0
      %8277 = vmatprep.subr.mxu0 0.0
      %8278 = vmatpush1.xpose.msra.mxu0 0.0
      %8279 = vmatprep.subr.mxu0 0.0
      %8280 = vmatpush1.xpose.msra.mxu0 0.0
      %8281 = vmatprep.subr.mxu0 0.0
      %8282 = vmatpush1.xpose.msra.mxu0 0.0
      %8283 = vmatprep.subr.mxu0 0.0
      %8284 = vmatpush1.xpose.msra.mxu0 0.0
      %8285 = vmatprep.subr.mxu0 0.0
      %8286 = vmatpush1.xpose.msra.mxu0 0.0
      %8287 = vmatprep.subr.mxu0 0.0
      %8288 = vmatpush1.xpose.msra.mxu0 0.0
      %8289 = vmatprep.subr.mxu0 0.0
      %8290 = vmatpush1.xpose.msra.mxu0 0.0
      %8291 = vmatprep.subr.mxu0 0.0
      %8292 = vmatpush1.xpose.msra.mxu0 0.0
      %8293 = vmatprep.subr.mxu0 0.0
      %8294 = vmatpush1.xpose.msra.mxu0 0.0
      %8295 = vmatprep.subr.mxu0 0.0
      %8296 = vmatpush1.xpose.msra.mxu0 0.0
      %8297 = vmatprep.subr.mxu0 0.0
      %8298 = vmatpush1.xpose.msra.mxu0 0.0
      %8299 = vmatprep.subr.mxu0 0.0
      %8300 = vmatpush1.xpose.msra.mxu0 0.0
      %8301 = vmatprep.subr.mxu0 0.0
      %8302 = vmatpush1.xpose.msra.mxu0 0.0
      %8303 = vmatprep.subr.mxu0 0.0
      %8304 = vmatpush1.xpose.msra.mxu0 0.0
      %8305 = vmatprep.subr.mxu0 0.0
      %8306 = vmatpush1.xpose.msra.mxu0 0.0
      %8307 = vmatprep.subr.mxu0 0.0
      %8308 = vmatpush1.xpose.msra.mxu0 0.0
      %8309 = vmatprep.subr.mxu0 0.0
      %8310 = vmatpush1.xpose.msra.mxu0 0.0
      %8311 = vmatprep.subr.mxu0 0.0
      %8312 = vmatpush1.xpose.msra.mxu0 0.0
      %8313 = vmatprep.subr.mxu0 0.0
      %8314 = vmatpush1.xpose.msra.mxu0 0.0
      %8315 = vmatprep.subr.mxu0 0.0
      %8316 = vmatpush1.xpose.msra.mxu0 0.0
      %8317 = vmatprep.subr.mxu0 0.0
      %8318 = vmatpush1.xpose.msra.mxu0 0.0
      %8319 = vmatprep.subr.mxu0 0.0
      %8320 = vmatpush1.xpose.msra.mxu0 0.0
      %8321 = vmatprep.subr.mxu0 0.0
      %8322 = vmatpush1.xpose.msra.mxu0 0.0
      %8323 = vmatprep.subr.mxu0 0.0
      %8324 = vmatpush1.xpose.msra.mxu0 0.0
      %8325 = vmatprep.subr.mxu0 0.0
      %8326 = vmatpush1.xpose.msra.mxu0 0.0
      %8327 = vmatprep.subr.mxu0 0.0
      %8328 = vmatpush1.xpose.msra.mxu0 0.0
      %8329 = vmatprep.mubr.f32.mxu0 0.0
      %v8330 = vand.u32 %v7670, 4294901760
      %8331 = vmatmul.mubr.f32.gmra.mrb[0].mxu0 %v8330
      %v8332 = vpop.f32.mrb[0].mxu0
      %v8333 = vadd.f32 %v8233, %v8332
      %v8334 = vpop.f32.mrb[0].mxu0
      %8335 = vmatprep.mubr.f32.mxu0 0.0
      %v8336 = vand.u32 %v7672, 4294901760
      %8337 = vmatmul.mubr.f32.gmra.mrb[0].mxu0 %v8336
      %v8338 = vpop.f32.mrb[0].mxu0
      %v8339 = vadd.f32 %v8239, %v8338
      %v8340 = vpop.f32.mrb[0].mxu0
      %8341 = vmatprep.mubr.f32.mxu0 0.0
      %v8342 = vand.u32 %v7674, 4294901760
      %8343 = vmatmul.mubr.f32.gmra.mrb[0].mxu0 %v8342
      %v8344 = vpop.f32.mrb[0].mxu0
      %v8345 = vadd.f32 %v8245, %v8344
      %v8346 = vpop.f32.mrb[0].mxu0
      %8347 = vmatprep.mubr.f32.mxu0 0.0
      %v8348 = vand.u32 %v7676, 4294901760
      %8349 = vmatmul.mubr.f32.gmra.mrb[0].mxu0 %v8348
      %v8350 = vpop.f32.mrb[0].mxu0
      %v8351 = vadd.f32 %v8251, %v8350
      %v8352 = vpop.f32.mrb[0].mxu0
      %8353 = vmatprep.mubr.f32.mxu0 0.0
      %v8354 = vand.u32 %v7678, 4294901760
      %8355 = vmatmul.mubr.f32.gmra.mrb[0].mxu0 %v8354
      %v8356 = vpop.f32.mrb[0].mxu0
      %v8357 = vadd.f32 %v8257, %v8356
      %v8358 = vpop.f32.mrb[0].mxu0
      %8359 = vdwg.mxu0
      %v8360 = vmul.f32 %v8333, 0.5
      %v8361 = vmul.f32 %v8339, 0.5
      %v8362 = vmul.f32 %v8345, 0.5
      %v8363 = vmul.f32 %v8351, 0.5
      %v8364 = vmul.f32 %v8357, 0.5
      %v8365 = vadd.f32 %v8360, %v1302
      %v8366 = vadd.f32 %v8361, %v1303
      %v8367 = vadd.f32 %v8362, %v1304
      %v8368 = vadd.f32 %v8363, %v1305
      %v8369 = vadd.f32 %v8364, %v1306
      %v8370 = vsel %vm2023, %v8365, -inf
      %8371 = vmax.xlane.f32.xlu0 %v8370
      %v8372 = vpop.xlane.xlu0 %8371
      %v8373 = vsel %vm2023, %v8366, -inf
      %8374 = vmax.xlane.f32.xlu0 %v8373
      %v8375 = vpop.xlane.xlu0 %8374
      %v8376 = vsel %vm2023, %v8367, -inf
      %8377 = vmax.xlane.f32.xlu0 %v8376
      %v8378 = vpop.xlane.xlu0 %8377
      %v8379 = vsel %vm2023, %v8368, -inf
      %8380 = vmax.xlane.f32.xlu0 %v8379
      %v8381 = vpop.xlane.xlu0 %8380
      %v8382 = vsel %vm2036, %v8369, -inf
      %8383 = vmax.xlane.f32.xlu0 %v8382
      %v8384 = vpop.xlane.xlu0 %8383
      %v8385 = vsub.f32 %v8365, %v8372
      %v8386 = vsub.f32 %v8366, %v8375
      %v8387 = vsub.f32 %v8367, %v8378
      %v8388 = vsub.f32 %v8368, %v8381
      %v8389 = vsub.f32 %v8369, %v8384
      %v8390 = vmul.f32 %v8385, 1.442695
      %v8391 = vpow.pop %v8390
      %v8392 = vmul.f32 %v8386, 1.442695
      %v8393 = vpow.pop %v8392
      %v8394 = vmul.f32 %v8387, 1.442695
      %v8395 = vpow.pop %v8394
      %v8396 = vmul.f32 %v8388, 1.442695
      %v8397 = vpow.pop %v8396
      %v8398 = vmul.f32 %v8389, 1.442695
      %v8399 = vpow.pop %v8398
      %v8400 = vsel %vm2023, %v8391, 0.0
      %8401 = vadd.xlane.f32.xlu0 %v8400
      %v8402 = vpop.xlane.xlu0 %8401
      %v8403 = vsel %vm2023, %v8393, 0.0
      %8404 = vadd.xlane.f32.xlu0 %v8403
      %v8405 = vpop.xlane.xlu0 %8404
      %v8406 = vsel %vm2023, %v8395, 0.0
      %8407 = vadd.xlane.f32.xlu0 %v8406
      %v8408 = vpop.xlane.xlu0 %8407
      %v8409 = vsel %vm2023, %v8397, 0.0
      %8410 = vadd.xlane.f32.xlu0 %v8409
      %v8411 = vpop.xlane.xlu0 %8410
      %v8412 = vsel %vm2036, %v8399, 0.0
      %8413 = vadd.xlane.f32.xlu0 %v8412
      %v8414 = vpop.xlane.xlu0 %8413
      %v8415 = vrcp.pop %v8402
      %v8416 = vmul.f32 %v8391, %v8415
      %v8417 = vrcp.pop %v8405
      %v8418 = vmul.f32 %v8393, %v8417
      %v8419 = vrcp.pop %v8408
      %v8420 = vmul.f32 %v8395, %v8419
      %v8421 = vrcp.pop %v8411
      %v8422 = vmul.f32 %v8397, %v8421
      %v8423 = vrcp.pop %v8414
      %v8424 = vmul.f32 %v8399, %v8423
      %8425 = vrot.lane.b32.xlu0 %v1275, 84
      %v8426 = vpop.permute.xlu0 %8425
      %8427 = vrot.lane.b32.xlu0 %v1281, 84
      %v8428 = vpop.permute.xlu0 %8427
      %8429 = vrot.lane.b32.xlu0 %v1287, 84
      %v8430 = vpop.permute.xlu0 %8429
      %8431 = vrot.lane.b32.xlu0 %v1293, 84
      %v8432 = vpop.permute.xlu0 %8431
      %8433 = vrot.lane.b32.xlu0 %v1299, 84
      %v8434 = vpop.permute.xlu0 %8433
      %v8440 = vsel %vm2023, %v8416, 0
      %v8443 = vsel %vm2023, %v8418, 0
      %v8446 = vsel %vm2023, %v8420, 0
      %v8449 = vsel %vm2023, %v8422, 0
      %v8452 = vsel %vm2023, %v8424, 0
      %v8454 = vsel %vm2109, %v8434, 0
      %8456 = vmatprep.subr.mxu0 0.0
      %v8457 = vand.u32 %v8426, 4294901760
      %8458 = vmatpush1.msra.mxu0 %v8457
      %8459 = vmatprep.subr.mxu0 0.0
      %v8460 = vand.u32 %v8428, 4294901760
      %8461 = vmatpush1.msra.mxu0 %v8460
      %8462 = vmatprep.subr.mxu0 0.0
      %v8463 = vand.u32 %v8430, 4294901760
      %8464 = vmatpush1.msra.mxu0 %v8463
      %8465 = vmatprep.subr.mxu0 0.0
      %v8466 = vand.u32 %v8432, 4294901760
      %8467 = vmatpush1.msra.mxu0 %v8466
      %8468 = vmatprep.subr.mxu0 0.0
      %v8469 = vand.u32 %v8454, 4294901760
      %8470 = vmatpush1.msra.mxu0 %v8469
      %8471 = vmatprep.subr.mxu0 0.0
      %8472 = vmatpush1.msra.mxu0 0.0
      %8473 = vmatprep.subr.mxu0 0.0
      %8474 = vmatpush1.msra.mxu0 0.0
      %8475 = vmatprep.subr.mxu0 0.0
      %8476 = vmatpush1.msra.mxu0 0.0
      %8477 = vmatprep.subr.mxu0 0.0
      %8478 = vmatpush1.msra.mxu0 0.0
      %8479 = vmatprep.subr.mxu0 0.0
      %8480 = vmatpush1.msra.mxu0 0.0
      %8481 = vmatprep.subr.mxu0 0.0
      %8482 = vmatpush1.msra.mxu0 0.0
      %8483 = vmatprep.subr.mxu0 0.0
      %8484 = vmatpush1.msra.mxu0 0.0
      %8485 = vmatprep.subr.mxu0 0.0
      %8486 = vmatpush1.msra.mxu0 0.0
      %8487 = vmatprep.subr.mxu0 0.0
      %8488 = vmatpush1.msra.mxu0 0.0
      %8489 = vmatprep.subr.mxu0 0.0
      %8490 = vmatpush1.msra.mxu0 0.0
      %8491 = vmatprep.subr.mxu0 0.0
      %8492 = vmatpush1.msra.mxu0 0.0
      %8493 = vmatprep.subr.mxu0 0.0
      %8494 = vmatpush1.msra.mxu0 0.0
      %8495 = vmatprep.subr.mxu0 0.0
      %8496 = vmatpush1.msra.mxu0 0.0
      %8497 = vmatprep.subr.mxu0 0.0
      %8498 = vmatpush1.msra.mxu0 0.0
      %8499 = vmatprep.subr.mxu0 0.0
      %8500 = vmatpush1.msra.mxu0 0.0
      %8501 = vmatprep.subr.mxu0 0.0
      %8502 = vmatpush1.msra.mxu0 0.0
      %8503 = vmatprep.subr.mxu0 0.0
      %8504 = vmatpush1.msra.mxu0 0.0
      %8505 = vmatprep.subr.mxu0 0.0
      %8506 = vmatpush1.msra.mxu0 0.0
      %8507 = vmatprep.subr.mxu0 0.0
      %8508 = vmatpush1.msra.mxu0 0.0
      %8509 = vmatprep.subr.mxu0 0.0
      %8510 = vmatpush1.msra.mxu0 0.0
      %8511 = vmatprep.subr.mxu0 0.0
      %8512 = vmatpush1.msra.mxu0 0.0
      %8513 = vmatprep.subr.mxu0 0.0
      %8514 = vmatpush1.msra.mxu0 0.0
      %8515 = vmatprep.subr.mxu0 0.0
      %8516 = vmatpush1.msra.mxu0 0.0
      %8517 = vmatprep.subr.mxu0 0.0
      %8518 = vmatpush1.msra.mxu0 0.0
      %8519 = vmatprep.subr.mxu0 0.0
      %8520 = vmatpush1.msra.mxu0 0.0
      %8521 = vmatprep.subr.mxu0 0.0
      %8522 = vmatpush1.msra.mxu0 0.0
      %8523 = vmatprep.subr.mxu0 0.0
      %8524 = vmatpush1.msra.mxu0 0.0
      %8525 = vmatprep.mubr.f32.mxu0 0.0
      %v8526 = vand.u32 %v8440, 4294901760
      %v8527 = vsub.f32 %v8440, %v8526
      %v8528 = vand.u32 %v8527, 4294901760
      %v8529 = vsub.f32 %v8527, %v8528
      %v8530 = vand.u32 %v8529, 4294901760
      %8531 = vmatmul.mubr.f32.gmra.mrb[0].mxu0 %v8530
      %v8532 = vpop.f32.mrb[0].mxu0
      %v8533 = vadd.f32 0.0, %v8532
      %v8534 = vpop.f32.mrb[0].mxu0
      %8535 = vmatprep.mubr.f32.mxu0 0.0
      %v8536 = vand.u32 %v8443, 4294901760
      %v8537 = vsub.f32 %v8443, %v8536
      %v8538 = vand.u32 %v8537, 4294901760
      %v8539 = vsub.f32 %v8537, %v8538
      %v8540 = vand.u32 %v8539, 4294901760
      %8541 = vmatmul.mubr.f32.gmra.mrb[0].mxu0 %v8540
      %v8542 = vpop.f32.mrb[0].mxu0
      %v8543 = vadd.f32 0.0, %v8542
      %v8544 = vpop.f32.mrb[0].mxu0
      %8545 = vmatprep.mubr.f32.mxu0 0.0
      %v8546 = vand.u32 %v8446, 4294901760
      %v8547 = vsub.f32 %v8446, %v8546
      %v8548 = vand.u32 %v8547, 4294901760
      %v8549 = vsub.f32 %v8547, %v8548
      %v8550 = vand.u32 %v8549, 4294901760
      %8551 = vmatmul.mubr.f32.gmra.mrb[0].mxu0 %v8550
      %v8552 = vpop.f32.mrb[0].mxu0
      %v8553 = vadd.f32 0.0, %v8552
      %v8554 = vpop.f32.mrb[0].mxu0
      %8555 = vmatprep.mubr.f32.mxu0 0.0
      %v8556 = vand.u32 %v8449, 4294901760
      %v8557 = vsub.f32 %v8449, %v8556
      %v8558 = vand.u32 %v8557, 4294901760
      %v8559 = vsub.f32 %v8557, %v8558
      %v8560 = vand.u32 %v8559, 4294901760
      %8561 = vmatmul.mubr.f32.gmra.mrb[0].mxu0 %v8560
      %v8562 = vpop.f32.mrb[0].mxu0
      %v8563 = vadd.f32 0.0, %v8562
      %v8564 = vpop.f32.mrb[0].mxu0
      %8565 = vmatprep.mubr.f32.mxu0 0.0
      %v8566 = vand.u32 %v8452, 4294901760
      %v8567 = vsub.f32 %v8452, %v8566
      %v8568 = vand.u32 %v8567, 4294901760
      %v8569 = vsub.f32 %v8567, %v8568
      %v8570 = vand.u32 %v8569, 4294901760
      %8571 = vmatmul.mubr.f32.gmra.mrb[0].mxu0 %v8570
      %v8572 = vpop.f32.mrb[0].mxu0
      %v8573 = vadd.f32 0.0, %v8572
      %v8574 = vpop.f32.mrb[0].mxu0
      %8575 = vdwg.mxu0
      %8576 = vmatprep.subr.mxu0 0.0
      %v8577 = vand.u32 %v8426, 4294901760
      %v8578 = vsub.f32 %v8426, %v8577
      %v8579 = vand.u32 %v8578, 4294901760
      %v8580 = vsub.f32 %v8578, %v8579
      %v8581 = vand.u32 %v8580, 4294901760
      %8582 = vmatpush1.msra.mxu0 %v8581
      %8583 = vmatprep.subr.mxu0 0.0
      %v8584 = vand.u32 %v8428, 4294901760
      %v8585 = vsub.f32 %v8428, %v8584
      %v8586 = vand.u32 %v8585, 4294901760
      %v8587 = vsub.f32 %v8585, %v8586
      %v8588 = vand.u32 %v8587, 4294901760
      %8589 = vmatpush1.msra.mxu0 %v8588
      %8590 = vmatprep.subr.mxu0 0.0
      %v8591 = vand.u32 %v8430, 4294901760
      %v8592 = vsub.f32 %v8430, %v8591
      %v8593 = vand.u32 %v8592, 4294901760
      %v8594 = vsub.f32 %v8592, %v8593
      %v8595 = vand.u32 %v8594, 4294901760
      %8596 = vmatpush1.msra.mxu0 %v8595
      %8597 = vmatprep.subr.mxu0 0.0
      %v8598 = vand.u32 %v8432, 4294901760
      %v8599 = vsub.f32 %v8432, %v8598
      %v8600 = vand.u32 %v8599, 4294901760
      %v8601 = vsub.f32 %v8599, %v8600
      %v8602 = vand.u32 %v8601, 4294901760
      %8603 = vmatpush1.msra.mxu0 %v8602
      %8604 = vmatprep.subr.mxu0 0.0
      %v8605 = vand.u32 %v8454, 4294901760
      %v8606 = vsub.f32 %v8454, %v8605
      %v8607 = vand.u32 %v8606, 4294901760
      %v8608 = vsub.f32 %v8606, %v8607
      %v8609 = vand.u32 %v8608, 4294901760
      %8610 = vmatpush1.msra.mxu0 %v8609
      %8611 = vmatprep.subr.mxu0 0.0
      %8612 = vmatpush1.msra.mxu0 0.0
      %8613 = vmatprep.subr.mxu0 0.0
      %8614 = vmatpush1.msra.mxu0 0.0
      %8615 = vmatprep.subr.mxu0 0.0
      %8616 = vmatpush1.msra.mxu0 0.0
      %8617 = vmatprep.subr.mxu0 0.0
      %8618 = vmatpush1.msra.mxu0 0.0
      %8619 = vmatprep.subr.mxu0 0.0
      %8620 = vmatpush1.msra.mxu0 0.0
      %8621 = vmatprep.subr.mxu0 0.0
      %8622 = vmatpush1.msra.mxu0 0.0
      %8623 = vmatprep.subr.mxu0 0.0
      %8624 = vmatpush1.msra.mxu0 0.0
      %8625 = vmatprep.subr.mxu0 0.0
      %8626 = vmatpush1.msra.mxu0 0.0
      %8627 = vmatprep.subr.mxu0 0.0
      %8628 = vmatpush1.msra.mxu0 0.0
      %8629 = vmatprep.subr.mxu0 0.0
      %8630 = vmatpush1.msra.mxu0 0.0
      %8631 = vmatprep.subr.mxu0 0.0
      %8632 = vmatpush1.msra.mxu0 0.0
      %8633 = vmatprep.subr.mxu0 0.0
      %8634 = vmatpush1.msra.mxu0 0.0
      %8635 = vmatprep.subr.mxu0 0.0
      %8636 = vmatpush1.msra.mxu0 0.0
      %8637 = vmatprep.subr.mxu0 0.0
      %8638 = vmatpush1.msra.mxu0 0.0
      %8639 = vmatprep.subr.mxu0 0.0
      %8640 = vmatpush1.msra.mxu0 0.0
      %8641 = vmatprep.subr.mxu0 0.0
      %8642 = vmatpush1.msra.mxu0 0.0
      %8643 = vmatprep.subr.mxu0 0.0
      %8644 = vmatpush1.msra.mxu0 0.0
      %8645 = vmatprep.subr.mxu0 0.0
      %8646 = vmatpush1.msra.mxu0 0.0
      %8647 = vmatprep.subr.mxu0 0.0
      %8648 = vmatpush1.msra.mxu0 0.0
      %8649 = vmatprep.subr.mxu0 0.0
      %8650 = vmatpush1.msra.mxu0 0.0
      %8651 = vmatprep.subr.mxu0 0.0
      %8652 = vmatpush1.msra.mxu0 0.0
      %8653 = vmatprep.subr.mxu0 0.0
      %8654 = vmatpush1.msra.mxu0 0.0
      %8655 = vmatprep.subr.mxu0 0.0
      %8656 = vmatpush1.msra.mxu0 0.0
      %8657 = vmatprep.subr.mxu0 0.0
      %8658 = vmatpush1.msra.mxu0 0.0
      %8659 = vmatprep.subr.mxu0 0.0
      %8660 = vmatpush1.msra.mxu0 0.0
      %8661 = vmatprep.subr.mxu0 0.0
      %8662 = vmatpush1.msra.mxu0 0.0
      %8663 = vmatprep.subr.mxu0 0.0
      %8664 = vmatpush1.msra.mxu0 0.0
      %8665 = vmatprep.mubr.f32.mxu0 0.0
      %v8666 = vand.u32 %v8440, 4294901760
      %8667 = vmatmul.mubr.f32.gmra.mrb[0].mxu0 %v8666
      %v8668 = vpop.f32.mrb[0].mxu0
      %v8669 = vadd.f32 %v8533, %v8668
      %v8670 = vpop.f32.mrb[0].mxu0
      %8671 = vmatprep.mubr.f32.mxu0 0.0
      %v8672 = vand.u32 %v8443, 4294901760
      %8673 = vmatmul.mubr.f32.gmra.mrb[0].mxu0 %v8672
      %v8674 = vpop.f32.mrb[0].mxu0
      %v8675 = vadd.f32 %v8543, %v8674
      %v8676 = vpop.f32.mrb[0].mxu0
      %8677 = vmatprep.mubr.f32.mxu0 0.0
      %v8678 = vand.u32 %v8446, 4294901760
      %8679 = vmatmul.mubr.f32.gmra.mrb[0].mxu0 %v8678
      %v8680 = vpop.f32.mrb[0].mxu0
      %v8681 = vadd.f32 %v8553, %v8680
      %v8682 = vpop.f32.mrb[0].mxu0
      %8683 = vmatprep.mubr.f32.mxu0 0.0
      %v8684 = vand.u32 %v8449, 4294901760
      %8685 = vmatmul.mubr.f32.gmra.mrb[0].mxu0 %v8684
      %v8686 = vpop.f32.mrb[0].mxu0
      %v8687 = vadd.f32 %v8563, %v8686
      %v8688 = vpop.f32.mrb[0].mxu0
      %8689 = vmatprep.mubr.f32.mxu0 0.0
      %v8690 = vand.u32 %v8452, 4294901760
      %8691 = vmatmul.mubr.f32.gmra.mrb[0].mxu0 %v8690
      %v8692 = vpop.f32.mrb[0].mxu0
      %v8693 = vadd.f32 %v8573, %v8692
      %v8694 = vpop.f32.mrb[0].mxu0
      %8695 = vdwg.mxu0
      %8696 = vmatprep.subr.mxu0 0.0
      %v8697 = vand.u32 %v8426, 4294901760
      %v8698 = vsub.f32 %v8426, %v8697
      %8699 = vmatpush1.msra.mxu0 %v8698
      %8700 = vmatprep.subr.mxu0 0.0
      %v8701 = vand.u32 %v8428, 4294901760
      %v8702 = vsub.f32 %v8428, %v8701
      %8703 = vmatpush1.msra.mxu0 %v8702
      %8704 = vmatprep.subr.mxu0 0.0
      %v8705 = vand.u32 %v8430, 4294901760
      %v8706 = vsub.f32 %v8430, %v8705
      %8707 = vmatpush1.msra.mxu0 %v8706
      %8708 = vmatprep.subr.mxu0 0.0
      %v8709 = vand.u32 %v8432, 4294901760
      %v8710 = vsub.f32 %v8432, %v8709
      %8711 = vmatpush1.msra.mxu0 %v8710
      %8712 = vmatprep.subr.mxu0 0.0
      %v8713 = vand.u32 %v8454, 4294901760
      %v8714 = vsub.f32 %v8454, %v8713
      %8715 = vmatpush1.msra.mxu0 %v8714
      %8716 = vmatprep.subr.mxu0 0.0
      %8717 = vmatpush1.msra.mxu0 0.0
      %8718 = vmatprep.subr.mxu0 0.0
      %8719 = vmatpush1.msra.mxu0 0.0
      %8720 = vmatprep.subr.mxu0 0.0
      %8721 = vmatpush1.msra.mxu0 0.0
      %8722 = vmatprep.subr.mxu0 0.0
      %8723 = vmatpush1.msra.mxu0 0.0
      %8724 = vmatprep.subr.mxu0 0.0
      %8725 = vmatpush1.msra.mxu0 0.0
      %8726 = vmatprep.subr.mxu0 0.0
      %8727 = vmatpush1.msra.mxu0 0.0
      %8728 = vmatprep.subr.mxu0 0.0
      %8729 = vmatpush1.msra.mxu0 0.0
      %8730 = vmatprep.subr.mxu0 0.0
      %8731 = vmatpush1.msra.mxu0 0.0
      %8732 = vmatprep.subr.mxu0 0.0
      %8733 = vmatpush1.msra.mxu0 0.0
      %8734 = vmatprep.subr.mxu0 0.0
      %8735 = vmatpush1.msra.mxu0 0.0
      %8736 = vmatprep.subr.mxu0 0.0
      %8737 = vmatpush1.msra.mxu0 0.0
      %8738 = vmatprep.subr.mxu0 0.0
      %8739 = vmatpush1.msra.mxu0 0.0
      %8740 = vmatprep.subr.mxu0 0.0
      %8741 = vmatpush1.msra.mxu0 0.0
      %8742 = vmatprep.subr.mxu0 0.0
      %8743 = vmatpush1.msra.mxu0 0.0
      %8744 = vmatprep.subr.mxu0 0.0
      %8745 = vmatpush1.msra.mxu0 0.0
      %8746 = vmatprep.subr.mxu0 0.0
      %8747 = vmatpush1.msra.mxu0 0.0
      %8748 = vmatprep.subr.mxu0 0.0
      %8749 = vmatpush1.msra.mxu0 0.0
      %8750 = vmatprep.subr.mxu0 0.0
      %8751 = vmatpush1.msra.mxu0 0.0
      %8752 = vmatprep.subr.mxu0 0.0
      %8753 = vmatpush1.msra.mxu0 0.0
      %8754 = vmatprep.subr.mxu0 0.0
      %8755 = vmatpush1.msra.mxu0 0.0
      %8756 = vmatprep.subr.mxu0 0.0
      %8757 = vmatpush1.msra.mxu0 0.0
      %8758 = vmatprep.subr.mxu0 0.0
      %8759 = vmatpush1.msra.mxu0 0.0
      %8760 = vmatprep.subr.mxu0 0.0
      %8761 = vmatpush1.msra.mxu0 0.0
      %8762 = vmatprep.subr.mxu0 0.0
      %8763 = vmatpush1.msra.mxu0 0.0
      %8764 = vmatprep.subr.mxu0 0.0
      %8765 = vmatpush1.msra.mxu0 0.0
      %8766 = vmatprep.subr.mxu0 0.0
      %8767 = vmatpush1.msra.mxu0 0.0
      %8768 = vmatprep.subr.mxu0 0.0
      %8769 = vmatpush1.msra.mxu0 0.0
      %8770 = vmatprep.mubr.f32.mxu0 0.0
      %v8771 = vand.u32 %v8440, 4294901760
      %v8772 = vsub.f32 %v8440, %v8771
      %8773 = vmatmul.mubr.f32.gmra.mrb[0].mxu0 %v8772
      %v8774 = vpop.f32.mrb[0].mxu0
      %v8775 = vadd.f32 %v8669, %v8774
      %v8776 = vpop.f32.mrb[0].mxu0
      %8777 = vmatprep.mubr.f32.mxu0 0.0
      %v8778 = vand.u32 %v8443, 4294901760
      %v8779 = vsub.f32 %v8443, %v8778
      %8780 = vmatmul.mubr.f32.gmra.mrb[0].mxu0 %v8779
      %v8781 = vpop.f32.mrb[0].mxu0
      %v8782 = vadd.f32 %v8675, %v8781
      %v8783 = vpop.f32.mrb[0].mxu0
      %8784 = vmatprep.mubr.f32.mxu0 0.0
      %v8785 = vand.u32 %v8446, 4294901760
      %v8786 = vsub.f32 %v8446, %v8785
      %8787 = vmatmul.mubr.f32.gmra.mrb[0].mxu0 %v8786
      %v8788 = vpop.f32.mrb[0].mxu0
      %v8789 = vadd.f32 %v8681, %v8788
      %v8790 = vpop.f32.mrb[0].mxu0
      %8791 = vmatprep.mubr.f32.mxu0 0.0
      %v8792 = vand.u32 %v8449, 4294901760
      %v8793 = vsub.f32 %v8449, %v8792
      %8794 = vmatmul.mubr.f32.gmra.mrb[0].mxu0 %v8793
      %v8795 = vpop.f32.mrb[0].mxu0
      %v8796 = vadd.f32 %v8687, %v8795
      %v8797 = vpop.f32.mrb[0].mxu0
      %8798 = vmatprep.mubr.f32.mxu0 0.0
      %v8799 = vand.u32 %v8452, 4294901760
      %v8800 = vsub.f32 %v8452, %v8799
      %8801 = vmatmul.mubr.f32.gmra.mrb[0].mxu0 %v8800
      %v8802 = vpop.f32.mrb[0].mxu0
      %v8803 = vadd.f32 %v8693, %v8802
      %v8804 = vpop.f32.mrb[0].mxu0
      %8805 = vdwg.mxu0
      %8806 = vmatprep.subr.mxu0 0.0
      %v8807 = vand.u32 %v8426, 4294901760
      %8808 = vmatpush1.msra.mxu0 %v8807
      %8809 = vmatprep.subr.mxu0 0.0
      %v8810 = vand.u32 %v8428, 4294901760
      %8811 = vmatpush1.msra.mxu0 %v8810
      %8812 = vmatprep.subr.mxu0 0.0
      %v8813 = vand.u32 %v8430, 4294901760
      %8814 = vmatpush1.msra.mxu0 %v8813
      %8815 = vmatprep.subr.mxu0 0.0
      %v8816 = vand.u32 %v8432, 4294901760
      %8817 = vmatpush1.msra.mxu0 %v8816
      %8818 = vmatprep.subr.mxu0 0.0
      %v8819 = vand.u32 %v8454, 4294901760
      %8820 = vmatpush1.msra.mxu0 %v8819
      %8821 = vmatprep.subr.mxu0 0.0
      %8822 = vmatpush1.msra.mxu0 0.0
      %8823 = vmatprep.subr.mxu0 0.0
      %8824 = vmatpush1.msra.mxu0 0.0
      %8825 = vmatprep.subr.mxu0 0.0
      %8826 = vmatpush1.msra.mxu0 0.0
      %8827 = vmatprep.subr.mxu0 0.0
      %8828 = vmatpush1.msra.mxu0 0.0
      %8829 = vmatprep.subr.mxu0 0.0
      %8830 = vmatpush1.msra.mxu0 0.0
      %8831 = vmatprep.subr.mxu0 0.0
      %8832 = vmatpush1.msra.mxu0 0.0
      %8833 = vmatprep.subr.mxu0 0.0
      %8834 = vmatpush1.msra.mxu0 0.0
      %8835 = vmatprep.subr.mxu0 0.0
      %8836 = vmatpush1.msra.mxu0 0.0
      %8837 = vmatprep.subr.mxu0 0.0
      %8838 = vmatpush1.msra.mxu0 0.0
      %8839 = vmatprep.subr.mxu0 0.0
      %8840 = vmatpush1.msra.mxu0 0.0
      %8841 = vmatprep.subr.mxu0 0.0
      %8842 = vmatpush1.msra.mxu0 0.0
      %8843 = vmatprep.subr.mxu0 0.0
      %8844 = vmatpush1.msra.mxu0 0.0
      %8845 = vmatprep.subr.mxu0 0.0
      %8846 = vmatpush1.msra.mxu0 0.0
      %8847 = vmatprep.subr.mxu0 0.0
      %8848 = vmatpush1.msra.mxu0 0.0
      %8849 = vmatprep.subr.mxu0 0.0
      %8850 = vmatpush1.msra.mxu0 0.0
      %8851 = vmatprep.subr.mxu0 0.0
      %8852 = vmatpush1.msra.mxu0 0.0
      %8853 = vmatprep.subr.mxu0 0.0
      %8854 = vmatpush1.msra.mxu0 0.0
      %8855 = vmatprep.subr.mxu0 0.0
      %8856 = vmatpush1.msra.mxu0 0.0
      %8857 = vmatprep.subr.mxu0 0.0
      %8858 = vmatpush1.msra.mxu0 0.0
      %8859 = vmatprep.subr.mxu0 0.0
      %8860 = vmatpush1.msra.mxu0 0.0
      %8861 = vmatprep.subr.mxu0 0.0
      %8862 = vmatpush1.msra.mxu0 0.0
      %8863 = vmatprep.subr.mxu0 0.0
      %8864 = vmatpush1.msra.mxu0 0.0
      %8865 = vmatprep.subr.mxu0 0.0
      %8866 = vmatpush1.msra.mxu0 0.0
      %8867 = vmatprep.subr.mxu0 0.0
      %8868 = vmatpush1.msra.mxu0 0.0
      %8869 = vmatprep.subr.mxu0 0.0
      %8870 = vmatpush1.msra.mxu0 0.0
      %8871 = vmatprep.subr.mxu0 0.0
      %8872 = vmatpush1.msra.mxu0 0.0
      %8873 = vmatprep.subr.mxu0 0.0
      %8874 = vmatpush1.msra.mxu0 0.0
      %8875 = vmatprep.mubr.f32.mxu0 0.0
      %v8876 = vand.u32 %v8440, 4294901760
      %v8877 = vsub.f32 %v8440, %v8876
      %v8878 = vand.u32 %v8877, 4294901760
      %8879 = vmatmul.mubr.f32.gmra.mrb[0].mxu0 %v8878
      %v8880 = vpop.f32.mrb[0].mxu0
      %v8881 = vadd.f32 %v8775, %v8880
      %v8882 = vpop.f32.mrb[0].mxu0
      %8883 = vmatprep.mubr.f32.mxu0 0.0
      %v8884 = vand.u32 %v8443, 4294901760
      %v8885 = vsub.f32 %v8443, %v8884
      %v8886 = vand.u32 %v8885, 4294901760
      %8887 = vmatmul.mubr.f32.gmra.mrb[0].mxu0 %v8886
      %v8888 = vpop.f32.mrb[0].mxu0
      %v8889 = vadd.f32 %v8782, %v8888
      %v8890 = vpop.f32.mrb[0].mxu0
      %8891 = vmatprep.mubr.f32.mxu0 0.0
      %v8892 = vand.u32 %v8446, 4294901760
      %v8893 = vsub.f32 %v8446, %v8892
      %v8894 = vand.u32 %v8893, 4294901760
      %8895 = vmatmul.mubr.f32.gmra.mrb[0].mxu0 %v8894
      %v8896 = vpop.f32.mrb[0].mxu0
      %v8897 = vadd.f32 %v8789, %v8896
      %v8898 = vpop.f32.mrb[0].mxu0
      %8899 = vmatprep.mubr.f32.mxu0 0.0
      %v8900 = vand.u32 %v8449, 4294901760
      %v8901 = vsub.f32 %v8449, %v8900
      %v8902 = vand.u32 %v8901, 4294901760
      %8903 = vmatmul.mubr.f32.gmra.mrb[0].mxu0 %v8902
      %v8904 = vpop.f32.mrb[0].mxu0
      %v8905 = vadd.f32 %v8796, %v8904
      %v8906 = vpop.f32.mrb[0].mxu0
      %8907 = vmatprep.mubr.f32.mxu0 0.0
      %v8908 = vand.u32 %v8452, 4294901760
      %v8909 = vsub.f32 %v8452, %v8908
      %v8910 = vand.u32 %v8909, 4294901760
      %8911 = vmatmul.mubr.f32.gmra.mrb[0].mxu0 %v8910
      %v8912 = vpop.f32.mrb[0].mxu0
      %v8913 = vadd.f32 %v8803, %v8912
      %v8914 = vpop.f32.mrb[0].mxu0
      %8915 = vdwg.mxu0
      %8916 = vmatprep.subr.mxu0 0.0
      %v8917 = vand.u32 %v8426, 4294901760
      %v8918 = vsub.f32 %v8426, %v8917
      %v8919 = vand.u32 %v8918, 4294901760
      %8920 = vmatpush1.msra.mxu0 %v8919
      %8921 = vmatprep.subr.mxu0 0.0
      %v8922 = vand.u32 %v8428, 4294901760
      %v8923 = vsub.f32 %v8428, %v8922
      %v8924 = vand.u32 %v8923, 4294901760
      %8925 = vmatpush1.msra.mxu0 %v8924
      %8926 = vmatprep.subr.mxu0 0.0
      %v8927 = vand.u32 %v8430, 4294901760
      %v8928 = vsub.f32 %v8430, %v8927
      %v8929 = vand.u32 %v8928, 4294901760
      %8930 = vmatpush1.msra.mxu0 %v8929
      %8931 = vmatprep.subr.mxu0 0.0
      %v8932 = vand.u32 %v8432, 4294901760
      %v8933 = vsub.f32 %v8432, %v8932
      %v8934 = vand.u32 %v8933, 4294901760
      %8935 = vmatpush1.msra.mxu0 %v8934
      %8936 = vmatprep.subr.mxu0 0.0
      %v8937 = vand.u32 %v8454, 4294901760
      %v8938 = vsub.f32 %v8454, %v8937
      %v8939 = vand.u32 %v8938, 4294901760
      %8940 = vmatpush1.msra.mxu0 %v8939
      %8941 = vmatprep.subr.mxu0 0.0
      %8942 = vmatpush1.msra.mxu0 0.0
      %8943 = vmatprep.subr.mxu0 0.0
      %8944 = vmatpush1.msra.mxu0 0.0
      %8945 = vmatprep.subr.mxu0 0.0
      %8946 = vmatpush1.msra.mxu0 0.0
      %8947 = vmatprep.subr.mxu0 0.0
      %8948 = vmatpush1.msra.mxu0 0.0
      %8949 = vmatprep.subr.mxu0 0.0
      %8950 = vmatpush1.msra.mxu0 0.0
      %8951 = vmatprep.subr.mxu0 0.0
      %8952 = vmatpush1.msra.mxu0 0.0
      %8953 = vmatprep.subr.mxu0 0.0
      %8954 = vmatpush1.msra.mxu0 0.0
      %8955 = vmatprep.subr.mxu0 0.0
      %8956 = vmatpush1.msra.mxu0 0.0
      %8957 = vmatprep.subr.mxu0 0.0
      %8958 = vmatpush1.msra.mxu0 0.0
      %8959 = vmatprep.subr.mxu0 0.0
      %8960 = vmatpush1.msra.mxu0 0.0
      %8961 = vmatprep.subr.mxu0 0.0
      %8962 = vmatpush1.msra.mxu0 0.0
      %8963 = vmatprep.subr.mxu0 0.0
      %8964 = vmatpush1.msra.mxu0 0.0
      %8965 = vmatprep.subr.mxu0 0.0
      %8966 = vmatpush1.msra.mxu0 0.0
      %8967 = vmatprep.subr.mxu0 0.0
      %8968 = vmatpush1.msra.mxu0 0.0
      %8969 = vmatprep.subr.mxu0 0.0
      %8970 = vmatpush1.msra.mxu0 0.0
      %8971 = vmatprep.subr.mxu0 0.0
      %8972 = vmatpush1.msra.mxu0 0.0
      %8973 = vmatprep.subr.mxu0 0.0
      %8974 = vmatpush1.msra.mxu0 0.0
      %8975 = vmatprep.subr.mxu0 0.0
      %8976 = vmatpush1.msra.mxu0 0.0
      %8977 = vmatprep.subr.mxu0 0.0
      %8978 = vmatpush1.msra.mxu0 0.0
      %8979 = vmatprep.subr.mxu0 0.0
      %8980 = vmatpush1.msra.mxu0 0.0
      %8981 = vmatprep.subr.mxu0 0.0
      %8982 = vmatpush1.msra.mxu0 0.0
      %8983 = vmatprep.subr.mxu0 0.0
      %8984 = vmatpush1.msra.mxu0 0.0
      %8985 = vmatprep.subr.mxu0 0.0
      %8986 = vmatpush1.msra.mxu0 0.0
      %8987 = vmatprep.subr.mxu0 0.0
      %8988 = vmatpush1.msra.mxu0 0.0
      %8989 = vmatprep.subr.mxu0 0.0
      %8990 = vmatpush1.msra.mxu0 0.0
      %8991 = vmatprep.subr.mxu0 0.0
      %8992 = vmatpush1.msra.mxu0 0.0
      %8993 = vmatprep.subr.mxu0 0.0
      %8994 = vmatpush1.msra.mxu0 0.0
      %8995 = vmatprep.mubr.f32.mxu0 0.0
      %v8996 = vand.u32 %v8440, 4294901760
      %8997 = vmatmul.mubr.f32.gmra.mrb[0].mxu0 %v8996
      %v8998 = vpop.f32.mrb[0].mxu0
      %v8999 = vadd.f32 %v8881, %v8998
      %v9000 = vpop.f32.mrb[0].mxu0
      %9001 = vmatprep.mubr.f32.mxu0 0.0
      %v9002 = vand.u32 %v8443, 4294901760
      %9003 = vmatmul.mubr.f32.gmra.mrb[0].mxu0 %v9002
      %v9004 = vpop.f32.mrb[0].mxu0
      %v9005 = vadd.f32 %v8889, %v9004
      %v9006 = vpop.f32.mrb[0].mxu0
      %9007 = vmatprep.mubr.f32.mxu0 0.0
      %v9008 = vand.u32 %v8446, 4294901760
      %9009 = vmatmul.mubr.f32.gmra.mrb[0].mxu0 %v9008
      %v9010 = vpop.f32.mrb[0].mxu0
      %v9011 = vadd.f32 %v8897, %v9010
      %v9012 = vpop.f32.mrb[0].mxu0
      %9013 = vmatprep.mubr.f32.mxu0 0.0
      %v9014 = vand.u32 %v8449, 4294901760
      %9015 = vmatmul.mubr.f32.gmra.mrb[0].mxu0 %v9014
      %v9016 = vpop.f32.mrb[0].mxu0
      %v9017 = vadd.f32 %v8905, %v9016
      %v9018 = vpop.f32.mrb[0].mxu0
      %9019 = vmatprep.mubr.f32.mxu0 0.0
      %v9020 = vand.u32 %v8452, 4294901760
      %9021 = vmatmul.mubr.f32.gmra.mrb[0].mxu0 %v9020
      %v9022 = vpop.f32.mrb[0].mxu0
      %v9023 = vadd.f32 %v8913, %v9022
      %v9024 = vpop.f32.mrb[0].mxu0
      %9025 = vdwg.mxu0
      %9026 = vmatprep.subr.mxu0 0.0
      %v9027 = vand.u32 %v8426, 4294901760
      %9028 = vmatpush1.msra.mxu0 %v9027
      %9029 = vmatprep.subr.mxu0 0.0
      %v9030 = vand.u32 %v8428, 4294901760
      %9031 = vmatpush1.msra.mxu0 %v9030
      %9032 = vmatprep.subr.mxu0 0.0
      %v9033 = vand.u32 %v8430, 4294901760
      %9034 = vmatpush1.msra.mxu0 %v9033
      %9035 = vmatprep.subr.mxu0 0.0
      %v9036 = vand.u32 %v8432, 4294901760
      %9037 = vmatpush1.msra.mxu0 %v9036
      %9038 = vmatprep.subr.mxu0 0.0
      %v9039 = vand.u32 %v8454, 4294901760
      %9040 = vmatpush1.msra.mxu0 %v9039
      %9041 = vmatprep.subr.mxu0 0.0
      %9042 = vmatpush1.msra.mxu0 0.0
      %9043 = vmatprep.subr.mxu0 0.0
      %9044 = vmatpush1.msra.mxu0 0.0
      %9045 = vmatprep.subr.mxu0 0.0
      %9046 = vmatpush1.msra.mxu0 0.0
      %9047 = vmatprep.subr.mxu0 0.0
      %9048 = vmatpush1.msra.mxu0 0.0
      %9049 = vmatprep.subr.mxu0 0.0
      %9050 = vmatpush1.msra.mxu0 0.0
      %9051 = vmatprep.subr.mxu0 0.0
      %9052 = vmatpush1.msra.mxu0 0.0
      %9053 = vmatprep.subr.mxu0 0.0
      %9054 = vmatpush1.msra.mxu0 0.0
      %9055 = vmatprep.subr.mxu0 0.0
      %9056 = vmatpush1.msra.mxu0 0.0
      %9057 = vmatprep.subr.mxu0 0.0
      %9058 = vmatpush1.msra.mxu0 0.0
      %9059 = vmatprep.subr.mxu0 0.0
      %9060 = vmatpush1.msra.mxu0 0.0
      %9061 = vmatprep.subr.mxu0 0.0
      %9062 = vmatpush1.msra.mxu0 0.0
      %9063 = vmatprep.subr.mxu0 0.0
      %9064 = vmatpush1.msra.mxu0 0.0
      %9065 = vmatprep.subr.mxu0 0.0
      %9066 = vmatpush1.msra.mxu0 0.0
      %9067 = vmatprep.subr.mxu0 0.0
      %9068 = vmatpush1.msra.mxu0 0.0
      %9069 = vmatprep.subr.mxu0 0.0
      %9070 = vmatpush1.msra.mxu0 0.0
      %9071 = vmatprep.subr.mxu0 0.0
      %9072 = vmatpush1.msra.mxu0 0.0
      %9073 = vmatprep.subr.mxu0 0.0
      %9074 = vmatpush1.msra.mxu0 0.0
      %9075 = vmatprep.subr.mxu0 0.0
      %9076 = vmatpush1.msra.mxu0 0.0
      %9077 = vmatprep.subr.mxu0 0.0
      %9078 = vmatpush1.msra.mxu0 0.0
      %9079 = vmatprep.subr.mxu0 0.0
      %9080 = vmatpush1.msra.mxu0 0.0
      %9081 = vmatprep.subr.mxu0 0.0
      %9082 = vmatpush1.msra.mxu0 0.0
      %9083 = vmatprep.subr.mxu0 0.0
      %9084 = vmatpush1.msra.mxu0 0.0
      %9085 = vmatprep.subr.mxu0 0.0
      %9086 = vmatpush1.msra.mxu0 0.0
      %9087 = vmatprep.subr.mxu0 0.0
      %9088 = vmatpush1.msra.mxu0 0.0
      %9089 = vmatprep.subr.mxu0 0.0
      %9090 = vmatpush1.msra.mxu0 0.0
      %9091 = vmatprep.subr.mxu0 0.0
      %9092 = vmatpush1.msra.mxu0 0.0
      %9093 = vmatprep.subr.mxu0 0.0
      %9094 = vmatpush1.msra.mxu0 0.0
      %9095 = vmatprep.mubr.f32.mxu0 0.0
      %v9096 = vand.u32 %v8440, 4294901760
      %9097 = vmatmul.mubr.f32.gmra.mrb[0].mxu0 %v9096
      %v9098 = vpop.f32.mrb[0].mxu0
      %v9099 = vadd.f32 %v8999, %v9098
      %v9100 = vpop.f32.mrb[0].mxu0
      %9101 = vmatprep.mubr.f32.mxu0 0.0
      %v9102 = vand.u32 %v8443, 4294901760
      %9103 = vmatmul.mubr.f32.gmra.mrb[0].mxu0 %v9102
      %v9104 = vpop.f32.mrb[0].mxu0
      %v9105 = vadd.f32 %v9005, %v9104
      %v9106 = vpop.f32.mrb[0].mxu0
      %9107 = vmatprep.mubr.f32.mxu0 0.0
      %v9108 = vand.u32 %v8446, 4294901760
      %9109 = vmatmul.mubr.f32.gmra.mrb[0].mxu0 %v9108
      %v9110 = vpop.f32.mrb[0].mxu0
      %v9111 = vadd.f32 %v9011, %v9110
      %v9112 = vpop.f32.mrb[0].mxu0
      %9113 = vmatprep.mubr.f32.mxu0 0.0
      %v9114 = vand.u32 %v8449, 4294901760
      %9115 = vmatmul.mubr.f32.gmra.mrb[0].mxu0 %v9114
      %v9116 = vpop.f32.mrb[0].mxu0
      %v9117 = vadd.f32 %v9017, %v9116
      %v9118 = vpop.f32.mrb[0].mxu0
      %9119 = vmatprep.mubr.f32.mxu0 0.0
      %v9120 = vand.u32 %v8452, 4294901760
      %9121 = vmatmul.mubr.f32.gmra.mrb[0].mxu0 %v9120
      %v9122 = vpop.f32.mrb[0].mxu0
      %v9123 = vadd.f32 %v9023, %v9122
      %v9124 = vpop.f32.mrb[0].mxu0
      %9125 = vdwg.mxu0
      %v9126 = vld [vmem:[%s593 + $0xc] sm:$0xf]
      %v9128 = vsel %vm1322, %v9099, 0
      %v9131 = vsel %vm1322, %v9105, 0
      %v9134 = vsel %vm1322, %v9111, 0
      %v9137 = vsel %vm1322, %v9117, 0
      %v9140 = vsel %vm1322, %v9123, 0
      %v9143 = vsel %vm2109, %v9126, 0
      %9145 = vmatprep.subr.mxu0 0.0
      %v9146 = vand.u32 %v9143, 4294901760
      %9147 = vmatpush1.msra.mxu0 %v9146
      %9148 = vmatprep.subr.mxu0 0.0
      %9149 = vmatpush1.msra.mxu0 0.0
      %9150 = vmatprep.subr.mxu0 0.0
      %9151 = vmatpush1.msra.mxu0 0.0
      %9152 = vmatprep.subr.mxu0 0.0
      %9153 = vmatpush1.msra.mxu0 0.0
      %9154 = vmatprep.subr.mxu0 0.0
      %9155 = vmatpush1.msra.mxu0 0.0
      %9156 = vmatprep.subr.mxu0 0.0
      %9157 = vmatpush1.msra.mxu0 0.0
      %9158 = vmatprep.subr.mxu0 0.0
      %9159 = vmatpush1.msra.mxu0 0.0
      %9160 = vmatprep.subr.mxu0 0.0
      %9161 = vmatpush1.msra.mxu0 0.0
      %9162 = vmatprep.subr.mxu0 0.0
      %9163 = vmatpush1.msra.mxu0 0.0
      %9164 = vmatprep.subr.mxu0 0.0
      %9165 = vmatpush1.msra.mxu0 0.0
      %9166 = vmatprep.subr.mxu0 0.0
      %9167 = vmatpush1.msra.mxu0 0.0
      %9168 = vmatprep.subr.mxu0 0.0
      %9169 = vmatpush1.msra.mxu0 0.0
      %9170 = vmatprep.subr.mxu0 0.0
      %9171 = vmatpush1.msra.mxu0 0.0
      %9172 = vmatprep.subr.mxu0 0.0
      %9173 = vmatpush1.msra.mxu0 0.0
      %9174 = vmatprep.subr.mxu0 0.0
      %9175 = vmatpush1.msra.mxu0 0.0
      %9176 = vmatprep.subr.mxu0 0.0
      %9177 = vmatpush1.msra.mxu0 0.0
      %9178 = vmatprep.subr.mxu0 0.0
      %9179 = vmatpush1.msra.mxu0 0.0
      %9180 = vmatprep.subr.mxu0 0.0
      %9181 = vmatpush1.msra.mxu0 0.0
      %9182 = vmatprep.subr.mxu0 0.0
      %9183 = vmatpush1.msra.mxu0 0.0
      %9184 = vmatprep.subr.mxu0 0.0
      %9185 = vmatpush1.msra.mxu0 0.0
      %9186 = vmatprep.subr.mxu0 0.0
      %9187 = vmatpush1.msra.mxu0 0.0
      %9188 = vmatprep.subr.mxu0 0.0
      %9189 = vmatpush1.msra.mxu0 0.0
      %9190 = vmatprep.subr.mxu0 0.0
      %9191 = vmatpush1.msra.mxu0 0.0
      %9192 = vmatprep.subr.mxu0 0.0
      %9193 = vmatpush1.msra.mxu0 0.0
      %9194 = vmatprep.subr.mxu0 0.0
      %9195 = vmatpush1.msra.mxu0 0.0
      %9196 = vmatprep.subr.mxu0 0.0
      %9197 = vmatpush1.msra.mxu0 0.0
      %9198 = vmatprep.subr.mxu0 0.0
      %9199 = vmatpush1.msra.mxu0 0.0
      %9200 = vmatprep.subr.mxu0 0.0
      %9201 = vmatpush1.msra.mxu0 0.0
      %9202 = vmatprep.subr.mxu0 0.0
      %9203 = vmatpush1.msra.mxu0 0.0
      %9204 = vmatprep.subr.mxu0 0.0
      %9205 = vmatpush1.msra.mxu0 0.0
      %9206 = vmatprep.subr.mxu0 0.0
      %9207 = vmatpush1.msra.mxu0 0.0
      %9208 = vmatprep.subr.mxu0 0.0
      %9209 = vmatpush1.msra.mxu0 0.0
      %9210 = vmatprep.mubr.f32.mxu0 0.0
      %v9211 = vand.u32 %v9128, 4294901760
      %v9212 = vsub.f32 %v9128, %v9211
      %v9213 = vand.u32 %v9212, 4294901760
      %v9214 = vsub.f32 %v9212, %v9213
      %v9215 = vand.u32 %v9214, 4294901760
      %9216 = vmatmul.mubr.f32.gmra.mrb[0].mxu0 %v9215
      %v9217 = vpop.f32.mrb[0].mxu0
      %v9218 = vadd.f32 0.0, %v9217
      %v9219 = vpop.f32.mrb[0].mxu0
      %9220 = vmatprep.mubr.f32.mxu0 0.0
      %v9221 = vand.u32 %v9131, 4294901760
      %v9222 = vsub.f32 %v9131, %v9221
      %v9223 = vand.u32 %v9222, 4294901760
      %v9224 = vsub.f32 %v9222, %v9223
      %v9225 = vand.u32 %v9224, 4294901760
      %9226 = vmatmul.mubr.f32.gmra.mrb[0].mxu0 %v9225
      %v9227 = vpop.f32.mrb[0].mxu0
      %v9228 = vadd.f32 0.0, %v9227
      %v9229 = vpop.f32.mrb[0].mxu0
      %9230 = vmatprep.mubr.f32.mxu0 0.0
      %v9231 = vand.u32 %v9134, 4294901760
      %v9232 = vsub.f32 %v9134, %v9231
      %v9233 = vand.u32 %v9232, 4294901760
      %v9234 = vsub.f32 %v9232, %v9233
      %v9235 = vand.u32 %v9234, 4294901760
      %9236 = vmatmul.mubr.f32.gmra.mrb[0].mxu0 %v9235
      %v9237 = vpop.f32.mrb[0].mxu0
      %v9238 = vadd.f32 0.0, %v9237
      %v9239 = vpop.f32.mrb[0].mxu0
      %9240 = vmatprep.mubr.f32.mxu0 0.0
      %v9241 = vand.u32 %v9137, 4294901760
      %v9242 = vsub.f32 %v9137, %v9241
      %v9243 = vand.u32 %v9242, 4294901760
      %v9244 = vsub.f32 %v9242, %v9243
      %v9245 = vand.u32 %v9244, 4294901760
      %9246 = vmatmul.mubr.f32.gmra.mrb[0].mxu0 %v9245
      %v9247 = vpop.f32.mrb[0].mxu0
      %v9248 = vadd.f32 0.0, %v9247
      %v9249 = vpop.f32.mrb[0].mxu0
      %9250 = vmatprep.mubr.f32.mxu0 0.0
      %v9251 = vand.u32 %v9140, 4294901760
      %v9252 = vsub.f32 %v9140, %v9251
      %v9253 = vand.u32 %v9252, 4294901760
      %v9254 = vsub.f32 %v9252, %v9253
      %v9255 = vand.u32 %v9254, 4294901760
      %9256 = vmatmul.mubr.f32.gmra.mrb[0].mxu0 %v9255
      %v9257 = vpop.f32.mrb[0].mxu0
      %v9258 = vadd.f32 0.0, %v9257
      %v9259 = vpop.f32.mrb[0].mxu0
      %9260 = vdwg.mxu0
      %9261 = vmatprep.subr.mxu0 0.0
      %v9262 = vand.u32 %v9143, 4294901760
      %v9263 = vsub.f32 %v9143, %v9262
      %v9264 = vand.u32 %v9263, 4294901760
      %v9265 = vsub.f32 %v9263, %v9264
      %v9266 = vand.u32 %v9265, 4294901760
      %9267 = vmatpush1.msra.mxu0 %v9266
      %9268 = vmatprep.subr.mxu0 0.0
      %9269 = vmatpush1.msra.mxu0 0.0
      %9270 = vmatprep.subr.mxu0 0.0
      %9271 = vmatpush1.msra.mxu0 0.0
      %9272 = vmatprep.subr.mxu0 0.0
      %9273 = vmatpush1.msra.mxu0 0.0
      %9274 = vmatprep.subr.mxu0 0.0
      %9275 = vmatpush1.msra.mxu0 0.0
      %9276 = vmatprep.subr.mxu0 0.0
      %9277 = vmatpush1.msra.mxu0 0.0
      %9278 = vmatprep.subr.mxu0 0.0
      %9279 = vmatpush1.msra.mxu0 0.0
      %9280 = vmatprep.subr.mxu0 0.0
      %9281 = vmatpush1.msra.mxu0 0.0
      %9282 = vmatprep.subr.mxu0 0.0
      %9283 = vmatpush1.msra.mxu0 0.0
      %9284 = vmatprep.subr.mxu0 0.0
      %9285 = vmatpush1.msra.mxu0 0.0
      %9286 = vmatprep.subr.mxu0 0.0
      %9287 = vmatpush1.msra.mxu0 0.0
      %9288 = vmatprep.subr.mxu0 0.0
      %9289 = vmatpush1.msra.mxu0 0.0
      %9290 = vmatprep.subr.mxu0 0.0
      %9291 = vmatpush1.msra.mxu0 0.0
      %9292 = vmatprep.subr.mxu0 0.0
      %9293 = vmatpush1.msra.mxu0 0.0
      %9294 = vmatprep.subr.mxu0 0.0
      %9295 = vmatpush1.msra.mxu0 0.0
      %9296 = vmatprep.subr.mxu0 0.0
      %9297 = vmatpush1.msra.mxu0 0.0
      %9298 = vmatprep.subr.mxu0 0.0
      %9299 = vmatpush1.msra.mxu0 0.0
      %9300 = vmatprep.subr.mxu0 0.0
      %9301 = vmatpush1.msra.mxu0 0.0
      %9302 = vmatprep.subr.mxu0 0.0
      %9303 = vmatpush1.msra.mxu0 0.0
      %9304 = vmatprep.subr.mxu0 0.0
      %9305 = vmatpush1.msra.mxu0 0.0
      %9306 = vmatprep.subr.mxu0 0.0
      %9307 = vmatpush1.msra.mxu0 0.0
      %9308 = vmatprep.subr.mxu0 0.0
      %9309 = vmatpush1.msra.mxu0 0.0
      %9310 = vmatprep.subr.mxu0 0.0
      %9311 = vmatpush1.msra.mxu0 0.0
      %9312 = vmatprep.subr.mxu0 0.0
      %9313 = vmatpush1.msra.mxu0 0.0
      %9314 = vmatprep.subr.mxu0 0.0
      %9315 = vmatpush1.msra.mxu0 0.0
      %9316 = vmatprep.subr.mxu0 0.0
      %9317 = vmatpush1.msra.mxu0 0.0
      %9318 = vmatprep.subr.mxu0 0.0
      %9319 = vmatpush1.msra.mxu0 0.0
      %9320 = vmatprep.subr.mxu0 0.0
      %9321 = vmatpush1.msra.mxu0 0.0
      %9322 = vmatprep.subr.mxu0 0.0
      %9323 = vmatpush1.msra.mxu0 0.0
      %9324 = vmatprep.subr.mxu0 0.0
      %9325 = vmatpush1.msra.mxu0 0.0
      %9326 = vmatprep.subr.mxu0 0.0
      %9327 = vmatpush1.msra.mxu0 0.0
      %9328 = vmatprep.subr.mxu0 0.0
      %9329 = vmatpush1.msra.mxu0 0.0
      %9330 = vmatprep.mubr.f32.mxu0 0.0
      %v9331 = vand.u32 %v9128, 4294901760
      %9332 = vmatmul.mubr.f32.gmra.mrb[0].mxu0 %v9331
      %v9333 = vpop.f32.mrb[0].mxu0
      %v9334 = vadd.f32 %v9218, %v9333
      %v9335 = vpop.f32.mrb[0].mxu0
      %9336 = vmatprep.mubr.f32.mxu0 0.0
      %v9337 = vand.u32 %v9131, 4294901760
      %9338 = vmatmul.mubr.f32.gmra.mrb[0].mxu0 %v9337
      %v9339 = vpop.f32.mrb[0].mxu0
      %v9340 = vadd.f32 %v9228, %v9339
      %v9341 = vpop.f32.mrb[0].mxu0
      %9342 = vmatprep.mubr.f32.mxu0 0.0
      %v9343 = vand.u32 %v9134, 4294901760
      %9344 = vmatmul.mubr.f32.gmra.mrb[0].mxu0 %v9343
      %v9345 = vpop.f32.mrb[0].mxu0
      %v9346 = vadd.f32 %v9238, %v9345
      %v9347 = vpop.f32.mrb[0].mxu0
      %9348 = vmatprep.mubr.f32.mxu0 0.0
      %v9349 = vand.u32 %v9137, 4294901760
      %9350 = vmatmul.mubr.f32.gmra.mrb[0].mxu0 %v9349
      %v9351 = vpop.f32.mrb[0].mxu0
      %v9352 = vadd.f32 %v9248, %v9351
      %v9353 = vpop.f32.mrb[0].mxu0
      %9354 = vmatprep.mubr.f32.mxu0 0.0
      %v9355 = vand.u32 %v9140, 4294901760
      %9356 = vmatmul.mubr.f32.gmra.mrb[0].mxu0 %v9355
      %v9357 = vpop.f32.mrb[0].mxu0
      %v9358 = vadd.f32 %v9258, %v9357
      %v9359 = vpop.f32.mrb[0].mxu0
      %9360 = vdwg.mxu0
      %9361 = vmatprep.subr.mxu0 0.0
      %v9362 = vand.u32 %v9143, 4294901760
      %v9363 = vsub.f32 %v9143, %v9362
      %9364 = vmatpush1.msra.mxu0 %v9363
      %9365 = vmatprep.subr.mxu0 0.0
      %9366 = vmatpush1.msra.mxu0 0.0
      %9367 = vmatprep.subr.mxu0 0.0
      %9368 = vmatpush1.msra.mxu0 0.0
      %9369 = vmatprep.subr.mxu0 0.0
      %9370 = vmatpush1.msra.mxu0 0.0
      %9371 = vmatprep.subr.mxu0 0.0
      %9372 = vmatpush1.msra.mxu0 0.0
      %9373 = vmatprep.subr.mxu0 0.0
      %9374 = vmatpush1.msra.mxu0 0.0
      %9375 = vmatprep.subr.mxu0 0.0
      %9376 = vmatpush1.msra.mxu0 0.0
      %9377 = vmatprep.subr.mxu0 0.0
      %9378 = vmatpush1.msra.mxu0 0.0
      %9379 = vmatprep.subr.mxu0 0.0
      %9380 = vmatpush1.msra.mxu0 0.0
      %9381 = vmatprep.subr.mxu0 0.0
      %9382 = vmatpush1.msra.mxu0 0.0
      %9383 = vmatprep.subr.mxu0 0.0
      %9384 = vmatpush1.msra.mxu0 0.0
      %9385 = vmatprep.subr.mxu0 0.0
      %9386 = vmatpush1.msra.mxu0 0.0
      %9387 = vmatprep.subr.mxu0 0.0
      %9388 = vmatpush1.msra.mxu0 0.0
      %9389 = vmatprep.subr.mxu0 0.0
      %9390 = vmatpush1.msra.mxu0 0.0
      %9391 = vmatprep.subr.mxu0 0.0
      %9392 = vmatpush1.msra.mxu0 0.0
      %9393 = vmatprep.subr.mxu0 0.0
      %9394 = vmatpush1.msra.mxu0 0.0
      %9395 = vmatprep.subr.mxu0 0.0
      %9396 = vmatpush1.msra.mxu0 0.0
      %9397 = vmatprep.subr.mxu0 0.0
      %9398 = vmatpush1.msra.mxu0 0.0
      %9399 = vmatprep.subr.mxu0 0.0
      %9400 = vmatpush1.msra.mxu0 0.0
      %9401 = vmatprep.subr.mxu0 0.0
      %9402 = vmatpush1.msra.mxu0 0.0
      %9403 = vmatprep.subr.mxu0 0.0
      %9404 = vmatpush1.msra.mxu0 0.0
      %9405 = vmatprep.subr.mxu0 0.0
      %9406 = vmatpush1.msra.mxu0 0.0
      %9407 = vmatprep.subr.mxu0 0.0
      %9408 = vmatpush1.msra.mxu0 0.0
      %9409 = vmatprep.subr.mxu0 0.0
      %9410 = vmatpush1.msra.mxu0 0.0
      %9411 = vmatprep.subr.mxu0 0.0
      %9412 = vmatpush1.msra.mxu0 0.0
      %9413 = vmatprep.subr.mxu0 0.0
      %9414 = vmatpush1.msra.mxu0 0.0
      %9415 = vmatprep.subr.mxu0 0.0
      %9416 = vmatpush1.msra.mxu0 0.0
      %9417 = vmatprep.subr.mxu0 0.0
      %9418 = vmatpush1.msra.mxu0 0.0
      %9419 = vmatprep.subr.mxu0 0.0
      %9420 = vmatpush1.msra.mxu0 0.0
      %9421 = vmatprep.subr.mxu0 0.0
      %9422 = vmatpush1.msra.mxu0 0.0
      %9423 = vmatprep.subr.mxu0 0.0
      %9424 = vmatpush1.msra.mxu0 0.0
      %9425 = vmatprep.subr.mxu0 0.0
      %9426 = vmatpush1.msra.mxu0 0.0
      %9427 = vmatprep.mubr.f32.mxu0 0.0
      %v9428 = vand.u32 %v9128, 4294901760
      %v9429 = vsub.f32 %v9128, %v9428
      %9430 = vmatmul.mubr.f32.gmra.mrb[0].mxu0 %v9429
      %v9431 = vpop.f32.mrb[0].mxu0
      %v9432 = vadd.f32 %v9334, %v9431
      %v9433 = vpop.f32.mrb[0].mxu0
      %9434 = vmatprep.mubr.f32.mxu0 0.0
      %v9435 = vand.u32 %v9131, 4294901760
      %v9436 = vsub.f32 %v9131, %v9435
      %9437 = vmatmul.mubr.f32.gmra.mrb[0].mxu0 %v9436
      %v9438 = vpop.f32.mrb[0].mxu0
      %v9439 = vadd.f32 %v9340, %v9438
      %v9440 = vpop.f32.mrb[0].mxu0
      %9441 = vmatprep.mubr.f32.mxu0 0.0
      %v9442 = vand.u32 %v9134, 4294901760
      %v9443 = vsub.f32 %v9134, %v9442
      %9444 = vmatmul.mubr.f32.gmra.mrb[0].mxu0 %v9443
      %v9445 = vpop.f32.mrb[0].mxu0
      %v9446 = vadd.f32 %v9346, %v9445
      %v9447 = vpop.f32.mrb[0].mxu0
      %9448 = vmatprep.mubr.f32.mxu0 0.0
      %v9449 = vand.u32 %v9137, 4294901760
      %v9450 = vsub.f32 %v9137, %v9449
      %9451 = vmatmul.mubr.f32.gmra.mrb[0].mxu0 %v9450
      %v9452 = vpop.f32.mrb[0].mxu0
      %v9453 = vadd.f32 %v9352, %v9452
      %v9454 = vpop.f32.mrb[0].mxu0
      %9455 = vmatprep.mubr.f32.mxu0 0.0
      %v9456 = vand.u32 %v9140, 4294901760
      %v9457 = vsub.f32 %v9140, %v9456
      %9458 = vmatmul.mubr.f32.gmra.mrb[0].mxu0 %v9457
      %v9459 = vpop.f32.mrb[0].mxu0
      %v9460 = vadd.f32 %v9358, %v9459
      %v9461 = vpop.f32.mrb[0].mxu0
      %9462 = vdwg.mxu0
      %9463 = vmatprep.subr.mxu0 0.0
      %v9464 = vand.u32 %v9143, 4294901760
      %9465 = vmatpush1.msra.mxu0 %v9464
      %9466 = vmatprep.subr.mxu0 0.0
      %9467 = vmatpush1.msra.mxu0 0.0
      %9468 = vmatprep.subr.mxu0 0.0
      %9469 = vmatpush1.msra.mxu0 0.0
      %9470 = vmatprep.subr.mxu0 0.0
      %9471 = vmatpush1.msra.mxu0 0.0
      %9472 = vmatprep.subr.mxu0 0.0
      %9473 = vmatpush1.msra.mxu0 0.0
      %9474 = vmatprep.subr.mxu0 0.0
      %9475 = vmatpush1.msra.mxu0 0.0
      %9476 = vmatprep.subr.mxu0 0.0
      %9477 = vmatpush1.msra.mxu0 0.0
      %9478 = vmatprep.subr.mxu0 0.0
      %9479 = vmatpush1.msra.mxu0 0.0
      %9480 = vmatprep.subr.mxu0 0.0
      %9481 = vmatpush1.msra.mxu0 0.0
      %9482 = vmatprep.subr.mxu0 0.0
      %9483 = vmatpush1.msra.mxu0 0.0
      %9484 = vmatprep.subr.mxu0 0.0
      %9485 = vmatpush1.msra.mxu0 0.0
      %9486 = vmatprep.subr.mxu0 0.0
      %9487 = vmatpush1.msra.mxu0 0.0
      %9488 = vmatprep.subr.mxu0 0.0
      %9489 = vmatpush1.msra.mxu0 0.0
      %9490 = vmatprep.subr.mxu0 0.0
      %9491 = vmatpush1.msra.mxu0 0.0
      %9492 = vmatprep.subr.mxu0 0.0
      %9493 = vmatpush1.msra.mxu0 0.0
      %9494 = vmatprep.subr.mxu0 0.0
      %9495 = vmatpush1.msra.mxu0 0.0
      %9496 = vmatprep.subr.mxu0 0.0
      %9497 = vmatpush1.msra.mxu0 0.0
      %9498 = vmatprep.subr.mxu0 0.0
      %9499 = vmatpush1.msra.mxu0 0.0
      %9500 = vmatprep.subr.mxu0 0.0
      %9501 = vmatpush1.msra.mxu0 0.0
      %9502 = vmatprep.subr.mxu0 0.0
      %9503 = vmatpush1.msra.mxu0 0.0
      %9504 = vmatprep.subr.mxu0 0.0
      %9505 = vmatpush1.msra.mxu0 0.0
      %9506 = vmatprep.subr.mxu0 0.0
      %9507 = vmatpush1.msra.mxu0 0.0
      %9508 = vmatprep.subr.mxu0 0.0
      %9509 = vmatpush1.msra.mxu0 0.0
      %9510 = vmatprep.subr.mxu0 0.0
      %9511 = vmatpush1.msra.mxu0 0.0
      %9512 = vmatprep.subr.mxu0 0.0
      %9513 = vmatpush1.msra.mxu0 0.0
      %9514 = vmatprep.subr.mxu0 0.0
      %9515 = vmatpush1.msra.mxu0 0.0
      %9516 = vmatprep.subr.mxu0 0.0
      %9517 = vmatpush1.msra.mxu0 0.0
      %9518 = vmatprep.subr.mxu0 0.0
      %9519 = vmatpush1.msra.mxu0 0.0
      %9520 = vmatprep.subr.mxu0 0.0
      %9521 = vmatpush1.msra.mxu0 0.0
      %9522 = vmatprep.subr.mxu0 0.0
      %9523 = vmatpush1.msra.mxu0 0.0
      %9524 = vmatprep.subr.mxu0 0.0
      %9525 = vmatpush1.msra.mxu0 0.0
      %9526 = vmatprep.subr.mxu0 0.0
      %9527 = vmatpush1.msra.mxu0 0.0
      %9528 = vmatprep.mubr.f32.mxu0 0.0
      %v9529 = vand.u32 %v9128, 4294901760
      %v9530 = vsub.f32 %v9128, %v9529
      %v9531 = vand.u32 %v9530, 4294901760
      %9532 = vmatmul.mubr.f32.gmra.mrb[0].mxu0 %v9531
      %v9533 = vpop.f32.mrb[0].mxu0
      %v9534 = vadd.f32 %v9432, %v9533
      %v9535 = vpop.f32.mrb[0].mxu0
      %9536 = vmatprep.mubr.f32.mxu0 0.0
      %v9537 = vand.u32 %v9131, 4294901760
      %v9538 = vsub.f32 %v9131, %v9537
      %v9539 = vand.u32 %v9538, 4294901760
      %9540 = vmatmul.mubr.f32.gmra.mrb[0].mxu0 %v9539
      %v9541 = vpop.f32.mrb[0].mxu0
      %v9542 = vadd.f32 %v9439, %v9541
      %v9543 = vpop.f32.mrb[0].mxu0
      %9544 = vmatprep.mubr.f32.mxu0 0.0
      %v9545 = vand.u32 %v9134, 4294901760
      %v9546 = vsub.f32 %v9134, %v9545
      %v9547 = vand.u32 %v9546, 4294901760
      %9548 = vmatmul.mubr.f32.gmra.mrb[0].mxu0 %v9547
      %v9549 = vpop.f32.mrb[0].mxu0
      %v9550 = vadd.f32 %v9446, %v9549
      %v9551 = vpop.f32.mrb[0].mxu0
      %9552 = vmatprep.mubr.f32.mxu0 0.0
      %v9553 = vand.u32 %v9137, 4294901760
      %v9554 = vsub.f32 %v9137, %v9553
      %v9555 = vand.u32 %v9554, 4294901760
      %9556 = vmatmul.mubr.f32.gmra.mrb[0].mxu0 %v9555
      %v9557 = vpop.f32.mrb[0].mxu0
      %v9558 = vadd.f32 %v9453, %v9557
      %v9559 = vpop.f32.mrb[0].mxu0
      %9560 = vmatprep.mubr.f32.mxu0 0.0
      %v9561 = vand.u32 %v9140, 4294901760
      %v9562 = vsub.f32 %v9140, %v9561
      %v9563 = vand.u32 %v9562, 4294901760
      %9564 = vmatmul.mubr.f32.gmra.mrb[0].mxu0 %v9563
      %v9565 = vpop.f32.mrb[0].mxu0
      %v9566 = vadd.f32 %v9460, %v9565
      %v9567 = vpop.f32.mrb[0].mxu0
      %9568 = vdwg.mxu0
      %9569 = vmatprep.subr.mxu0 0.0
      %v9570 = vand.u32 %v9143, 4294901760
      %v9571 = vsub.f32 %v9143, %v9570
      %v9572 = vand.u32 %v9571, 4294901760
      %9573 = vmatpush1.msra.mxu0 %v9572
      %9574 = vmatprep.subr.mxu0 0.0
      %9575 = vmatpush1.msra.mxu0 0.0
      %9576 = vmatprep.subr.mxu0 0.0
      %9577 = vmatpush1.msra.mxu0 0.0
      %9578 = vmatprep.subr.mxu0 0.0
      %9579 = vmatpush1.msra.mxu0 0.0
      %9580 = vmatprep.subr.mxu0 0.0
      %9581 = vmatpush1.msra.mxu0 0.0
      %9582 = vmatprep.subr.mxu0 0.0
      %9583 = vmatpush1.msra.mxu0 0.0
      %9584 = vmatprep.subr.mxu0 0.0
      %9585 = vmatpush1.msra.mxu0 0.0
      %9586 = vmatprep.subr.mxu0 0.0
      %9587 = vmatpush1.msra.mxu0 0.0
      %9588 = vmatprep.subr.mxu0 0.0
      %9589 = vmatpush1.msra.mxu0 0.0
      %9590 = vmatprep.subr.mxu0 0.0
      %9591 = vmatpush1.msra.mxu0 0.0
      %9592 = vmatprep.subr.mxu0 0.0
      %9593 = vmatpush1.msra.mxu0 0.0
      %9594 = vmatprep.subr.mxu0 0.0
      %9595 = vmatpush1.msra.mxu0 0.0
      %9596 = vmatprep.subr.mxu0 0.0
      %9597 = vmatpush1.msra.mxu0 0.0
      %9598 = vmatprep.subr.mxu0 0.0
      %9599 = vmatpush1.msra.mxu0 0.0
      %9600 = vmatprep.subr.mxu0 0.0
      %9601 = vmatpush1.msra.mxu0 0.0
      %9602 = vmatprep.subr.mxu0 0.0
      %9603 = vmatpush1.msra.mxu0 0.0
      %9604 = vmatprep.subr.mxu0 0.0
      %9605 = vmatpush1.msra.mxu0 0.0
      %9606 = vmatprep.subr.mxu0 0.0
      %9607 = vmatpush1.msra.mxu0 0.0
      %9608 = vmatprep.subr.mxu0 0.0
      %9609 = vmatpush1.msra.mxu0 0.0
      %9610 = vmatprep.subr.mxu0 0.0
      %9611 = vmatpush1.msra.mxu0 0.0
      %9612 = vmatprep.subr.mxu0 0.0
      %9613 = vmatpush1.msra.mxu0 0.0
      %9614 = vmatprep.subr.mxu0 0.0
      %9615 = vmatpush1.msra.mxu0 0.0
      %9616 = vmatprep.subr.mxu0 0.0
      %9617 = vmatpush1.msra.mxu0 0.0
      %9618 = vmatprep.subr.mxu0 0.0
      %9619 = vmatpush1.msra.mxu0 0.0
      %9620 = vmatprep.subr.mxu0 0.0
      %9621 = vmatpush1.msra.mxu0 0.0
      %9622 = vmatprep.subr.mxu0 0.0
      %9623 = vmatpush1.msra.mxu0 0.0
      %9624 = vmatprep.subr.mxu0 0.0
      %9625 = vmatpush1.msra.mxu0 0.0
      %9626 = vmatprep.subr.mxu0 0.0
      %9627 = vmatpush1.msra.mxu0 0.0
      %9628 = vmatprep.subr.mxu0 0.0
      %9629 = vmatpush1.msra.mxu0 0.0
      %9630 = vmatprep.subr.mxu0 0.0
      %9631 = vmatpush1.msra.mxu0 0.0
      %9632 = vmatprep.subr.mxu0 0.0
      %9633 = vmatpush1.msra.mxu0 0.0
      %9634 = vmatprep.subr.mxu0 0.0
      %9635 = vmatpush1.msra.mxu0 0.0
      %9636 = vmatprep.mubr.f32.mxu0 0.0
      %v9637 = vand.u32 %v9128, 4294901760
      %9638 = vmatmul.mubr.f32.gmra.mrb[0].mxu0 %v9637
      %v9639 = vpop.f32.mrb[0].mxu0
      %v9640 = vadd.f32 %v9534, %v9639
      %v9641 = vpop.f32.mrb[0].mxu0
      %9642 = vmatprep.mubr.f32.mxu0 0.0
      %v9643 = vand.u32 %v9131, 4294901760
      %9644 = vmatmul.mubr.f32.gmra.mrb[0].mxu0 %v9643
      %v9645 = vpop.f32.mrb[0].mxu0
      %v9646 = vadd.f32 %v9542, %v9645
      %v9647 = vpop.f32.mrb[0].mxu0
      %9648 = vmatprep.mubr.f32.mxu0 0.0
      %v9649 = vand.u32 %v9134, 4294901760
      %9650 = vmatmul.mubr.f32.gmra.mrb[0].mxu0 %v9649
      %v9651 = vpop.f32.mrb[0].mxu0
      %v9652 = vadd.f32 %v9550, %v9651
      %v9653 = vpop.f32.mrb[0].mxu0
      %9654 = vmatprep.mubr.f32.mxu0 0.0
      %v9655 = vand.u32 %v9137, 4294901760
      %9656 = vmatmul.mubr.f32.gmra.mrb[0].mxu0 %v9655
      %v9657 = vpop.f32.mrb[0].mxu0
      %v9658 = vadd.f32 %v9558, %v9657
      %v9659 = vpop.f32.mrb[0].mxu0
      %9660 = vmatprep.mubr.f32.mxu0 0.0
      %v9661 = vand.u32 %v9140, 4294901760
      %9662 = vmatmul.mubr.f32.gmra.mrb[0].mxu0 %v9661
      %v9663 = vpop.f32.mrb[0].mxu0
      %v9664 = vadd.f32 %v9566, %v9663
      %v9665 = vpop.f32.mrb[0].mxu0
      %9666 = vdwg.mxu0
      %9667 = vmatprep.subr.mxu0 0.0
      %v9668 = vand.u32 %v9143, 4294901760
      %9669 = vmatpush1.msra.mxu0 %v9668
      %9670 = vmatprep.subr.mxu0 0.0
      %9671 = vmatpush1.msra.mxu0 0.0
      %9672 = vmatprep.subr.mxu0 0.0
      %9673 = vmatpush1.msra.mxu0 0.0
      %9674 = vmatprep.subr.mxu0 0.0
      %9675 = vmatpush1.msra.mxu0 0.0
      %9676 = vmatprep.subr.mxu0 0.0
      %9677 = vmatpush1.msra.mxu0 0.0
      %9678 = vmatprep.subr.mxu0 0.0
      %9679 = vmatpush1.msra.mxu0 0.0
      %9680 = vmatprep.subr.mxu0 0.0
      %9681 = vmatpush1.msra.mxu0 0.0
      %9682 = vmatprep.subr.mxu0 0.0
      %9683 = vmatpush1.msra.mxu0 0.0
      %9684 = vmatprep.subr.mxu0 0.0
      %9685 = vmatpush1.msra.mxu0 0.0
      %9686 = vmatprep.subr.mxu0 0.0
      %9687 = vmatpush1.msra.mxu0 0.0
      %9688 = vmatprep.subr.mxu0 0.0
      %9689 = vmatpush1.msra.mxu0 0.0
      %9690 = vmatprep.subr.mxu0 0.0
      %9691 = vmatpush1.msra.mxu0 0.0
      %9692 = vmatprep.subr.mxu0 0.0
      %9693 = vmatpush1.msra.mxu0 0.0
      %9694 = vmatprep.subr.mxu0 0.0
      %9695 = vmatpush1.msra.mxu0 0.0
      %9696 = vmatprep.subr.mxu0 0.0
      %9697 = vmatpush1.msra.mxu0 0.0
      %9698 = vmatprep.subr.mxu0 0.0
      %9699 = vmatpush1.msra.mxu0 0.0
      %9700 = vmatprep.subr.mxu0 0.0
      %9701 = vmatpush1.msra.mxu0 0.0
      %9702 = vmatprep.subr.mxu0 0.0
      %9703 = vmatpush1.msra.mxu0 0.0
      %9704 = vmatprep.subr.mxu0 0.0
      %9705 = vmatpush1.msra.mxu0 0.0
      %9706 = vmatprep.subr.mxu0 0.0
      %9707 = vmatpush1.msra.mxu0 0.0
      %9708 = vmatprep.subr.mxu0 0.0
      %9709 = vmatpush1.msra.mxu0 0.0
      %9710 = vmatprep.subr.mxu0 0.0
      %9711 = vmatpush1.msra.mxu0 0.0
      %9712 = vmatprep.subr.mxu0 0.0
      %9713 = vmatpush1.msra.mxu0 0.0
      %9714 = vmatprep.subr.mxu0 0.0
      %9715 = vmatpush1.msra.mxu0 0.0
      %9716 = vmatprep.subr.mxu0 0.0
      %9717 = vmatpush1.msra.mxu0 0.0
      %9718 = vmatprep.subr.mxu0 0.0
      %9719 = vmatpush1.msra.mxu0 0.0
      %9720 = vmatprep.subr.mxu0 0.0
      %9721 = vmatpush1.msra.mxu0 0.0
      %9722 = vmatprep.subr.mxu0 0.0
      %9723 = vmatpush1.msra.mxu0 0.0
      %9724 = vmatprep.subr.mxu0 0.0
      %9725 = vmatpush1.msra.mxu0 0.0
      %9726 = vmatprep.subr.mxu0 0.0
      %9727 = vmatpush1.msra.mxu0 0.0
      %9728 = vmatprep.subr.mxu0 0.0
      %9729 = vmatpush1.msra.mxu0 0.0
      %9730 = vmatprep.subr.mxu0 0.0
      %9731 = vmatpush1.msra.mxu0 0.0
      %9732 = vmatprep.mubr.f32.mxu0 0.0
      %v9733 = vand.u32 %v9128, 4294901760
      %9734 = vmatmul.mubr.f32.gmra.mrb[0].mxu0 %v9733
      %v9735 = vpop.f32.mrb[0].mxu0
      %v9736 = vadd.f32 %v9640, %v9735
      %v9737 = vpop.f32.mrb[0].mxu0
      %9738 = vmatprep.mubr.f32.mxu0 0.0
      %v9739 = vand.u32 %v9131, 4294901760
      %9740 = vmatmul.mubr.f32.gmra.mrb[0].mxu0 %v9739
      %v9741 = vpop.f32.mrb[0].mxu0
      %v9742 = vadd.f32 %v9646, %v9741
      %v9743 = vpop.f32.mrb[0].mxu0
      %9744 = vmatprep.mubr.f32.mxu0 0.0
      %v9745 = vand.u32 %v9134, 4294901760
      %9746 = vmatmul.mubr.f32.gmra.mrb[0].mxu0 %v9745
      %v9747 = vpop.f32.mrb[0].mxu0
      %v9748 = vadd.f32 %v9652, %v9747
      %v9749 = vpop.f32.mrb[0].mxu0
      %9750 = vmatprep.mubr.f32.mxu0 0.0
      %v9751 = vand.u32 %v9137, 4294901760
      %9752 = vmatmul.mubr.f32.gmra.mrb[0].mxu0 %v9751
      %v9753 = vpop.f32.mrb[0].mxu0
      %v9754 = vadd.f32 %v9658, %v9753
      %v9755 = vpop.f32.mrb[0].mxu0
      %9756 = vmatprep.mubr.f32.mxu0 0.0
      %v9757 = vand.u32 %v9140, 4294901760
      %9758 = vmatmul.mubr.f32.gmra.mrb[0].mxu0 %v9757
      %v9759 = vpop.f32.mrb[0].mxu0
      %v9760 = vadd.f32 %v9664, %v9759
      %v9761 = vpop.f32.mrb[0].mxu0
      %9762 = vdwg.mxu0
      %v9763 = vadd.f32 %v7645, %v9736
      %v9764 = vadd.f32 %v7646, %v9742
      %v9765 = vadd.f32 %v7647, %v9748
      %v9766 = vadd.f32 %v7648, %v9754
      %v9767 = vadd.f32 %v7649, %v9760
      %v9768 = vld [vmem:[%s596] sm:$0x1]
      %v9770 = vlaneseq
      %v9771 = vshrl.u32 %v9770, 7
      %v9772 = vsub.s32 0, %v9771
      %v9773 = vrot.slane %v9768, %v9772
      %v9775 = vadd.f32 %v9763, %v9773
      %v9776 = vadd.f32 %v9764, %v9773
      %v9777 = vadd.f32 %v9765, %v9773
      %v9778 = vadd.f32 %v9766, %v9773
      %v9779 = vadd.f32 %v9767, %v9773
      %v9780 = vadd.f32 %v641, %v9775
      %v9781 = vadd.f32 %v642, %v9776
      %v9782 = vadd.f32 %v643, %v9777
      %v9783 = vadd.f32 %v644, %v9778
      %v9784 = vadd.f32 %v645, %v9779
      %v9785 = vld [vmem:[%s615] sm:$0x1]
      %v9786 = vld [vmem:[%s618] sm:$0x1]
      %v9787 = vsel %vm655, %v9780, 0.0
      %9788 = vadd.xlane.f32.xlu0 %v9787
      %v9789 = vpop.xlane.xlu0 %9788
      %v9790 = vsel %vm655, %v9781, 0.0
      %9791 = vadd.xlane.f32.xlu0 %v9790
      %v9792 = vpop.xlane.xlu0 %9791
      %v9793 = vsel %vm655, %v9782, 0.0
      %9794 = vadd.xlane.f32.xlu0 %v9793
      %v9795 = vpop.xlane.xlu0 %9794
      %v9796 = vsel %vm655, %v9783, 0.0
      %9797 = vadd.xlane.f32.xlu0 %v9796
      %v9798 = vpop.xlane.xlu0 %9797
      %vm9799 = vcmask 125952
      %v9800 = vsel %vm9799, %v9784, 0.0
      %9801 = vadd.xlane.f32.xlu0 %v9800
      %v9802 = vpop.xlane.xlu0 %9801
      %v9803 = vrcp.pop 16.0
      %v9804 = vmul.f32 %v9789, %v9803
      %v9805 = vmul.f32 %v9792, %v9803
      %v9806 = vmul.f32 %v9795, %v9803
      %v9807 = vmul.f32 %v9798, %v9803
      %v9808 = vmul.f32 %v9802, %v9803
      %v9809 = vsub.f32 %v9780, %v9804
      %v9810 = vsub.f32 %v9781, %v9805
      %v9811 = vsub.f32 %v9782, %v9806
      %v9812 = vsub.f32 %v9783, %v9807
      %v9813 = vsub.f32 %v9784, %v9808
      %v9814 = vmul.f32 %v9809, %v9809
      %v9815 = vmul.f32 %v9810, %v9810
      %v9816 = vmul.f32 %v9811, %v9811
      %v9817 = vmul.f32 %v9812, %v9812
      %v9818 = vmul.f32 %v9813, %v9813
      %v9819 = vsel %vm655, %v9814, 0.0
      %9820 = vadd.xlane.f32.xlu0 %v9819
      %v9821 = vpop.xlane.xlu0 %9820
      %v9822 = vsel %vm655, %v9815, 0.0
      %9823 = vadd.xlane.f32.xlu0 %v9822
      %v9824 = vpop.xlane.xlu0 %9823
      %v9825 = vsel %vm655, %v9816, 0.0
      %9826 = vadd.xlane.f32.xlu0 %v9825
      %v9827 = vpop.xlane.xlu0 %9826
      %v9828 = vsel %vm655, %v9817, 0.0
      %9829 = vadd.xlane.f32.xlu0 %v9828
      %v9830 = vpop.xlane.xlu0 %9829
      %v9831 = vsel %vm9799, %v9818, 0.0
      %9832 = vadd.xlane.f32.xlu0 %v9831
      %v9833 = vpop.xlane.xlu0 %9832
      %v9834 = vmul.f32 %v9821, %v9803
      %v9835 = vmul.f32 %v9824, %v9803
      %v9836 = vmul.f32 %v9827, %v9803
      %v9837 = vmul.f32 %v9830, %v9803
      %v9838 = vmul.f32 %v9833, %v9803
      %v9839 = vadd.f32 %v9834, 1e-05
      %v9840 = vadd.f32 %v9835, 1e-05
      %v9841 = vadd.f32 %v9836, 1e-05
      %v9842 = vadd.f32 %v9837, 1e-05
      %v9843 = vadd.f32 %v9838, 1e-05
      %v9844 = vrsqrt.pop %v9839
      %v9845 = vrsqrt.pop %v9840
      %v9846 = vrsqrt.pop %v9841
      %v9847 = vrsqrt.pop %v9842
      %v9848 = vrsqrt.pop %v9843
      %v9849 = vmul.f32 %v9809, %v9844
      %v9850 = vmul.f32 %v9810, %v9845
      %v9851 = vmul.f32 %v9811, %v9846
      %v9852 = vmul.f32 %v9812, %v9847
      %v9853 = vmul.f32 %v9813, %v9848
      %v9855 = vlaneseq
      %v9856 = vshrl.u32 %v9855, 7
      %v9857 = vsub.s32 0, %v9856
      %v9858 = vrot.slane %v9785, %v9857
      %v9860 = vmul.f32 %v9849, %v9858
      %v9861 = vmul.f32 %v9850, %v9858
      %v9862 = vmul.f32 %v9851, %v9858
      %v9863 = vmul.f32 %v9852, %v9858
      %v9864 = vmul.f32 %v9853, %v9858
      %v9866 = vlaneseq
      %v9867 = vshrl.u32 %v9866, 7
      %v9868 = vsub.s32 0, %v9867
      %v9869 = vrot.slane %v9786, %v9868
      %v9871 = vadd.f32 %v9860, %v9869
      %v9872 = vadd.f32 %v9861, %v9869
      %v9873 = vadd.f32 %v9862, %v9869
      %v9874 = vadd.f32 %v9863, %v9869
      %v9875 = vadd.f32 %v9864, %v9869
      %v9876 = vld [vmem:[%s601] sm:$0xff]
      %v9877 = vld [vmem:[%s601 + $0x8] sm:$0xff]
      %v9878 = vld [vmem:[%s604] sm:$0x1]
      %v9880 = vlaneseq
      %v9881 = vshrl.u32 %v9880, 7
      %v9882 = vsub.s32 0, %v9881
      %v9883 = vrot.slane %v9878, %v9882
      %v9886 = vsel %vm655, %v9871, 0
      %v9889 = vsel %vm655, %v9872, 0
      %v9892 = vsel %vm655, %v9873, 0
      %v9895 = vsel %vm655, %v9874, 0
      %v9898 = vsel %vm655, %v9875, 0
      %9900 = vmatprep.subr.mxu0 0.0
      %v9901 = vand.u32 %v9876, 4294901760
      %9902 = vmatpush1.msra.mxu0 %v9901
      %9903 = vmatprep.subr.mxu0 0.0
      %v9904 = vand.u32 %v9877, 4294901760
      %9905 = vmatpush1.msra.mxu0 %v9904
      %9906 = vmatprep.subr.mxu0 0.0
      %9907 = vmatpush1.msra.mxu0 0.0
      %9908 = vmatprep.subr.mxu0 0.0
      %9909 = vmatpush1.msra.mxu0 0.0
      %9910 = vmatprep.subr.mxu0 0.0
      %9911 = vmatpush1.msra.mxu0 0.0
      %9912 = vmatprep.subr.mxu0 0.0
      %9913 = vmatpush1.msra.mxu0 0.0
      %9914 = vmatprep.subr.mxu0 0.0
      %9915 = vmatpush1.msra.mxu0 0.0
      %9916 = vmatprep.subr.mxu0 0.0
      %9917 = vmatpush1.msra.mxu0 0.0
      %9918 = vmatprep.subr.mxu0 0.0
      %9919 = vmatpush1.msra.mxu0 0.0
      %9920 = vmatprep.subr.mxu0 0.0
      %9921 = vmatpush1.msra.mxu0 0.0
      %9922 = vmatprep.subr.mxu0 0.0
      %9923 = vmatpush1.msra.mxu0 0.0
      %9924 = vmatprep.subr.mxu0 0.0
      %9925 = vmatpush1.msra.mxu0 0.0
      %9926 = vmatprep.subr.mxu0 0.0
      %9927 = vmatpush1.msra.mxu0 0.0
      %9928 = vmatprep.subr.mxu0 0.0
      %9929 = vmatpush1.msra.mxu0 0.0
      %9930 = vmatprep.subr.mxu0 0.0
      %9931 = vmatpush1.msra.mxu0 0.0
      %9932 = vmatprep.subr.mxu0 0.0
      %9933 = vmatpush1.msra.mxu0 0.0
      %9934 = vmatprep.subr.mxu0 0.0
      %9935 = vmatpush1.msra.mxu0 0.0
      %9936 = vmatprep.subr.mxu0 0.0
      %9937 = vmatpush1.msra.mxu0 0.0
      %9938 = vmatprep.subr.mxu0 0.0
      %9939 = vmatpush1.msra.mxu0 0.0
      %9940 = vmatprep.subr.mxu0 0.0
      %9941 = vmatpush1.msra.mxu0 0.0
      %9942 = vmatprep.subr.mxu0 0.0
      %9943 = vmatpush1.msra.mxu0 0.0
      %9944 = vmatprep.subr.mxu0 0.0
      %9945 = vmatpush1.msra.mxu0 0.0
      %9946 = vmatprep.subr.mxu0 0.0
      %9947 = vmatpush1.msra.mxu0 0.0
      %9948 = vmatprep.subr.mxu0 0.0
      %9949 = vmatpush1.msra.mxu0 0.0
      %9950 = vmatprep.subr.mxu0 0.0
      %9951 = vmatpush1.msra.mxu0 0.0
      %9952 = vmatprep.subr.mxu0 0.0
      %9953 = vmatpush1.msra.mxu0 0.0
      %9954 = vmatprep.subr.mxu0 0.0
      %9955 = vmatpush1.msra.mxu0 0.0
      %9956 = vmatprep.subr.mxu0 0.0
      %9957 = vmatpush1.msra.mxu0 0.0
      %9958 = vmatprep.subr.mxu0 0.0
      %9959 = vmatpush1.msra.mxu0 0.0
      %9960 = vmatprep.subr.mxu0 0.0
      %9961 = vmatpush1.msra.mxu0 0.0
      %9962 = vmatprep.subr.mxu0 0.0
      %9963 = vmatpush1.msra.mxu0 0.0
      %9964 = vmatprep.subr.mxu0 0.0
      %9965 = vmatpush1.msra.mxu0 0.0
      %9966 = vmatprep.mubr.f32.mxu0 0.0
      %v9967 = vand.u32 %v9886, 4294901760
      %v9968 = vsub.f32 %v9886, %v9967
      %v9969 = vand.u32 %v9968, 4294901760
      %v9970 = vsub.f32 %v9968, %v9969
      %v9971 = vand.u32 %v9970, 4294901760
      %9972 = vmatmul.mubr.f32.gmra.mrb[0].mxu0 %v9971
      %v9973 = vpop.f32.mrb[0].mxu0
      %v9974 = vadd.f32 %v9883, %v9973
      %v9975 = vpop.f32.mrb[0].mxu0
      %9976 = vmatprep.mubr.f32.mxu0 0.0
      %v9977 = vand.u32 %v9889, 4294901760
      %v9978 = vsub.f32 %v9889, %v9977
      %v9979 = vand.u32 %v9978, 4294901760
      %v9980 = vsub.f32 %v9978, %v9979
      %v9981 = vand.u32 %v9980, 4294901760
      %9982 = vmatmul.mubr.f32.gmra.mrb[0].mxu0 %v9981
      %v9983 = vpop.f32.mrb[0].mxu0
      %v9984 = vadd.f32 %v9883, %v9983
      %v9985 = vpop.f32.mrb[0].mxu0
      %9986 = vmatprep.mubr.f32.mxu0 0.0
      %v9987 = vand.u32 %v9892, 4294901760
      %v9988 = vsub.f32 %v9892, %v9987
      %v9989 = vand.u32 %v9988, 4294901760
      %v9990 = vsub.f32 %v9988, %v9989
      %v9991 = vand.u32 %v9990, 4294901760
      %9992 = vmatmul.mubr.f32.gmra.mrb[0].mxu0 %v9991
      %v9993 = vpop.f32.mrb[0].mxu0
      %v9994 = vadd.f32 %v9883, %v9993
      %v9995 = vpop.f32.mrb[0].mxu0
      %9996 = vmatprep.mubr.f32.mxu0 0.0
      %v9997 = vand.u32 %v9895, 4294901760
      %v9998 = vsub.f32 %v9895, %v9997
      %v9999 = vand.u32 %v9998, 4294901760
      %v10000 = vsub.f32 %v9998, %v9999
      %v10001 = vand.u32 %v10000, 4294901760
      %10002 = vmatmul.mubr.f32.gmra.mrb[0].mxu0 %v10001
      %v10003 = vpop.f32.mrb[0].mxu0
      %v10004 = vadd.f32 %v9883, %v10003
      %v10005 = vpop.f32.mrb[0].mxu0
      %10006 = vmatprep.mubr.f32.mxu0 0.0
      %v10007 = vand.u32 %v9898, 4294901760
      %v10008 = vsub.f32 %v9898, %v10007
      %v10009 = vand.u32 %v10008, 4294901760
      %v10010 = vsub.f32 %v10008, %v10009
      %v10011 = vand.u32 %v10010, 4294901760
      %10012 = vmatmul.mubr.f32.gmra.mrb[0].mxu0 %v10011
      %v10013 = vpop.f32.mrb[0].mxu0
      %v10014 = vadd.f32 %v9883, %v10013
      %v10015 = vpop.f32.mrb[0].mxu0
      %10016 = vdwg.mxu0
      %10017 = vmatprep.subr.mxu0 0.0
      %v10018 = vand.u32 %v9876, 4294901760
      %v10019 = vsub.f32 %v9876, %v10018
      %v10020 = vand.u32 %v10019, 4294901760
      %v10021 = vsub.f32 %v10019, %v10020
      %v10022 = vand.u32 %v10021, 4294901760
      %10023 = vmatpush1.msra.mxu0 %v10022
      %10024 = vmatprep.subr.mxu0 0.0
      %v10025 = vand.u32 %v9877, 4294901760
      %v10026 = vsub.f32 %v9877, %v10025
      %v10027 = vand.u32 %v10026, 4294901760
      %v10028 = vsub.f32 %v10026, %v10027
      %v10029 = vand.u32 %v10028, 4294901760
      %10030 = vmatpush1.msra.mxu0 %v10029
      %10031 = vmatprep.subr.mxu0 0.0
      %10032 = vmatpush1.msra.mxu0 0.0
      %10033 = vmatprep.subr.mxu0 0.0
      %10034 = vmatpush1.msra.mxu0 0.0
      %10035 = vmatprep.subr.mxu0 0.0
      %10036 = vmatpush1.msra.mxu0 0.0
      %10037 = vmatprep.subr.mxu0 0.0
      %10038 = vmatpush1.msra.mxu0 0.0
      %10039 = vmatprep.subr.mxu0 0.0
      %10040 = vmatpush1.msra.mxu0 0.0
      %10041 = vmatprep.subr.mxu0 0.0
      %10042 = vmatpush1.msra.mxu0 0.0
      %10043 = vmatprep.subr.mxu0 0.0
      %10044 = vmatpush1.msra.mxu0 0.0
      %10045 = vmatprep.subr.mxu0 0.0
      %10046 = vmatpush1.msra.mxu0 0.0
      %10047 = vmatprep.subr.mxu0 0.0
      %10048 = vmatpush1.msra.mxu0 0.0
      %10049 = vmatprep.subr.mxu0 0.0
      %10050 = vmatpush1.msra.mxu0 0.0
      %10051 = vmatprep.subr.mxu0 0.0
      %10052 = vmatpush1.msra.mxu0 0.0
      %10053 = vmatprep.subr.mxu0 0.0
      %10054 = vmatpush1.msra.mxu0 0.0
      %10055 = vmatprep.subr.mxu0 0.0
      %10056 = vmatpush1.msra.mxu0 0.0
      %10057 = vmatprep.subr.mxu0 0.0
      %10058 = vmatpush1.msra.mxu0 0.0
      %10059 = vmatprep.subr.mxu0 0.0
      %10060 = vmatpush1.msra.mxu0 0.0
      %10061 = vmatprep.subr.mxu0 0.0
      %10062 = vmatpush1.msra.mxu0 0.0
      %10063 = vmatprep.subr.mxu0 0.0
      %10064 = vmatpush1.msra.mxu0 0.0
      %10065 = vmatprep.subr.mxu0 0.0
      %10066 = vmatpush1.msra.mxu0 0.0
      %10067 = vmatprep.subr.mxu0 0.0
      %10068 = vmatpush1.msra.mxu0 0.0
      %10069 = vmatprep.subr.mxu0 0.0
      %10070 = vmatpush1.msra.mxu0 0.0
      %10071 = vmatprep.subr.mxu0 0.0
      %10072 = vmatpush1.msra.mxu0 0.0
      %10073 = vmatprep.subr.mxu0 0.0
      %10074 = vmatpush1.msra.mxu0 0.0
      %10075 = vmatprep.subr.mxu0 0.0
      %10076 = vmatpush1.msra.mxu0 0.0
      %10077 = vmatprep.subr.mxu0 0.0
      %10078 = vmatpush1.msra.mxu0 0.0
      %10079 = vmatprep.subr.mxu0 0.0
      %10080 = vmatpush1.msra.mxu0 0.0
      %10081 = vmatprep.subr.mxu0 0.0
      %10082 = vmatpush1.msra.mxu0 0.0
      %10083 = vmatprep.subr.mxu0 0.0
      %10084 = vmatpush1.msra.mxu0 0.0
      %10085 = vmatprep.subr.mxu0 0.0
      %10086 = vmatpush1.msra.mxu0 0.0
      %10087 = vmatprep.subr.mxu0 0.0
      %10088 = vmatpush1.msra.mxu0 0.0
      %10089 = vmatprep.subr.mxu0 0.0
      %10090 = vmatpush1.msra.mxu0 0.0
      %10091 = vmatprep.mubr.f32.mxu0 0.0
      %v10092 = vand.u32 %v9886, 4294901760
      %10093 = vmatmul.mubr.f32.gmra.mrb[0].mxu0 %v10092
      %v10094 = vpop.f32.mrb[0].mxu0
      %v10095 = vadd.f32 %v9974, %v10094
      %v10096 = vpop.f32.mrb[0].mxu0
      %10097 = vmatprep.mubr.f32.mxu0 0.0
      %v10098 = vand.u32 %v9889, 4294901760
      %10099 = vmatmul.mubr.f32.gmra.mrb[0].mxu0 %v10098
      %v10100 = vpop.f32.mrb[0].mxu0
      %v10101 = vadd.f32 %v9984, %v10100
      %v10102 = vpop.f32.mrb[0].mxu0
      %10103 = vmatprep.mubr.f32.mxu0 0.0
      %v10104 = vand.u32 %v9892, 4294901760
      %10105 = vmatmul.mubr.f32.gmra.mrb[0].mxu0 %v10104
      %v10106 = vpop.f32.mrb[0].mxu0
      %v10107 = vadd.f32 %v9994, %v10106
      %v10108 = vpop.f32.mrb[0].mxu0
      %10109 = vmatprep.mubr.f32.mxu0 0.0
      %v10110 = vand.u32 %v9895, 4294901760
      %10111 = vmatmul.mubr.f32.gmra.mrb[0].mxu0 %v10110
      %v10112 = vpop.f32.mrb[0].mxu0
      %v10113 = vadd.f32 %v10004, %v10112
      %v10114 = vpop.f32.mrb[0].mxu0
      %10115 = vmatprep.mubr.f32.mxu0 0.0
      %v10116 = vand.u32 %v9898, 4294901760
      %10117 = vmatmul.mubr.f32.gmra.mrb[0].mxu0 %v10116
      %v10118 = vpop.f32.mrb[0].mxu0
      %v10119 = vadd.f32 %v10014, %v10118
      %v10120 = vpop.f32.mrb[0].mxu0
      %10121 = vdwg.mxu0
      %10122 = vmatprep.subr.mxu0 0.0
      %v10123 = vand.u32 %v9876, 4294901760
      %v10124 = vsub.f32 %v9876, %v10123
      %10125 = vmatpush1.msra.mxu0 %v10124
      %10126 = vmatprep.subr.mxu0 0.0
      %v10127 = vand.u32 %v9877, 4294901760
      %v10128 = vsub.f32 %v9877, %v10127
      %10129 = vmatpush1.msra.mxu0 %v10128
      %10130 = vmatprep.subr.mxu0 0.0
      %10131 = vmatpush1.msra.mxu0 0.0
      %10132 = vmatprep.subr.mxu0 0.0
      %10133 = vmatpush1.msra.mxu0 0.0
      %10134 = vmatprep.subr.mxu0 0.0
      %10135 = vmatpush1.msra.mxu0 0.0
      %10136 = vmatprep.subr.mxu0 0.0
      %10137 = vmatpush1.msra.mxu0 0.0
      %10138 = vmatprep.subr.mxu0 0.0
      %10139 = vmatpush1.msra.mxu0 0.0
      %10140 = vmatprep.subr.mxu0 0.0
      %10141 = vmatpush1.msra.mxu0 0.0
      %10142 = vmatprep.subr.mxu0 0.0
      %10143 = vmatpush1.msra.mxu0 0.0
      %10144 = vmatprep.subr.mxu0 0.0
      %10145 = vmatpush1.msra.mxu0 0.0
      %10146 = vmatprep.subr.mxu0 0.0
      %10147 = vmatpush1.msra.mxu0 0.0
      %10148 = vmatprep.subr.mxu0 0.0
      %10149 = vmatpush1.msra.mxu0 0.0
      %10150 = vmatprep.subr.mxu0 0.0
      %10151 = vmatpush1.msra.mxu0 0.0
      %10152 = vmatprep.subr.mxu0 0.0
      %10153 = vmatpush1.msra.mxu0 0.0
      %10154 = vmatprep.subr.mxu0 0.0
      %10155 = vmatpush1.msra.mxu0 0.0
      %10156 = vmatprep.subr.mxu0 0.0
      %10157 = vmatpush1.msra.mxu0 0.0
      %10158 = vmatprep.subr.mxu0 0.0
      %10159 = vmatpush1.msra.mxu0 0.0
      %10160 = vmatprep.subr.mxu0 0.0
      %10161 = vmatpush1.msra.mxu0 0.0
      %10162 = vmatprep.subr.mxu0 0.0
      %10163 = vmatpush1.msra.mxu0 0.0
      %10164 = vmatprep.subr.mxu0 0.0
      %10165 = vmatpush1.msra.mxu0 0.0
      %10166 = vmatprep.subr.mxu0 0.0
      %10167 = vmatpush1.msra.mxu0 0.0
      %10168 = vmatprep.subr.mxu0 0.0
      %10169 = vmatpush1.msra.mxu0 0.0
      %10170 = vmatprep.subr.mxu0 0.0
      %10171 = vmatpush1.msra.mxu0 0.0
      %10172 = vmatprep.subr.mxu0 0.0
      %10173 = vmatpush1.msra.mxu0 0.0
      %10174 = vmatprep.subr.mxu0 0.0
      %10175 = vmatpush1.msra.mxu0 0.0
      %10176 = vmatprep.subr.mxu0 0.0
      %10177 = vmatpush1.msra.mxu0 0.0
      %10178 = vmatprep.subr.mxu0 0.0
      %10179 = vmatpush1.msra.mxu0 0.0
      %10180 = vmatprep.subr.mxu0 0.0
      %10181 = vmatpush1.msra.mxu0 0.0
      %10182 = vmatprep.subr.mxu0 0.0
      %10183 = vmatpush1.msra.mxu0 0.0
      %10184 = vmatprep.subr.mxu0 0.0
      %10185 = vmatpush1.msra.mxu0 0.0
      %10186 = vmatprep.subr.mxu0 0.0
      %10187 = vmatpush1.msra.mxu0 0.0
      %10188 = vmatprep.subr.mxu0 0.0
      %10189 = vmatpush1.msra.mxu0 0.0
      %10190 = vmatprep.mubr.f32.mxu0 0.0
      %v10191 = vand.u32 %v9886, 4294901760
      %v10192 = vsub.f32 %v9886, %v10191
      %10193 = vmatmul.mubr.f32.gmra.mrb[0].mxu0 %v10192
      %v10194 = vpop.f32.mrb[0].mxu0
      %v10195 = vadd.f32 %v10095, %v10194
      %v10196 = vpop.f32.mrb[0].mxu0
      %10197 = vmatprep.mubr.f32.mxu0 0.0
      %v10198 = vand.u32 %v9889, 4294901760
      %v10199 = vsub.f32 %v9889, %v10198
      %10200 = vmatmul.mubr.f32.gmra.mrb[0].mxu0 %v10199
      %v10201 = vpop.f32.mrb[0].mxu0
      %v10202 = vadd.f32 %v10101, %v10201
      %v10203 = vpop.f32.mrb[0].mxu0
      %10204 = vmatprep.mubr.f32.mxu0 0.0
      %v10205 = vand.u32 %v9892, 4294901760
      %v10206 = vsub.f32 %v9892, %v10205
      %10207 = vmatmul.mubr.f32.gmra.mrb[0].mxu0 %v10206
      %v10208 = vpop.f32.mrb[0].mxu0
      %v10209 = vadd.f32 %v10107, %v10208
      %v10210 = vpop.f32.mrb[0].mxu0
      %10211 = vmatprep.mubr.f32.mxu0 0.0
      %v10212 = vand.u32 %v9895, 4294901760
      %v10213 = vsub.f32 %v9895, %v10212
      %10214 = vmatmul.mubr.f32.gmra.mrb[0].mxu0 %v10213
      %v10215 = vpop.f32.mrb[0].mxu0
      %v10216 = vadd.f32 %v10113, %v10215
      %v10217 = vpop.f32.mrb[0].mxu0
      %10218 = vmatprep.mubr.f32.mxu0 0.0
      %v10219 = vand.u32 %v9898, 4294901760
      %v10220 = vsub.f32 %v9898, %v10219
      %10221 = vmatmul.mubr.f32.gmra.mrb[0].mxu0 %v10220
      %v10222 = vpop.f32.mrb[0].mxu0
      %v10223 = vadd.f32 %v10119, %v10222
      %v10224 = vpop.f32.mrb[0].mxu0
      %10225 = vdwg.mxu0
      %10226 = vmatprep.subr.mxu0 0.0
      %v10227 = vand.u32 %v9876, 4294901760
      %10228 = vmatpush1.msra.mxu0 %v10227
      %10229 = vmatprep.subr.mxu0 0.0
      %v10230 = vand.u32 %v9877, 4294901760
      %10231 = vmatpush1.msra.mxu0 %v10230
      %10232 = vmatprep.subr.mxu0 0.0
      %10233 = vmatpush1.msra.mxu0 0.0
      %10234 = vmatprep.subr.mxu0 0.0
      %10235 = vmatpush1.msra.mxu0 0.0
      %10236 = vmatprep.subr.mxu0 0.0
      %10237 = vmatpush1.msra.mxu0 0.0
      %10238 = vmatprep.subr.mxu0 0.0
      %10239 = vmatpush1.msra.mxu0 0.0
      %10240 = vmatprep.subr.mxu0 0.0
      %10241 = vmatpush1.msra.mxu0 0.0
      %10242 = vmatprep.subr.mxu0 0.0
      %10243 = vmatpush1.msra.mxu0 0.0
      %10244 = vmatprep.subr.mxu0 0.0
      %10245 = vmatpush1.msra.mxu0 0.0
      %10246 = vmatprep.subr.mxu0 0.0
      %10247 = vmatpush1.msra.mxu0 0.0
      %10248 = vmatprep.subr.mxu0 0.0
      %10249 = vmatpush1.msra.mxu0 0.0
      %10250 = vmatprep.subr.mxu0 0.0
      %10251 = vmatpush1.msra.mxu0 0.0
      %10252 = vmatprep.subr.mxu0 0.0
      %10253 = vmatpush1.msra.mxu0 0.0
      %10254 = vmatprep.subr.mxu0 0.0
      %10255 = vmatpush1.msra.mxu0 0.0
      %10256 = vmatprep.subr.mxu0 0.0
      %10257 = vmatpush1.msra.mxu0 0.0
      %10258 = vmatprep.subr.mxu0 0.0
      %10259 = vmatpush1.msra.mxu0 0.0
      %10260 = vmatprep.subr.mxu0 0.0
      %10261 = vmatpush1.msra.mxu0 0.0
      %10262 = vmatprep.subr.mxu0 0.0
      %10263 = vmatpush1.msra.mxu0 0.0
      %10264 = vmatprep.subr.mxu0 0.0
      %10265 = vmatpush1.msra.mxu0 0.0
      %10266 = vmatprep.subr.mxu0 0.0
      %10267 = vmatpush1.msra.mxu0 0.0
      %10268 = vmatprep.subr.mxu0 0.0
      %10269 = vmatpush1.msra.mxu0 0.0
      %10270 = vmatprep.subr.mxu0 0.0
      %10271 = vmatpush1.msra.mxu0 0.0
      %10272 = vmatprep.subr.mxu0 0.0
      %10273 = vmatpush1.msra.mxu0 0.0
      %10274 = vmatprep.subr.mxu0 0.0
      %10275 = vmatpush1.msra.mxu0 0.0
      %10276 = vmatprep.subr.mxu0 0.0
      %10277 = vmatpush1.msra.mxu0 0.0
      %10278 = vmatprep.subr.mxu0 0.0
      %10279 = vmatpush1.msra.mxu0 0.0
      %10280 = vmatprep.subr.mxu0 0.0
      %10281 = vmatpush1.msra.mxu0 0.0
      %10282 = vmatprep.subr.mxu0 0.0
      %10283 = vmatpush1.msra.mxu0 0.0
      %10284 = vmatprep.subr.mxu0 0.0
      %10285 = vmatpush1.msra.mxu0 0.0
      %10286 = vmatprep.subr.mxu0 0.0
      %10287 = vmatpush1.msra.mxu0 0.0
      %10288 = vmatprep.subr.mxu0 0.0
      %10289 = vmatpush1.msra.mxu0 0.0
      %10290 = vmatprep.subr.mxu0 0.0
      %10291 = vmatpush1.msra.mxu0 0.0
      %10292 = vmatprep.mubr.f32.mxu0 0.0
      %v10293 = vand.u32 %v9886, 4294901760
      %v10294 = vsub.f32 %v9886, %v10293
      %v10295 = vand.u32 %v10294, 4294901760
      %10296 = vmatmul.mubr.f32.gmra.mrb[0].mxu0 %v10295
      %v10297 = vpop.f32.mrb[0].mxu0
      %v10298 = vadd.f32 %v10195, %v10297
      %v10299 = vpop.f32.mrb[0].mxu0
      %10300 = vmatprep.mubr.f32.mxu0 0.0
      %v10301 = vand.u32 %v9889, 4294901760
      %v10302 = vsub.f32 %v9889, %v10301
      %v10303 = vand.u32 %v10302, 4294901760
      %10304 = vmatmul.mubr.f32.gmra.mrb[0].mxu0 %v10303
      %v10305 = vpop.f32.mrb[0].mxu0
      %v10306 = vadd.f32 %v10202, %v10305
      %v10307 = vpop.f32.mrb[0].mxu0
      %10308 = vmatprep.mubr.f32.mxu0 0.0
      %v10309 = vand.u32 %v9892, 4294901760
      %v10310 = vsub.f32 %v9892, %v10309
      %v10311 = vand.u32 %v10310, 4294901760
      %10312 = vmatmul.mubr.f32.gmra.mrb[0].mxu0 %v10311
      %v10313 = vpop.f32.mrb[0].mxu0
      %v10314 = vadd.f32 %v10209, %v10313
      %v10315 = vpop.f32.mrb[0].mxu0
      %10316 = vmatprep.mubr.f32.mxu0 0.0
      %v10317 = vand.u32 %v9895, 4294901760
      %v10318 = vsub.f32 %v9895, %v10317
      %v10319 = vand.u32 %v10318, 4294901760
      %10320 = vmatmul.mubr.f32.gmra.mrb[0].mxu0 %v10319
      %v10321 = vpop.f32.mrb[0].mxu0
      %v10322 = vadd.f32 %v10216, %v10321
      %v10323 = vpop.f32.mrb[0].mxu0
      %10324 = vmatprep.mubr.f32.mxu0 0.0
      %v10325 = vand.u32 %v9898, 4294901760
      %v10326 = vsub.f32 %v9898, %v10325
      %v10327 = vand.u32 %v10326, 4294901760
      %10328 = vmatmul.mubr.f32.gmra.mrb[0].mxu0 %v10327
      %v10329 = vpop.f32.mrb[0].mxu0
      %v10330 = vadd.f32 %v10223, %v10329
      %v10331 = vpop.f32.mrb[0].mxu0
      %10332 = vdwg.mxu0
      %10333 = vmatprep.subr.mxu0 0.0
      %v10334 = vand.u32 %v9876, 4294901760
      %v10335 = vsub.f32 %v9876, %v10334
      %v10336 = vand.u32 %v10335, 4294901760
      %10337 = vmatpush1.msra.mxu0 %v10336
      %10338 = vmatprep.subr.mxu0 0.0
      %v10339 = vand.u32 %v9877, 4294901760
      %v10340 = vsub.f32 %v9877, %v10339
      %v10341 = vand.u32 %v10340, 4294901760
      %10342 = vmatpush1.msra.mxu0 %v10341
      %10343 = vmatprep.subr.mxu0 0.0
      %10344 = vmatpush1.msra.mxu0 0.0
      %10345 = vmatprep.subr.mxu0 0.0
      %10346 = vmatpush1.msra.mxu0 0.0
      %10347 = vmatprep.subr.mxu0 0.0
      %10348 = vmatpush1.msra.mxu0 0.0
      %10349 = vmatprep.subr.mxu0 0.0
      %10350 = vmatpush1.msra.mxu0 0.0
      %10351 = vmatprep.subr.mxu0 0.0
      %10352 = vmatpush1.msra.mxu0 0.0
      %10353 = vmatprep.subr.mxu0 0.0
      %10354 = vmatpush1.msra.mxu0 0.0
      %10355 = vmatprep.subr.mxu0 0.0
      %10356 = vmatpush1.msra.mxu0 0.0
      %10357 = vmatprep.subr.mxu0 0.0
      %10358 = vmatpush1.msra.mxu0 0.0
      %10359 = vmatprep.subr.mxu0 0.0
      %10360 = vmatpush1.msra.mxu0 0.0
      %10361 = vmatprep.subr.mxu0 0.0
      %10362 = vmatpush1.msra.mxu0 0.0
      %10363 = vmatprep.subr.mxu0 0.0
      %10364 = vmatpush1.msra.mxu0 0.0
      %10365 = vmatprep.subr.mxu0 0.0
      %10366 = vmatpush1.msra.mxu0 0.0
      %10367 = vmatprep.subr.mxu0 0.0
      %10368 = vmatpush1.msra.mxu0 0.0
      %10369 = vmatprep.subr.mxu0 0.0
      %10370 = vmatpush1.msra.mxu0 0.0
      %10371 = vmatprep.subr.mxu0 0.0
      %10372 = vmatpush1.msra.mxu0 0.0
      %10373 = vmatprep.subr.mxu0 0.0
      %10374 = vmatpush1.msra.mxu0 0.0
      %10375 = vmatprep.subr.mxu0 0.0
      %10376 = vmatpush1.msra.mxu0 0.0
      %10377 = vmatprep.subr.mxu0 0.0
      %10378 = vmatpush1.msra.mxu0 0.0
      %10379 = vmatprep.subr.mxu0 0.0
      %10380 = vmatpush1.msra.mxu0 0.0
      %10381 = vmatprep.subr.mxu0 0.0
      %10382 = vmatpush1.msra.mxu0 0.0
      %10383 = vmatprep.subr.mxu0 0.0
      %10384 = vmatpush1.msra.mxu0 0.0
      %10385 = vmatprep.subr.mxu0 0.0
      %10386 = vmatpush1.msra.mxu0 0.0
      %10387 = vmatprep.subr.mxu0 0.0
      %10388 = vmatpush1.msra.mxu0 0.0
      %10389 = vmatprep.subr.mxu0 0.0
      %10390 = vmatpush1.msra.mxu0 0.0
      %10391 = vmatprep.subr.mxu0 0.0
      %10392 = vmatpush1.msra.mxu0 0.0
      %10393 = vmatprep.subr.mxu0 0.0
      %10394 = vmatpush1.msra.mxu0 0.0
      %10395 = vmatprep.subr.mxu0 0.0
      %10396 = vmatpush1.msra.mxu0 0.0
      %10397 = vmatprep.subr.mxu0 0.0
      %10398 = vmatpush1.msra.mxu0 0.0
      %10399 = vmatprep.subr.mxu0 0.0
      %10400 = vmatpush1.msra.mxu0 0.0
      %10401 = vmatprep.subr.mxu0 0.0
      %10402 = vmatpush1.msra.mxu0 0.0
      %10403 = vmatprep.mubr.f32.mxu0 0.0
      %v10404 = vand.u32 %v9886, 4294901760
      %10405 = vmatmul.mubr.f32.gmra.mrb[0].mxu0 %v10404
      %v10406 = vpop.f32.mrb[0].mxu0
      %v10407 = vadd.f32 %v10298, %v10406
      %v10408 = vpop.f32.mrb[0].mxu0
      %10409 = vmatprep.mubr.f32.mxu0 0.0
      %v10410 = vand.u32 %v9889, 4294901760
      %10411 = vmatmul.mubr.f32.gmra.mrb[0].mxu0 %v10410
      %v10412 = vpop.f32.mrb[0].mxu0
      %v10413 = vadd.f32 %v10306, %v10412
      %v10414 = vpop.f32.mrb[0].mxu0
      %10415 = vmatprep.mubr.f32.mxu0 0.0
      %v10416 = vand.u32 %v9892, 4294901760
      %10417 = vmatmul.mubr.f32.gmra.mrb[0].mxu0 %v10416
      %v10418 = vpop.f32.mrb[0].mxu0
      %v10419 = vadd.f32 %v10314, %v10418
      %v10420 = vpop.f32.mrb[0].mxu0
      %10421 = vmatprep.mubr.f32.mxu0 0.0
      %v10422 = vand.u32 %v9895, 4294901760
      %10423 = vmatmul.mubr.f32.gmra.mrb[0].mxu0 %v10422
      %v10424 = vpop.f32.mrb[0].mxu0
      %v10425 = vadd.f32 %v10322, %v10424
      %v10426 = vpop.f32.mrb[0].mxu0
      %10427 = vmatprep.mubr.f32.mxu0 0.0
      %v10428 = vand.u32 %v9898, 4294901760
      %10429 = vmatmul.mubr.f32.gmra.mrb[0].mxu0 %v10428
      %v10430 = vpop.f32.mrb[0].mxu0
      %v10431 = vadd.f32 %v10330, %v10430
      %v10432 = vpop.f32.mrb[0].mxu0
      %10433 = vdwg.mxu0
      %10434 = vmatprep.subr.mxu0 0.0
      %v10435 = vand.u32 %v9876, 4294901760
      %10436 = vmatpush1.msra.mxu0 %v10435
      %10437 = vmatprep.subr.mxu0 0.0
      %v10438 = vand.u32 %v9877, 4294901760
      %10439 = vmatpush1.msra.mxu0 %v10438
      %10440 = vmatprep.subr.mxu0 0.0
      %10441 = vmatpush1.msra.mxu0 0.0
      %10442 = vmatprep.subr.mxu0 0.0
      %10443 = vmatpush1.msra.mxu0 0.0
      %10444 = vmatprep.subr.mxu0 0.0
      %10445 = vmatpush1.msra.mxu0 0.0
      %10446 = vmatprep.subr.mxu0 0.0
      %10447 = vmatpush1.msra.mxu0 0.0
      %10448 = vmatprep.subr.mxu0 0.0
      %10449 = vmatpush1.msra.mxu0 0.0
      %10450 = vmatprep.subr.mxu0 0.0
      %10451 = vmatpush1.msra.mxu0 0.0
      %10452 = vmatprep.subr.mxu0 0.0
      %10453 = vmatpush1.msra.mxu0 0.0
      %10454 = vmatprep.subr.mxu0 0.0
      %10455 = vmatpush1.msra.mxu0 0.0
      %10456 = vmatprep.subr.mxu0 0.0
      %10457 = vmatpush1.msra.mxu0 0.0
      %10458 = vmatprep.subr.mxu0 0.0
      %10459 = vmatpush1.msra.mxu0 0.0
      %10460 = vmatprep.subr.mxu0 0.0
      %10461 = vmatpush1.msra.mxu0 0.0
      %10462 = vmatprep.subr.mxu0 0.0
      %10463 = vmatpush1.msra.mxu0 0.0
      %10464 = vmatprep.subr.mxu0 0.0
      %10465 = vmatpush1.msra.mxu0 0.0
      %10466 = vmatprep.subr.mxu0 0.0
      %10467 = vmatpush1.msra.mxu0 0.0
      %10468 = vmatprep.subr.mxu0 0.0
      %10469 = vmatpush1.msra.mxu0 0.0
      %10470 = vmatprep.subr.mxu0 0.0
      %10471 = vmatpush1.msra.mxu0 0.0
      %10472 = vmatprep.subr.mxu0 0.0
      %10473 = vmatpush1.msra.mxu0 0.0
      %10474 = vmatprep.subr.mxu0 0.0
      %10475 = vmatpush1.msra.mxu0 0.0
      %10476 = vmatprep.subr.mxu0 0.0
      %10477 = vmatpush1.msra.mxu0 0.0
      %10478 = vmatprep.subr.mxu0 0.0
      %10479 = vmatpush1.msra.mxu0 0.0
      %10480 = vmatprep.subr.mxu0 0.0
      %10481 = vmatpush1.msra.mxu0 0.0
      %10482 = vmatprep.subr.mxu0 0.0
      %10483 = vmatpush1.msra.mxu0 0.0
      %10484 = vmatprep.subr.mxu0 0.0
      %10485 = vmatpush1.msra.mxu0 0.0
      %10486 = vmatprep.subr.mxu0 0.0
      %10487 = vmatpush1.msra.mxu0 0.0
      %10488 = vmatprep.subr.mxu0 0.0
      %10489 = vmatpush1.msra.mxu0 0.0
      %10490 = vmatprep.subr.mxu0 0.0
      %10491 = vmatpush1.msra.mxu0 0.0
      %10492 = vmatprep.subr.mxu0 0.0
      %10493 = vmatpush1.msra.mxu0 0.0
      %10494 = vmatprep.subr.mxu0 0.0
      %10495 = vmatpush1.msra.mxu0 0.0
      %10496 = vmatprep.subr.mxu0 0.0
      %10497 = vmatpush1.msra.mxu0 0.0
      %10498 = vmatprep.subr.mxu0 0.0
      %10499 = vmatpush1.msra.mxu0 0.0
      %10500 = vmatprep.mubr.f32.mxu0 0.0
      %v10501 = vand.u32 %v9886, 4294901760
      %10502 = vmatmul.mubr.f32.gmra.mrb[0].mxu0 %v10501
      %v10503 = vpop.f32.mrb[0].mxu0
      %v10504 = vadd.f32 %v10407, %v10503
      %v10505 = vpop.f32.mrb[0].mxu0
      %10506 = vmatprep.mubr.f32.mxu0 0.0
      %v10507 = vand.u32 %v9889, 4294901760
      %10508 = vmatmul.mubr.f32.gmra.mrb[0].mxu0 %v10507
      %v10509 = vpop.f32.mrb[0].mxu0
      %v10510 = vadd.f32 %v10413, %v10509
      %v10511 = vpop.f32.mrb[0].mxu0
      %10512 = vmatprep.mubr.f32.mxu0 0.0
      %v10513 = vand.u32 %v9892, 4294901760
      %10514 = vmatmul.mubr.f32.gmra.mrb[0].mxu0 %v10513
      %v10515 = vpop.f32.mrb[0].mxu0
      %v10516 = vadd.f32 %v10419, %v10515
      %v10517 = vpop.f32.mrb[0].mxu0
      %10518 = vmatprep.mubr.f32.mxu0 0.0
      %v10519 = vand.u32 %v9895, 4294901760
      %10520 = vmatmul.mubr.f32.gmra.mrb[0].mxu0 %v10519
      %v10521 = vpop.f32.mrb[0].mxu0
      %v10522 = vadd.f32 %v10425, %v10521
      %v10523 = vpop.f32.mrb[0].mxu0
      %10524 = vmatprep.mubr.f32.mxu0 0.0
      %v10525 = vand.u32 %v9898, 4294901760
      %10526 = vmatmul.mubr.f32.gmra.mrb[0].mxu0 %v10525
      %v10527 = vpop.f32.mrb[0].mxu0
      %v10528 = vadd.f32 %v10431, %v10527
      %v10529 = vpop.f32.mrb[0].mxu0
      %10530 = vdwg.mxu0
      %v10531 = vmax.f32 %v10504, 0.0
      %v10532 = vmax.f32 %v10510, 0.0
      %v10533 = vmax.f32 %v10516, 0.0
      %v10534 = vmax.f32 %v10522, 0.0
      %v10535 = vmax.f32 %v10528, 0.0
      %v10536 = vld [vmem:[%s609] sm:$0xff]
      %v10537 = vld [vmem:[%s609 + $0x8] sm:$0xff]
      %v10538 = vld [vmem:[%s609 + $0x10] sm:$0xff]
      %v10539 = vld [vmem:[%s609 + $0x18] sm:$0xff]
      %v10540 = vld [vmem:[%s609 + $0x20] sm:$0xff]
      %v10541 = vld [vmem:[%s609 + $0x28] sm:$0xff]
      %v10542 = vld [vmem:[%s609 + $0x30] sm:$0xff]
      %v10543 = vld [vmem:[%s609 + $0x38] sm:$0xff]
      %v10544 = vld [vmem:[%s612] sm:$0x1]
      %v10546 = vlaneseq
      %v10547 = vshrl.u32 %v10546, 7
      %v10548 = vsub.s32 0, %v10547
      %v10549 = vrot.slane %v10544, %v10548
      %vm10551 = vcmask 523264
      %v10553 = vsel %vm10551, %v10531, 0
      %v10556 = vsel %vm10551, %v10532, 0
      %v10559 = vsel %vm10551, %v10533, 0
      %v10562 = vsel %vm10551, %v10534, 0
      %v10565 = vsel %vm10551, %v10535, 0
      %10567 = vmatprep.subr.mxu0 0.0
      %v10568 = vand.u32 %v10536, 4294901760
      %10569 = vmatpush1.msra.mxu0 %v10568
      %10570 = vmatprep.subr.mxu0 0.0
      %v10571 = vand.u32 %v10537, 4294901760
      %10572 = vmatpush1.msra.mxu0 %v10571
      %10573 = vmatprep.subr.mxu0 0.0
      %v10574 = vand.u32 %v10538, 4294901760
      %10575 = vmatpush1.msra.mxu0 %v10574
      %10576 = vmatprep.subr.mxu0 0.0
      %v10577 = vand.u32 %v10539, 4294901760
      %10578 = vmatpush1.msra.mxu0 %v10577
      %10579 = vmatprep.subr.mxu0 0.0
      %v10580 = vand.u32 %v10540, 4294901760
      %10581 = vmatpush1.msra.mxu0 %v10580
      %10582 = vmatprep.subr.mxu0 0.0
      %v10583 = vand.u32 %v10541, 4294901760
      %10584 = vmatpush1.msra.mxu0 %v10583
      %10585 = vmatprep.subr.mxu0 0.0
      %v10586 = vand.u32 %v10542, 4294901760
      %10587 = vmatpush1.msra.mxu0 %v10586
      %10588 = vmatprep.subr.mxu0 0.0
      %v10589 = vand.u32 %v10543, 4294901760
      %10590 = vmatpush1.msra.mxu0 %v10589
      %10591 = vmatprep.subr.mxu0 0.0
      %10592 = vmatpush1.msra.mxu0 0.0
      %10593 = vmatprep.subr.mxu0 0.0
      %10594 = vmatpush1.msra.mxu0 0.0
      %10595 = vmatprep.subr.mxu0 0.0
      %10596 = vmatpush1.msra.mxu0 0.0
      %10597 = vmatprep.subr.mxu0 0.0
      %10598 = vmatpush1.msra.mxu0 0.0
      %10599 = vmatprep.subr.mxu0 0.0
      %10600 = vmatpush1.msra.mxu0 0.0
      %10601 = vmatprep.subr.mxu0 0.0
      %10602 = vmatpush1.msra.mxu0 0.0
      %10603 = vmatprep.subr.mxu0 0.0
      %10604 = vmatpush1.msra.mxu0 0.0
      %10605 = vmatprep.subr.mxu0 0.0
      %10606 = vmatpush1.msra.mxu0 0.0
      %10607 = vmatprep.subr.mxu0 0.0
      %10608 = vmatpush1.msra.mxu0 0.0
      %10609 = vmatprep.subr.mxu0 0.0
      %10610 = vmatpush1.msra.mxu0 0.0
      %10611 = vmatprep.subr.mxu0 0.0
      %10612 = vmatpush1.msra.mxu0 0.0
      %10613 = vmatprep.subr.mxu0 0.0
      %10614 = vmatpush1.msra.mxu0 0.0
      %10615 = vmatprep.subr.mxu0 0.0
      %10616 = vmatpush1.msra.mxu0 0.0
      %10617 = vmatprep.subr.mxu0 0.0
      %10618 = vmatpush1.msra.mxu0 0.0
      %10619 = vmatprep.subr.mxu0 0.0
      %10620 = vmatpush1.msra.mxu0 0.0
      %10621 = vmatprep.subr.mxu0 0.0
      %10622 = vmatpush1.msra.mxu0 0.0
      %10623 = vmatprep.subr.mxu0 0.0
      %10624 = vmatpush1.msra.mxu0 0.0
      %10625 = vmatprep.subr.mxu0 0.0
      %10626 = vmatpush1.msra.mxu0 0.0
      %10627 = vmatprep.subr.mxu0 0.0
      %10628 = vmatpush1.msra.mxu0 0.0
      %10629 = vmatprep.subr.mxu0 0.0
      %10630 = vmatpush1.msra.mxu0 0.0
      %10631 = vmatprep.subr.mxu0 0.0
      %10632 = vmatpush1.msra.mxu0 0.0
      %10633 = vmatprep.subr.mxu0 0.0
      %10634 = vmatpush1.msra.mxu0 0.0
      %10635 = vmatprep.subr.mxu0 0.0
      %10636 = vmatpush1.msra.mxu0 0.0
      %10637 = vmatprep.subr.mxu0 0.0
      %10638 = vmatpush1.msra.mxu0 0.0
      %10639 = vmatprep.mubr.f32.mxu0 0.0
      %v10640 = vand.u32 %v10553, 4294901760
      %v10641 = vsub.f32 %v10553, %v10640
      %v10642 = vand.u32 %v10641, 4294901760
      %v10643 = vsub.f32 %v10641, %v10642
      %v10644 = vand.u32 %v10643, 4294901760
      %10645 = vmatmul.mubr.f32.gmra.mrb[0].mxu0 %v10644
      %v10646 = vpop.f32.mrb[0].mxu0
      %v10647 = vadd.f32 %v10549, %v10646
      %v10648 = vpop.f32.mrb[0].mxu0
      %10649 = vmatprep.mubr.f32.mxu0 0.0
      %v10650 = vand.u32 %v10556, 4294901760
      %v10651 = vsub.f32 %v10556, %v10650
      %v10652 = vand.u32 %v10651, 4294901760
      %v10653 = vsub.f32 %v10651, %v10652
      %v10654 = vand.u32 %v10653, 4294901760
      %10655 = vmatmul.mubr.f32.gmra.mrb[0].mxu0 %v10654
      %v10656 = vpop.f32.mrb[0].mxu0
      %v10657 = vadd.f32 %v10549, %v10656
      %v10658 = vpop.f32.mrb[0].mxu0
      %10659 = vmatprep.mubr.f32.mxu0 0.0
      %v10660 = vand.u32 %v10559, 4294901760
      %v10661 = vsub.f32 %v10559, %v10660
      %v10662 = vand.u32 %v10661, 4294901760
      %v10663 = vsub.f32 %v10661, %v10662
      %v10664 = vand.u32 %v10663, 4294901760
      %10665 = vmatmul.mubr.f32.gmra.mrb[0].mxu0 %v10664
      %v10666 = vpop.f32.mrb[0].mxu0
      %v10667 = vadd.f32 %v10549, %v10666
      %v10668 = vpop.f32.mrb[0].mxu0
      %10669 = vmatprep.mubr.f32.mxu0 0.0
      %v10670 = vand.u32 %v10562, 4294901760
      %v10671 = vsub.f32 %v10562, %v10670
      %v10672 = vand.u32 %v10671, 4294901760
      %v10673 = vsub.f32 %v10671, %v10672
      %v10674 = vand.u32 %v10673, 4294901760
      %10675 = vmatmul.mubr.f32.gmra.mrb[0].mxu0 %v10674
      %v10676 = vpop.f32.mrb[0].mxu0
      %v10677 = vadd.f32 %v10549, %v10676
      %v10678 = vpop.f32.mrb[0].mxu0
      %10679 = vmatprep.mubr.f32.mxu0 0.0
      %v10680 = vand.u32 %v10565, 4294901760
      %v10681 = vsub.f32 %v10565, %v10680
      %v10682 = vand.u32 %v10681, 4294901760
      %v10683 = vsub.f32 %v10681, %v10682
      %v10684 = vand.u32 %v10683, 4294901760
      %10685 = vmatmul.mubr.f32.gmra.mrb[0].mxu0 %v10684
      %v10686 = vpop.f32.mrb[0].mxu0
      %v10687 = vadd.f32 %v10549, %v10686
      %v10688 = vpop.f32.mrb[0].mxu0
      %10689 = vdwg.mxu0
      %10690 = vmatprep.subr.mxu0 0.0
      %v10691 = vand.u32 %v10536, 4294901760
      %v10692 = vsub.f32 %v10536, %v10691
      %v10693 = vand.u32 %v10692, 4294901760
      %v10694 = vsub.f32 %v10692, %v10693
      %v10695 = vand.u32 %v10694, 4294901760
      %10696 = vmatpush1.msra.mxu0 %v10695
      %10697 = vmatprep.subr.mxu0 0.0
      %v10698 = vand.u32 %v10537, 4294901760
      %v10699 = vsub.f32 %v10537, %v10698
      %v10700 = vand.u32 %v10699, 4294901760
      %v10701 = vsub.f32 %v10699, %v10700
      %v10702 = vand.u32 %v10701, 4294901760
      %10703 = vmatpush1.msra.mxu0 %v10702
      %10704 = vmatprep.subr.mxu0 0.0
      %v10705 = vand.u32 %v10538, 4294901760
      %v10706 = vsub.f32 %v10538, %v10705
      %v10707 = vand.u32 %v10706, 4294901760
      %v10708 = vsub.f32 %v10706, %v10707
      %v10709 = vand.u32 %v10708, 4294901760
      %10710 = vmatpush1.msra.mxu0 %v10709
      %10711 = vmatprep.subr.mxu0 0.0
      %v10712 = vand.u32 %v10539, 4294901760
      %v10713 = vsub.f32 %v10539, %v10712
      %v10714 = vand.u32 %v10713, 4294901760
      %v10715 = vsub.f32 %v10713, %v10714
      %v10716 = vand.u32 %v10715, 4294901760
      %10717 = vmatpush1.msra.mxu0 %v10716
      %10718 = vmatprep.subr.mxu0 0.0
      %v10719 = vand.u32 %v10540, 4294901760
      %v10720 = vsub.f32 %v10540, %v10719
      %v10721 = vand.u32 %v10720, 4294901760
      %v10722 = vsub.f32 %v10720, %v10721
      %v10723 = vand.u32 %v10722, 4294901760
      %10724 = vmatpush1.msra.mxu0 %v10723
      %10725 = vmatprep.subr.mxu0 0.0
      %v10726 = vand.u32 %v10541, 4294901760
      %v10727 = vsub.f32 %v10541, %v10726
      %v10728 = vand.u32 %v10727, 4294901760
      %v10729 = vsub.f32 %v10727, %v10728
      %v10730 = vand.u32 %v10729, 4294901760
      %10731 = vmatpush1.msra.mxu0 %v10730
      %10732 = vmatprep.subr.mxu0 0.0
      %v10733 = vand.u32 %v10542, 4294901760
      %v10734 = vsub.f32 %v10542, %v10733
      %v10735 = vand.u32 %v10734, 4294901760
      %v10736 = vsub.f32 %v10734, %v10735
      %v10737 = vand.u32 %v10736, 4294901760
      %10738 = vmatpush1.msra.mxu0 %v10737
      %10739 = vmatprep.subr.mxu0 0.0
      %v10740 = vand.u32 %v10543, 4294901760
      %v10741 = vsub.f32 %v10543, %v10740
      %v10742 = vand.u32 %v10741, 4294901760
      %v10743 = vsub.f32 %v10741, %v10742
      %v10744 = vand.u32 %v10743, 4294901760
      %10745 = vmatpush1.msra.mxu0 %v10744
      %10746 = vmatprep.subr.mxu0 0.0
      %10747 = vmatpush1.msra.mxu0 0.0
      %10748 = vmatprep.subr.mxu0 0.0
      %10749 = vmatpush1.msra.mxu0 0.0
      %10750 = vmatprep.subr.mxu0 0.0
      %10751 = vmatpush1.msra.mxu0 0.0
      %10752 = vmatprep.subr.mxu0 0.0
      %10753 = vmatpush1.msra.mxu0 0.0
      %10754 = vmatprep.subr.mxu0 0.0
      %10755 = vmatpush1.msra.mxu0 0.0
      %10756 = vmatprep.subr.mxu0 0.0
      %10757 = vmatpush1.msra.mxu0 0.0
      %10758 = vmatprep.subr.mxu0 0.0
      %10759 = vmatpush1.msra.mxu0 0.0
      %10760 = vmatprep.subr.mxu0 0.0
      %10761 = vmatpush1.msra.mxu0 0.0
      %10762 = vmatprep.subr.mxu0 0.0
      %10763 = vmatpush1.msra.mxu0 0.0
      %10764 = vmatprep.subr.mxu0 0.0
      %10765 = vmatpush1.msra.mxu0 0.0
      %10766 = vmatprep.subr.mxu0 0.0
      %10767 = vmatpush1.msra.mxu0 0.0
      %10768 = vmatprep.subr.mxu0 0.0
      %10769 = vmatpush1.msra.mxu0 0.0
      %10770 = vmatprep.subr.mxu0 0.0
      %10771 = vmatpush1.msra.mxu0 0.0
      %10772 = vmatprep.subr.mxu0 0.0
      %10773 = vmatpush1.msra.mxu0 0.0
      %10774 = vmatprep.subr.mxu0 0.0
      %10775 = vmatpush1.msra.mxu0 0.0
      %10776 = vmatprep.subr.mxu0 0.0
      %10777 = vmatpush1.msra.mxu0 0.0
      %10778 = vmatprep.subr.mxu0 0.0
      %10779 = vmatpush1.msra.mxu0 0.0
      %10780 = vmatprep.subr.mxu0 0.0
      %10781 = vmatpush1.msra.mxu0 0.0
      %10782 = vmatprep.subr.mxu0 0.0
      %10783 = vmatpush1.msra.mxu0 0.0
      %10784 = vmatprep.subr.mxu0 0.0
      %10785 = vmatpush1.msra.mxu0 0.0
      %10786 = vmatprep.subr.mxu0 0.0
      %10787 = vmatpush1.msra.mxu0 0.0
      %10788 = vmatprep.subr.mxu0 0.0
      %10789 = vmatpush1.msra.mxu0 0.0
      %10790 = vmatprep.subr.mxu0 0.0
      %10791 = vmatpush1.msra.mxu0 0.0
      %10792 = vmatprep.subr.mxu0 0.0
      %10793 = vmatpush1.msra.mxu0 0.0
      %10794 = vmatprep.mubr.f32.mxu0 0.0
      %v10795 = vand.u32 %v10553, 4294901760
      %10796 = vmatmul.mubr.f32.gmra.mrb[0].mxu0 %v10795
      %v10797 = vpop.f32.mrb[0].mxu0
      %v10798 = vadd.f32 %v10647, %v10797
      %v10799 = vpop.f32.mrb[0].mxu0
      %10800 = vmatprep.mubr.f32.mxu0 0.0
      %v10801 = vand.u32 %v10556, 4294901760
      %10802 = vmatmul.mubr.f32.gmra.mrb[0].mxu0 %v10801
      %v10803 = vpop.f32.mrb[0].mxu0
      %v10804 = vadd.f32 %v10657, %v10803
      %v10805 = vpop.f32.mrb[0].mxu0
      %10806 = vmatprep.mubr.f32.mxu0 0.0
      %v10807 = vand.u32 %v10559, 4294901760
      %10808 = vmatmul.mubr.f32.gmra.mrb[0].mxu0 %v10807
      %v10809 = vpop.f32.mrb[0].mxu0
      %v10810 = vadd.f32 %v10667, %v10809
      %v10811 = vpop.f32.mrb[0].mxu0
      %10812 = vmatprep.mubr.f32.mxu0 0.0
      %v10813 = vand.u32 %v10562, 4294901760
      %10814 = vmatmul.mubr.f32.gmra.mrb[0].mxu0 %v10813
      %v10815 = vpop.f32.mrb[0].mxu0
      %v10816 = vadd.f32 %v10677, %v10815
      %v10817 = vpop.f32.mrb[0].mxu0
      %10818 = vmatprep.mubr.f32.mxu0 0.0
      %v10819 = vand.u32 %v10565, 4294901760
      %10820 = vmatmul.mubr.f32.gmra.mrb[0].mxu0 %v10819
      %v10821 = vpop.f32.mrb[0].mxu0
      %v10822 = vadd.f32 %v10687, %v10821
      %v10823 = vpop.f32.mrb[0].mxu0
      %10824 = vdwg.mxu0
      %10825 = vmatprep.subr.mxu0 0.0
      %v10826 = vand.u32 %v10536, 4294901760
      %v10827 = vsub.f32 %v10536, %v10826
      %10828 = vmatpush1.msra.mxu0 %v10827
      %10829 = vmatprep.subr.mxu0 0.0
      %v10830 = vand.u32 %v10537, 4294901760
      %v10831 = vsub.f32 %v10537, %v10830
      %10832 = vmatpush1.msra.mxu0 %v10831
      %10833 = vmatprep.subr.mxu0 0.0
      %v10834 = vand.u32 %v10538, 4294901760
      %v10835 = vsub.f32 %v10538, %v10834
      %10836 = vmatpush1.msra.mxu0 %v10835
      %10837 = vmatprep.subr.mxu0 0.0
      %v10838 = vand.u32 %v10539, 4294901760
      %v10839 = vsub.f32 %v10539, %v10838
      %10840 = vmatpush1.msra.mxu0 %v10839
      %10841 = vmatprep.subr.mxu0 0.0
      %v10842 = vand.u32 %v10540, 4294901760
      %v10843 = vsub.f32 %v10540, %v10842
      %10844 = vmatpush1.msra.mxu0 %v10843
      %10845 = vmatprep.subr.mxu0 0.0
      %v10846 = vand.u32 %v10541, 4294901760
      %v10847 = vsub.f32 %v10541, %v10846
      %10848 = vmatpush1.msra.mxu0 %v10847
      %10849 = vmatprep.subr.mxu0 0.0
      %v10850 = vand.u32 %v10542, 4294901760
      %v10851 = vsub.f32 %v10542, %v10850
      %10852 = vmatpush1.msra.mxu0 %v10851
      %10853 = vmatprep.subr.mxu0 0.0
      %v10854 = vand.u32 %v10543, 4294901760
      %v10855 = vsub.f32 %v10543, %v10854
      %10856 = vmatpush1.msra.mxu0 %v10855
      %10857 = vmatprep.subr.mxu0 0.0
      %10858 = vmatpush1.msra.mxu0 0.0
      %10859 = vmatprep.subr.mxu0 0.0
      %10860 = vmatpush1.msra.mxu0 0.0
      %10861 = vmatprep.subr.mxu0 0.0
      %10862 = vmatpush1.msra.mxu0 0.0
      %10863 = vmatprep.subr.mxu0 0.0
      %10864 = vmatpush1.msra.mxu0 0.0
      %10865 = vmatprep.subr.mxu0 0.0
      %10866 = vmatpush1.msra.mxu0 0.0
      %10867 = vmatprep.subr.mxu0 0.0
      %10868 = vmatpush1.msra.mxu0 0.0
      %10869 = vmatprep.subr.mxu0 0.0
      %10870 = vmatpush1.msra.mxu0 0.0
      %10871 = vmatprep.subr.mxu0 0.0
      %10872 = vmatpush1.msra.mxu0 0.0
      %10873 = vmatprep.subr.mxu0 0.0
      %10874 = vmatpush1.msra.mxu0 0.0
      %10875 = vmatprep.subr.mxu0 0.0
      %10876 = vmatpush1.msra.mxu0 0.0
      %10877 = vmatprep.subr.mxu0 0.0
      %10878 = vmatpush1.msra.mxu0 0.0
      %10879 = vmatprep.subr.mxu0 0.0
      %10880 = vmatpush1.msra.mxu0 0.0
      %10881 = vmatprep.subr.mxu0 0.0
      %10882 = vmatpush1.msra.mxu0 0.0
      %10883 = vmatprep.subr.mxu0 0.0
      %10884 = vmatpush1.msra.mxu0 0.0
      %10885 = vmatprep.subr.mxu0 0.0
      %10886 = vmatpush1.msra.mxu0 0.0
      %10887 = vmatprep.subr.mxu0 0.0
      %10888 = vmatpush1.msra.mxu0 0.0
      %10889 = vmatprep.subr.mxu0 0.0
      %10890 = vmatpush1.msra.mxu0 0.0
      %10891 = vmatprep.subr.mxu0 0.0
      %10892 = vmatpush1.msra.mxu0 0.0
      %10893 = vmatprep.subr.mxu0 0.0
      %10894 = vmatpush1.msra.mxu0 0.0
      %10895 = vmatprep.subr.mxu0 0.0
      %10896 = vmatpush1.msra.mxu0 0.0
      %10897 = vmatprep.subr.mxu0 0.0
      %10898 = vmatpush1.msra.mxu0 0.0
      %10899 = vmatprep.subr.mxu0 0.0
      %10900 = vmatpush1.msra.mxu0 0.0
      %10901 = vmatprep.subr.mxu0 0.0
      %10902 = vmatpush1.msra.mxu0 0.0
      %10903 = vmatprep.subr.mxu0 0.0
      %10904 = vmatpush1.msra.mxu0 0.0
      %10905 = vmatprep.mubr.f32.mxu0 0.0
      %v10906 = vand.u32 %v10553, 4294901760
      %v10907 = vsub.f32 %v10553, %v10906
      %10908 = vmatmul.mubr.f32.gmra.mrb[0].mxu0 %v10907
      %v10909 = vpop.f32.mrb[0].mxu0
      %v10910 = vadd.f32 %v10798, %v10909
      %v10911 = vpop.f32.mrb[0].mxu0
      %10912 = vmatprep.mubr.f32.mxu0 0.0
      %v10913 = vand.u32 %v10556, 4294901760
      %v10914 = vsub.f32 %v10556, %v10913
      %10915 = vmatmul.mubr.f32.gmra.mrb[0].mxu0 %v10914
      %v10916 = vpop.f32.mrb[0].mxu0
      %v10917 = vadd.f32 %v10804, %v10916
      %v10918 = vpop.f32.mrb[0].mxu0
      %10919 = vmatprep.mubr.f32.mxu0 0.0
      %v10920 = vand.u32 %v10559, 4294901760
      %v10921 = vsub.f32 %v10559, %v10920
      %10922 = vmatmul.mubr.f32.gmra.mrb[0].mxu0 %v10921
      %v10923 = vpop.f32.mrb[0].mxu0
      %v10924 = vadd.f32 %v10810, %v10923
      %v10925 = vpop.f32.mrb[0].mxu0
      %10926 = vmatprep.mubr.f32.mxu0 0.0
      %v10927 = vand.u32 %v10562, 4294901760
      %v10928 = vsub.f32 %v10562, %v10927
      %10929 = vmatmul.mubr.f32.gmra.mrb[0].mxu0 %v10928
      %v10930 = vpop.f32.mrb[0].mxu0
      %v10931 = vadd.f32 %v10816, %v10930
      %v10932 = vpop.f32.mrb[0].mxu0
      %10933 = vmatprep.mubr.f32.mxu0 0.0
      %v10934 = vand.u32 %v10565, 4294901760
      %v10935 = vsub.f32 %v10565, %v10934
      %10936 = vmatmul.mubr.f32.gmra.mrb[0].mxu0 %v10935
      %v10937 = vpop.f32.mrb[0].mxu0
      %v10938 = vadd.f32 %v10822, %v10937
      %v10939 = vpop.f32.mrb[0].mxu0
      %10940 = vdwg.mxu0
      %10941 = vmatprep.subr.mxu0 0.0
      %v10942 = vand.u32 %v10536, 4294901760
      %10943 = vmatpush1.msra.mxu0 %v10942
      %10944 = vmatprep.subr.mxu0 0.0
      %v10945 = vand.u32 %v10537, 4294901760
      %10946 = vmatpush1.msra.mxu0 %v10945
      %10947 = vmatprep.subr.mxu0 0.0
      %v10948 = vand.u32 %v10538, 4294901760
      %10949 = vmatpush1.msra.mxu0 %v10948
      %10950 = vmatprep.subr.mxu0 0.0
      %v10951 = vand.u32 %v10539, 4294901760
      %10952 = vmatpush1.msra.mxu0 %v10951
      %10953 = vmatprep.subr.mxu0 0.0
      %v10954 = vand.u32 %v10540, 4294901760
      %10955 = vmatpush1.msra.mxu0 %v10954
      %10956 = vmatprep.subr.mxu0 0.0
      %v10957 = vand.u32 %v10541, 4294901760
      %10958 = vmatpush1.msra.mxu0 %v10957
      %10959 = vmatprep.subr.mxu0 0.0
      %v10960 = vand.u32 %v10542, 4294901760
      %10961 = vmatpush1.msra.mxu0 %v10960
      %10962 = vmatprep.subr.mxu0 0.0
      %v10963 = vand.u32 %v10543, 4294901760
      %10964 = vmatpush1.msra.mxu0 %v10963
      %10965 = vmatprep.subr.mxu0 0.0
      %10966 = vmatpush1.msra.mxu0 0.0
      %10967 = vmatprep.subr.mxu0 0.0
      %10968 = vmatpush1.msra.mxu0 0.0
      %10969 = vmatprep.subr.mxu0 0.0
      %10970 = vmatpush1.msra.mxu0 0.0
      %10971 = vmatprep.subr.mxu0 0.0
      %10972 = vmatpush1.msra.mxu0 0.0
      %10973 = vmatprep.subr.mxu0 0.0
      %10974 = vmatpush1.msra.mxu0 0.0
      %10975 = vmatprep.subr.mxu0 0.0
      %10976 = vmatpush1.msra.mxu0 0.0
      %10977 = vmatprep.subr.mxu0 0.0
      %10978 = vmatpush1.msra.mxu0 0.0
      %10979 = vmatprep.subr.mxu0 0.0
      %10980 = vmatpush1.msra.mxu0 0.0
      %10981 = vmatprep.subr.mxu0 0.0
      %10982 = vmatpush1.msra.mxu0 0.0
      %10983 = vmatprep.subr.mxu0 0.0
      %10984 = vmatpush1.msra.mxu0 0.0
      %10985 = vmatprep.subr.mxu0 0.0
      %10986 = vmatpush1.msra.mxu0 0.0
      %10987 = vmatprep.subr.mxu0 0.0
      %10988 = vmatpush1.msra.mxu0 0.0
      %10989 = vmatprep.subr.mxu0 0.0
      %10990 = vmatpush1.msra.mxu0 0.0
      %10991 = vmatprep.subr.mxu0 0.0
      %10992 = vmatpush1.msra.mxu0 0.0
      %10993 = vmatprep.subr.mxu0 0.0
      %10994 = vmatpush1.msra.mxu0 0.0
      %10995 = vmatprep.subr.mxu0 0.0
      %10996 = vmatpush1.msra.mxu0 0.0
      %10997 = vmatprep.subr.mxu0 0.0
      %10998 = vmatpush1.msra.mxu0 0.0
      %10999 = vmatprep.subr.mxu0 0.0
      %11000 = vmatpush1.msra.mxu0 0.0
      %11001 = vmatprep.subr.mxu0 0.0
      %11002 = vmatpush1.msra.mxu0 0.0
      %11003 = vmatprep.subr.mxu0 0.0
      %11004 = vmatpush1.msra.mxu0 0.0
      %11005 = vmatprep.subr.mxu0 0.0
      %11006 = vmatpush1.msra.mxu0 0.0
      %11007 = vmatprep.subr.mxu0 0.0
      %11008 = vmatpush1.msra.mxu0 0.0
      %11009 = vmatprep.subr.mxu0 0.0
      %11010 = vmatpush1.msra.mxu0 0.0
      %11011 = vmatprep.subr.mxu0 0.0
      %11012 = vmatpush1.msra.mxu0 0.0
      %11013 = vmatprep.mubr.f32.mxu0 0.0
      %v11014 = vand.u32 %v10553, 4294901760
      %v11015 = vsub.f32 %v10553, %v11014
      %v11016 = vand.u32 %v11015, 4294901760
      %11017 = vmatmul.mubr.f32.gmra.mrb[0].mxu0 %v11016
      %v11018 = vpop.f32.mrb[0].mxu0
      %v11019 = vadd.f32 %v10910, %v11018
      %v11020 = vpop.f32.mrb[0].mxu0
      %11021 = vmatprep.mubr.f32.mxu0 0.0
      %v11022 = vand.u32 %v10556, 4294901760
      %v11023 = vsub.f32 %v10556, %v11022
      %v11024 = vand.u32 %v11023, 4294901760
      %11025 = vmatmul.mubr.f32.gmra.mrb[0].mxu0 %v11024
      %v11026 = vpop.f32.mrb[0].mxu0
      %v11027 = vadd.f32 %v10917, %v11026
      %v11028 = vpop.f32.mrb[0].mxu0
      %11029 = vmatprep.mubr.f32.mxu0 0.0
      %v11030 = vand.u32 %v10559, 4294901760
      %v11031 = vsub.f32 %v10559, %v11030
      %v11032 = vand.u32 %v11031, 4294901760
      %11033 = vmatmul.mubr.f32.gmra.mrb[0].mxu0 %v11032
      %v11034 = vpop.f32.mrb[0].mxu0
      %v11035 = vadd.f32 %v10924, %v11034
      %v11036 = vpop.f32.mrb[0].mxu0
      %11037 = vmatprep.mubr.f32.mxu0 0.0
      %v11038 = vand.u32 %v10562, 4294901760
      %v11039 = vsub.f32 %v10562, %v11038
      %v11040 = vand.u32 %v11039, 4294901760
      %11041 = vmatmul.mubr.f32.gmra.mrb[0].mxu0 %v11040
      %v11042 = vpop.f32.mrb[0].mxu0
      %v11043 = vadd.f32 %v10931, %v11042
      %v11044 = vpop.f32.mrb[0].mxu0
      %11045 = vmatprep.mubr.f32.mxu0 0.0
      %v11046 = vand.u32 %v10565, 4294901760
      %v11047 = vsub.f32 %v10565, %v11046
      %v11048 = vand.u32 %v11047, 4294901760
      %11049 = vmatmul.mubr.f32.gmra.mrb[0].mxu0 %v11048
      %v11050 = vpop.f32.mrb[0].mxu0
      %v11051 = vadd.f32 %v10938, %v11050
      %v11052 = vpop.f32.mrb[0].mxu0
      %11053 = vdwg.mxu0
      %11054 = vmatprep.subr.mxu0 0.0
      %v11055 = vand.u32 %v10536, 4294901760
      %v11056 = vsub.f32 %v10536, %v11055
      %v11057 = vand.u32 %v11056, 4294901760
      %11058 = vmatpush1.msra.mxu0 %v11057
      %11059 = vmatprep.subr.mxu0 0.0
      %v11060 = vand.u32 %v10537, 4294901760
      %v11061 = vsub.f32 %v10537, %v11060
      %v11062 = vand.u32 %v11061, 4294901760
      %11063 = vmatpush1.msra.mxu0 %v11062
      %11064 = vmatprep.subr.mxu0 0.0
      %v11065 = vand.u32 %v10538, 4294901760
      %v11066 = vsub.f32 %v10538, %v11065
      %v11067 = vand.u32 %v11066, 4294901760
      %11068 = vmatpush1.msra.mxu0 %v11067
      %11069 = vmatprep.subr.mxu0 0.0
      %v11070 = vand.u32 %v10539, 4294901760
      %v11071 = vsub.f32 %v10539, %v11070
      %v11072 = vand.u32 %v11071, 4294901760
      %11073 = vmatpush1.msra.mxu0 %v11072
      %11074 = vmatprep.subr.mxu0 0.0
      %v11075 = vand.u32 %v10540, 4294901760
      %v11076 = vsub.f32 %v10540, %v11075
      %v11077 = vand.u32 %v11076, 4294901760
      %11078 = vmatpush1.msra.mxu0 %v11077
      %11079 = vmatprep.subr.mxu0 0.0
      %v11080 = vand.u32 %v10541, 4294901760
      %v11081 = vsub.f32 %v10541, %v11080
      %v11082 = vand.u32 %v11081, 4294901760
      %11083 = vmatpush1.msra.mxu0 %v11082
      %11084 = vmatprep.subr.mxu0 0.0
      %v11085 = vand.u32 %v10542, 4294901760
      %v11086 = vsub.f32 %v10542, %v11085
      %v11087 = vand.u32 %v11086, 4294901760
      %11088 = vmatpush1.msra.mxu0 %v11087
      %11089 = vmatprep.subr.mxu0 0.0
      %v11090 = vand.u32 %v10543, 4294901760
      %v11091 = vsub.f32 %v10543, %v11090
      %v11092 = vand.u32 %v11091, 4294901760
      %11093 = vmatpush1.msra.mxu0 %v11092
      %11094 = vmatprep.subr.mxu0 0.0
      %11095 = vmatpush1.msra.mxu0 0.0
      %11096 = vmatprep.subr.mxu0 0.0
      %11097 = vmatpush1.msra.mxu0 0.0
      %11098 = vmatprep.subr.mxu0 0.0
      %11099 = vmatpush1.msra.mxu0 0.0
      %11100 = vmatprep.subr.mxu0 0.0
      %11101 = vmatpush1.msra.mxu0 0.0
      %11102 = vmatprep.subr.mxu0 0.0
      %11103 = vmatpush1.msra.mxu0 0.0
      %11104 = vmatprep.subr.mxu0 0.0
      %11105 = vmatpush1.msra.mxu0 0.0
      %11106 = vmatprep.subr.mxu0 0.0
      %11107 = vmatpush1.msra.mxu0 0.0
      %11108 = vmatprep.subr.mxu0 0.0
      %11109 = vmatpush1.msra.mxu0 0.0
      %11110 = vmatprep.subr.mxu0 0.0
      %11111 = vmatpush1.msra.mxu0 0.0
      %11112 = vmatprep.subr.mxu0 0.0
      %11113 = vmatpush1.msra.mxu0 0.0
      %11114 = vmatprep.subr.mxu0 0.0
      %11115 = vmatpush1.msra.mxu0 0.0
      %11116 = vmatprep.subr.mxu0 0.0
      %11117 = vmatpush1.msra.mxu0 0.0
      %11118 = vmatprep.subr.mxu0 0.0
      %11119 = vmatpush1.msra.mxu0 0.0
      %11120 = vmatprep.subr.mxu0 0.0
      %11121 = vmatpush1.msra.mxu0 0.0
      %11122 = vmatprep.subr.mxu0 0.0
      %11123 = vmatpush1.msra.mxu0 0.0
      %11124 = vmatprep.subr.mxu0 0.0
      %11125 = vmatpush1.msra.mxu0 0.0
      %11126 = vmatprep.subr.mxu0 0.0
      %11127 = vmatpush1.msra.mxu0 0.0
      %11128 = vmatprep.subr.mxu0 0.0
      %11129 = vmatpush1.msra.mxu0 0.0
      %11130 = vmatprep.subr.mxu0 0.0
      %11131 = vmatpush1.msra.mxu0 0.0
      %11132 = vmatprep.subr.mxu0 0.0
      %11133 = vmatpush1.msra.mxu0 0.0
      %11134 = vmatprep.subr.mxu0 0.0
      %11135 = vmatpush1.msra.mxu0 0.0
      %11136 = vmatprep.subr.mxu0 0.0
      %11137 = vmatpush1.msra.mxu0 0.0
      %11138 = vmatprep.subr.mxu0 0.0
      %11139 = vmatpush1.msra.mxu0 0.0
      %11140 = vmatprep.subr.mxu0 0.0
      %11141 = vmatpush1.msra.mxu0 0.0
      %11142 = vmatprep.mubr.f32.mxu0 0.0
      %v11143 = vand.u32 %v10553, 4294901760
      %11144 = vmatmul.mubr.f32.gmra.mrb[0].mxu0 %v11143
      %v11145 = vpop.f32.mrb[0].mxu0
      %v11146 = vadd.f32 %v11019, %v11145
      %v11147 = vpop.f32.mrb[0].mxu0
      %11148 = vmatprep.mubr.f32.mxu0 0.0
      %v11149 = vand.u32 %v10556, 4294901760
      %11150 = vmatmul.mubr.f32.gmra.mrb[0].mxu0 %v11149
      %v11151 = vpop.f32.mrb[0].mxu0
      %v11152 = vadd.f32 %v11027, %v11151
      %v11153 = vpop.f32.mrb[0].mxu0
      %11154 = vmatprep.mubr.f32.mxu0 0.0
      %v11155 = vand.u32 %v10559, 4294901760
      %11156 = vmatmul.mubr.f32.gmra.mrb[0].mxu0 %v11155
      %v11157 = vpop.f32.mrb[0].mxu0
      %v11158 = vadd.f32 %v11035, %v11157
      %v11159 = vpop.f32.mrb[0].mxu0
      %11160 = vmatprep.mubr.f32.mxu0 0.0
      %v11161 = vand.u32 %v10562, 4294901760
      %11162 = vmatmul.mubr.f32.gmra.mrb[0].mxu0 %v11161
      %v11163 = vpop.f32.mrb[0].mxu0
      %v11164 = vadd.f32 %v11043, %v11163
      %v11165 = vpop.f32.mrb[0].mxu0
      %11166 = vmatprep.mubr.f32.mxu0 0.0
      %v11167 = vand.u32 %v10565, 4294901760
      %11168 = vmatmul.mubr.f32.gmra.mrb[0].mxu0 %v11167
      %v11169 = vpop.f32.mrb[0].mxu0
      %v11170 = vadd.f32 %v11051, %v11169
      %v11171 = vpop.f32.mrb[0].mxu0
      %11172 = vdwg.mxu0
      %11173 = vmatprep.subr.mxu0 0.0
      %v11174 = vand.u32 %v10536, 4294901760
      %11175 = vmatpush1.msra.mxu0 %v11174
      %11176 = vmatprep.subr.mxu0 0.0
      %v11177 = vand.u32 %v10537, 4294901760
      %11178 = vmatpush1.msra.mxu0 %v11177
      %11179 = vmatprep.subr.mxu0 0.0
      %v11180 = vand.u32 %v10538, 4294901760
      %11181 = vmatpush1.msra.mxu0 %v11180
      %11182 = vmatprep.subr.mxu0 0.0
      %v11183 = vand.u32 %v10539, 4294901760
      %11184 = vmatpush1.msra.mxu0 %v11183
      %11185 = vmatprep.subr.mxu0 0.0
      %v11186 = vand.u32 %v10540, 4294901760
      %11187 = vmatpush1.msra.mxu0 %v11186
      %11188 = vmatprep.subr.mxu0 0.0
      %v11189 = vand.u32 %v10541, 4294901760
      %11190 = vmatpush1.msra.mxu0 %v11189
      %11191 = vmatprep.subr.mxu0 0.0
      %v11192 = vand.u32 %v10542, 4294901760
      %11193 = vmatpush1.msra.mxu0 %v11192
      %11194 = vmatprep.subr.mxu0 0.0
      %v11195 = vand.u32 %v10543, 4294901760
      %11196 = vmatpush1.msra.mxu0 %v11195
      %11197 = vmatprep.subr.mxu0 0.0
      %11198 = vmatpush1.msra.mxu0 0.0
      %11199 = vmatprep.subr.mxu0 0.0
      %11200 = vmatpush1.msra.mxu0 0.0
      %11201 = vmatprep.subr.mxu0 0.0
      %11202 = vmatpush1.msra.mxu0 0.0
      %11203 = vmatprep.subr.mxu0 0.0
      %11204 = vmatpush1.msra.mxu0 0.0
      %11205 = vmatprep.subr.mxu0 0.0
      %11206 = vmatpush1.msra.mxu0 0.0
      %11207 = vmatprep.subr.mxu0 0.0
      %11208 = vmatpush1.msra.mxu0 0.0
      %11209 = vmatprep.subr.mxu0 0.0
      %11210 = vmatpush1.msra.mxu0 0.0
      %11211 = vmatprep.subr.mxu0 0.0
      %11212 = vmatpush1.msra.mxu0 0.0
      %11213 = vmatprep.subr.mxu0 0.0
      %11214 = vmatpush1.msra.mxu0 0.0
      %11215 = vmatprep.subr.mxu0 0.0
      %11216 = vmatpush1.msra.mxu0 0.0
      %11217 = vmatprep.subr.mxu0 0.0
      %11218 = vmatpush1.msra.mxu0 0.0
      %11219 = vmatprep.subr.mxu0 0.0
      %11220 = vmatpush1.msra.mxu0 0.0
      %11221 = vmatprep.subr.mxu0 0.0
      %11222 = vmatpush1.msra.mxu0 0.0
      %11223 = vmatprep.subr.mxu0 0.0
      %11224 = vmatpush1.msra.mxu0 0.0
      %11225 = vmatprep.subr.mxu0 0.0
      %11226 = vmatpush1.msra.mxu0 0.0
      %11227 = vmatprep.subr.mxu0 0.0
      %11228 = vmatpush1.msra.mxu0 0.0
      %11229 = vmatprep.subr.mxu0 0.0
      %11230 = vmatpush1.msra.mxu0 0.0
      %11231 = vmatprep.subr.mxu0 0.0
      %11232 = vmatpush1.msra.mxu0 0.0
      %11233 = vmatprep.subr.mxu0 0.0
      %11234 = vmatpush1.msra.mxu0 0.0
      %11235 = vmatprep.subr.mxu0 0.0
      %11236 = vmatpush1.msra.mxu0 0.0
      %11237 = vmatprep.subr.mxu0 0.0
      %11238 = vmatpush1.msra.mxu0 0.0
      %11239 = vmatprep.subr.mxu0 0.0
      %11240 = vmatpush1.msra.mxu0 0.0
      %11241 = vmatprep.subr.mxu0 0.0
      %11242 = vmatpush1.msra.mxu0 0.0
      %11243 = vmatprep.subr.mxu0 0.0
      %11244 = vmatpush1.msra.mxu0 0.0
      %11245 = vmatprep.mubr.f32.mxu0 0.0
      %v11246 = vand.u32 %v10553, 4294901760
      %11247 = vmatmul.mubr.f32.gmra.mrb[0].mxu0 %v11246
      %v11248 = vpop.f32.mrb[0].mxu0
      %v11249 = vadd.f32 %v11146, %v11248
      %v11250 = vpop.f32.mrb[0].mxu0
      %11251 = vmatprep.mubr.f32.mxu0 0.0
      %v11252 = vand.u32 %v10556, 4294901760
      %11253 = vmatmul.mubr.f32.gmra.mrb[0].mxu0 %v11252
      %v11254 = vpop.f32.mrb[0].mxu0
      %v11255 = vadd.f32 %v11152, %v11254
      %v11256 = vpop.f32.mrb[0].mxu0
      %11257 = vmatprep.mubr.f32.mxu0 0.0
      %v11258 = vand.u32 %v10559, 4294901760
      %11259 = vmatmul.mubr.f32.gmra.mrb[0].mxu0 %v11258
      %v11260 = vpop.f32.mrb[0].mxu0
      %v11261 = vadd.f32 %v11158, %v11260
      %v11262 = vpop.f32.mrb[0].mxu0
      %11263 = vmatprep.mubr.f32.mxu0 0.0
      %v11264 = vand.u32 %v10562, 4294901760
      %11265 = vmatmul.mubr.f32.gmra.mrb[0].mxu0 %v11264
      %v11266 = vpop.f32.mrb[0].mxu0
      %v11267 = vadd.f32 %v11164, %v11266
      %v11268 = vpop.f32.mrb[0].mxu0
      %11269 = vmatprep.mubr.f32.mxu0 0.0
      %v11270 = vand.u32 %v10565, 4294901760
      %11271 = vmatmul.mubr.f32.gmra.mrb[0].mxu0 %v11270
      %v11272 = vpop.f32.mrb[0].mxu0
      %v11273 = vadd.f32 %v11170, %v11272
      %v11274 = vpop.f32.mrb[0].mxu0
      %11275 = vdwg.mxu0
      %v11276 = vadd.f32 %v9871, %v11249
      %v11277 = vadd.f32 %v9872, %v11255
      %v11278 = vadd.f32 %v9873, %v11261
      %v11279 = vadd.f32 %v9874, %v11267
      %v11280 = vadd.f32 %v9875, %v11273
      %v11281 = vld [vmem:[%s621] sm:$0x1]
      %v11282 = vld [vmem:[%s624] sm:$0x1]
      %v11283 = vsel %vm655, %v11276, 0.0
      %11284 = vadd.xlane.f32.xlu0 %v11283
      %v11285 = vpop.xlane.xlu0 %11284
      %v11286 = vsel %vm655, %v11277, 0.0
      %11287 = vadd.xlane.f32.xlu0 %v11286
      %v11288 = vpop.xlane.xlu0 %11287
      %v11289 = vsel %vm655, %v11278, 0.0
      %11290 = vadd.xlane.f32.xlu0 %v11289
      %v11291 = vpop.xlane.xlu0 %11290
      %v11292 = vsel %vm655, %v11279, 0.0
      %11293 = vadd.xlane.f32.xlu0 %v11292
      %v11294 = vpop.xlane.xlu0 %11293
      %v11295 = vsel %vm9799, %v11280, 0.0
      %11296 = vadd.xlane.f32.xlu0 %v11295
      %v11297 = vpop.xlane.xlu0 %11296
      %v11298 = vmul.f32 %v11285, %v9803
      %v11299 = vmul.f32 %v11288, %v9803
      %v11300 = vmul.f32 %v11291, %v9803
      %v11301 = vmul.f32 %v11294, %v9803
      %v11302 = vmul.f32 %v11297, %v9803
      %v11303 = vsub.f32 %v11276, %v11298
      %v11304 = vsub.f32 %v11277, %v11299
      %v11305 = vsub.f32 %v11278, %v11300
      %v11306 = vsub.f32 %v11279, %v11301
      %v11307 = vsub.f32 %v11280, %v11302
      %v11308 = vmul.f32 %v11303, %v11303
      %v11309 = vmul.f32 %v11304, %v11304
      %v11310 = vmul.f32 %v11305, %v11305
      %v11311 = vmul.f32 %v11306, %v11306
      %v11312 = vmul.f32 %v11307, %v11307
      %v11313 = vsel %vm655, %v11308, 0.0
      %11314 = vadd.xlane.f32.xlu0 %v11313
      %v11315 = vpop.xlane.xlu0 %11314
      %v11316 = vsel %vm655, %v11309, 0.0
      %11317 = vadd.xlane.f32.xlu0 %v11316
      %v11318 = vpop.xlane.xlu0 %11317
      %v11319 = vsel %vm655, %v11310, 0.0
      %11320 = vadd.xlane.f32.xlu0 %v11319
      %v11321 = vpop.xlane.xlu0 %11320
      %v11322 = vsel %vm655, %v11311, 0.0
      %11323 = vadd.xlane.f32.xlu0 %v11322
      %v11324 = vpop.xlane.xlu0 %11323
      %v11325 = vsel %vm9799, %v11312, 0.0
      %11326 = vadd.xlane.f32.xlu0 %v11325
      %v11327 = vpop.xlane.xlu0 %11326
      %v11328 = vmul.f32 %v11315, %v9803
      %v11329 = vmul.f32 %v11318, %v9803
      %v11330 = vmul.f32 %v11321, %v9803
      %v11331 = vmul.f32 %v11324, %v9803
      %v11332 = vmul.f32 %v11327, %v9803
      %v11333 = vadd.f32 %v11328, 1e-05
      %v11334 = vadd.f32 %v11329, 1e-05
      %v11335 = vadd.f32 %v11330, 1e-05
      %v11336 = vadd.f32 %v11331, 1e-05
      %v11337 = vadd.f32 %v11332, 1e-05
      %v11338 = vrsqrt.pop %v11333
      %v11339 = vrsqrt.pop %v11334
      %v11340 = vrsqrt.pop %v11335
      %v11341 = vrsqrt.pop %v11336
      %v11342 = vrsqrt.pop %v11337
      %v11343 = vmul.f32 %v11303, %v11338
      %v11344 = vmul.f32 %v11304, %v11339
      %v11345 = vmul.f32 %v11305, %v11340
      %v11346 = vmul.f32 %v11306, %v11341
      %v11347 = vmul.f32 %v11307, %v11342
      %v11349 = vlaneseq
      %v11350 = vshrl.u32 %v11349, 7
      %v11351 = vsub.s32 0, %v11350
      %v11352 = vrot.slane %v11281, %v11351
      %v11354 = vmul.f32 %v11343, %v11352
      %v11355 = vmul.f32 %v11344, %v11352
      %v11356 = vmul.f32 %v11345, %v11352
      %v11357 = vmul.f32 %v11346, %v11352
      %v11358 = vmul.f32 %v11347, %v11352
      %v11360 = vlaneseq
      %v11361 = vshrl.u32 %v11360, 7
      %v11362 = vsub.s32 0, %v11361
      %v11363 = vrot.slane %v11282, %v11362
      %v11365 = vadd.f32 %v11354, %v11363
      %v11366 = vadd.f32 %v11355, %v11363
      %v11367 = vadd.f32 %v11356, %v11363
      %v11368 = vadd.f32 %v11357, %v11363
      %v11369 = vadd.f32 %v11358, %v11363
      %11370 = vst.msk [vmem:[#allocation2] sm:$0xff] %vm655, %v11365
      %11371 = vst.msk [vmem:[#allocation2 + $0x8] sm:$0xff] %vm655, %v11366
      %11372 = vst.msk [vmem:[#allocation2 + $0x10] sm:$0xff] %vm655, %v11367
      %11373 = vst.msk [vmem:[#allocation2 + $0x18] sm:$0xff] %vm655, %v11368
      %11374 = vst.msk [vmem:[#allocation2 + $0x20] sm:$0xf] %vm9799, %v11369
      %p11375 = scmp.eq.s32.totalorder %s25, 1
      // Predicated region
      $region81: #{transformer_seq_model_forward.1} parent=75 // pred_check
        %p11376 = pneg %p11375
      $region82: #{transformer_seq_model_forward.1} parent=75 // pred_check_branch
        %11378 = sbr.rel (%p11376) target = $region84
      $region83: #{transformer_seq_model_forward.1} parent=75 // pred_region
        %11379 = vst.msk [vmem:[%s14] sm:$0xff] %vm655, %v11365
        %11380 = vst.msk [vmem:[%s14 + $0x8] sm:$0xff] %vm655, %v11366
        %11381 = vst.msk [vmem:[%s14 + $0x10] sm:$0xff] %vm655, %v11367
        %11382 = vst.msk [vmem:[%s14 + $0x18] sm:$0xff] %vm655, %v11368
        %11383 = vst.msk [vmem:[%s14 + $0x20] sm:$0xf] %vm9799, %v11369
      $region84: #{transformer_seq_model_forward.1} parent=75 // pred_fallthru
        _
      // Predicated region
      $region85: #{transformer_seq_model_forward.1} parent=75 // pred_check
        %p11384 = pneg %p392
      $region86: #{transformer_seq_model_forward.1} parent=75 // pred_check_branch
        %11386 = sbr.rel (%p11384) target = $region88
      $region87: #{transformer_seq_model_forward.1} parent=75 // pred_region
        _
      $region88: #{transformer_seq_model_forward.1} parent=75 // pred_fallthru
        _
      // Predicated region
      $region89: #{transformer_seq_model_forward.1} parent=75 // pred_check
        %p11387 = pneg %p392
      $region90: #{transformer_seq_model_forward.1} parent=75 // pred_check_branch
        %11389 = sbr.rel (%p11387) target = $region92
      $region91: #{transformer_seq_model_forward.1} parent=75 // pred_region
        _
      $region92: #{transformer_seq_model_forward.1} parent=75 // pred_fallthru
        _
    $region76: #{transformer_seq_model_forward.1} parent=5 // pred_fallthru
      _
    %p11390 = scmp.le.s32.totalorder 2, %s20
    // Predicated region
    $region93: #{transformer_seq_model_forward.1} parent=5 // pred_check
      %p11391 = pneg %p11390
    $region94: #{transformer_seq_model_forward.1} parent=5 // pred_check_branch
      %11393 = sbr.rel (%p11391) target = $region96
    $region95: #{transformer_seq_model_forward.1} parent=5 // pred_region
      %s11394 = ssub.s32 %s20, 2
    $region96: #{transformer_seq_model_forward.1} parent=5 // pred_fallthru
      _
  $region6: #{transformer_seq_model_forward.1} parent=0 // loop_footer
    %s24 = sadd.s32 1, %s20
  $region7: #{transformer_seq_model_forward.1} parent=0 // loop_footer_branch
    %19 = sbr.rel target = $region3
  $region8: #{transformer_seq_model_forward.1} parent=0 // loop_exit
    _

</llo_original>
